<compile_context>
chip_gen: v7x
topology: tpu7x:2x2x1
jax: 0.10.0
libtpu: 0.0.40
codegen_flags: <defaults>
</compile_context>

<pallas_src>
import math

import jax
import jax.numpy as jnp
import numpy as np
from jax import lax
from jax.experimental import pallas as pl
from jax.experimental.pallas import tpu as pltpu

# ----------------------------- small config ---------------------------------
B = 8          # batch
T = 8          # sequence length
H = 128        # hidden_size
EN = 32        # embedding_sizeN
ET = 64        # embedding_sizeT
ED = ET        # embedding_sizeT_dyn (identity emb_transform)
VN = 16        # vocab_sizeN
VT = 12        # vocab_sizeT
STATIC_IDS = list(range(6))            # static_x_ids
VS = len(STATIC_IDS)                   # vocab_size_static
VD = VT - VS                           # vocab_size_dyn

# fused-kernel layout constants
EDp = 128                  # dynamic-cell width padded to a full 128-lane vreg
OH_OFF = EN + ET           # one-hot offset inside the 128-lane input slab (=96)
KF = 3 * 128               # fused LHS width: [x_slab | h_prev | h_dyn_pad] = 384
NG = 4 * H + 4 * EDp       # fused gate width: main 512 + dynamic(padded) 512 = 1024


# ------------------------------ Pallas kernel -------------------------------
def dyn_rnn_fused_kernel(x_ref, w_ref, b_ref, dh0_ref, dc0_ref, h0_ref, c0_ref,
                         out_ref):
    # ---- hoisted loop invariants (JAX does not CSE broadcast_in_dim) ----
    w = w_ref[...]                                        # (KF, NG) bf16 weights
    bias = jnp.broadcast_to(b_ref[...], (B, NG))          # (B, NG)  f32
    dyn_h0 = jnp.broadcast_to(dh0_ref[...], (B, EDp))     # (B, EDp) f32 (pad lanes 0)
    dyn_c0 = jnp.broadcast_to(dc0_ref[...], (B, EDp))

    h0 = jnp.broadcast_to(h0_ref[...], (B, H))
    c0 = jnp.broadcast_to(c0_ref[...], (B, H))
    seen0 = jnp.zeros((B, VD), jnp.float32)               # lookup_table != -1 flags
    tab0 = jnp.zeros((B, VD, EDp), jnp.float32)           # dynamic h / c tables

    def step(t, carry):
        h, c, seen, htab, ctab = carry

        x = x_ref[t]                                      # (B,128): [n_emb|static_h|onehot|0]
        oh = x[:, OH_OFF:OH_OFF + VD]                     # (B, VD) dynamic-token one-hot

        # classify dynamic tokens: new vs previously-seen (update)
        is_dyn = jnp.sum(oh, axis=1, keepdims=True)                   # (B, 1)
        seen_sel = jnp.sum(oh * seen, axis=1, keepdims=True)          # (B, 1)
        is_upd = is_dyn * seen_sel
        is_new = is_dyn * (1.0 - seen_sel)

        # gather stored dynamic (h, c) for this token (pad lanes stay exactly 0)
        h_g = jnp.sum(oh[:, :, None] * htab, axis=1)                  # (B, EDp)
        c_g = jnp.sum(oh[:, :, None] * ctab, axis=1)                  # (B, EDp)
        h_dyn_st = is_upd * h_g + is_new * dyn_h0                     # (B, EDp)
        c_dyn_st = is_upd * c_g + is_new * dyn_c0                     # (B, EDp)

        # ONE fused MXU matmul for BOTH LSTM cells (bf16 operands, f32 acc):
        #   main gates = n_emb@Wn + (static_h + h_dyn)@Wt + h@Whh       cols 0:512
        #   dyn  gates = n_emb@Wdn + h@Wdh + h_dyn@Wdhh (128/gate pad)  cols 512:1024
        lhs = jnp.concatenate([x, h, h_dyn_st], axis=1).astype(jnp.bfloat16)
        gates = jnp.dot(lhs, w, preferred_element_type=jnp.float32) + bias

        # main LSTMCell (all gate slices are 128-lane aligned)
        i_g = jax.nn.sigmoid(gates[:, 0 * H:1 * H])
        f_g = jax.nn.sigmoid(gates[:, 1 * H:2 * H])
        g_g = jnp.tanh(gates[:, 2 * H:3 * H])
        o_g = jax.nn.sigmoid(gates[:, 3 * H:4 * H])
        c_new = f_g * c + i_g * g_g
        h_new = o_g * jnp.tanh(c_new)

        # dynamic LSTMCell (each gate zero-padded to 128 lanes -> aligned slices;
        # pad columns of the gates are 0, so table pad lanes remain exactly 0)
        gd = gates[:, 4 * H:]
        id_g = jax.nn.sigmoid(gd[:, 0 * EDp:1 * EDp])
        fd_g = jax.nn.sigmoid(gd[:, 1 * EDp:2 * EDp])
        gd_g = jnp.tanh(gd[:, 2 * EDp:3 * EDp])
        od_g = jax.nn.sigmoid(gd[:, 3 * EDp:4 * EDp])
        c_dyn = fd_g * c_dyn_st + id_g * gd_g
        h_dyn = od_g * jnp.tanh(c_dyn)

        # scatter updated dynamic state back (dynamic rows only); update seen flags
        mask3 = oh[:, :, None] > 0.0
        htab = jnp.where(mask3, h_dyn[:, None, :], htab)
        ctab = jnp.where(mask3, c_dyn[:, None, :], ctab)
        seen = jnp.maximum(seen, oh)

        out_ref[t] = h_new
        return h_new, c_new, seen, htab, ctab

    lax.fori_loop(0, T, step, (h0, c0, seen0, tab0, tab0), unroll=True)


# ------------------------------ glue / wrapper -------------------------------
def _precompute_inputs(n_tokens, t_tokens, p):
    """Embedding lookups + static/dynamic classification (plain JAX glue)."""
    n_emb_all = p['embN'][n_tokens]                                    # (B, T, EN)
    static_ids = p['static_ids']
    is_static = (t_tokens[:, :, None] == static_ids[None, None, :]).any(-1)   # (B, T)
    static_h = (p['embT'][p['static2dense'][t_tokens]]
                * is_static[..., None].astype(jnp.float32))            # (B, T, ET)
    dyn_id = p['dynamic2dense'][t_tokens]                              # (B, T)
    onehot = (jax.nn.one_hot(dyn_id, VD, dtype=jnp.float32)
              * (~is_static)[..., None].astype(jnp.float32))           # (B, T, VD)
    return n_emb_all, static_h, onehot


def _build_input_slab(n_tokens, t_tokens, p):
    """Lane-dense (T, B, 128) time-major slab: [n_emb | static_h | one-hot | 0]."""
    n_emb_all, static_h_all, onehot_all = _precompute_inputs(n_tokens, t_tokens, p)
    pad = jnp.zeros((B, T, 128 - OH_OFF - VD), jnp.float32)
    slab = jnp.concatenate([n_emb_all, static_h_all, onehot_all, pad], axis=-1)
    return jnp.transpose(slab, (1, 0, 2)).astype(jnp.float32)          # (T, B, 128)


def _pad_dyn_gate_cols(w):
    """(rows, 4*ED) -> (rows, 4*EDp): zero-pad each 64-wide gate block to 128 lanes."""
    r = w.shape[0]
    w4 = w.reshape(r, 4, ED)
    w4 = jnp.pad(w4, ((0, 0), (0, 0), (0, EDp - ED)))
    return w4.reshape(r, 4 * EDp)


def _build_fused_weights(p):
    """Pack both LSTM cells into one (KF=384, NG=1024) weight + (1, NG) bias."""
    z = lambda r, c: jnp.zeros((r, c), jnp.float32)
    # Row layout (K axis) matches kernel LHS: [x_slab(128) | h_prev(128) | h_dyn_pad(128)]
    main_cols = jnp.concatenate([
        p['w_ih_n'],                     # x lanes  0..31 : n_emb
        p['w_ih_t'],                     # x lanes 32..95 : static_h  (-> h_tensor path)
        z(128 - OH_OFF, 4 * H),          # x lanes 96..127: one-hot + pad (no contribution)
        p['w_hh'],                       # h_prev
        p['w_ih_t'],                     # h_dynamic (real 64 lanes)  (-> h_tensor path)
        z(EDp - ED, 4 * H),              # h_dynamic pad lanes
    ], axis=0)
    dyn_cols = jnp.concatenate([
        _pad_dyn_gate_cols(p['wd_ih_n']),    # n_emb
        z(ET, 4 * EDp),                      # static_h: no dynamic-cell contribution
        z(128 - OH_OFF, 4 * EDp),            # one-hot + pad
        _pad_dyn_gate_cols(p['wd_ih_h']),    # h_prev
        _pad_dyn_gate_cols(p['wd_hh']),      # h_dynamic (real 64 lanes)
        z(EDp - ED, 4 * EDp),                # h_dynamic pad lanes
    ], axis=0)
    w_all = jnp.concatenate([main_cols, dyn_cols], axis=1).astype(jnp.bfloat16)
    bias_all = jnp.concatenate([p['b'], _pad_dyn_gate_cols(p['bd'])], axis=1)  # f32
    dyn_h0_pad = jnp.pad(p['dyn_init_h'], ((0, 0), (0, EDp - ED)))
    dyn_c0_pad = jnp.pad(p['dyn_init_c'], ((0, 0), (0, EDp - ED)))
    return w_all, bias_all, dyn_h0_pad, dyn_c0_pad


def dynamic_rnn_encoder_forward(n_tokens, t_tokens, p):
    x_slab = _build_input_slab(n_tokens, t_tokens, p)
    w_all, bias_all, dyn_h0_pad, dyn_c0_pad = _build_fused_weights(p)

    vmem = pl.BlockSpec(memory_space=pltpu.MemorySpace.VMEM)
    out_tm = pl.pallas_call(
        dyn_rnn_fused_kernel,
        out_shape=jax.ShapeDtypeStruct((T, B, H), jnp.float32),
        in_specs=[vmem] * 7,
        out_specs=vmem,
    )(x_slab, w_all, bias_all, dyn_h0_pad, dyn_c0_pad,
      p['hid_init'], p['cell_init'])

    return jnp.transpose(out_tm, (1, 0, 2))   # (B, T, H)


# --------------------------- pure-JAX reference ------------------------------
def reference_forward(n_tokens, t_tokens, p):
    """Step-by-step reference in the module's natural (split-matmul) form.

    Matmul operands are cast to bf16 (f32 accumulate) to mirror the kernel's
    MXU numerics; all state / elementwise math stays f32.
    """
    bf = lambda a: a.astype(jnp.bfloat16)
    dot = lambda a, b: jnp.dot(bf(a), bf(b), preferred_element_type=jnp.float32)

    n_emb_all, static_h_all, onehot_all = _precompute_inputs(n_tokens, t_tokens, p)
    h = jnp.broadcast_to(p['hid_init'], (B, H))
    c = jnp.broadcast_to(p['cell_init'], (B, H))
    seen = jnp.zeros((B, VD), jnp.float32)
    htab = jnp.zeros((B, VD, ED), jnp.float32)
    ctab = jnp.zeros((B, VD, ED), jnp.float32)
    outs = []
    for t in range(T):
        n_emb = n_emb_all[:, t]
        static_h = static_h_all[:, t]
        oh = onehot_all[:, t]
        is_dyn = oh.sum(1, keepdims=True)
        seen_sel = (oh * seen).sum(1, keepdims=True)
        is_upd = is_dyn * seen_sel
        is_new = is_dyn * (1.0 - seen_sel)
        h_g = (oh[:, :, None] * htab).sum(1)
        c_g = (oh[:, :, None] * ctab).sum(1)
        h_dynamic = is_upd * h_g + is_new * p['dyn_init_h']
        c_dynamic = is_upd * c_g + is_new * p['dyn_init_c']
        h_tensor = static_h + h_dynamic
        gates = (dot(n_emb, p['w_ih_n']) + dot(h_tensor, p['w_ih_t'])
                 + dot(h, p['w_hh']) + p['b'])
        i_g = jax.nn.sigmoid(gates[:, :H])
        f_g = jax.nn.sigmoid(gates[:, H:2 * H])
        g_g = jnp.tanh(gates[:, 2 * H:3 * H])
        o_g = jax.nn.sigmoid(gates[:, 3 * H:])
        c_new = f_g * c + i_g * g_g
        h_new = o_g * jnp.tanh(c_new)
        gates_d = (dot(n_emb, p['wd_ih_n']) + dot(h, p['wd_ih_h'])
                   + dot(h_dynamic, p['wd_hh']) + p['bd'])
        id_g = jax.nn.sigmoid(gates_d[:, :ED])
        fd_g = jax.nn.sigmoid(gates_d[:, ED:2 * ED])
        gd_g = jnp.tanh(gates_d[:, 2 * ED:3 * ED])
        od_g = jax.nn.sigmoid(gates_d[:, 3 * ED:])
        c_dyn = fd_g * c_dynamic + id_g * gd_g
        h_dyn = od_g * jnp.tanh(c_dyn)
        mask3 = oh[:, :, None] > 0.0
        htab = jnp.where(mask3, h_dyn[:, None, :], htab)
        ctab = jnp.where(mask3, c_dyn[:, None, :], ctab)
        seen = jnp.maximum(seen, oh)
        h, c = h_new, c_new
        outs.append(h_new)
    return jnp.stack(outs, axis=1)


# ------------------------------ parameter init -------------------------------
def init_params(key):
    ks = jax.random.split(key, 12)
    u = lambda k, shp, s: jax.random.uniform(k, shp, jnp.float32, -s, s)
    sH = 1.0 / math.sqrt(H)
    sE = 1.0 / math.sqrt(ED)
    dynamic_ids = sorted(set(range(VT)) - set(STATIC_IDS))
    p = dict(
        embN=u(ks[0], (VN, EN), 0.1),
        embT=u(ks[1], (VS, ET), 0.1),
        w_ih_n=u(ks[2], (EN, 4 * H), sH),
        w_ih_t=u(ks[3], (ET, 4 * H), sH),
        w_hh=u(ks[4], (H, 4 * H), sH),
        b=u(ks[5], (1, 4 * H), sH),
        wd_ih_n=u(ks[6], (EN, 4 * ED), sE),
        wd_ih_h=u(ks[7], (H, 4 * ED), sE),
        wd_hh=u(ks[8], (ED, 4 * ED), sE),
        bd=u(ks[9], (1, 4 * ED), sE),
        dyn_init_h=u(ks[10], (1, ED), 0.05),      # 'pure_uni'
        dyn_init_c=u(ks[11], (1, ED), 0.05),
        hid_init=jnp.zeros((1, H), jnp.float32),  # nn.Parameter(zeros)
        cell_init=jnp.zeros((1, H), jnp.float32),
        static_ids=jnp.array(STATIC_IDS, jnp.int32),
    )
    p['static2dense'] = (jnp.zeros((VT,), jnp.int32)
                         .at[jnp.array(STATIC_IDS, jnp.int32)]
                         .set(jnp.arange(VS, dtype=jnp.int32)))
    p['dynamic2dense'] = (jnp.zeros((VT,), jnp.int32)
                          .at[jnp.array(dynamic_ids, jnp.int32)]
                          .set(jnp.arange(VD, dtype=jnp.int32)))
    return p


if __name__ == "__main__":
    key = jax.random.PRNGKey(0)
    kp, kn, kt = jax.random.split(key, 3)
    params = init_params(kp)
    n_tokens = jax.random.randint(kn, (B, T), 0, VN, dtype=jnp.int32)
    t_tokens = jax.random.randint(kt, (B, T), 0, VT, dtype=jnp.int32)

    out = dynamic_rnn_encoder_forward(n_tokens, t_tokens, params)
    out = jax.block_until_ready(out)
    assert out.shape == (B, T, H)

    ref = reference_forward(n_tokens, t_tokens, params)
    np.testing.assert_allclose(np.asarray(out), np.asarray(ref), rtol=2e-3, atol=2e-3)
    print("KERNEL_OK")
</pallas_src>

<mosaic_0001>
module attributes {stable_mosaic.version = 11 : i64} {
  func.func @dyn_rnn_fused_kernel(%arg0: memref<8x8x128xf32, #tpu.memory_space<vmem>>, %arg1: memref<384x1024xbf16, #tpu.memory_space<vmem>>, %arg2: memref<1x1024xf32, #tpu.memory_space<vmem>>, %arg3: memref<1x128xf32, #tpu.memory_space<vmem>>, %arg4: memref<1x128xf32, #tpu.memory_space<vmem>>, %arg5: memref<1x128xf32, #tpu.memory_space<vmem>>, %arg6: memref<1x128xf32, #tpu.memory_space<vmem>>, %arg7: memref<8x8x128xf32, #tpu.memory_space<vmem>>) attributes {dimension_semantics = [], scalar_prefetch = 0 : i64, scratch_operands = 0 : i64, tpu.core_type = #tpu.core_type<tc>} {
    %c0 = arith.constant 0 : index
    %c0_0 = arith.constant 0 : index
    %0 = vector.load %arg1[%c0, %c0_0] : memref<384x1024xbf16, #tpu.memory_space<vmem>>, vector<384x1024xbf16>
    %c0_1 = arith.constant 0 : index
    %c0_2 = arith.constant 0 : index
    %1 = vector.load %arg2[%c0_1, %c0_2] : memref<1x1024xf32, #tpu.memory_space<vmem>>, vector<1x1024xf32>
    %2 = vector.shape_cast %1 : vector<1x1024xf32> to vector<1x1024xf32>
    %3 = vector.broadcast %2 : vector<1x1024xf32> to vector<8x1024xf32>
    %c0_3 = arith.constant 0 : index
    %c0_4 = arith.constant 0 : index
    %4 = vector.load %arg3[%c0_3, %c0_4] : memref<1x128xf32, #tpu.memory_space<vmem>>, vector<1x128xf32>
    %5 = vector.shape_cast %4 : vector<1x128xf32> to vector<1x128xf32>
    %6 = vector.broadcast %5 : vector<1x128xf32> to vector<8x128xf32>
    %c0_5 = arith.constant 0 : index
    %c0_6 = arith.constant 0 : index
    %7 = vector.load %arg4[%c0_5, %c0_6] : memref<1x128xf32, #tpu.memory_space<vmem>>, vector<1x128xf32>
    %8 = vector.shape_cast %7 : vector<1x128xf32> to vector<1x128xf32>
    %9 = vector.broadcast %8 : vector<1x128xf32> to vector<8x128xf32>
    %c0_7 = arith.constant 0 : index
    %c0_8 = arith.constant 0 : index
    %10 = vector.load %arg5[%c0_7, %c0_8] : memref<1x128xf32, #tpu.memory_space<vmem>>, vector<1x128xf32>
    %11 = vector.shape_cast %10 : vector<1x128xf32> to vector<1x128xf32>
    %12 = vector.broadcast %11 : vector<1x128xf32> to vector<8x128xf32>
    %c0_9 = arith.constant 0 : index
    %c0_10 = arith.constant 0 : index
    %13 = vector.load %arg6[%c0_9, %c0_10] : memref<1x128xf32, #tpu.memory_space<vmem>>, vector<1x128xf32>
    %14 = vector.shape_cast %13 : vector<1x128xf32> to vector<1x128xf32>
    %15 = vector.broadcast %14 : vector<1x128xf32> to vector<8x128xf32>
    %cst = arith.constant 0.000000e+00 : f32
    %16 = vector.broadcast %cst : f32 to vector<8x6xf32>
    %cst_11 = arith.constant 0.000000e+00 : f32
    %17 = vector.broadcast %cst_11 : f32 to vector<8x6x128xf32>
    %c0_i32 = arith.constant 0 : i32
    %18 = arith.index_cast %c0_i32 : i32 to index
    %c0_12 = arith.constant 0 : index
    %c0_13 = arith.constant 0 : index
    %19 = vector.load %arg0[%18, %c0_12, %c0_13] : memref<8x8x128xf32, #tpu.memory_space<vmem>>, vector<1x8x128xf32>
    %20 = vector.shape_cast %19 : vector<1x8x128xf32> to vector<8x128xf32>
    %21 = vector.extract_strided_slice %20 {offsets = [0, 96], sizes = [8, 6], strides = [1, 1]} : vector<8x128xf32> to vector<8x6xf32>
    %cst_14 = arith.constant dense<0.000000e+00> : vector<8xf32>
    %22 = vector.multi_reduction <add>, %21, %cst_14 [1] : vector<8x6xf32> to vector<8xf32>
    %23 = vector.shape_cast %22 : vector<8xf32> to vector<8x1xf32>
    %24 = arith.mulf %21, %16 : vector<8x6xf32>
    %cst_15 = arith.constant dense<0.000000e+00> : vector<8xf32>
    %25 = vector.multi_reduction <add>, %24, %cst_15 [1] : vector<8x6xf32> to vector<8xf32>
    %26 = vector.shape_cast %25 : vector<8xf32> to vector<8x1xf32>
    %27 = arith.mulf %23, %26 : vector<8x1xf32>
    %cst_16 = arith.constant 1.000000e+00 : f32
    %28 = vector.broadcast %cst_16 : f32 to vector<8x1xf32>
    %29 = arith.subf %28, %26 : vector<8x1xf32>
    %30 = arith.mulf %23, %29 : vector<8x1xf32>
    %31 = vector.shape_cast %21 : vector<8x6xf32> to vector<8x6x1xf32>
    %32 = vector.broadcast %31 : vector<8x6x1xf32> to vector<8x6x128xf32>
    %33 = arith.mulf %32, %17 : vector<8x6x128xf32>
    %cst_17 = arith.constant dense<0.000000e+00> : vector<8x128xf32>
    %34 = vector.multi_reduction <add>, %33, %cst_17 [1] : vector<8x6x128xf32> to vector<8x128xf32>
    %35 = vector.shape_cast %21 : vector<8x6xf32> to vector<8x6x1xf32>
    %36 = vector.broadcast %35 : vector<8x6x1xf32> to vector<8x6x128xf32>
    %37 = arith.mulf %36, %17 : vector<8x6x128xf32>
    %cst_18 = arith.constant dense<0.000000e+00> : vector<8x128xf32>
    %38 = vector.multi_reduction <add>, %37, %cst_18 [1] : vector<8x6x128xf32> to vector<8x128xf32>
    %39 = vector.broadcast %27 : vector<8x1xf32> to vector<8x128xf32>
    %40 = arith.mulf %39, %34 : vector<8x128xf32>
    %41 = vector.broadcast %30 : vector<8x1xf32> to vector<8x128xf32>
    %42 = arith.mulf %41, %6 : vector<8x128xf32>
    %43 = arith.addf %40, %42 : vector<8x128xf32>
    %44 = vector.broadcast %27 : vector<8x1xf32> to vector<8x128xf32>
    %45 = arith.mulf %44, %38 : vector<8x128xf32>
    %46 = vector.broadcast %30 : vector<8x1xf32> to vector<8x128xf32>
    %47 = arith.mulf %46, %9 : vector<8x128xf32>
    %48 = arith.addf %45, %47 : vector<8x128xf32>
    %49 = tpu.concatenate %20, %12, %43 in 1 : vector<8x128xf32>, vector<8x128xf32>, vector<8x128xf32> -> vector<8x384xf32>
    %50 = arith.truncf %49 : vector<8x384xf32> to vector<8x384xbf16>
    %cst_19 = arith.constant dense<0.000000e+00> : vector<8x1024xf32>
    %51 = tpu.matmul %50, %0, %cst_19 {dimension_numbers = #tpu.dot_dimension_numbers<[1], [0], [0], [1], [0, 0, 1, 1], [], []>} : vector<8x384xbf16>, vector<384x1024xbf16>, vector<8x1024xf32> -> vector<8x1024xf32>
    %52 = arith.addf %51, %3 : vector<8x1024xf32>
    %53 = vector.extract_strided_slice %52 {offsets = [0, 0], sizes = [8, 128], strides = [1, 1]} : vector<8x1024xf32> to vector<8x128xf32>
    %54 = arith.negf %53 : vector<8x128xf32>
    %55 = math.exp %54 : vector<8x128xf32>
    %cst_20 = arith.constant 1.000000e+00 : f32
    %56 = vector.broadcast %cst_20 : f32 to vector<8x128xf32>
    %57 = arith.addf %56, %55 : vector<8x128xf32>
    %58 = arith.divf %56, %57 : vector<8x128xf32>
    %59 = vector.extract_strided_slice %52 {offsets = [0, 128], sizes = [8, 128], strides = [1, 1]} : vector<8x1024xf32> to vector<8x128xf32>
    %60 = arith.negf %59 : vector<8x128xf32>
    %61 = math.exp %60 : vector<8x128xf32>
    %cst_21 = arith.constant 1.000000e+00 : f32
    %62 = vector.broadcast %cst_21 : f32 to vector<8x128xf32>
    %63 = arith.addf %62, %61 : vector<8x128xf32>
    %64 = arith.divf %62, %63 : vector<8x128xf32>
    %65 = vector.extract_strided_slice %52 {offsets = [0, 256], sizes = [8, 128], strides = [1, 1]} : vector<8x1024xf32> to vector<8x128xf32>
    %66 = math.tanh %65 : vector<8x128xf32>
    %67 = vector.extract_strided_slice %52 {offsets = [0, 384], sizes = [8, 128], strides = [1, 1]} : vector<8x1024xf32> to vector<8x128xf32>
    %68 = arith.negf %67 : vector<8x128xf32>
    %69 = math.exp %68 : vector<8x128xf32>
    %cst_22 = arith.constant 1.000000e+00 : f32
    %70 = vector.broadcast %cst_22 : f32 to vector<8x128xf32>
    %71 = arith.addf %70, %69 : vector<8x128xf32>
    %72 = arith.divf %70, %71 : vector<8x128xf32>
    %73 = arith.mulf %64, %15 : vector<8x128xf32>
    %74 = arith.mulf %58, %66 : vector<8x128xf32>
    %75 = arith.addf %73, %74 : vector<8x128xf32>
    %76 = math.tanh %75 : vector<8x128xf32>
    %77 = arith.mulf %72, %76 : vector<8x128xf32>
    %78 = vector.extract_strided_slice %52 {offsets = [0, 512], sizes = [8, 512], strides = [1, 1]} : vector<8x1024xf32> to vector<8x512xf32>
    %79 = vector.extract_strided_slice %78 {offsets = [0, 0], sizes = [8, 128], strides = [1, 1]} : vector<8x512xf32> to vector<8x128xf32>
    %80 = arith.negf %79 : vector<8x128xf32>
    %81 = math.exp %80 : vector<8x128xf32>
    %cst_23 = arith.constant 1.000000e+00 : f32
    %82 = vector.broadcast %cst_23 : f32 to vector<8x128xf32>
    %83 = arith.addf %82, %81 : vector<8x128xf32>
    %84 = arith.divf %82, %83 : vector<8x128xf32>
    %85 = vector.extract_strided_slice %78 {offsets = [0, 128], sizes = [8, 128], strides = [1, 1]} : vector<8x512xf32> to vector<8x128xf32>
    %86 = arith.negf %85 : vector<8x128xf32>
    %87 = math.exp %86 : vector<8x128xf32>
    %cst_24 = arith.constant 1.000000e+00 : f32
    %88 = vector.broadcast %cst_24 : f32 to vector<8x128xf32>
    %89 = arith.addf %88, %87 : vector<8x128xf32>
    %90 = arith.divf %88, %89 : vector<8x128xf32>
    %91 = vector.extract_strided_slice %78 {offsets = [0, 256], sizes = [8, 128], strides = [1, 1]} : vector<8x512xf32> to vector<8x128xf32>
    %92 = math.tanh %91 : vector<8x128xf32>
    %93 = vector.extract_strided_slice %78 {offsets = [0, 384], sizes = [8, 128], strides = [1, 1]} : vector<8x512xf32> to vector<8x128xf32>
    %94 = arith.negf %93 : vector<8x128xf32>
    %95 = math.exp %94 : vector<8x128xf32>
    %cst_25 = arith.constant 1.000000e+00 : f32
    %96 = vector.broadcast %cst_25 : f32 to vector<8x128xf32>
    %97 = arith.addf %96, %95 : vector<8x128xf32>
    %98 = arith.divf %96, %97 : vector<8x128xf32>
    %99 = arith.mulf %90, %48 : vector<8x128xf32>
    %100 = arith.mulf %84, %92 : vector<8x128xf32>
    %101 = arith.addf %99, %100 : vector<8x128xf32>
    %102 = math.tanh %101 : vector<8x128xf32>
    %103 = arith.mulf %98, %102 : vector<8x128xf32>
    %104 = vector.shape_cast %21 : vector<8x6xf32> to vector<8x6x1xf32>
    %cst_26 = arith.constant 0.000000e+00 : f32
    %105 = vector.broadcast %cst_26 : f32 to vector<8x6x1xf32>
    %106 = arith.cmpf ogt, %104, %105 : vector<8x6x1xf32>
    %107 = vector.shape_cast %103 : vector<8x128xf32> to vector<8x1x128xf32>
    %108 = vector.shape_cast %106 : vector<8x6x1xi1> to vector<8x6x1xi1>
    %109 = vector.broadcast %108 : vector<8x6x1xi1> to vector<8x6x128xi1>
    %110 = vector.shape_cast %107 : vector<8x1x128xf32> to vector<8x1x128xf32>
    %111 = vector.broadcast %110 : vector<8x1x128xf32> to vector<8x6x128xf32>
    %112 = arith.select %109, %111, %17 : vector<8x6x128xi1>, vector<8x6x128xf32>
    %113 = vector.shape_cast %101 : vector<8x128xf32> to vector<8x1x128xf32>
    %114 = vector.shape_cast %106 : vector<8x6x1xi1> to vector<8x6x1xi1>
    %115 = vector.broadcast %114 : vector<8x6x1xi1> to vector<8x6x128xi1>
    %116 = vector.shape_cast %113 : vector<8x1x128xf32> to vector<8x1x128xf32>
    %117 = vector.broadcast %116 : vector<8x1x128xf32> to vector<8x6x128xf32>
    %118 = arith.select %115, %117, %17 : vector<8x6x128xi1>, vector<8x6x128xf32>
    %119 = arith.maximumf %16, %21 : vector<8x6xf32>
    %120 = arith.index_cast %c0_i32 : i32 to index
    %c0_27 = arith.constant 0 : index
    %c0_28 = arith.constant 0 : index
    %121 = vector.load %arg7[%120, %c0_27, %c0_28] : memref<8x8x128xf32, #tpu.memory_space<vmem>>, vector<1x8x128xf32>
    %122 = vector.shape_cast %121 : vector<1x8x128xf32> to vector<8x128xf32>
    %123 = vector.shape_cast %77 : vector<8x128xf32> to vector<1x8x128xf32>
    tpu.vector_store %arg7[%120, %c0_27, %c0_28], %123 {strides = array<i32>} : memref<8x8x128xf32, #tpu.memory_space<vmem>>, vector<1x8x128xf32>,
    %c1_i32 = arith.constant 1 : i32
    %124 = arith.index_cast %c1_i32 : i32 to index
    %c0_29 = arith.constant 0 : index
    %c0_30 = arith.constant 0 : index
    %125 = vector.load %arg0[%124, %c0_29, %c0_30] : memref<8x8x128xf32, #tpu.memory_space<vmem>>, vector<1x8x128xf32>
    %126 = vector.shape_cast %125 : vector<1x8x128xf32> to vector<8x128xf32>
    %127 = vector.extract_strided_slice %126 {offsets = [0, 96], sizes = [8, 6], strides = [1, 1]} : vector<8x128xf32> to vector<8x6xf32>
    %cst_31 = arith.constant dense<0.000000e+00> : vector<8xf32>
    %128 = vector.multi_reduction <add>, %127, %cst_31 [1] : vector<8x6xf32> to vector<8xf32>
    %129 = vector.shape_cast %128 : vector<8xf32> to vector<8x1xf32>
    %130 = arith.mulf %127, %119 : vector<8x6xf32>
    %cst_32 = arith.constant dense<0.000000e+00> : vector<8xf32>
    %131 = vector.multi_reduction <add>, %130, %cst_32 [1] : vector<8x6xf32> to vector<8xf32>
    %132 = vector.shape_cast %131 : vector<8xf32> to vector<8x1xf32>
    %133 = arith.mulf %129, %132 : vector<8x1xf32>
    %cst_33 = arith.constant 1.000000e+00 : f32
    %134 = vector.broadcast %cst_33 : f32 to vector<8x1xf32>
    %135 = arith.subf %134, %132 : vector<8x1xf32>
    %136 = arith.mulf %129, %135 : vector<8x1xf32>
    %137 = vector.shape_cast %127 : vector<8x6xf32> to vector<8x6x1xf32>
    %138 = vector.broadcast %137 : vector<8x6x1xf32> to vector<8x6x128xf32>
    %139 = arith.mulf %138, %112 : vector<8x6x128xf32>
    %cst_34 = arith.constant dense<0.000000e+00> : vector<8x128xf32>
    %140 = vector.multi_reduction <add>, %139, %cst_34 [1] : vector<8x6x128xf32> to vector<8x128xf32>
    %141 = vector.shape_cast %127 : vector<8x6xf32> to vector<8x6x1xf32>
    %142 = vector.broadcast %141 : vector<8x6x1xf32> to vector<8x6x128xf32>
    %143 = arith.mulf %142, %118 : vector<8x6x128xf32>
    %cst_35 = arith.constant dense<0.000000e+00> : vector<8x128xf32>
    %144 = vector.multi_reduction <add>, %143, %cst_35 [1] : vector<8x6x128xf32> to vector<8x128xf32>
    %145 = vector.broadcast %133 : vector<8x1xf32> to vector<8x128xf32>
    %146 = arith.mulf %145, %140 : vector<8x128xf32>
    %147 = vector.broadcast %136 : vector<8x1xf32> to vector<8x128xf32>
    %148 = arith.mulf %147, %6 : vector<8x128xf32>
    %149 = arith.addf %146, %148 : vector<8x128xf32>
    %150 = vector.broadcast %133 : vector<8x1xf32> to vector<8x128xf32>
    %151 = arith.mulf %150, %144 : vector<8x128xf32>
    %152 = vector.broadcast %136 : vector<8x1xf32> to vector<8x128xf32>
    %153 = arith.mulf %152, %9 : vector<8x128xf32>
    %154 = arith.addf %151, %153 : vector<8x128xf32>
    %155 = tpu.concatenate %126, %77, %149 in 1 : vector<8x128xf32>, vector<8x128xf32>, vector<8x128xf32> -> vector<8x384xf32>
    %156 = arith.truncf %155 : vector<8x384xf32> to vector<8x384xbf16>
    %cst_36 = arith.constant dense<0.000000e+00> : vector<8x1024xf32>
    %157 = tpu.matmul %156, %0, %cst_36 {dimension_numbers = #tpu.dot_dimension_numbers<[1], [0], [0], [1], [0, 0, 1, 1], [], []>} : vector<8x384xbf16>, vector<384x1024xbf16>, vector<8x1024xf32> -> vector<8x1024xf32>
    %158 = arith.addf %157, %3 : vector<8x1024xf32>
    %159 = vector.extract_strided_slice %158 {offsets = [0, 0], sizes = [8, 128], strides = [1, 1]} : vector<8x1024xf32> to vector<8x128xf32>
    %160 = arith.negf %159 : vector<8x128xf32>
    %161 = math.exp %160 : vector<8x128xf32>
    %cst_37 = arith.constant 1.000000e+00 : f32
    %162 = vector.broadcast %cst_37 : f32 to vector<8x128xf32>
    %163 = arith.addf %162, %161 : vector<8x128xf32>
    %164 = arith.divf %162, %163 : vector<8x128xf32>
    %165 = vector.extract_strided_slice %158 {offsets = [0, 128], sizes = [8, 128], strides = [1, 1]} : vector<8x1024xf32> to vector<8x128xf32>
    %166 = arith.negf %165 : vector<8x128xf32>
    %167 = math.exp %166 : vector<8x128xf32>
    %cst_38 = arith.constant 1.000000e+00 : f32
    %168 = vector.broadcast %cst_38 : f32 to vector<8x128xf32>
    %169 = arith.addf %168, %167 : vector<8x128xf32>
    %170 = arith.divf %168, %169 : vector<8x128xf32>
    %171 = vector.extract_strided_slice %158 {offsets = [0, 256], sizes = [8, 128], strides = [1, 1]} : vector<8x1024xf32> to vector<8x128xf32>
    %172 = math.tanh %171 : vector<8x128xf32>
    %173 = vector.extract_strided_slice %158 {offsets = [0, 384], sizes = [8, 128], strides = [1, 1]} : vector<8x1024xf32> to vector<8x128xf32>
    %174 = arith.negf %173 : vector<8x128xf32>
    %175 = math.exp %174 : vector<8x128xf32>
    %cst_39 = arith.constant 1.000000e+00 : f32
    %176 = vector.broadcast %cst_39 : f32 to vector<8x128xf32>
    %177 = arith.addf %176, %175 : vector<8x128xf32>
    %178 = arith.divf %176, %177 : vector<8x128xf32>
    %179 = arith.mulf %170, %75 : vector<8x128xf32>
    %180 = arith.mulf %164, %172 : vector<8x128xf32>
    %181 = arith.addf %179, %180 : vector<8x128xf32>
    %182 = math.tanh %181 : vector<8x128xf32>
    %183 = arith.mulf %178, %182 : vector<8x128xf32>
    %184 = vector.extract_strided_slice %158 {offsets = [0, 512], sizes = [8, 512], strides = [1, 1]} : vector<8x1024xf32> to vector<8x512xf32>
    %185 = vector.extract_strided_slice %184 {offsets = [0, 0], sizes = [8, 128], strides = [1, 1]} : vector<8x512xf32> to vector<8x128xf32>
    %186 = arith.negf %185 : vector<8x128xf32>
    %187 = math.exp %186 : vector<8x128xf32>
    %cst_40 = arith.constant 1.000000e+00 : f32
    %188 = vector.broadcast %cst_40 : f32 to vector<8x128xf32>
    %189 = arith.addf %188, %187 : vector<8x128xf32>
    %190 = arith.divf %188, %189 : vector<8x128xf32>
    %191 = vector.extract_strided_slice %184 {offsets = [0, 128], sizes = [8, 128], strides = [1, 1]} : vector<8x512xf32> to vector<8x128xf32>
    %192 = arith.negf %191 : vector<8x128xf32>
    %193 = math.exp %192 : vector<8x128xf32>
    %cst_41 = arith.constant 1.000000e+00 : f32
    %194 = vector.broadcast %cst_41 : f32 to vector<8x128xf32>
    %195 = arith.addf %194, %193 : vector<8x128xf32>
    %196 = arith.divf %194, %195 : vector<8x128xf32>
    %197 = vector.extract_strided_slice %184 {offsets = [0, 256], sizes = [8, 128], strides = [1, 1]} : vector<8x512xf32> to vector<8x128xf32>
    %198 = math.tanh %197 : vector<8x128xf32>
    %199 = vector.extract_strided_slice %184 {offsets = [0, 384], sizes = [8, 128], strides = [1, 1]} : vector<8x512xf32> to vector<8x128xf32>
    %200 = arith.negf %199 : vector<8x128xf32>
    %201 = math.exp %200 : vector<8x128xf32>
    %cst_42 = arith.constant 1.000000e+00 : f32
    %202 = vector.broadcast %cst_42 : f32 to vector<8x128xf32>
    %203 = arith.addf %202, %201 : vector<8x128xf32>
    %204 = arith.divf %202, %203 : vector<8x128xf32>
    %205 = arith.mulf %196, %154 : vector<8x128xf32>
    %206 = arith.mulf %190, %198 : vector<8x128xf32>
    %207 = arith.addf %205, %206 : vector<8x128xf32>
    %208 = math.tanh %207 : vector<8x128xf32>
    %209 = arith.mulf %204, %208 : vector<8x128xf32>
    %210 = vector.shape_cast %127 : vector<8x6xf32> to vector<8x6x1xf32>
    %cst_43 = arith.constant 0.000000e+00 : f32
    %211 = vector.broadcast %cst_43 : f32 to vector<8x6x1xf32>
    %212 = arith.cmpf ogt, %210, %211 : vector<8x6x1xf32>
    %213 = vector.shape_cast %209 : vector<8x128xf32> to vector<8x1x128xf32>
    %214 = vector.shape_cast %212 : vector<8x6x1xi1> to vector<8x6x1xi1>
    %215 = vector.broadcast %214 : vector<8x6x1xi1> to vector<8x6x128xi1>
    %216 = vector.shape_cast %213 : vector<8x1x128xf32> to vector<8x1x128xf32>
    %217 = vector.broadcast %216 : vector<8x1x128xf32> to vector<8x6x128xf32>
    %218 = arith.select %215, %217, %112 : vector<8x6x128xi1>, vector<8x6x128xf32>
    %219 = vector.shape_cast %207 : vector<8x128xf32> to vector<8x1x128xf32>
    %220 = vector.shape_cast %212 : vector<8x6x1xi1> to vector<8x6x1xi1>
    %221 = vector.broadcast %220 : vector<8x6x1xi1> to vector<8x6x128xi1>
    %222 = vector.shape_cast %219 : vector<8x1x128xf32> to vector<8x1x128xf32>
    %223 = vector.broadcast %222 : vector<8x1x128xf32> to vector<8x6x128xf32>
    %224 = arith.select %221, %223, %118 : vector<8x6x128xi1>, vector<8x6x128xf32>
    %225 = arith.maximumf %119, %127 : vector<8x6xf32>
    %226 = arith.index_cast %c1_i32 : i32 to index
    %c0_44 = arith.constant 0 : index
    %c0_45 = arith.constant 0 : index
    %227 = vector.load %arg7[%226, %c0_44, %c0_45] : memref<8x8x128xf32, #tpu.memory_space<vmem>>, vector<1x8x128xf32>
    %228 = vector.shape_cast %227 : vector<1x8x128xf32> to vector<8x128xf32>
    %229 = vector.shape_cast %183 : vector<8x128xf32> to vector<1x8x128xf32>
    tpu.vector_store %arg7[%226, %c0_44, %c0_45], %229 {strides = array<i32>} : memref<8x8x128xf32, #tpu.memory_space<vmem>>, vector<1x8x128xf32>,
    %c2_i32 = arith.constant 2 : i32
    %230 = arith.index_cast %c2_i32 : i32 to index
    %c0_46 = arith.constant 0 : index
    %c0_47 = arith.constant 0 : index
    %231 = vector.load %arg0[%230, %c0_46, %c0_47] : memref<8x8x128xf32, #tpu.memory_space<vmem>>, vector<1x8x128xf32>
    %232 = vector.shape_cast %231 : vector<1x8x128xf32> to vector<8x128xf32>
    %233 = vector.extract_strided_slice %232 {offsets = [0, 96], sizes = [8, 6], strides = [1, 1]} : vector<8x128xf32> to vector<8x6xf32>
    %cst_48 = arith.constant dense<0.000000e+00> : vector<8xf32>
    %234 = vector.multi_reduction <add>, %233, %cst_48 [1] : vector<8x6xf32> to vector<8xf32>
    %235 = vector.shape_cast %234 : vector<8xf32> to vector<8x1xf32>
    %236 = arith.mulf %233, %225 : vector<8x6xf32>
    %cst_49 = arith.constant dense<0.000000e+00> : vector<8xf32>
    %237 = vector.multi_reduction <add>, %236, %cst_49 [1] : vector<8x6xf32> to vector<8xf32>
    %238 = vector.shape_cast %237 : vector<8xf32> to vector<8x1xf32>
    %239 = arith.mulf %235, %238 : vector<8x1xf32>
    %cst_50 = arith.constant 1.000000e+00 : f32
    %240 = vector.broadcast %cst_50 : f32 to vector<8x1xf32>
    %241 = arith.subf %240, %238 : vector<8x1xf32>
    %242 = arith.mulf %235, %241 : vector<8x1xf32>
    %243 = vector.shape_cast %233 : vector<8x6xf32> to vector<8x6x1xf32>
    %244 = vector.broadcast %243 : vector<8x6x1xf32> to vector<8x6x128xf32>
    %245 = arith.mulf %244, %218 : vector<8x6x128xf32>
    %cst_51 = arith.constant dense<0.000000e+00> : vector<8x128xf32>
    %246 = vector.multi_reduction <add>, %245, %cst_51 [1] : vector<8x6x128xf32> to vector<8x128xf32>
    %247 = vector.shape_cast %233 : vector<8x6xf32> to vector<8x6x1xf32>
    %248 = vector.broadcast %247 : vector<8x6x1xf32> to vector<8x6x128xf32>
    %249 = arith.mulf %248, %224 : vector<8x6x128xf32>
    %cst_52 = arith.constant dense<0.000000e+00> : vector<8x128xf32>
    %250 = vector.multi_reduction <add>, %249, %cst_52 [1] : vector<8x6x128xf32> to vector<8x128xf32>
    %251 = vector.broadcast %239 : vector<8x1xf32> to vector<8x128xf32>
    %252 = arith.mulf %251, %246 : vector<8x128xf32>
    %253 = vector.broadcast %242 : vector<8x1xf32> to vector<8x128xf32>
    %254 = arith.mulf %253, %6 : vector<8x128xf32>
    %255 = arith.addf %252, %254 : vector<8x128xf32>
    %256 = vector.broadcast %239 : vector<8x1xf32> to vector<8x128xf32>
    %257 = arith.mulf %256, %250 : vector<8x128xf32>
    %258 = vector.broadcast %242 : vector<8x1xf32> to vector<8x128xf32>
    %259 = arith.mulf %258, %9 : vector<8x128xf32>
    %260 = arith.addf %257, %259 : vector<8x128xf32>
    %261 = tpu.concatenate %232, %183, %255 in 1 : vector<8x128xf32>, vector<8x128xf32>, vector<8x128xf32> -> vector<8x384xf32>
    %262 = arith.truncf %261 : vector<8x384xf32> to vector<8x384xbf16>
    %cst_53 = arith.constant dense<0.000000e+00> : vector<8x1024xf32>
    %263 = tpu.matmul %262, %0, %cst_53 {dimension_numbers = #tpu.dot_dimension_numbers<[1], [0], [0], [1], [0, 0, 1, 1], [], []>} : vector<8x384xbf16>, vector<384x1024xbf16>, vector<8x1024xf32> -> vector<8x1024xf32>
    %264 = arith.addf %263, %3 : vector<8x1024xf32>
    %265 = vector.extract_strided_slice %264 {offsets = [0, 0], sizes = [8, 128], strides = [1, 1]} : vector<8x1024xf32> to vector<8x128xf32>
    %266 = arith.negf %265 : vector<8x128xf32>
    %267 = math.exp %266 : vector<8x128xf32>
    %cst_54 = arith.constant 1.000000e+00 : f32
    %268 = vector.broadcast %cst_54 : f32 to vector<8x128xf32>
    %269 = arith.addf %268, %267 : vector<8x128xf32>
    %270 = arith.divf %268, %269 : vector<8x128xf32>
    %271 = vector.extract_strided_slice %264 {offsets = [0, 128], sizes = [8, 128], strides = [1, 1]} : vector<8x1024xf32> to vector<8x128xf32>
    %272 = arith.negf %271 : vector<8x128xf32>
    %273 = math.exp %272 : vector<8x128xf32>
    %cst_55 = arith.constant 1.000000e+00 : f32
    %274 = vector.broadcast %cst_55 : f32 to vector<8x128xf32>
    %275 = arith.addf %274, %273 : vector<8x128xf32>
    %276 = arith.divf %274, %275 : vector<8x128xf32>
    %277 = vector.extract_strided_slice %264 {offsets = [0, 256], sizes = [8, 128], strides = [1, 1]} : vector<8x1024xf32> to vector<8x128xf32>
    %278 = math.tanh %277 : vector<8x128xf32>
    %279 = vector.extract_strided_slice %264 {offsets = [0, 384], sizes = [8, 128], strides = [1, 1]} : vector<8x1024xf32> to vector<8x128xf32>
    %280 = arith.negf %279 : vector<8x128xf32>
    %281 = math.exp %280 : vector<8x128xf32>
    %cst_56 = arith.constant 1.000000e+00 : f32
    %282 = vector.broadcast %cst_56 : f32 to vector<8x128xf32>
    %283 = arith.addf %282, %281 : vector<8x128xf32>
    %284 = arith.divf %282, %283 : vector<8x128xf32>
    %285 = arith.mulf %276, %181 : vector<8x128xf32>
    %286 = arith.mulf %270, %278 : vector<8x128xf32>
    %287 = arith.addf %285, %286 : vector<8x128xf32>
    %288 = math.tanh %287 : vector<8x128xf32>
    %289 = arith.mulf %284, %288 : vector<8x128xf32>
    %290 = vector.extract_strided_slice %264 {offsets = [0, 512], sizes = [8, 512], strides = [1, 1]} : vector<8x1024xf32> to vector<8x512xf32>
    %291 = vector.extract_strided_slice %290 {offsets = [0, 0], sizes = [8, 128], strides = [1, 1]} : vector<8x512xf32> to vector<8x128xf32>
    %292 = arith.negf %291 : vector<8x128xf32>
    %293 = math.exp %292 : vector<8x128xf32>
    %cst_57 = arith.constant 1.000000e+00 : f32
    %294 = vector.broadcast %cst_57 : f32 to vector<8x128xf32>
    %295 = arith.addf %294, %293 : vector<8x128xf32>
    %296 = arith.divf %294, %295 : vector<8x128xf32>
    %297 = vector.extract_strided_slice %290 {offsets = [0, 128], sizes = [8, 128], strides = [1, 1]} : vector<8x512xf32> to vector<8x128xf32>
    %298 = arith.negf %297 : vector<8x128xf32>
    %299 = math.exp %298 : vector<8x128xf32>
    %cst_58 = arith.constant 1.000000e+00 : f32
    %300 = vector.broadcast %cst_58 : f32 to vector<8x128xf32>
    %301 = arith.addf %300, %299 : vector<8x128xf32>
    %302 = arith.divf %300, %301 : vector<8x128xf32>
    %303 = vector.extract_strided_slice %290 {offsets = [0, 256], sizes = [8, 128], strides = [1, 1]} : vector<8x512xf32> to vector<8x128xf32>
    %304 = math.tanh %303 : vector<8x128xf32>
    %305 = vector.extract_strided_slice %290 {offsets = [0, 384], sizes = [8, 128], strides = [1, 1]} : vector<8x512xf32> to vector<8x128xf32>
    %306 = arith.negf %305 : vector<8x128xf32>
    %307 = math.exp %306 : vector<8x128xf32>
    %cst_59 = arith.constant 1.000000e+00 : f32
    %308 = vector.broadcast %cst_59 : f32 to vector<8x128xf32>
    %309 = arith.addf %308, %307 : vector<8x128xf32>
    %310 = arith.divf %308, %309 : vector<8x128xf32>
    %311 = arith.mulf %302, %260 : vector<8x128xf32>
    %312 = arith.mulf %296, %304 : vector<8x128xf32>
    %313 = arith.addf %311, %312 : vector<8x128xf32>
    %314 = math.tanh %313 : vector<8x128xf32>
    %315 = arith.mulf %310, %314 : vector<8x128xf32>
    %316 = vector.shape_cast %233 : vector<8x6xf32> to vector<8x6x1xf32>
    %cst_60 = arith.constant 0.000000e+00 : f32
    %317 = vector.broadcast %cst_60 : f32 to vector<8x6x1xf32>
    %318 = arith.cmpf ogt, %316, %317 : vector<8x6x1xf32>
    %319 = vector.shape_cast %315 : vector<8x128xf32> to vector<8x1x128xf32>
    %320 = vector.shape_cast %318 : vector<8x6x1xi1> to vector<8x6x1xi1>
    %321 = vector.broadcast %320 : vector<8x6x1xi1> to vector<8x6x128xi1>
    %322 = vector.shape_cast %319 : vector<8x1x128xf32> to vector<8x1x128xf32>
    %323 = vector.broadcast %322 : vector<8x1x128xf32> to vector<8x6x128xf32>
    %324 = arith.select %321, %323, %218 : vector<8x6x128xi1>, vector<8x6x128xf32>
    %325 = vector.shape_cast %313 : vector<8x128xf32> to vector<8x1x128xf32>
    %326 = vector.shape_cast %318 : vector<8x6x1xi1> to vector<8x6x1xi1>
    %327 = vector.broadcast %326 : vector<8x6x1xi1> to vector<8x6x128xi1>
    %328 = vector.shape_cast %325 : vector<8x1x128xf32> to vector<8x1x128xf32>
    %329 = vector.broadcast %328 : vector<8x1x128xf32> to vector<8x6x128xf32>
    %330 = arith.select %327, %329, %224 : vector<8x6x128xi1>, vector<8x6x128xf32>
    %331 = arith.maximumf %225, %233 : vector<8x6xf32>
    %332 = arith.index_cast %c2_i32 : i32 to index
    %c0_61 = arith.constant 0 : index
    %c0_62 = arith.constant 0 : index
    %333 = vector.load %arg7[%332, %c0_61, %c0_62] : memref<8x8x128xf32, #tpu.memory_space<vmem>>, vector<1x8x128xf32>
    %334 = vector.shape_cast %333 : vector<1x8x128xf32> to vector<8x128xf32>
    %335 = vector.shape_cast %289 : vector<8x128xf32> to vector<1x8x128xf32>
    tpu.vector_store %arg7[%332, %c0_61, %c0_62], %335 {strides = array<i32>} : memref<8x8x128xf32, #tpu.memory_space<vmem>>, vector<1x8x128xf32>,
    %c3_i32 = arith.constant 3 : i32
    %336 = arith.index_cast %c3_i32 : i32 to index
    %c0_63 = arith.constant 0 : index
    %c0_64 = arith.constant 0 : index
    %337 = vector.load %arg0[%336, %c0_63, %c0_64] : memref<8x8x128xf32, #tpu.memory_space<vmem>>, vector<1x8x128xf32>
    %338 = vector.shape_cast %337 : vector<1x8x128xf32> to vector<8x128xf32>
    %339 = vector.extract_strided_slice %338 {offsets = [0, 96], sizes = [8, 6], strides = [1, 1]} : vector<8x128xf32> to vector<8x6xf32>
    %cst_65 = arith.constant dense<0.000000e+00> : vector<8xf32>
    %340 = vector.multi_reduction <add>, %339, %cst_65 [1] : vector<8x6xf32> to vector<8xf32>
    %341 = vector.shape_cast %340 : vector<8xf32> to vector<8x1xf32>
    %342 = arith.mulf %339, %331 : vector<8x6xf32>
    %cst_66 = arith.constant dense<0.000000e+00> : vector<8xf32>
    %343 = vector.multi_reduction <add>, %342, %cst_66 [1] : vector<8x6xf32> to vector<8xf32>
    %344 = vector.shape_cast %343 : vector<8xf32> to vector<8x1xf32>
    %345 = arith.mulf %341, %344 : vector<8x1xf32>
    %cst_67 = arith.constant 1.000000e+00 : f32
    %346 = vector.broadcast %cst_67 : f32 to vector<8x1xf32>
    %347 = arith.subf %346, %344 : vector<8x1xf32>
    %348 = arith.mulf %341, %347 : vector<8x1xf32>
    %349 = vector.shape_cast %339 : vector<8x6xf32> to vector<8x6x1xf32>
    %350 = vector.broadcast %349 : vector<8x6x1xf32> to vector<8x6x128xf32>
    %351 = arith.mulf %350, %324 : vector<8x6x128xf32>
    %cst_68 = arith.constant dense<0.000000e+00> : vector<8x128xf32>
    %352 = vector.multi_reduction <add>, %351, %cst_68 [1] : vector<8x6x128xf32> to vector<8x128xf32>
    %353 = vector.shape_cast %339 : vector<8x6xf32> to vector<8x6x1xf32>
    %354 = vector.broadcast %353 : vector<8x6x1xf32> to vector<8x6x128xf32>
    %355 = arith.mulf %354, %330 : vector<8x6x128xf32>
    %cst_69 = arith.constant dense<0.000000e+00> : vector<8x128xf32>
    %356 = vector.multi_reduction <add>, %355, %cst_69 [1] : vector<8x6x128xf32> to vector<8x128xf32>
    %357 = vector.broadcast %345 : vector<8x1xf32> to vector<8x128xf32>
    %358 = arith.mulf %357, %352 : vector<8x128xf32>
    %359 = vector.broadcast %348 : vector<8x1xf32> to vector<8x128xf32>
    %360 = arith.mulf %359, %6 : vector<8x128xf32>
    %361 = arith.addf %358, %360 : vector<8x128xf32>
    %362 = vector.broadcast %345 : vector<8x1xf32> to vector<8x128xf32>
    %363 = arith.mulf %362, %356 : vector<8x128xf32>
    %364 = vector.broadcast %348 : vector<8x1xf32> to vector<8x128xf32>
    %365 = arith.mulf %364, %9 : vector<8x128xf32>
    %366 = arith.addf %363, %365 : vector<8x128xf32>
    %367 = tpu.concatenate %338, %289, %361 in 1 : vector<8x128xf32>, vector<8x128xf32>, vector<8x128xf32> -> vector<8x384xf32>
    %368 = arith.truncf %367 : vector<8x384xf32> to vector<8x384xbf16>
    %cst_70 = arith.constant dense<0.000000e+00> : vector<8x1024xf32>
    %369 = tpu.matmul %368, %0, %cst_70 {dimension_numbers = #tpu.dot_dimension_numbers<[1], [0], [0], [1], [0, 0, 1, 1], [], []>} : vector<8x384xbf16>, vector<384x1024xbf16>, vector<8x1024xf32> -> vector<8x1024xf32>
    %370 = arith.addf %369, %3 : vector<8x1024xf32>
    %371 = vector.extract_strided_slice %370 {offsets = [0, 0], sizes = [8, 128], strides = [1, 1]} : vector<8x1024xf32> to vector<8x128xf32>
    %372 = arith.negf %371 : vector<8x128xf32>
    %373 = math.exp %372 : vector<8x128xf32>
    %cst_71 = arith.constant 1.000000e+00 : f32
    %374 = vector.broadcast %cst_71 : f32 to vector<8x128xf32>
    %375 = arith.addf %374, %373 : vector<8x128xf32>
    %376 = arith.divf %374, %375 : vector<8x128xf32>
    %377 = vector.extract_strided_slice %370 {offsets = [0, 128], sizes = [8, 128], strides = [1, 1]} : vector<8x1024xf32> to vector<8x128xf32>
    %378 = arith.negf %377 : vector<8x128xf32>
    %379 = math.exp %378 : vector<8x128xf32>
    %cst_72 = arith.constant 1.000000e+00 : f32
    %380 = vector.broadcast %cst_72 : f32 to vector<8x128xf32>
    %381 = arith.addf %380, %379 : vector<8x128xf32>
    %382 = arith.divf %380, %381 : vector<8x128xf32>
    %383 = vector.extract_strided_slice %370 {offsets = [0, 256], sizes = [8, 128], strides = [1, 1]} : vector<8x1024xf32> to vector<8x128xf32>
    %384 = math.tanh %383 : vector<8x128xf32>
    %385 = vector.extract_strided_slice %370 {offsets = [0, 384], sizes = [8, 128], strides = [1, 1]} : vector<8x1024xf32> to vector<8x128xf32>
    %386 = arith.negf %385 : vector<8x128xf32>
    %387 = math.exp %386 : vector<8x128xf32>
    %cst_73 = arith.constant 1.000000e+00 : f32
    %388 = vector.broadcast %cst_73 : f32 to vector<8x128xf32>
    %389 = arith.addf %388, %387 : vector<8x128xf32>
    %390 = arith.divf %388, %389 : vector<8x128xf32>
    %391 = arith.mulf %382, %287 : vector<8x128xf32>
    %392 = arith.mulf %376, %384 : vector<8x128xf32>
    %393 = arith.addf %391, %392 : vector<8x128xf32>
    %394 = math.tanh %393 : vector<8x128xf32>
    %395 = arith.mulf %390, %394 : vector<8x128xf32>
    %396 = vector.extract_strided_slice %370 {offsets = [0, 512], sizes = [8, 512], strides = [1, 1]} : vector<8x1024xf32> to vector<8x512xf32>
    %397 = vector.extract_strided_slice %396 {offsets = [0, 0], sizes = [8, 128], strides = [1, 1]} : vector<8x512xf32> to vector<8x128xf32>
    %398 = arith.negf %397 : vector<8x128xf32>
    %399 = math.exp %398 : vector<8x128xf32>
    %cst_74 = arith.constant 1.000000e+00 : f32
    %400 = vector.broadcast %cst_74 : f32 to vector<8x128xf32>
    %401 = arith.addf %400, %399 : vector<8x128xf32>
    %402 = arith.divf %400, %401 : vector<8x128xf32>
    %403 = vector.extract_strided_slice %396 {offsets = [0, 128], sizes = [8, 128], strides = [1, 1]} : vector<8x512xf32> to vector<8x128xf32>
    %404 = arith.negf %403 : vector<8x128xf32>
    %405 = math.exp %404 : vector<8x128xf32>
    %cst_75 = arith.constant 1.000000e+00 : f32
    %406 = vector.broadcast %cst_75 : f32 to vector<8x128xf32>
    %407 = arith.addf %406, %405 : vector<8x128xf32>
    %408 = arith.divf %406, %407 : vector<8x128xf32>
    %409 = vector.extract_strided_slice %396 {offsets = [0, 256], sizes = [8, 128], strides = [1, 1]} : vector<8x512xf32> to vector<8x128xf32>
    %410 = math.tanh %409 : vector<8x128xf32>
    %411 = vector.extract_strided_slice %396 {offsets = [0, 384], sizes = [8, 128], strides = [1, 1]} : vector<8x512xf32> to vector<8x128xf32>
    %412 = arith.negf %411 : vector<8x128xf32>
    %413 = math.exp %412 : vector<8x128xf32>
    %cst_76 = arith.constant 1.000000e+00 : f32
    %414 = vector.broadcast %cst_76 : f32 to vector<8x128xf32>
    %415 = arith.addf %414, %413 : vector<8x128xf32>
    %416 = arith.divf %414, %415 : vector<8x128xf32>
    %417 = arith.mulf %408, %366 : vector<8x128xf32>
    %418 = arith.mulf %402, %410 : vector<8x128xf32>
    %419 = arith.addf %417, %418 : vector<8x128xf32>
    %420 = math.tanh %419 : vector<8x128xf32>
    %421 = arith.mulf %416, %420 : vector<8x128xf32>
    %422 = vector.shape_cast %339 : vector<8x6xf32> to vector<8x6x1xf32>
    %cst_77 = arith.constant 0.000000e+00 : f32
    %423 = vector.broadcast %cst_77 : f32 to vector<8x6x1xf32>
    %424 = arith.cmpf ogt, %422, %423 : vector<8x6x1xf32>
    %425 = vector.shape_cast %421 : vector<8x128xf32> to vector<8x1x128xf32>
    %426 = vector.shape_cast %424 : vector<8x6x1xi1> to vector<8x6x1xi1>
    %427 = vector.broadcast %426 : vector<8x6x1xi1> to vector<8x6x128xi1>
    %428 = vector.shape_cast %425 : vector<8x1x128xf32> to vector<8x1x128xf32>
    %429 = vector.broadcast %428 : vector<8x1x128xf32> to vector<8x6x128xf32>
    %430 = arith.select %427, %429, %324 : vector<8x6x128xi1>, vector<8x6x128xf32>
    %431 = vector.shape_cast %419 : vector<8x128xf32> to vector<8x1x128xf32>
    %432 = vector.shape_cast %424 : vector<8x6x1xi1> to vector<8x6x1xi1>
    %433 = vector.broadcast %432 : vector<8x6x1xi1> to vector<8x6x128xi1>
    %434 = vector.shape_cast %431 : vector<8x1x128xf32> to vector<8x1x128xf32>
    %435 = vector.broadcast %434 : vector<8x1x128xf32> to vector<8x6x128xf32>
    %436 = arith.select %433, %435, %330 : vector<8x6x128xi1>, vector<8x6x128xf32>
    %437 = arith.maximumf %331, %339 : vector<8x6xf32>
    %438 = arith.index_cast %c3_i32 : i32 to index
    %c0_78 = arith.constant 0 : index
    %c0_79 = arith.constant 0 : index
    %439 = vector.load %arg7[%438, %c0_78, %c0_79] : memref<8x8x128xf32, #tpu.memory_space<vmem>>, vector<1x8x128xf32>
    %440 = vector.shape_cast %439 : vector<1x8x128xf32> to vector<8x128xf32>
    %441 = vector.shape_cast %395 : vector<8x128xf32> to vector<1x8x128xf32>
    tpu.vector_store %arg7[%438, %c0_78, %c0_79], %441 {strides = array<i32>} : memref<8x8x128xf32, #tpu.memory_space<vmem>>, vector<1x8x128xf32>,
    %c4_i32 = arith.constant 4 : i32
    %442 = arith.index_cast %c4_i32 : i32 to index
    %c0_80 = arith.constant 0 : index
    %c0_81 = arith.constant 0 : index
    %443 = vector.load %arg0[%442, %c0_80, %c0_81] : memref<8x8x128xf32, #tpu.memory_space<vmem>>, vector<1x8x128xf32>
    %444 = vector.shape_cast %443 : vector<1x8x128xf32> to vector<8x128xf32>
    %445 = vector.extract_strided_slice %444 {offsets = [0, 96], sizes = [8, 6], strides = [1, 1]} : vector<8x128xf32> to vector<8x6xf32>
    %cst_82 = arith.constant dense<0.000000e+00> : vector<8xf32>
    %446 = vector.multi_reduction <add>, %445, %cst_82 [1] : vector<8x6xf32> to vector<8xf32>
    %447 = vector.shape_cast %446 : vector<8xf32> to vector<8x1xf32>
    %448 = arith.mulf %445, %437 : vector<8x6xf32>
    %cst_83 = arith.constant dense<0.000000e+00> : vector<8xf32>
    %449 = vector.multi_reduction <add>, %448, %cst_83 [1] : vector<8x6xf32> to vector<8xf32>
    %450 = vector.shape_cast %449 : vector<8xf32> to vector<8x1xf32>
    %451 = arith.mulf %447, %450 : vector<8x1xf32>
    %cst_84 = arith.constant 1.000000e+00 : f32
    %452 = vector.broadcast %cst_84 : f32 to vector<8x1xf32>
    %453 = arith.subf %452, %450 : vector<8x1xf32>
    %454 = arith.mulf %447, %453 : vector<8x1xf32>
    %455 = vector.shape_cast %445 : vector<8x6xf32> to vector<8x6x1xf32>
    %456 = vector.broadcast %455 : vector<8x6x1xf32> to vector<8x6x128xf32>
    %457 = arith.mulf %456, %430 : vector<8x6x128xf32>
    %cst_85 = arith.constant dense<0.000000e+00> : vector<8x128xf32>
    %458 = vector.multi_reduction <add>, %457, %cst_85 [1] : vector<8x6x128xf32> to vector<8x128xf32>
    %459 = vector.shape_cast %445 : vector<8x6xf32> to vector<8x6x1xf32>
    %460 = vector.broadcast %459 : vector<8x6x1xf32> to vector<8x6x128xf32>
    %461 = arith.mulf %460, %436 : vector<8x6x128xf32>
    %cst_86 = arith.constant dense<0.000000e+00> : vector<8x128xf32>
    %462 = vector.multi_reduction <add>, %461, %cst_86 [1] : vector<8x6x128xf32> to vector<8x128xf32>
    %463 = vector.broadcast %451 : vector<8x1xf32> to vector<8x128xf32>
    %464 = arith.mulf %463, %458 : vector<8x128xf32>
    %465 = vector.broadcast %454 : vector<8x1xf32> to vector<8x128xf32>
    %466 = arith.mulf %465, %6 : vector<8x128xf32>
    %467 = arith.addf %464, %466 : vector<8x128xf32>
    %468 = vector.broadcast %451 : vector<8x1xf32> to vector<8x128xf32>
    %469 = arith.mulf %468, %462 : vector<8x128xf32>
    %470 = vector.broadcast %454 : vector<8x1xf32> to vector<8x128xf32>
    %471 = arith.mulf %470, %9 : vector<8x128xf32>
    %472 = arith.addf %469, %471 : vector<8x128xf32>
    %473 = tpu.concatenate %444, %395, %467 in 1 : vector<8x128xf32>, vector<8x128xf32>, vector<8x128xf32> -> vector<8x384xf32>
    %474 = arith.truncf %473 : vector<8x384xf32> to vector<8x384xbf16>
    %cst_87 = arith.constant dense<0.000000e+00> : vector<8x1024xf32>
    %475 = tpu.matmul %474, %0, %cst_87 {dimension_numbers = #tpu.dot_dimension_numbers<[1], [0], [0], [1], [0, 0, 1, 1], [], []>} : vector<8x384xbf16>, vector<384x1024xbf16>, vector<8x1024xf32> -> vector<8x1024xf32>
    %476 = arith.addf %475, %3 : vector<8x1024xf32>
    %477 = vector.extract_strided_slice %476 {offsets = [0, 0], sizes = [8, 128], strides = [1, 1]} : vector<8x1024xf32> to vector<8x128xf32>
    %478 = arith.negf %477 : vector<8x128xf32>
    %479 = math.exp %478 : vector<8x128xf32>
    %cst_88 = arith.constant 1.000000e+00 : f32
    %480 = vector.broadcast %cst_88 : f32 to vector<8x128xf32>
    %481 = arith.addf %480, %479 : vector<8x128xf32>
    %482 = arith.divf %480, %481 : vector<8x128xf32>
    %483 = vector.extract_strided_slice %476 {offsets = [0, 128], sizes = [8, 128], strides = [1, 1]} : vector<8x1024xf32> to vector<8x128xf32>
    %484 = arith.negf %483 : vector<8x128xf32>
    %485 = math.exp %484 : vector<8x128xf32>
    %cst_89 = arith.constant 1.000000e+00 : f32
    %486 = vector.broadcast %cst_89 : f32 to vector<8x128xf32>
    %487 = arith.addf %486, %485 : vector<8x128xf32>
    %488 = arith.divf %486, %487 : vector<8x128xf32>
    %489 = vector.extract_strided_slice %476 {offsets = [0, 256], sizes = [8, 128], strides = [1, 1]} : vector<8x1024xf32> to vector<8x128xf32>
    %490 = math.tanh %489 : vector<8x128xf32>
    %491 = vector.extract_strided_slice %476 {offsets = [0, 384], sizes = [8, 128], strides = [1, 1]} : vector<8x1024xf32> to vector<8x128xf32>
    %492 = arith.negf %491 : vector<8x128xf32>
    %493 = math.exp %492 : vector<8x128xf32>
    %cst_90 = arith.constant 1.000000e+00 : f32
    %494 = vector.broadcast %cst_90 : f32 to vector<8x128xf32>
    %495 = arith.addf %494, %493 : vector<8x128xf32>
    %496 = arith.divf %494, %495 : vector<8x128xf32>
    %497 = arith.mulf %488, %393 : vector<8x128xf32>
    %498 = arith.mulf %482, %490 : vector<8x128xf32>
    %499 = arith.addf %497, %498 : vector<8x128xf32>
    %500 = math.tanh %499 : vector<8x128xf32>
    %501 = arith.mulf %496, %500 : vector<8x128xf32>
    %502 = vector.extract_strided_slice %476 {offsets = [0, 512], sizes = [8, 512], strides = [1, 1]} : vector<8x1024xf32> to vector<8x512xf32>
    %503 = vector.extract_strided_slice %502 {offsets = [0, 0], sizes = [8, 128], strides = [1, 1]} : vector<8x512xf32> to vector<8x128xf32>
    %504 = arith.negf %503 : vector<8x128xf32>
    %505 = math.exp %504 : vector<8x128xf32>
    %cst_91 = arith.constant 1.000000e+00 : f32
    %506 = vector.broadcast %cst_91 : f32 to vector<8x128xf32>
    %507 = arith.addf %506, %505 : vector<8x128xf32>
    %508 = arith.divf %506, %507 : vector<8x128xf32>
    %509 = vector.extract_strided_slice %502 {offsets = [0, 128], sizes = [8, 128], strides = [1, 1]} : vector<8x512xf32> to vector<8x128xf32>
    %510 = arith.negf %509 : vector<8x128xf32>
    %511 = math.exp %510 : vector<8x128xf32>
    %cst_92 = arith.constant 1.000000e+00 : f32
    %512 = vector.broadcast %cst_92 : f32 to vector<8x128xf32>
    %513 = arith.addf %512, %511 : vector<8x128xf32>
    %514 = arith.divf %512, %513 : vector<8x128xf32>
    %515 = vector.extract_strided_slice %502 {offsets = [0, 256], sizes = [8, 128], strides = [1, 1]} : vector<8x512xf32> to vector<8x128xf32>
    %516 = math.tanh %515 : vector<8x128xf32>
    %517 = vector.extract_strided_slice %502 {offsets = [0, 384], sizes = [8, 128], strides = [1, 1]} : vector<8x512xf32> to vector<8x128xf32>
    %518 = arith.negf %517 : vector<8x128xf32>
    %519 = math.exp %518 : vector<8x128xf32>
    %cst_93 = arith.constant 1.000000e+00 : f32
    %520 = vector.broadcast %cst_93 : f32 to vector<8x128xf32>
    %521 = arith.addf %520, %519 : vector<8x128xf32>
    %522 = arith.divf %520, %521 : vector<8x128xf32>
    %523 = arith.mulf %514, %472 : vector<8x128xf32>
    %524 = arith.mulf %508, %516 : vector<8x128xf32>
    %525 = arith.addf %523, %524 : vector<8x128xf32>
    %526 = math.tanh %525 : vector<8x128xf32>
    %527 = arith.mulf %522, %526 : vector<8x128xf32>
    %528 = vector.shape_cast %445 : vector<8x6xf32> to vector<8x6x1xf32>
    %cst_94 = arith.constant 0.000000e+00 : f32
    %529 = vector.broadcast %cst_94 : f32 to vector<8x6x1xf32>
    %530 = arith.cmpf ogt, %528, %529 : vector<8x6x1xf32>
    %531 = vector.shape_cast %527 : vector<8x128xf32> to vector<8x1x128xf32>
    %532 = vector.shape_cast %530 : vector<8x6x1xi1> to vector<8x6x1xi1>
    %533 = vector.broadcast %532 : vector<8x6x1xi1> to vector<8x6x128xi1>
    %534 = vector.shape_cast %531 : vector<8x1x128xf32> to vector<8x1x128xf32>
    %535 = vector.broadcast %534 : vector<8x1x128xf32> to vector<8x6x128xf32>
    %536 = arith.select %533, %535, %430 : vector<8x6x128xi1>, vector<8x6x128xf32>
    %537 = vector.shape_cast %525 : vector<8x128xf32> to vector<8x1x128xf32>
    %538 = vector.shape_cast %530 : vector<8x6x1xi1> to vector<8x6x1xi1>
    %539 = vector.broadcast %538 : vector<8x6x1xi1> to vector<8x6x128xi1>
    %540 = vector.shape_cast %537 : vector<8x1x128xf32> to vector<8x1x128xf32>
    %541 = vector.broadcast %540 : vector<8x1x128xf32> to vector<8x6x128xf32>
    %542 = arith.select %539, %541, %436 : vector<8x6x128xi1>, vector<8x6x128xf32>
    %543 = arith.maximumf %437, %445 : vector<8x6xf32>
    %544 = arith.index_cast %c4_i32 : i32 to index
    %c0_95 = arith.constant 0 : index
    %c0_96 = arith.constant 0 : index
    %545 = vector.load %arg7[%544, %c0_95, %c0_96] : memref<8x8x128xf32, #tpu.memory_space<vmem>>, vector<1x8x128xf32>
    %546 = vector.shape_cast %545 : vector<1x8x128xf32> to vector<8x128xf32>
    %547 = vector.shape_cast %501 : vector<8x128xf32> to vector<1x8x128xf32>
    tpu.vector_store %arg7[%544, %c0_95, %c0_96], %547 {strides = array<i32>} : memref<8x8x128xf32, #tpu.memory_space<vmem>>, vector<1x8x128xf32>,
    %c5_i32 = arith.constant 5 : i32
    %548 = arith.index_cast %c5_i32 : i32 to index
    %c0_97 = arith.constant 0 : index
    %c0_98 = arith.constant 0 : index
    %549 = vector.load %arg0[%548, %c0_97, %c0_98] : memref<8x8x128xf32, #tpu.memory_space<vmem>>, vector<1x8x128xf32>
    %550 = vector.shape_cast %549 : vector<1x8x128xf32> to vector<8x128xf32>
    %551 = vector.extract_strided_slice %550 {offsets = [0, 96], sizes = [8, 6], strides = [1, 1]} : vector<8x128xf32> to vector<8x6xf32>
    %cst_99 = arith.constant dense<0.000000e+00> : vector<8xf32>
    %552 = vector.multi_reduction <add>, %551, %cst_99 [1] : vector<8x6xf32> to vector<8xf32>
    %553 = vector.shape_cast %552 : vector<8xf32> to vector<8x1xf32>
    %554 = arith.mulf %551, %543 : vector<8x6xf32>
    %cst_100 = arith.constant dense<0.000000e+00> : vector<8xf32>
    %555 = vector.multi_reduction <add>, %554, %cst_100 [1] : vector<8x6xf32> to vector<8xf32>
    %556 = vector.shape_cast %555 : vector<8xf32> to vector<8x1xf32>
    %557 = arith.mulf %553, %556 : vector<8x1xf32>
    %cst_101 = arith.constant 1.000000e+00 : f32
    %558 = vector.broadcast %cst_101 : f32 to vector<8x1xf32>
    %559 = arith.subf %558, %556 : vector<8x1xf32>
    %560 = arith.mulf %553, %559 : vector<8x1xf32>
    %561 = vector.shape_cast %551 : vector<8x6xf32> to vector<8x6x1xf32>
    %562 = vector.broadcast %561 : vector<8x6x1xf32> to vector<8x6x128xf32>
    %563 = arith.mulf %562, %536 : vector<8x6x128xf32>
    %cst_102 = arith.constant dense<0.000000e+00> : vector<8x128xf32>
    %564 = vector.multi_reduction <add>, %563, %cst_102 [1] : vector<8x6x128xf32> to vector<8x128xf32>
    %565 = vector.shape_cast %551 : vector<8x6xf32> to vector<8x6x1xf32>
    %566 = vector.broadcast %565 : vector<8x6x1xf32> to vector<8x6x128xf32>
    %567 = arith.mulf %566, %542 : vector<8x6x128xf32>
    %cst_103 = arith.constant dense<0.000000e+00> : vector<8x128xf32>
    %568 = vector.multi_reduction <add>, %567, %cst_103 [1] : vector<8x6x128xf32> to vector<8x128xf32>
    %569 = vector.broadcast %557 : vector<8x1xf32> to vector<8x128xf32>
    %570 = arith.mulf %569, %564 : vector<8x128xf32>
    %571 = vector.broadcast %560 : vector<8x1xf32> to vector<8x128xf32>
    %572 = arith.mulf %571, %6 : vector<8x128xf32>
    %573 = arith.addf %570, %572 : vector<8x128xf32>
    %574 = vector.broadcast %557 : vector<8x1xf32> to vector<8x128xf32>
    %575 = arith.mulf %574, %568 : vector<8x128xf32>
    %576 = vector.broadcast %560 : vector<8x1xf32> to vector<8x128xf32>
    %577 = arith.mulf %576, %9 : vector<8x128xf32>
    %578 = arith.addf %575, %577 : vector<8x128xf32>
    %579 = tpu.concatenate %550, %501, %573 in 1 : vector<8x128xf32>, vector<8x128xf32>, vector<8x128xf32> -> vector<8x384xf32>
    %580 = arith.truncf %579 : vector<8x384xf32> to vector<8x384xbf16>
    %cst_104 = arith.constant dense<0.000000e+00> : vector<8x1024xf32>
    %581 = tpu.matmul %580, %0, %cst_104 {dimension_numbers = #tpu.dot_dimension_numbers<[1], [0], [0], [1], [0, 0, 1, 1], [], []>} : vector<8x384xbf16>, vector<384x1024xbf16>, vector<8x1024xf32> -> vector<8x1024xf32>
    %582 = arith.addf %581, %3 : vector<8x1024xf32>
    %583 = vector.extract_strided_slice %582 {offsets = [0, 0], sizes = [8, 128], strides = [1, 1]} : vector<8x1024xf32> to vector<8x128xf32>
    %584 = arith.negf %583 : vector<8x128xf32>
    %585 = math.exp %584 : vector<8x128xf32>
    %cst_105 = arith.constant 1.000000e+00 : f32
    %586 = vector.broadcast %cst_105 : f32 to vector<8x128xf32>
    %587 = arith.addf %586, %585 : vector<8x128xf32>
    %588 = arith.divf %586, %587 : vector<8x128xf32>
    %589 = vector.extract_strided_slice %582 {offsets = [0, 128], sizes = [8, 128], strides = [1, 1]} : vector<8x1024xf32> to vector<8x128xf32>
    %590 = arith.negf %589 : vector<8x128xf32>
    %591 = math.exp %590 : vector<8x128xf32>
    %cst_106 = arith.constant 1.000000e+00 : f32
    %592 = vector.broadcast %cst_106 : f32 to vector<8x128xf32>
    %593 = arith.addf %592, %591 : vector<8x128xf32>
    %594 = arith.divf %592, %593 : vector<8x128xf32>
    %595 = vector.extract_strided_slice %582 {offsets = [0, 256], sizes = [8, 128], strides = [1, 1]} : vector<8x1024xf32> to vector<8x128xf32>
    %596 = math.tanh %595 : vector<8x128xf32>
    %597 = vector.extract_strided_slice %582 {offsets = [0, 384], sizes = [8, 128], strides = [1, 1]} : vector<8x1024xf32> to vector<8x128xf32>
    %598 = arith.negf %597 : vector<8x128xf32>
    %599 = math.exp %598 : vector<8x128xf32>
    %cst_107 = arith.constant 1.000000e+00 : f32
    %600 = vector.broadcast %cst_107 : f32 to vector<8x128xf32>
    %601 = arith.addf %600, %599 : vector<8x128xf32>
    %602 = arith.divf %600, %601 : vector<8x128xf32>
    %603 = arith.mulf %594, %499 : vector<8x128xf32>
    %604 = arith.mulf %588, %596 : vector<8x128xf32>
    %605 = arith.addf %603, %604 : vector<8x128xf32>
    %606 = math.tanh %605 : vector<8x128xf32>
    %607 = arith.mulf %602, %606 : vector<8x128xf32>
    %608 = vector.extract_strided_slice %582 {offsets = [0, 512], sizes = [8, 512], strides = [1, 1]} : vector<8x1024xf32> to vector<8x512xf32>
    %609 = vector.extract_strided_slice %608 {offsets = [0, 0], sizes = [8, 128], strides = [1, 1]} : vector<8x512xf32> to vector<8x128xf32>
    %610 = arith.negf %609 : vector<8x128xf32>
    %611 = math.exp %610 : vector<8x128xf32>
    %cst_108 = arith.constant 1.000000e+00 : f32
    %612 = vector.broadcast %cst_108 : f32 to vector<8x128xf32>
    %613 = arith.addf %612, %611 : vector<8x128xf32>
    %614 = arith.divf %612, %613 : vector<8x128xf32>
    %615 = vector.extract_strided_slice %608 {offsets = [0, 128], sizes = [8, 128], strides = [1, 1]} : vector<8x512xf32> to vector<8x128xf32>
    %616 = arith.negf %615 : vector<8x128xf32>
    %617 = math.exp %616 : vector<8x128xf32>
    %cst_109 = arith.constant 1.000000e+00 : f32
    %618 = vector.broadcast %cst_109 : f32 to vector<8x128xf32>
    %619 = arith.addf %618, %617 : vector<8x128xf32>
    %620 = arith.divf %618, %619 : vector<8x128xf32>
    %621 = vector.extract_strided_slice %608 {offsets = [0, 256], sizes = [8, 128], strides = [1, 1]} : vector<8x512xf32> to vector<8x128xf32>
    %622 = math.tanh %621 : vector<8x128xf32>
    %623 = vector.extract_strided_slice %608 {offsets = [0, 384], sizes = [8, 128], strides = [1, 1]} : vector<8x512xf32> to vector<8x128xf32>
    %624 = arith.negf %623 : vector<8x128xf32>
    %625 = math.exp %624 : vector<8x128xf32>
    %cst_110 = arith.constant 1.000000e+00 : f32
    %626 = vector.broadcast %cst_110 : f32 to vector<8x128xf32>
    %627 = arith.addf %626, %625 : vector<8x128xf32>
    %628 = arith.divf %626, %627 : vector<8x128xf32>
    %629 = arith.mulf %620, %578 : vector<8x128xf32>
    %630 = arith.mulf %614, %622 : vector<8x128xf32>
    %631 = arith.addf %629, %630 : vector<8x128xf32>
    %632 = math.tanh %631 : vector<8x128xf32>
    %633 = arith.mulf %628, %632 : vector<8x128xf32>
    %634 = vector.shape_cast %551 : vector<8x6xf32> to vector<8x6x1xf32>
    %cst_111 = arith.constant 0.000000e+00 : f32
    %635 = vector.broadcast %cst_111 : f32 to vector<8x6x1xf32>
    %636 = arith.cmpf ogt, %634, %635 : vector<8x6x1xf32>
    %637 = vector.shape_cast %633 : vector<8x128xf32> to vector<8x1x128xf32>
    %638 = vector.shape_cast %636 : vector<8x6x1xi1> to vector<8x6x1xi1>
    %639 = vector.broadcast %638 : vector<8x6x1xi1> to vector<8x6x128xi1>
    %640 = vector.shape_cast %637 : vector<8x1x128xf32> to vector<8x1x128xf32>
    %641 = vector.broadcast %640 : vector<8x1x128xf32> to vector<8x6x128xf32>
    %642 = arith.select %639, %641, %536 : vector<8x6x128xi1>, vector<8x6x128xf32>
    %643 = vector.shape_cast %631 : vector<8x128xf32> to vector<8x1x128xf32>
    %644 = vector.shape_cast %636 : vector<8x6x1xi1> to vector<8x6x1xi1>
    %645 = vector.broadcast %644 : vector<8x6x1xi1> to vector<8x6x128xi1>
    %646 = vector.shape_cast %643 : vector<8x1x128xf32> to vector<8x1x128xf32>
    %647 = vector.broadcast %646 : vector<8x1x128xf32> to vector<8x6x128xf32>
    %648 = arith.select %645, %647, %542 : vector<8x6x128xi1>, vector<8x6x128xf32>
    %649 = arith.maximumf %543, %551 : vector<8x6xf32>
    %650 = arith.index_cast %c5_i32 : i32 to index
    %c0_112 = arith.constant 0 : index
    %c0_113 = arith.constant 0 : index
    %651 = vector.load %arg7[%650, %c0_112, %c0_113] : memref<8x8x128xf32, #tpu.memory_space<vmem>>, vector<1x8x128xf32>
    %652 = vector.shape_cast %651 : vector<1x8x128xf32> to vector<8x128xf32>
    %653 = vector.shape_cast %607 : vector<8x128xf32> to vector<1x8x128xf32>
    tpu.vector_store %arg7[%650, %c0_112, %c0_113], %653 {strides = array<i32>} : memref<8x8x128xf32, #tpu.memory_space<vmem>>, vector<1x8x128xf32>,
    %c6_i32 = arith.constant 6 : i32
    %654 = arith.index_cast %c6_i32 : i32 to index
    %c0_114 = arith.constant 0 : index
    %c0_115 = arith.constant 0 : index
    %655 = vector.load %arg0[%654, %c0_114, %c0_115] : memref<8x8x128xf32, #tpu.memory_space<vmem>>, vector<1x8x128xf32>
    %656 = vector.shape_cast %655 : vector<1x8x128xf32> to vector<8x128xf32>
    %657 = vector.extract_strided_slice %656 {offsets = [0, 96], sizes = [8, 6], strides = [1, 1]} : vector<8x128xf32> to vector<8x6xf32>
    %cst_116 = arith.constant dense<0.000000e+00> : vector<8xf32>
    %658 = vector.multi_reduction <add>, %657, %cst_116 [1] : vector<8x6xf32> to vector<8xf32>
    %659 = vector.shape_cast %658 : vector<8xf32> to vector<8x1xf32>
    %660 = arith.mulf %657, %649 : vector<8x6xf32>
    %cst_117 = arith.constant dense<0.000000e+00> : vector<8xf32>
    %661 = vector.multi_reduction <add>, %660, %cst_117 [1] : vector<8x6xf32> to vector<8xf32>
    %662 = vector.shape_cast %661 : vector<8xf32> to vector<8x1xf32>
    %663 = arith.mulf %659, %662 : vector<8x1xf32>
    %cst_118 = arith.constant 1.000000e+00 : f32
    %664 = vector.broadcast %cst_118 : f32 to vector<8x1xf32>
    %665 = arith.subf %664, %662 : vector<8x1xf32>
    %666 = arith.mulf %659, %665 : vector<8x1xf32>
    %667 = vector.shape_cast %657 : vector<8x6xf32> to vector<8x6x1xf32>
    %668 = vector.broadcast %667 : vector<8x6x1xf32> to vector<8x6x128xf32>
    %669 = arith.mulf %668, %642 : vector<8x6x128xf32>
    %cst_119 = arith.constant dense<0.000000e+00> : vector<8x128xf32>
    %670 = vector.multi_reduction <add>, %669, %cst_119 [1] : vector<8x6x128xf32> to vector<8x128xf32>
    %671 = vector.shape_cast %657 : vector<8x6xf32> to vector<8x6x1xf32>
    %672 = vector.broadcast %671 : vector<8x6x1xf32> to vector<8x6x128xf32>
    %673 = arith.mulf %672, %648 : vector<8x6x128xf32>
    %cst_120 = arith.constant dense<0.000000e+00> : vector<8x128xf32>
    %674 = vector.multi_reduction <add>, %673, %cst_120 [1] : vector<8x6x128xf32> to vector<8x128xf32>
    %675 = vector.broadcast %663 : vector<8x1xf32> to vector<8x128xf32>
    %676 = arith.mulf %675, %670 : vector<8x128xf32>
    %677 = vector.broadcast %666 : vector<8x1xf32> to vector<8x128xf32>
    %678 = arith.mulf %677, %6 : vector<8x128xf32>
    %679 = arith.addf %676, %678 : vector<8x128xf32>
    %680 = vector.broadcast %663 : vector<8x1xf32> to vector<8x128xf32>
    %681 = arith.mulf %680, %674 : vector<8x128xf32>
    %682 = vector.broadcast %666 : vector<8x1xf32> to vector<8x128xf32>
    %683 = arith.mulf %682, %9 : vector<8x128xf32>
    %684 = arith.addf %681, %683 : vector<8x128xf32>
    %685 = tpu.concatenate %656, %607, %679 in 1 : vector<8x128xf32>, vector<8x128xf32>, vector<8x128xf32> -> vector<8x384xf32>
    %686 = arith.truncf %685 : vector<8x384xf32> to vector<8x384xbf16>
    %cst_121 = arith.constant dense<0.000000e+00> : vector<8x1024xf32>
    %687 = tpu.matmul %686, %0, %cst_121 {dimension_numbers = #tpu.dot_dimension_numbers<[1], [0], [0], [1], [0, 0, 1, 1], [], []>} : vector<8x384xbf16>, vector<384x1024xbf16>, vector<8x1024xf32> -> vector<8x1024xf32>
    %688 = arith.addf %687, %3 : vector<8x1024xf32>
    %689 = vector.extract_strided_slice %688 {offsets = [0, 0], sizes = [8, 128], strides = [1, 1]} : vector<8x1024xf32> to vector<8x128xf32>
    %690 = arith.negf %689 : vector<8x128xf32>
    %691 = math.exp %690 : vector<8x128xf32>
    %cst_122 = arith.constant 1.000000e+00 : f32
    %692 = vector.broadcast %cst_122 : f32 to vector<8x128xf32>
    %693 = arith.addf %692, %691 : vector<8x128xf32>
    %694 = arith.divf %692, %693 : vector<8x128xf32>
    %695 = vector.extract_strided_slice %688 {offsets = [0, 128], sizes = [8, 128], strides = [1, 1]} : vector<8x1024xf32> to vector<8x128xf32>
    %696 = arith.negf %695 : vector<8x128xf32>
    %697 = math.exp %696 : vector<8x128xf32>
    %cst_123 = arith.constant 1.000000e+00 : f32
    %698 = vector.broadcast %cst_123 : f32 to vector<8x128xf32>
    %699 = arith.addf %698, %697 : vector<8x128xf32>
    %700 = arith.divf %698, %699 : vector<8x128xf32>
    %701 = vector.extract_strided_slice %688 {offsets = [0, 256], sizes = [8, 128], strides = [1, 1]} : vector<8x1024xf32> to vector<8x128xf32>
    %702 = math.tanh %701 : vector<8x128xf32>
    %703 = vector.extract_strided_slice %688 {offsets = [0, 384], sizes = [8, 128], strides = [1, 1]} : vector<8x1024xf32> to vector<8x128xf32>
    %704 = arith.negf %703 : vector<8x128xf32>
    %705 = math.exp %704 : vector<8x128xf32>
    %cst_124 = arith.constant 1.000000e+00 : f32
    %706 = vector.broadcast %cst_124 : f32 to vector<8x128xf32>
    %707 = arith.addf %706, %705 : vector<8x128xf32>
    %708 = arith.divf %706, %707 : vector<8x128xf32>
    %709 = arith.mulf %700, %605 : vector<8x128xf32>
    %710 = arith.mulf %694, %702 : vector<8x128xf32>
    %711 = arith.addf %709, %710 : vector<8x128xf32>
    %712 = math.tanh %711 : vector<8x128xf32>
    %713 = arith.mulf %708, %712 : vector<8x128xf32>
    %714 = vector.extract_strided_slice %688 {offsets = [0, 512], sizes = [8, 512], strides = [1, 1]} : vector<8x1024xf32> to vector<8x512xf32>
    %715 = vector.extract_strided_slice %714 {offsets = [0, 0], sizes = [8, 128], strides = [1, 1]} : vector<8x512xf32> to vector<8x128xf32>
    %716 = arith.negf %715 : vector<8x128xf32>
    %717 = math.exp %716 : vector<8x128xf32>
    %cst_125 = arith.constant 1.000000e+00 : f32
    %718 = vector.broadcast %cst_125 : f32 to vector<8x128xf32>
    %719 = arith.addf %718, %717 : vector<8x128xf32>
    %720 = arith.divf %718, %719 : vector<8x128xf32>
    %721 = vector.extract_strided_slice %714 {offsets = [0, 128], sizes = [8, 128], strides = [1, 1]} : vector<8x512xf32> to vector<8x128xf32>
    %722 = arith.negf %721 : vector<8x128xf32>
    %723 = math.exp %722 : vector<8x128xf32>
    %cst_126 = arith.constant 1.000000e+00 : f32
    %724 = vector.broadcast %cst_126 : f32 to vector<8x128xf32>
    %725 = arith.addf %724, %723 : vector<8x128xf32>
    %726 = arith.divf %724, %725 : vector<8x128xf32>
    %727 = vector.extract_strided_slice %714 {offsets = [0, 256], sizes = [8, 128], strides = [1, 1]} : vector<8x512xf32> to vector<8x128xf32>
    %728 = math.tanh %727 : vector<8x128xf32>
    %729 = vector.extract_strided_slice %714 {offsets = [0, 384], sizes = [8, 128], strides = [1, 1]} : vector<8x512xf32> to vector<8x128xf32>
    %730 = arith.negf %729 : vector<8x128xf32>
    %731 = math.exp %730 : vector<8x128xf32>
    %cst_127 = arith.constant 1.000000e+00 : f32
    %732 = vector.broadcast %cst_127 : f32 to vector<8x128xf32>
    %733 = arith.addf %732, %731 : vector<8x128xf32>
    %734 = arith.divf %732, %733 : vector<8x128xf32>
    %735 = arith.mulf %726, %684 : vector<8x128xf32>
    %736 = arith.mulf %720, %728 : vector<8x128xf32>
    %737 = arith.addf %735, %736 : vector<8x128xf32>
    %738 = math.tanh %737 : vector<8x128xf32>
    %739 = arith.mulf %734, %738 : vector<8x128xf32>
    %740 = vector.shape_cast %657 : vector<8x6xf32> to vector<8x6x1xf32>
    %cst_128 = arith.constant 0.000000e+00 : f32
    %741 = vector.broadcast %cst_128 : f32 to vector<8x6x1xf32>
    %742 = arith.cmpf ogt, %740, %741 : vector<8x6x1xf32>
    %743 = vector.shape_cast %739 : vector<8x128xf32> to vector<8x1x128xf32>
    %744 = vector.shape_cast %742 : vector<8x6x1xi1> to vector<8x6x1xi1>
    %745 = vector.broadcast %744 : vector<8x6x1xi1> to vector<8x6x128xi1>
    %746 = vector.shape_cast %743 : vector<8x1x128xf32> to vector<8x1x128xf32>
    %747 = vector.broadcast %746 : vector<8x1x128xf32> to vector<8x6x128xf32>
    %748 = arith.select %745, %747, %642 : vector<8x6x128xi1>, vector<8x6x128xf32>
    %749 = vector.shape_cast %737 : vector<8x128xf32> to vector<8x1x128xf32>
    %750 = vector.shape_cast %742 : vector<8x6x1xi1> to vector<8x6x1xi1>
    %751 = vector.broadcast %750 : vector<8x6x1xi1> to vector<8x6x128xi1>
    %752 = vector.shape_cast %749 : vector<8x1x128xf32> to vector<8x1x128xf32>
    %753 = vector.broadcast %752 : vector<8x1x128xf32> to vector<8x6x128xf32>
    %754 = arith.select %751, %753, %648 : vector<8x6x128xi1>, vector<8x6x128xf32>
    %755 = arith.maximumf %649, %657 : vector<8x6xf32>
    %756 = arith.index_cast %c6_i32 : i32 to index
    %c0_129 = arith.constant 0 : index
    %c0_130 = arith.constant 0 : index
    %757 = vector.load %arg7[%756, %c0_129, %c0_130] : memref<8x8x128xf32, #tpu.memory_space<vmem>>, vector<1x8x128xf32>
    %758 = vector.shape_cast %757 : vector<1x8x128xf32> to vector<8x128xf32>
    %759 = vector.shape_cast %713 : vector<8x128xf32> to vector<1x8x128xf32>
    tpu.vector_store %arg7[%756, %c0_129, %c0_130], %759 {strides = array<i32>} : memref<8x8x128xf32, #tpu.memory_space<vmem>>, vector<1x8x128xf32>,
    %c7_i32 = arith.constant 7 : i32
    %760 = arith.index_cast %c7_i32 : i32 to index
    %c0_131 = arith.constant 0 : index
    %c0_132 = arith.constant 0 : index
    %761 = vector.load %arg0[%760, %c0_131, %c0_132] : memref<8x8x128xf32, #tpu.memory_space<vmem>>, vector<1x8x128xf32>
    %762 = vector.shape_cast %761 : vector<1x8x128xf32> to vector<8x128xf32>
    %763 = vector.extract_strided_slice %762 {offsets = [0, 96], sizes = [8, 6], strides = [1, 1]} : vector<8x128xf32> to vector<8x6xf32>
    %cst_133 = arith.constant dense<0.000000e+00> : vector<8xf32>
    %764 = vector.multi_reduction <add>, %763, %cst_133 [1] : vector<8x6xf32> to vector<8xf32>
    %765 = vector.shape_cast %764 : vector<8xf32> to vector<8x1xf32>
    %766 = arith.mulf %763, %755 : vector<8x6xf32>
    %cst_134 = arith.constant dense<0.000000e+00> : vector<8xf32>
    %767 = vector.multi_reduction <add>, %766, %cst_134 [1] : vector<8x6xf32> to vector<8xf32>
    %768 = vector.shape_cast %767 : vector<8xf32> to vector<8x1xf32>
    %769 = arith.mulf %765, %768 : vector<8x1xf32>
    %cst_135 = arith.constant 1.000000e+00 : f32
    %770 = vector.broadcast %cst_135 : f32 to vector<8x1xf32>
    %771 = arith.subf %770, %768 : vector<8x1xf32>
    %772 = arith.mulf %765, %771 : vector<8x1xf32>
    %773 = vector.shape_cast %763 : vector<8x6xf32> to vector<8x6x1xf32>
    %774 = vector.broadcast %773 : vector<8x6x1xf32> to vector<8x6x128xf32>
    %775 = arith.mulf %774, %748 : vector<8x6x128xf32>
    %cst_136 = arith.constant dense<0.000000e+00> : vector<8x128xf32>
    %776 = vector.multi_reduction <add>, %775, %cst_136 [1] : vector<8x6x128xf32> to vector<8x128xf32>
    %777 = vector.shape_cast %763 : vector<8x6xf32> to vector<8x6x1xf32>
    %778 = vector.broadcast %777 : vector<8x6x1xf32> to vector<8x6x128xf32>
    %779 = arith.mulf %778, %754 : vector<8x6x128xf32>
    %cst_137 = arith.constant dense<0.000000e+00> : vector<8x128xf32>
    %780 = vector.multi_reduction <add>, %779, %cst_137 [1] : vector<8x6x128xf32> to vector<8x128xf32>
    %781 = vector.broadcast %769 : vector<8x1xf32> to vector<8x128xf32>
    %782 = arith.mulf %781, %776 : vector<8x128xf32>
    %783 = vector.broadcast %772 : vector<8x1xf32> to vector<8x128xf32>
    %784 = arith.mulf %783, %6 : vector<8x128xf32>
    %785 = arith.addf %782, %784 : vector<8x128xf32>
    %786 = vector.broadcast %769 : vector<8x1xf32> to vector<8x128xf32>
    %787 = arith.mulf %786, %780 : vector<8x128xf32>
    %788 = vector.broadcast %772 : vector<8x1xf32> to vector<8x128xf32>
    %789 = arith.mulf %788, %9 : vector<8x128xf32>
    %790 = arith.addf %787, %789 : vector<8x128xf32>
    %791 = tpu.concatenate %762, %713, %785 in 1 : vector<8x128xf32>, vector<8x128xf32>, vector<8x128xf32> -> vector<8x384xf32>
    %792 = arith.truncf %791 : vector<8x384xf32> to vector<8x384xbf16>
    %cst_138 = arith.constant dense<0.000000e+00> : vector<8x1024xf32>
    %793 = tpu.matmul %792, %0, %cst_138 {dimension_numbers = #tpu.dot_dimension_numbers<[1], [0], [0], [1], [0, 0, 1, 1], [], []>} : vector<8x384xbf16>, vector<384x1024xbf16>, vector<8x1024xf32> -> vector<8x1024xf32>
    %794 = arith.addf %793, %3 : vector<8x1024xf32>
    %795 = vector.extract_strided_slice %794 {offsets = [0, 0], sizes = [8, 128], strides = [1, 1]} : vector<8x1024xf32> to vector<8x128xf32>
    %796 = arith.negf %795 : vector<8x128xf32>
    %797 = math.exp %796 : vector<8x128xf32>
    %cst_139 = arith.constant 1.000000e+00 : f32
    %798 = vector.broadcast %cst_139 : f32 to vector<8x128xf32>
    %799 = arith.addf %798, %797 : vector<8x128xf32>
    %800 = arith.divf %798, %799 : vector<8x128xf32>
    %801 = vector.extract_strided_slice %794 {offsets = [0, 128], sizes = [8, 128], strides = [1, 1]} : vector<8x1024xf32> to vector<8x128xf32>
    %802 = arith.negf %801 : vector<8x128xf32>
    %803 = math.exp %802 : vector<8x128xf32>
    %cst_140 = arith.constant 1.000000e+00 : f32
    %804 = vector.broadcast %cst_140 : f32 to vector<8x128xf32>
    %805 = arith.addf %804, %803 : vector<8x128xf32>
    %806 = arith.divf %804, %805 : vector<8x128xf32>
    %807 = vector.extract_strided_slice %794 {offsets = [0, 256], sizes = [8, 128], strides = [1, 1]} : vector<8x1024xf32> to vector<8x128xf32>
    %808 = math.tanh %807 : vector<8x128xf32>
    %809 = vector.extract_strided_slice %794 {offsets = [0, 384], sizes = [8, 128], strides = [1, 1]} : vector<8x1024xf32> to vector<8x128xf32>
    %810 = arith.negf %809 : vector<8x128xf32>
    %811 = math.exp %810 : vector<8x128xf32>
    %cst_141 = arith.constant 1.000000e+00 : f32
    %812 = vector.broadcast %cst_141 : f32 to vector<8x128xf32>
    %813 = arith.addf %812, %811 : vector<8x128xf32>
    %814 = arith.divf %812, %813 : vector<8x128xf32>
    %815 = arith.mulf %806, %711 : vector<8x128xf32>
    %816 = arith.mulf %800, %808 : vector<8x128xf32>
    %817 = arith.addf %815, %816 : vector<8x128xf32>
    %818 = math.tanh %817 : vector<8x128xf32>
    %819 = arith.mulf %814, %818 : vector<8x128xf32>
    %820 = vector.extract_strided_slice %794 {offsets = [0, 512], sizes = [8, 512], strides = [1, 1]} : vector<8x1024xf32> to vector<8x512xf32>
    %821 = vector.extract_strided_slice %820 {offsets = [0, 0], sizes = [8, 128], strides = [1, 1]} : vector<8x512xf32> to vector<8x128xf32>
    %822 = arith.negf %821 : vector<8x128xf32>
    %823 = math.exp %822 : vector<8x128xf32>
    %cst_142 = arith.constant 1.000000e+00 : f32
    %824 = vector.broadcast %cst_142 : f32 to vector<8x128xf32>
    %825 = arith.addf %824, %823 : vector<8x128xf32>
    %826 = arith.divf %824, %825 : vector<8x128xf32>
    %827 = vector.extract_strided_slice %820 {offsets = [0, 128], sizes = [8, 128], strides = [1, 1]} : vector<8x512xf32> to vector<8x128xf32>
    %828 = arith.negf %827 : vector<8x128xf32>
    %829 = math.exp %828 : vector<8x128xf32>
    %cst_143 = arith.constant 1.000000e+00 : f32
    %830 = vector.broadcast %cst_143 : f32 to vector<8x128xf32>
    %831 = arith.addf %830, %829 : vector<8x128xf32>
    %832 = arith.divf %830, %831 : vector<8x128xf32>
    %833 = vector.extract_strided_slice %820 {offsets = [0, 256], sizes = [8, 128], strides = [1, 1]} : vector<8x512xf32> to vector<8x128xf32>
    %834 = math.tanh %833 : vector<8x128xf32>
    %835 = vector.extract_strided_slice %820 {offsets = [0, 384], sizes = [8, 128], strides = [1, 1]} : vector<8x512xf32> to vector<8x128xf32>
    %836 = arith.negf %835 : vector<8x128xf32>
    %837 = math.exp %836 : vector<8x128xf32>
    %cst_144 = arith.constant 1.000000e+00 : f32
    %838 = vector.broadcast %cst_144 : f32 to vector<8x128xf32>
    %839 = arith.addf %838, %837 : vector<8x128xf32>
    %840 = arith.divf %838, %839 : vector<8x128xf32>
    %841 = arith.mulf %832, %790 : vector<8x128xf32>
    %842 = arith.mulf %826, %834 : vector<8x128xf32>
    %843 = arith.addf %841, %842 : vector<8x128xf32>
    %844 = math.tanh %843 : vector<8x128xf32>
    %845 = arith.mulf %840, %844 : vector<8x128xf32>
    %846 = vector.shape_cast %763 : vector<8x6xf32> to vector<8x6x1xf32>
    %cst_145 = arith.constant 0.000000e+00 : f32
    %847 = vector.broadcast %cst_145 : f32 to vector<8x6x1xf32>
    %848 = arith.cmpf ogt, %846, %847 : vector<8x6x1xf32>
    %849 = vector.shape_cast %845 : vector<8x128xf32> to vector<8x1x128xf32>
    %850 = vector.shape_cast %848 : vector<8x6x1xi1> to vector<8x6x1xi1>
    %851 = vector.broadcast %850 : vector<8x6x1xi1> to vector<8x6x128xi1>
    %852 = vector.shape_cast %849 : vector<8x1x128xf32> to vector<8x1x128xf32>
    %853 = vector.broadcast %852 : vector<8x1x128xf32> to vector<8x6x128xf32>
    %854 = arith.select %851, %853, %748 : vector<8x6x128xi1>, vector<8x6x128xf32>
    %855 = vector.shape_cast %843 : vector<8x128xf32> to vector<8x1x128xf32>
    %856 = vector.shape_cast %848 : vector<8x6x1xi1> to vector<8x6x1xi1>
    %857 = vector.broadcast %856 : vector<8x6x1xi1> to vector<8x6x128xi1>
    %858 = vector.shape_cast %855 : vector<8x1x128xf32> to vector<8x1x128xf32>
    %859 = vector.broadcast %858 : vector<8x1x128xf32> to vector<8x6x128xf32>
    %860 = arith.select %857, %859, %754 : vector<8x6x128xi1>, vector<8x6x128xf32>
    %861 = arith.maximumf %755, %763 : vector<8x6xf32>
    %862 = arith.index_cast %c7_i32 : i32 to index
    %c0_146 = arith.constant 0 : index
    %c0_147 = arith.constant 0 : index
    %863 = vector.load %arg7[%862, %c0_146, %c0_147] : memref<8x8x128xf32, #tpu.memory_space<vmem>>, vector<1x8x128xf32>
    %864 = vector.shape_cast %863 : vector<1x8x128xf32> to vector<8x128xf32>
    %865 = vector.shape_cast %819 : vector<8x128xf32> to vector<1x8x128xf32>
    tpu.vector_store %arg7[%862, %c0_146, %c0_147], %865 {strides = array<i32>} : memref<8x8x128xf32, #tpu.memory_space<vmem>>, vector<1x8x128xf32>,
    %c8_i32 = arith.constant 8 : i32
    return
  }
}

</mosaic_0001>

<llo_original>
// kernel: tpu_custom_call.1
$region0: #{tpu_custom_call.1}
  #allocation0 [shape = 'u32[]', space=smem, size = 0x4, offset = 0x4, fixed_abs, tag = 'smem constant byte address 0x4 - core index']
  #allocation1 [shape = 'u32[144,128]{1,0:T(1,128)}', space=vmem, size = 0x12000, scoped, tag = 'internal scratch']
  %s0 = inlined_call_operand.hbm [shape: f32[8,8,128], index: 0, kind: input, shape index: {}]
  %s1 = inlined_call_operand.hbm [shape: bf16[384,1024], index: 1, kind: input, shape index: {}]
  %s2 = inlined_call_operand.hbm [shape: f32[1,1024], index: 2, kind: input, shape index: {}]
  %s3 = inlined_call_operand.vmem [shape: f32[1,128], index: 3, kind: input, shape index: {}]
  %s4 = inlined_call_operand.vmem [shape: f32[1,128], index: 4, kind: input, shape index: {}]
  %s5 = inlined_call_operand.vmem [shape: f32[1,128], index: 5, kind: input, shape index: {}]
  %s6 = inlined_call_operand.vmem [shape: f32[1,128], index: 6, kind: input, shape index: {}]
  %s7 = inlined_call_operand.hbm [shape: f32[8,8,128], index: 7, kind: output, shape index: {}]
  %s8 = sld [smem:[#allocation0]]
  $region50: #{tpu_custom_call.1} parent=0
    _
  %s10 = ssub.s32 1, %s8
  %s11 = scalar_select 0, %s10, %s8
  $region1: #{tpu_custom_call.1} parent=0
    #allocation2 [shape = 'u8[32768]{0}', space=vmem, size = 0x8000, scoped, tag = 'input window, operand 0, single buffered']
    #allocation3 [shape = 's32[1]{0}', space=sflag, size = 0x4, scoped, tag = 'scoped memory for tpu_custom_call.1']
    #allocation4 [shape = 's32[1]{0}', space=sflag, size = 0x4, scoped, tag = 'scoped memory for tpu_custom_call.1']
    #allocation5 [shape = 'u8[786432]{0}', space=vmem, size = 0xc0000, scoped, tag = 'input window, operand 1, single buffered']
    #allocation6 [shape = 's32[1]{0}', space=sflag, size = 0x4, scoped, tag = 'scoped memory for tpu_custom_call.1']
    #allocation7 [shape = 'u8[4096]{0}', space=vmem, size = 0x1000, scoped, tag = 'input window, operand 2, single buffered']
    #allocation8 [shape = 'u8[32768]{0}', space=vmem, size = 0x8000, scoped, tag = 'output window, operand 0, single buffered']
    %12 = vsyncpa [#allocation3], 0
    %13 = vsyncpa [#allocation6], 0
    %14 = vsyncpa [#allocation4], 0
    // Predicated region
    $region2: #{tpu_custom_call.1} parent=1 // pred_check
      _
    $region3: #{tpu_custom_call.1} parent=1 // pred_check_branch
      %16 = sbr.rel (0) target = $region5
    $region4: #{tpu_custom_call.1} parent=1 // pred_region
      %s18 = ssub.s32 1024, 1024
      %19 = vsyncadd [#allocation3], %s18
      %s20 = sshll.u32 [#allocation2], 4
      %s21 = int_to_ptr.vmem [resolvable:$true] %s20
      %26 = dma.hbm_to_vmem [thread:$0]  %s0, 1024, %s21, [#allocation3], 128, 128, 8
    $region5: #{tpu_custom_call.1} parent=1 // pred_fallthru
      _
    // Predicated region
    $region6: #{tpu_custom_call.1} parent=1 // pred_check
      _
    $region7: #{tpu_custom_call.1} parent=1 // pred_check_branch
      %28 = sbr.rel (0) target = $region9
    $region8: #{tpu_custom_call.1} parent=1 // pred_region
      %s30 = ssub.s32 24576, 24576
      %31 = vsyncadd [#allocation6], %s30
      %s32 = sshll.u32 [#allocation5], 4
      %s33 = int_to_ptr.vmem [resolvable:$true] %s32
      %38 = dma.hbm_to_vmem [thread:$0]  %s1, 24576, %s33, [#allocation6], 512, 512, 32
    $region9: #{tpu_custom_call.1} parent=1 // pred_fallthru
      _
    // Predicated region
    $region10: #{tpu_custom_call.1} parent=1 // pred_check
      _
    $region11: #{tpu_custom_call.1} parent=1 // pred_check_branch
      %40 = sbr.rel (0) target = $region13
    $region12: #{tpu_custom_call.1} parent=1 // pred_region
      %s42 = ssub.s32 128, 128
      %43 = vsyncadd [#allocation6], %s42
      %s45 = sshll.u32 [#allocation7], 4
      %s46 = int_to_ptr.vmem [resolvable:$true] %s45
      %48 = dma.hbm_to_vmem [thread:$0]  %s2, 128, %s46, [#allocation6]
    $region13: #{tpu_custom_call.1} parent=1 // pred_fallthru
      _
    // Predicated region
    $region14: #{tpu_custom_call.1} parent=1 // pred_check
      _
    $region15: #{tpu_custom_call.1} parent=1 // pred_check_branch
      %50 = sbr.rel (0) target = $region17
    $region16: #{tpu_custom_call.1} parent=1 // pred_region
      _
    $region17: #{tpu_custom_call.1} parent=1 // pred_fallthru
      _
    // Predicated region
    $region18: #{tpu_custom_call.1} parent=1 // pred_check
      _
    $region19: #{tpu_custom_call.1} parent=1 // pred_check_branch
      %52 = sbr.rel (0) target = $region21
    $region20: #{tpu_custom_call.1} parent=1 // pred_region
      _
    $region21: #{tpu_custom_call.1} parent=1 // pred_fallthru
      _
    // Predicated region
    $region22: #{tpu_custom_call.1} parent=1 // pred_check
      _
    $region23: #{tpu_custom_call.1} parent=1 // pred_check_branch
      %54 = sbr.rel (0) target = $region25
    $region24: #{tpu_custom_call.1} parent=1 // pred_region
      _
    $region25: #{tpu_custom_call.1} parent=1 // pred_fallthru
      _
    // Predicated region
    $region26: #{tpu_custom_call.1} parent=1 // pred_check
      _
    $region27: #{tpu_custom_call.1} parent=1 // pred_check_branch
      %56 = sbr.rel (0) target = $region29
    $region28: #{tpu_custom_call.1} parent=1 // pred_region
      _
    $region29: #{tpu_custom_call.1} parent=1 // pred_fallthru
      _
    // Predicated region
    $region30: #{tpu_custom_call.1} parent=1 // pred_check
      _
    $region31: #{tpu_custom_call.1} parent=1 // pred_check_branch
      %58 = sbr.rel (0) target = $region33
    $region32: #{tpu_custom_call.1} parent=1 // pred_region
      %59 = dma.done [#allocation3], 1024
    $region33: #{tpu_custom_call.1} parent=1 // pred_fallthru
      _
    // Predicated region
    $region34: #{tpu_custom_call.1} parent=1 // pred_check
      _
    $region35: #{tpu_custom_call.1} parent=1 // pred_check_branch
      %61 = sbr.rel (0) target = $region37
    $region36: #{tpu_custom_call.1} parent=1 // pred_region
      %62 = dma.done [#allocation6], 24576
    $region37: #{tpu_custom_call.1} parent=1 // pred_fallthru
      _
    // Predicated region
    $region38: #{tpu_custom_call.1} parent=1 // pred_check
      _
    $region39: #{tpu_custom_call.1} parent=1 // pred_check_branch
      %64 = sbr.rel (0) target = $region41
    $region40: #{tpu_custom_call.1} parent=1 // pred_region
      %65 = dma.done [#allocation6], 128
    $region41: #{tpu_custom_call.1} parent=1 // pred_fallthru
      _
    %v67 = vld [vmem:[#allocation5] sm:$0xff]
    %v68 = vld [vmem:[#allocation5 + $0x8] sm:$0xff]
    %v69 = vld [vmem:[#allocation5 + $0x10] sm:$0xff]
    %v70 = vld [vmem:[#allocation5 + $0x18] sm:$0xff]
    %v71 = vld [vmem:[#allocation5 + $0x20] sm:$0xff]
    %v72 = vld [vmem:[#allocation5 + $0x28] sm:$0xff]
    %v73 = vld [vmem:[#allocation5 + $0x30] sm:$0xff]
    %v74 = vld [vmem:[#allocation5 + $0x38] sm:$0xff]
    %v75 = vld [vmem:[#allocation5 + $0x40] sm:$0xff]
    %v76 = vld [vmem:[#allocation5 + $0x48] sm:$0xff]
    %v77 = vld [vmem:[#allocation5 + $0x50] sm:$0xff]
    %v78 = vld [vmem:[#allocation5 + $0x58] sm:$0xff]
    %v79 = vld [vmem:[#allocation5 + $0x60] sm:$0xff]
    %v80 = vld [vmem:[#allocation5 + $0x68] sm:$0xff]
    %v81 = vld [vmem:[#allocation5 + $0x70] sm:$0xff]
    %v82 = vld [vmem:[#allocation5 + $0x78] sm:$0xff]
    %v83 = vld [vmem:[#allocation5 + $0x80] sm:$0xff]
    %v84 = vld [vmem:[#allocation5 + $0x88] sm:$0xff]
    %v85 = vld [vmem:[#allocation5 + $0x90] sm:$0xff]
    %v86 = vld [vmem:[#allocation5 + $0x98] sm:$0xff]
    %v87 = vld [vmem:[#allocation5 + $0xa0] sm:$0xff]
    %v88 = vld [vmem:[#allocation5 + $0xa8] sm:$0xff]
    %v89 = vld [vmem:[#allocation5 + $0xb0] sm:$0xff]
    %v90 = vld [vmem:[#allocation5 + $0xb8] sm:$0xff]
    %v91 = vld [vmem:[#allocation5 + $0xc0] sm:$0xff]
    %v92 = vld [vmem:[#allocation5 + $0xc8] sm:$0xff]
    %v93 = vld [vmem:[#allocation5 + $0xd0] sm:$0xff]
    %v94 = vld [vmem:[#allocation5 + $0xd8] sm:$0xff]
    %v95 = vld [vmem:[#allocation5 + $0xe0] sm:$0xff]
    %v96 = vld [vmem:[#allocation5 + $0xe8] sm:$0xff]
    %v97 = vld [vmem:[#allocation5 + $0xf0] sm:$0xff]
    %v98 = vld [vmem:[#allocation5 + $0xf8] sm:$0xff]
    %v99 = vld [vmem:[#allocation5 + $0x100] sm:$0xff]
    %v100 = vld [vmem:[#allocation5 + $0x108] sm:$0xff]
    %v101 = vld [vmem:[#allocation5 + $0x110] sm:$0xff]
    %v102 = vld [vmem:[#allocation5 + $0x118] sm:$0xff]
    %v103 = vld [vmem:[#allocation5 + $0x120] sm:$0xff]
    %v104 = vld [vmem:[#allocation5 + $0x128] sm:$0xff]
    %v105 = vld [vmem:[#allocation5 + $0x130] sm:$0xff]
    %v106 = vld [vmem:[#allocation5 + $0x138] sm:$0xff]
    %v107 = vld [vmem:[#allocation5 + $0x140] sm:$0xff]
    %v108 = vld [vmem:[#allocation5 + $0x148] sm:$0xff]
    %v109 = vld [vmem:[#allocation5 + $0x150] sm:$0xff]
    %v110 = vld [vmem:[#allocation5 + $0x158] sm:$0xff]
    %v111 = vld [vmem:[#allocation5 + $0x160] sm:$0xff]
    %v112 = vld [vmem:[#allocation5 + $0x168] sm:$0xff]
    %v113 = vld [vmem:[#allocation5 + $0x170] sm:$0xff]
    %v114 = vld [vmem:[#allocation5 + $0x178] sm:$0xff]
    %v115 = vld [vmem:[#allocation5 + $0x180] sm:$0xff]
    %v116 = vld [vmem:[#allocation5 + $0x188] sm:$0xff]
    %v117 = vld [vmem:[#allocation5 + $0x190] sm:$0xff]
    %v118 = vld [vmem:[#allocation5 + $0x198] sm:$0xff]
    %v119 = vld [vmem:[#allocation5 + $0x1a0] sm:$0xff]
    %v120 = vld [vmem:[#allocation5 + $0x1a8] sm:$0xff]
    %v121 = vld [vmem:[#allocation5 + $0x1b0] sm:$0xff]
    %v122 = vld [vmem:[#allocation5 + $0x1b8] sm:$0xff]
    %v123 = vld [vmem:[#allocation5 + $0x1c0] sm:$0xff]
    %v124 = vld [vmem:[#allocation5 + $0x1c8] sm:$0xff]
    %v125 = vld [vmem:[#allocation5 + $0x1d0] sm:$0xff]
    %v126 = vld [vmem:[#allocation5 + $0x1d8] sm:$0xff]
    %v127 = vld [vmem:[#allocation5 + $0x1e0] sm:$0xff]
    %v128 = vld [vmem:[#allocation5 + $0x1e8] sm:$0xff]
    %v129 = vld [vmem:[#allocation5 + $0x1f0] sm:$0xff]
    %v130 = vld [vmem:[#allocation5 + $0x1f8] sm:$0xff]
    %v131 = vld [vmem:[#allocation5 + $0x200] sm:$0xff]
    %v132 = vld [vmem:[#allocation5 + $0x208] sm:$0xff]
    %v133 = vld [vmem:[#allocation5 + $0x210] sm:$0xff]
    %v134 = vld [vmem:[#allocation5 + $0x218] sm:$0xff]
    %v135 = vld [vmem:[#allocation5 + $0x220] sm:$0xff]
    %v136 = vld [vmem:[#allocation5 + $0x228] sm:$0xff]
    %v137 = vld [vmem:[#allocation5 + $0x230] sm:$0xff]
    %v138 = vld [vmem:[#allocation5 + $0x238] sm:$0xff]
    %v139 = vld [vmem:[#allocation5 + $0x240] sm:$0xff]
    %v140 = vld [vmem:[#allocation5 + $0x248] sm:$0xff]
    %v141 = vld [vmem:[#allocation5 + $0x250] sm:$0xff]
    %v142 = vld [vmem:[#allocation5 + $0x258] sm:$0xff]
    %v143 = vld [vmem:[#allocation5 + $0x260] sm:$0xff]
    %v144 = vld [vmem:[#allocation5 + $0x268] sm:$0xff]
    %v145 = vld [vmem:[#allocation5 + $0x270] sm:$0xff]
    %v146 = vld [vmem:[#allocation5 + $0x278] sm:$0xff]
    %v147 = vld [vmem:[#allocation5 + $0x280] sm:$0xff]
    %v148 = vld [vmem:[#allocation5 + $0x288] sm:$0xff]
    %v149 = vld [vmem:[#allocation5 + $0x290] sm:$0xff]
    %v150 = vld [vmem:[#allocation5 + $0x298] sm:$0xff]
    %v151 = vld [vmem:[#allocation5 + $0x2a0] sm:$0xff]
    %v152 = vld [vmem:[#allocation5 + $0x2a8] sm:$0xff]
    %v153 = vld [vmem:[#allocation5 + $0x2b0] sm:$0xff]
    %v154 = vld [vmem:[#allocation5 + $0x2b8] sm:$0xff]
    %v155 = vld [vmem:[#allocation5 + $0x2c0] sm:$0xff]
    %v156 = vld [vmem:[#allocation5 + $0x2c8] sm:$0xff]
    %v157 = vld [vmem:[#allocation5 + $0x2d0] sm:$0xff]
    %v158 = vld [vmem:[#allocation5 + $0x2d8] sm:$0xff]
    %v159 = vld [vmem:[#allocation5 + $0x2e0] sm:$0xff]
    %v160 = vld [vmem:[#allocation5 + $0x2e8] sm:$0xff]
    %v161 = vld [vmem:[#allocation5 + $0x2f0] sm:$0xff]
    %v162 = vld [vmem:[#allocation5 + $0x2f8] sm:$0xff]
    %v163 = vld [vmem:[#allocation5 + $0x300] sm:$0xff]
    %v164 = vld [vmem:[#allocation5 + $0x308] sm:$0xff]
    %v165 = vld [vmem:[#allocation5 + $0x310] sm:$0xff]
    %v166 = vld [vmem:[#allocation5 + $0x318] sm:$0xff]
    %v167 = vld [vmem:[#allocation5 + $0x320] sm:$0xff]
    %v168 = vld [vmem:[#allocation5 + $0x328] sm:$0xff]
    %v169 = vld [vmem:[#allocation5 + $0x330] sm:$0xff]
    %v170 = vld [vmem:[#allocation5 + $0x338] sm:$0xff]
    %v171 = vld [vmem:[#allocation5 + $0x340] sm:$0xff]
    %v172 = vld [vmem:[#allocation5 + $0x348] sm:$0xff]
    %v173 = vld [vmem:[#allocation5 + $0x350] sm:$0xff]
    %v174 = vld [vmem:[#allocation5 + $0x358] sm:$0xff]
    %v175 = vld [vmem:[#allocation5 + $0x360] sm:$0xff]
    %v176 = vld [vmem:[#allocation5 + $0x368] sm:$0xff]
    %v177 = vld [vmem:[#allocation5 + $0x370] sm:$0xff]
    %v178 = vld [vmem:[#allocation5 + $0x378] sm:$0xff]
    %v179 = vld [vmem:[#allocation5 + $0x380] sm:$0xff]
    %v180 = vld [vmem:[#allocation5 + $0x388] sm:$0xff]
    %v181 = vld [vmem:[#allocation5 + $0x390] sm:$0xff]
    %v182 = vld [vmem:[#allocation5 + $0x398] sm:$0xff]
    %v183 = vld [vmem:[#allocation5 + $0x3a0] sm:$0xff]
    %v184 = vld [vmem:[#allocation5 + $0x3a8] sm:$0xff]
    %v185 = vld [vmem:[#allocation5 + $0x3b0] sm:$0xff]
    %v186 = vld [vmem:[#allocation5 + $0x3b8] sm:$0xff]
    %v187 = vld [vmem:[#allocation5 + $0x3c0] sm:$0xff]
    %v188 = vld [vmem:[#allocation5 + $0x3c8] sm:$0xff]
    %v189 = vld [vmem:[#allocation5 + $0x3d0] sm:$0xff]
    %v190 = vld [vmem:[#allocation5 + $0x3d8] sm:$0xff]
    %v191 = vld [vmem:[#allocation5 + $0x3e0] sm:$0xff]
    %v192 = vld [vmem:[#allocation5 + $0x3e8] sm:$0xff]
    %v193 = vld [vmem:[#allocation5 + $0x3f0] sm:$0xff]
    %v194 = vld [vmem:[#allocation5 + $0x3f8] sm:$0xff]
    %v195 = vld [vmem:[#allocation5 + $0x400] sm:$0xff]
    %v196 = vld [vmem:[#allocation5 + $0x408] sm:$0xff]
    %v197 = vld [vmem:[#allocation5 + $0x410] sm:$0xff]
    %v198 = vld [vmem:[#allocation5 + $0x418] sm:$0xff]
    %v199 = vld [vmem:[#allocation5 + $0x420] sm:$0xff]
    %v200 = vld [vmem:[#allocation5 + $0x428] sm:$0xff]
    %v201 = vld [vmem:[#allocation5 + $0x430] sm:$0xff]
    %v202 = vld [vmem:[#allocation5 + $0x438] sm:$0xff]
    %v203 = vld [vmem:[#allocation5 + $0x440] sm:$0xff]
    %v204 = vld [vmem:[#allocation5 + $0x448] sm:$0xff]
    %v205 = vld [vmem:[#allocation5 + $0x450] sm:$0xff]
    %v206 = vld [vmem:[#allocation5 + $0x458] sm:$0xff]
    %v207 = vld [vmem:[#allocation5 + $0x460] sm:$0xff]
    %v208 = vld [vmem:[#allocation5 + $0x468] sm:$0xff]
    %v209 = vld [vmem:[#allocation5 + $0x470] sm:$0xff]
    %v210 = vld [vmem:[#allocation5 + $0x478] sm:$0xff]
    %v211 = vld [vmem:[#allocation5 + $0x480] sm:$0xff]
    %v212 = vld [vmem:[#allocation5 + $0x488] sm:$0xff]
    %v213 = vld [vmem:[#allocation5 + $0x490] sm:$0xff]
    %v214 = vld [vmem:[#allocation5 + $0x498] sm:$0xff]
    %v215 = vld [vmem:[#allocation5 + $0x4a0] sm:$0xff]
    %v216 = vld [vmem:[#allocation5 + $0x4a8] sm:$0xff]
    %v217 = vld [vmem:[#allocation5 + $0x4b0] sm:$0xff]
    %v218 = vld [vmem:[#allocation5 + $0x4b8] sm:$0xff]
    %v219 = vld [vmem:[#allocation5 + $0x4c0] sm:$0xff]
    %v220 = vld [vmem:[#allocation5 + $0x4c8] sm:$0xff]
    %v221 = vld [vmem:[#allocation5 + $0x4d0] sm:$0xff]
    %v222 = vld [vmem:[#allocation5 + $0x4d8] sm:$0xff]
    %v223 = vld [vmem:[#allocation5 + $0x4e0] sm:$0xff]
    %v224 = vld [vmem:[#allocation5 + $0x4e8] sm:$0xff]
    %v225 = vld [vmem:[#allocation5 + $0x4f0] sm:$0xff]
    %v226 = vld [vmem:[#allocation5 + $0x4f8] sm:$0xff]
    %v227 = vld [vmem:[#allocation5 + $0x500] sm:$0xff]
    %v228 = vld [vmem:[#allocation5 + $0x508] sm:$0xff]
    %v229 = vld [vmem:[#allocation5 + $0x510] sm:$0xff]
    %v230 = vld [vmem:[#allocation5 + $0x518] sm:$0xff]
    %v231 = vld [vmem:[#allocation5 + $0x520] sm:$0xff]
    %v232 = vld [vmem:[#allocation5 + $0x528] sm:$0xff]
    %v233 = vld [vmem:[#allocation5 + $0x530] sm:$0xff]
    %v234 = vld [vmem:[#allocation5 + $0x538] sm:$0xff]
    %v235 = vld [vmem:[#allocation5 + $0x540] sm:$0xff]
    %v236 = vld [vmem:[#allocation5 + $0x548] sm:$0xff]
    %v237 = vld [vmem:[#allocation5 + $0x550] sm:$0xff]
    %v238 = vld [vmem:[#allocation5 + $0x558] sm:$0xff]
    %v239 = vld [vmem:[#allocation5 + $0x560] sm:$0xff]
    %v240 = vld [vmem:[#allocation5 + $0x568] sm:$0xff]
    %v241 = vld [vmem:[#allocation5 + $0x570] sm:$0xff]
    %v242 = vld [vmem:[#allocation5 + $0x578] sm:$0xff]
    %v243 = vld [vmem:[#allocation5 + $0x580] sm:$0xff]
    %v244 = vld [vmem:[#allocation5 + $0x588] sm:$0xff]
    %v245 = vld [vmem:[#allocation5 + $0x590] sm:$0xff]
    %v246 = vld [vmem:[#allocation5 + $0x598] sm:$0xff]
    %v247 = vld [vmem:[#allocation5 + $0x5a0] sm:$0xff]
    %v248 = vld [vmem:[#allocation5 + $0x5a8] sm:$0xff]
    %v249 = vld [vmem:[#allocation5 + $0x5b0] sm:$0xff]
    %v250 = vld [vmem:[#allocation5 + $0x5b8] sm:$0xff]
    %v251 = vld [vmem:[#allocation5 + $0x5c0] sm:$0xff]
    %v252 = vld [vmem:[#allocation5 + $0x5c8] sm:$0xff]
    %v253 = vld [vmem:[#allocation5 + $0x5d0] sm:$0xff]
    %v254 = vld [vmem:[#allocation5 + $0x5d8] sm:$0xff]
    %v255 = vld [vmem:[#allocation5 + $0x5e0] sm:$0xff]
    %v256 = vld [vmem:[#allocation5 + $0x5e8] sm:$0xff]
    %v257 = vld [vmem:[#allocation5 + $0x5f0] sm:$0xff]
    %v258 = vld [vmem:[#allocation5 + $0x5f8] sm:$0xff]
    %v259 = vld [vmem:[#allocation7] sm:$0xff]
    %v261 = vlaneseq
    %v262 = vshrl.u32 %v261, 7
    %v263 = vsub.s32 0, %v262
    %v264 = vrot.slane %v259, %v263
    %v265 = vlaneseq
    %v266 = vshrl.u32 %v265, 7
    %v267 = vsub.s32 1, %v266
    %v268 = vrot.slane %v259, %v267
    %v269 = vlaneseq
    %v270 = vshrl.u32 %v269, 7
    %v271 = vsub.s32 2, %v270
    %v272 = vrot.slane %v259, %v271
    %v273 = vlaneseq
    %v274 = vshrl.u32 %v273, 7
    %v275 = vsub.s32 3, %v274
    %v276 = vrot.slane %v259, %v275
    %v277 = vlaneseq
    %v278 = vshrl.u32 %v277, 7
    %v279 = vsub.s32 4, %v278
    %v280 = vrot.slane %v259, %v279
    %v281 = vlaneseq
    %v282 = vshrl.u32 %v281, 7
    %v283 = vsub.s32 5, %v282
    %v284 = vrot.slane %v259, %v283
    %v285 = vlaneseq
    %v286 = vshrl.u32 %v285, 7
    %v287 = vsub.s32 6, %v286
    %v288 = vrot.slane %v259, %v287
    %v289 = vlaneseq
    %v290 = vshrl.u32 %v289, 7
    %v291 = vsub.s32 7, %v290
    %v292 = vrot.slane %v259, %v291
    %v301 = vld [vmem:[%s3] sm:$0x1]
    %v303 = vlaneseq
    %v304 = vshrl.u32 %v303, 7
    %v305 = vsub.s32 0, %v304
    %v306 = vrot.slane %v301, %v305
    %v308 = vld [vmem:[%s4] sm:$0x1]
    %v310 = vlaneseq
    %v311 = vshrl.u32 %v310, 7
    %v312 = vsub.s32 0, %v311
    %v313 = vrot.slane %v308, %v312
    %v315 = vld [vmem:[%s5] sm:$0x1]
    %v317 = vlaneseq
    %v318 = vshrl.u32 %v317, 7
    %v319 = vsub.s32 0, %v318
    %v320 = vrot.slane %v315, %v319
    %v322 = vld [vmem:[%s6] sm:$0x1]
    %v324 = vlaneseq
    %v325 = vshrl.u32 %v324, 7
    %v326 = vsub.s32 0, %v325
    %v327 = vrot.slane %v322, %v326
    %v329 = vld [vmem:[#allocation2] sm:$0xff]
    %331 = vrot.lane.b32.xlu0 %v329, 32
    %v332 = vpop.permute.xlu0 %331
    %vm334 = vcmask 48128
    %v335 = vsel %vm334, %v332, 0.0
    %336 = vadd.xlane.f32.xlu0 %v335
    %v337 = vpop.xlane.xlu0 %336
    %v338 = vmul.f32 %v329, 0.0
    %340 = vrot.lane.b32.xlu0 %v338, 32
    %v341 = vpop.permute.xlu0 %340
    %v343 = vsel %vm334, %v341, 0.0
    %344 = vadd.xlane.f32.xlu0 %v343
    %v345 = vpop.xlane.xlu0 %344
    %v346 = vmul.f32 %v337, %v345
    %v347 = vsub.f32 1.0, %v345
    %v348 = vmul.f32 %v337, %v347
    %v349 = vlaneseq
    %v350 = vshrl.u32 %v349, 7
    %v351 = vsub.s32 0, %v350
    %v352 = vrot.slane %v329, %v351
    %s354 = sor.u32 256, 96
    %355 = vbcast.lane.b32.xlu0 %v352, %s354
    %v356 = vpop.permute.xlu0 %355
    %v357 = vlaneseq
    %v358 = vshrl.u32 %v357, 7
    %v359 = vsub.s32 1, %v358
    %v360 = vrot.slane %v329, %v359
    %s362 = sor.u32 256, 96
    %363 = vbcast.lane.b32.xlu0 %v360, %s362
    %v364 = vpop.permute.xlu0 %363
    %v365 = vlaneseq
    %v366 = vshrl.u32 %v365, 7
    %v367 = vsub.s32 2, %v366
    %v368 = vrot.slane %v329, %v367
    %s370 = sor.u32 256, 96
    %371 = vbcast.lane.b32.xlu0 %v368, %s370
    %v372 = vpop.permute.xlu0 %371
    %v373 = vlaneseq
    %v374 = vshrl.u32 %v373, 7
    %v375 = vsub.s32 3, %v374
    %v376 = vrot.slane %v329, %v375
    %s378 = sor.u32 256, 96
    %379 = vbcast.lane.b32.xlu0 %v376, %s378
    %v380 = vpop.permute.xlu0 %379
    %v381 = vlaneseq
    %v382 = vshrl.u32 %v381, 7
    %v383 = vsub.s32 4, %v382
    %v384 = vrot.slane %v329, %v383
    %s386 = sor.u32 256, 96
    %387 = vbcast.lane.b32.xlu0 %v384, %s386
    %v388 = vpop.permute.xlu0 %387
    %v389 = vlaneseq
    %v390 = vshrl.u32 %v389, 7
    %v391 = vsub.s32 5, %v390
    %v392 = vrot.slane %v329, %v391
    %s394 = sor.u32 256, 96
    %395 = vbcast.lane.b32.xlu0 %v392, %s394
    %v396 = vpop.permute.xlu0 %395
    %v397 = vlaneseq
    %v398 = vshrl.u32 %v397, 7
    %v399 = vsub.s32 6, %v398
    %v400 = vrot.slane %v329, %v399
    %s402 = sor.u32 256, 96
    %403 = vbcast.lane.b32.xlu0 %v400, %s402
    %v404 = vpop.permute.xlu0 %403
    %v405 = vlaneseq
    %v406 = vshrl.u32 %v405, 7
    %v407 = vsub.s32 7, %v406
    %v408 = vrot.slane %v329, %v407
    %s410 = sor.u32 256, 96
    %411 = vbcast.lane.b32.xlu0 %v408, %s410
    %v412 = vpop.permute.xlu0 %411
    %v413 = vmul.f32 %v356, 0.0
    %v414 = vmul.f32 %v364, 0.0
    %v415 = vmul.f32 %v372, 0.0
    %v416 = vmul.f32 %v380, 0.0
    %v417 = vmul.f32 %v388, 0.0
    %v418 = vmul.f32 %v396, 0.0
    %v419 = vmul.f32 %v404, 0.0
    %v420 = vmul.f32 %v412, 0.0
    %vm421 = vcmask 1045504
    %v422 = vsel %vm421, %v413, 0.0
    %v423 = vrot.slane %v422, 4
    %v424 = vadd.f32 %v422, %v423
    %v425 = vrot.slane %v424, 2
    %v426 = vadd.f32 %v424, %v425
    %v427 = vrot.slane %v426, 1
    %v428 = vadd.f32 %v426, %v427
    %v429 = vsel %vm421, %v414, 0.0
    %v430 = vrot.slane %v429, 4
    %v431 = vadd.f32 %v429, %v430
    %v432 = vrot.slane %v431, 2
    %v433 = vadd.f32 %v431, %v432
    %v434 = vrot.slane %v433, 1
    %v435 = vadd.f32 %v433, %v434
    %v436 = vsel %vm421, %v415, 0.0
    %v437 = vrot.slane %v436, 4
    %v438 = vadd.f32 %v436, %v437
    %v439 = vrot.slane %v438, 2
    %v440 = vadd.f32 %v438, %v439
    %v441 = vrot.slane %v440, 1
    %v442 = vadd.f32 %v440, %v441
    %v443 = vsel %vm421, %v416, 0.0
    %v444 = vrot.slane %v443, 4
    %v445 = vadd.f32 %v443, %v444
    %v446 = vrot.slane %v445, 2
    %v447 = vadd.f32 %v445, %v446
    %v448 = vrot.slane %v447, 1
    %v449 = vadd.f32 %v447, %v448
    %v450 = vsel %vm421, %v417, 0.0
    %v451 = vrot.slane %v450, 4
    %v452 = vadd.f32 %v450, %v451
    %v453 = vrot.slane %v452, 2
    %v454 = vadd.f32 %v452, %v453
    %v455 = vrot.slane %v454, 1
    %v456 = vadd.f32 %v454, %v455
    %v457 = vsel %vm421, %v418, 0.0
    %v458 = vrot.slane %v457, 4
    %v459 = vadd.f32 %v457, %v458
    %v460 = vrot.slane %v459, 2
    %v461 = vadd.f32 %v459, %v460
    %v462 = vrot.slane %v461, 1
    %v463 = vadd.f32 %v461, %v462
    %v464 = vsel %vm421, %v419, 0.0
    %v465 = vrot.slane %v464, 4
    %v466 = vadd.f32 %v464, %v465
    %v467 = vrot.slane %v466, 2
    %v468 = vadd.f32 %v466, %v467
    %v469 = vrot.slane %v468, 1
    %v470 = vadd.f32 %v468, %v469
    %v471 = vsel %vm421, %v420, 0.0
    %v472 = vrot.slane %v471, 4
    %v473 = vadd.f32 %v471, %v472
    %v474 = vrot.slane %v473, 2
    %v475 = vadd.f32 %v473, %v474
    %v476 = vrot.slane %v475, 1
    %v477 = vadd.f32 %v475, %v476
    %vm486 = vcmask 1041409
    %v487 = vsel %vm486, %v435, %v428
    %vm488 = vcmask 1042434
    %v489 = vsel %vm488, %v442, %v487
    %vm490 = vcmask 1043459
    %v491 = vsel %vm490, %v449, %v489
    %vm492 = vcmask 1044484
    %v493 = vsel %vm492, %v456, %v491
    %vm494 = vcmask 1045509
    %v495 = vsel %vm494, %v463, %v493
    %vm496 = vcmask 1046534
    %v497 = vsel %vm496, %v470, %v495
    %vm498 = vcmask 1047559
    %v499 = vsel %vm498, %v477, %v497
    %v501 = vmul.f32 %v346, %v499
    %v502 = vmul.f32 %v348, %v306
    %v503 = vadd.f32 %v501, %v502
    %v504 = vmul.f32 %v348, %v313
    %v505 = vadd.f32 %v501, %v504
    %v506 = vpack.c.bf16 %v329, %v329
    %v507 = vpack.c.bf16 %v320, %v320
    %v508 = vpack.c.bf16 %v503, %v503
    %v701 = vunpack.c.l.b16 %v67
    %v702 = vunpack.c.h.b16 %v67
    %v703 = vunpack.c.l.b16 %v68
    %v704 = vunpack.c.h.b16 %v68
    %v705 = vunpack.c.l.b16 %v69
    %v706 = vunpack.c.h.b16 %v69
    %v707 = vunpack.c.l.b16 %v70
    %v708 = vunpack.c.h.b16 %v70
    %v709 = vunpack.c.l.b16 %v71
    %v710 = vunpack.c.h.b16 %v71
    %v711 = vunpack.c.l.b16 %v72
    %v712 = vunpack.c.h.b16 %v72
    %v713 = vunpack.c.l.b16 %v73
    %v714 = vunpack.c.h.b16 %v73
    %v715 = vunpack.c.l.b16 %v74
    %v716 = vunpack.c.h.b16 %v74
    %v717 = vunpack.c.l.b16 %v75
    %v718 = vunpack.c.h.b16 %v75
    %v719 = vunpack.c.l.b16 %v76
    %v720 = vunpack.c.h.b16 %v76
    %v721 = vunpack.c.l.b16 %v77
    %v722 = vunpack.c.h.b16 %v77
    %v723 = vunpack.c.l.b16 %v78
    %v724 = vunpack.c.h.b16 %v78
    %v725 = vunpack.c.l.b16 %v79
    %v726 = vunpack.c.h.b16 %v79
    %v727 = vunpack.c.l.b16 %v80
    %v728 = vunpack.c.h.b16 %v80
    %v729 = vunpack.c.l.b16 %v81
    %v730 = vunpack.c.h.b16 %v81
    %v731 = vunpack.c.l.b16 %v82
    %v732 = vunpack.c.h.b16 %v82
    %v733 = vunpack.c.l.b16 %v83
    %v734 = vunpack.c.h.b16 %v83
    %v735 = vunpack.c.l.b16 %v84
    %v736 = vunpack.c.h.b16 %v84
    %v737 = vunpack.c.l.b16 %v85
    %v738 = vunpack.c.h.b16 %v85
    %v739 = vunpack.c.l.b16 %v86
    %v740 = vunpack.c.h.b16 %v86
    %v741 = vunpack.c.l.b16 %v87
    %v742 = vunpack.c.h.b16 %v87
    %v743 = vunpack.c.l.b16 %v88
    %v744 = vunpack.c.h.b16 %v88
    %v745 = vunpack.c.l.b16 %v89
    %v746 = vunpack.c.h.b16 %v89
    %v747 = vunpack.c.l.b16 %v90
    %v748 = vunpack.c.h.b16 %v90
    %v749 = vunpack.c.l.b16 %v91
    %v750 = vunpack.c.h.b16 %v91
    %v751 = vunpack.c.l.b16 %v92
    %v752 = vunpack.c.h.b16 %v92
    %v753 = vunpack.c.l.b16 %v93
    %v754 = vunpack.c.h.b16 %v93
    %v755 = vunpack.c.l.b16 %v94
    %v756 = vunpack.c.h.b16 %v94
    %v757 = vunpack.c.l.b16 %v95
    %v758 = vunpack.c.h.b16 %v95
    %v759 = vunpack.c.l.b16 %v96
    %v760 = vunpack.c.h.b16 %v96
    %v761 = vunpack.c.l.b16 %v97
    %v762 = vunpack.c.h.b16 %v97
    %v763 = vunpack.c.l.b16 %v98
    %v764 = vunpack.c.h.b16 %v98
    %v765 = vunpack.c.l.b16 %v99
    %v766 = vunpack.c.h.b16 %v99
    %v767 = vunpack.c.l.b16 %v100
    %v768 = vunpack.c.h.b16 %v100
    %v769 = vunpack.c.l.b16 %v101
    %v770 = vunpack.c.h.b16 %v101
    %v771 = vunpack.c.l.b16 %v102
    %v772 = vunpack.c.h.b16 %v102
    %v773 = vunpack.c.l.b16 %v103
    %v774 = vunpack.c.h.b16 %v103
    %v775 = vunpack.c.l.b16 %v104
    %v776 = vunpack.c.h.b16 %v104
    %v777 = vunpack.c.l.b16 %v105
    %v778 = vunpack.c.h.b16 %v105
    %v779 = vunpack.c.l.b16 %v106
    %v780 = vunpack.c.h.b16 %v106
    %v781 = vunpack.c.l.b16 %v107
    %v782 = vunpack.c.h.b16 %v107
    %v783 = vunpack.c.l.b16 %v108
    %v784 = vunpack.c.h.b16 %v108
    %v785 = vunpack.c.l.b16 %v109
    %v786 = vunpack.c.h.b16 %v109
    %v787 = vunpack.c.l.b16 %v110
    %v788 = vunpack.c.h.b16 %v110
    %v789 = vunpack.c.l.b16 %v111
    %v790 = vunpack.c.h.b16 %v111
    %v791 = vunpack.c.l.b16 %v112
    %v792 = vunpack.c.h.b16 %v112
    %v793 = vunpack.c.l.b16 %v113
    %v794 = vunpack.c.h.b16 %v113
    %v795 = vunpack.c.l.b16 %v114
    %v796 = vunpack.c.h.b16 %v114
    %v797 = vunpack.c.l.b16 %v115
    %v798 = vunpack.c.h.b16 %v115
    %v799 = vunpack.c.l.b16 %v116
    %v800 = vunpack.c.h.b16 %v116
    %v801 = vunpack.c.l.b16 %v117
    %v802 = vunpack.c.h.b16 %v117
    %v803 = vunpack.c.l.b16 %v118
    %v804 = vunpack.c.h.b16 %v118
    %v805 = vunpack.c.l.b16 %v119
    %v806 = vunpack.c.h.b16 %v119
    %v807 = vunpack.c.l.b16 %v120
    %v808 = vunpack.c.h.b16 %v120
    %v809 = vunpack.c.l.b16 %v121
    %v810 = vunpack.c.h.b16 %v121
    %v811 = vunpack.c.l.b16 %v122
    %v812 = vunpack.c.h.b16 %v122
    %v813 = vunpack.c.l.b16 %v123
    %v814 = vunpack.c.h.b16 %v123
    %v815 = vunpack.c.l.b16 %v124
    %v816 = vunpack.c.h.b16 %v124
    %v817 = vunpack.c.l.b16 %v125
    %v818 = vunpack.c.h.b16 %v125
    %v819 = vunpack.c.l.b16 %v126
    %v820 = vunpack.c.h.b16 %v126
    %v821 = vunpack.c.l.b16 %v127
    %v822 = vunpack.c.h.b16 %v127
    %v823 = vunpack.c.l.b16 %v128
    %v824 = vunpack.c.h.b16 %v128
    %v825 = vunpack.c.l.b16 %v129
    %v826 = vunpack.c.h.b16 %v129
    %v827 = vunpack.c.l.b16 %v130
    %v828 = vunpack.c.h.b16 %v130
    %v829 = vunpack.c.l.b16 %v131
    %v830 = vunpack.c.h.b16 %v131
    %v831 = vunpack.c.l.b16 %v132
    %v832 = vunpack.c.h.b16 %v132
    %v833 = vunpack.c.l.b16 %v133
    %v834 = vunpack.c.h.b16 %v133
    %v835 = vunpack.c.l.b16 %v134
    %v836 = vunpack.c.h.b16 %v134
    %v837 = vunpack.c.l.b16 %v135
    %v838 = vunpack.c.h.b16 %v135
    %v839 = vunpack.c.l.b16 %v136
    %v840 = vunpack.c.h.b16 %v136
    %v841 = vunpack.c.l.b16 %v137
    %v842 = vunpack.c.h.b16 %v137
    %v843 = vunpack.c.l.b16 %v138
    %v844 = vunpack.c.h.b16 %v138
    %v845 = vunpack.c.l.b16 %v139
    %v846 = vunpack.c.h.b16 %v139
    %v847 = vunpack.c.l.b16 %v140
    %v848 = vunpack.c.h.b16 %v140
    %v849 = vunpack.c.l.b16 %v141
    %v850 = vunpack.c.h.b16 %v141
    %v851 = vunpack.c.l.b16 %v142
    %v852 = vunpack.c.h.b16 %v142
    %v853 = vunpack.c.l.b16 %v143
    %v854 = vunpack.c.h.b16 %v143
    %v855 = vunpack.c.l.b16 %v144
    %v856 = vunpack.c.h.b16 %v144
    %v857 = vunpack.c.l.b16 %v145
    %v858 = vunpack.c.h.b16 %v145
    %v859 = vunpack.c.l.b16 %v146
    %v860 = vunpack.c.h.b16 %v146
    %v861 = vunpack.c.l.b16 %v147
    %v862 = vunpack.c.h.b16 %v147
    %v863 = vunpack.c.l.b16 %v148
    %v864 = vunpack.c.h.b16 %v148
    %v865 = vunpack.c.l.b16 %v149
    %v866 = vunpack.c.h.b16 %v149
    %v867 = vunpack.c.l.b16 %v150
    %v868 = vunpack.c.h.b16 %v150
    %v869 = vunpack.c.l.b16 %v151
    %v870 = vunpack.c.h.b16 %v151
    %v871 = vunpack.c.l.b16 %v152
    %v872 = vunpack.c.h.b16 %v152
    %v873 = vunpack.c.l.b16 %v153
    %v874 = vunpack.c.h.b16 %v153
    %v875 = vunpack.c.l.b16 %v154
    %v876 = vunpack.c.h.b16 %v154
    %v877 = vunpack.c.l.b16 %v155
    %v878 = vunpack.c.h.b16 %v155
    %v879 = vunpack.c.l.b16 %v156
    %v880 = vunpack.c.h.b16 %v156
    %v881 = vunpack.c.l.b16 %v157
    %v882 = vunpack.c.h.b16 %v157
    %v883 = vunpack.c.l.b16 %v158
    %v884 = vunpack.c.h.b16 %v158
    %v885 = vunpack.c.l.b16 %v159
    %v886 = vunpack.c.h.b16 %v159
    %v887 = vunpack.c.l.b16 %v160
    %v888 = vunpack.c.h.b16 %v160
    %v889 = vunpack.c.l.b16 %v161
    %v890 = vunpack.c.h.b16 %v161
    %v891 = vunpack.c.l.b16 %v162
    %v892 = vunpack.c.h.b16 %v162
    %v893 = vunpack.c.l.b16 %v163
    %v894 = vunpack.c.h.b16 %v163
    %v895 = vunpack.c.l.b16 %v164
    %v896 = vunpack.c.h.b16 %v164
    %v897 = vunpack.c.l.b16 %v165
    %v898 = vunpack.c.h.b16 %v165
    %v899 = vunpack.c.l.b16 %v166
    %v900 = vunpack.c.h.b16 %v166
    %v901 = vunpack.c.l.b16 %v167
    %v902 = vunpack.c.h.b16 %v167
    %v903 = vunpack.c.l.b16 %v168
    %v904 = vunpack.c.h.b16 %v168
    %v905 = vunpack.c.l.b16 %v169
    %v906 = vunpack.c.h.b16 %v169
    %v907 = vunpack.c.l.b16 %v170
    %v908 = vunpack.c.h.b16 %v170
    %v909 = vunpack.c.l.b16 %v171
    %v910 = vunpack.c.h.b16 %v171
    %v911 = vunpack.c.l.b16 %v172
    %v912 = vunpack.c.h.b16 %v172
    %v913 = vunpack.c.l.b16 %v173
    %v914 = vunpack.c.h.b16 %v173
    %v915 = vunpack.c.l.b16 %v174
    %v916 = vunpack.c.h.b16 %v174
    %v917 = vunpack.c.l.b16 %v175
    %v918 = vunpack.c.h.b16 %v175
    %v919 = vunpack.c.l.b16 %v176
    %v920 = vunpack.c.h.b16 %v176
    %v921 = vunpack.c.l.b16 %v177
    %v922 = vunpack.c.h.b16 %v177
    %v923 = vunpack.c.l.b16 %v178
    %v924 = vunpack.c.h.b16 %v178
    %v925 = vunpack.c.l.b16 %v179
    %v926 = vunpack.c.h.b16 %v179
    %v927 = vunpack.c.l.b16 %v180
    %v928 = vunpack.c.h.b16 %v180
    %v929 = vunpack.c.l.b16 %v181
    %v930 = vunpack.c.h.b16 %v181
    %v931 = vunpack.c.l.b16 %v182
    %v932 = vunpack.c.h.b16 %v182
    %v933 = vunpack.c.l.b16 %v183
    %v934 = vunpack.c.h.b16 %v183
    %v935 = vunpack.c.l.b16 %v184
    %v936 = vunpack.c.h.b16 %v184
    %v937 = vunpack.c.l.b16 %v185
    %v938 = vunpack.c.h.b16 %v185
    %v939 = vunpack.c.l.b16 %v186
    %v940 = vunpack.c.h.b16 %v186
    %v941 = vunpack.c.l.b16 %v187
    %v942 = vunpack.c.h.b16 %v187
    %v943 = vunpack.c.l.b16 %v188
    %v944 = vunpack.c.h.b16 %v188
    %v945 = vunpack.c.l.b16 %v189
    %v946 = vunpack.c.h.b16 %v189
    %v947 = vunpack.c.l.b16 %v190
    %v948 = vunpack.c.h.b16 %v190
    %v949 = vunpack.c.l.b16 %v191
    %v950 = vunpack.c.h.b16 %v191
    %v951 = vunpack.c.l.b16 %v192
    %v952 = vunpack.c.h.b16 %v192
    %v953 = vunpack.c.l.b16 %v193
    %v954 = vunpack.c.h.b16 %v193
    %v955 = vunpack.c.l.b16 %v194
    %v956 = vunpack.c.h.b16 %v194
    %v957 = vunpack.c.l.b16 %v195
    %v958 = vunpack.c.h.b16 %v195
    %v959 = vunpack.c.l.b16 %v196
    %v960 = vunpack.c.h.b16 %v196
    %v961 = vunpack.c.l.b16 %v197
    %v962 = vunpack.c.h.b16 %v197
    %v963 = vunpack.c.l.b16 %v198
    %v964 = vunpack.c.h.b16 %v198
    %v965 = vunpack.c.l.b16 %v199
    %v966 = vunpack.c.h.b16 %v199
    %v967 = vunpack.c.l.b16 %v200
    %v968 = vunpack.c.h.b16 %v200
    %v969 = vunpack.c.l.b16 %v201
    %v970 = vunpack.c.h.b16 %v201
    %v971 = vunpack.c.l.b16 %v202
    %v972 = vunpack.c.h.b16 %v202
    %v973 = vunpack.c.l.b16 %v203
    %v974 = vunpack.c.h.b16 %v203
    %v975 = vunpack.c.l.b16 %v204
    %v976 = vunpack.c.h.b16 %v204
    %v977 = vunpack.c.l.b16 %v205
    %v978 = vunpack.c.h.b16 %v205
    %v979 = vunpack.c.l.b16 %v206
    %v980 = vunpack.c.h.b16 %v206
    %v981 = vunpack.c.l.b16 %v207
    %v982 = vunpack.c.h.b16 %v207
    %v983 = vunpack.c.l.b16 %v208
    %v984 = vunpack.c.h.b16 %v208
    %v985 = vunpack.c.l.b16 %v209
    %v986 = vunpack.c.h.b16 %v209
    %v987 = vunpack.c.l.b16 %v210
    %v988 = vunpack.c.h.b16 %v210
    %v989 = vunpack.c.l.b16 %v211
    %v990 = vunpack.c.h.b16 %v211
    %v991 = vunpack.c.l.b16 %v212
    %v992 = vunpack.c.h.b16 %v212
    %v993 = vunpack.c.l.b16 %v213
    %v994 = vunpack.c.h.b16 %v213
    %v995 = vunpack.c.l.b16 %v214
    %v996 = vunpack.c.h.b16 %v214
    %v997 = vunpack.c.l.b16 %v215
    %v998 = vunpack.c.h.b16 %v215
    %v999 = vunpack.c.l.b16 %v216
    %v1000 = vunpack.c.h.b16 %v216
    %v1001 = vunpack.c.l.b16 %v217
    %v1002 = vunpack.c.h.b16 %v217
    %v1003 = vunpack.c.l.b16 %v218
    %v1004 = vunpack.c.h.b16 %v218
    %v1005 = vunpack.c.l.b16 %v219
    %v1006 = vunpack.c.h.b16 %v219
    %v1007 = vunpack.c.l.b16 %v220
    %v1008 = vunpack.c.h.b16 %v220
    %v1009 = vunpack.c.l.b16 %v221
    %v1010 = vunpack.c.h.b16 %v221
    %v1011 = vunpack.c.l.b16 %v222
    %v1012 = vunpack.c.h.b16 %v222
    %v1013 = vunpack.c.l.b16 %v223
    %v1014 = vunpack.c.h.b16 %v223
    %v1015 = vunpack.c.l.b16 %v224
    %v1016 = vunpack.c.h.b16 %v224
    %v1017 = vunpack.c.l.b16 %v225
    %v1018 = vunpack.c.h.b16 %v225
    %v1019 = vunpack.c.l.b16 %v226
    %v1020 = vunpack.c.h.b16 %v226
    %v1021 = vunpack.c.l.b16 %v227
    %v1022 = vunpack.c.h.b16 %v227
    %v1023 = vunpack.c.l.b16 %v228
    %v1024 = vunpack.c.h.b16 %v228
    %v1025 = vunpack.c.l.b16 %v229
    %v1026 = vunpack.c.h.b16 %v229
    %v1027 = vunpack.c.l.b16 %v230
    %v1028 = vunpack.c.h.b16 %v230
    %v1029 = vunpack.c.l.b16 %v231
    %v1030 = vunpack.c.h.b16 %v231
    %v1031 = vunpack.c.l.b16 %v232
    %v1032 = vunpack.c.h.b16 %v232
    %v1033 = vunpack.c.l.b16 %v233
    %v1034 = vunpack.c.h.b16 %v233
    %v1035 = vunpack.c.l.b16 %v234
    %v1036 = vunpack.c.h.b16 %v234
    %v1037 = vunpack.c.l.b16 %v235
    %v1038 = vunpack.c.h.b16 %v235
    %v1039 = vunpack.c.l.b16 %v236
    %v1040 = vunpack.c.h.b16 %v236
    %v1041 = vunpack.c.l.b16 %v237
    %v1042 = vunpack.c.h.b16 %v237
    %v1043 = vunpack.c.l.b16 %v238
    %v1044 = vunpack.c.h.b16 %v238
    %v1045 = vunpack.c.l.b16 %v239
    %v1046 = vunpack.c.h.b16 %v239
    %v1047 = vunpack.c.l.b16 %v240
    %v1048 = vunpack.c.h.b16 %v240
    %v1049 = vunpack.c.l.b16 %v241
    %v1050 = vunpack.c.h.b16 %v241
    %v1051 = vunpack.c.l.b16 %v242
    %v1052 = vunpack.c.h.b16 %v242
    %v1053 = vunpack.c.l.b16 %v243
    %v1054 = vunpack.c.h.b16 %v243
    %v1055 = vunpack.c.l.b16 %v244
    %v1056 = vunpack.c.h.b16 %v244
    %v1057 = vunpack.c.l.b16 %v245
    %v1058 = vunpack.c.h.b16 %v245
    %v1059 = vunpack.c.l.b16 %v246
    %v1060 = vunpack.c.h.b16 %v246
    %v1061 = vunpack.c.l.b16 %v247
    %v1062 = vunpack.c.h.b16 %v247
    %v1063 = vunpack.c.l.b16 %v248
    %v1064 = vunpack.c.h.b16 %v248
    %v1065 = vunpack.c.l.b16 %v249
    %v1066 = vunpack.c.h.b16 %v249
    %v1067 = vunpack.c.l.b16 %v250
    %v1068 = vunpack.c.h.b16 %v250
    %v1069 = vunpack.c.l.b16 %v251
    %v1070 = vunpack.c.h.b16 %v251
    %v1071 = vunpack.c.l.b16 %v252
    %v1072 = vunpack.c.h.b16 %v252
    %v1073 = vunpack.c.l.b16 %v253
    %v1074 = vunpack.c.h.b16 %v253
    %v1075 = vunpack.c.l.b16 %v254
    %v1076 = vunpack.c.h.b16 %v254
    %v1077 = vunpack.c.l.b16 %v255
    %v1078 = vunpack.c.h.b16 %v255
    %v1079 = vunpack.c.l.b16 %v256
    %v1080 = vunpack.c.h.b16 %v256
    %v1081 = vunpack.c.l.b16 %v257
    %v1082 = vunpack.c.h.b16 %v257
    %v1083 = vunpack.c.l.b16 %v258
    %v1084 = vunpack.c.h.b16 %v258
    %v1085 = vpack.c.b16 %v709, %v701
    %v1086 = vpack.c.b16 %v710, %v702
    %v1087 = vpack.c.b16 %v711, %v703
    %v1088 = vpack.c.b16 %v712, %v704
    %v1089 = vpack.c.b16 %v713, %v705
    %v1090 = vpack.c.b16 %v714, %v706
    %v1091 = vpack.c.b16 %v715, %v707
    %v1092 = vpack.c.b16 %v716, %v708
    %v1093 = vpack.c.b16 %v725, %v717
    %v1094 = vpack.c.b16 %v726, %v718
    %v1095 = vpack.c.b16 %v727, %v719
    %v1096 = vpack.c.b16 %v728, %v720
    %v1097 = vpack.c.b16 %v729, %v721
    %v1098 = vpack.c.b16 %v730, %v722
    %v1099 = vpack.c.b16 %v731, %v723
    %v1100 = vpack.c.b16 %v732, %v724
    %v1101 = vpack.c.b16 %v741, %v733
    %v1102 = vpack.c.b16 %v742, %v734
    %v1103 = vpack.c.b16 %v743, %v735
    %v1104 = vpack.c.b16 %v744, %v736
    %v1105 = vpack.c.b16 %v745, %v737
    %v1106 = vpack.c.b16 %v746, %v738
    %v1107 = vpack.c.b16 %v747, %v739
    %v1108 = vpack.c.b16 %v748, %v740
    %v1109 = vpack.c.b16 %v757, %v749
    %v1110 = vpack.c.b16 %v758, %v750
    %v1111 = vpack.c.b16 %v759, %v751
    %v1112 = vpack.c.b16 %v760, %v752
    %v1113 = vpack.c.b16 %v761, %v753
    %v1114 = vpack.c.b16 %v762, %v754
    %v1115 = vpack.c.b16 %v763, %v755
    %v1116 = vpack.c.b16 %v764, %v756
    %v1117 = vpack.c.b16 %v773, %v765
    %v1118 = vpack.c.b16 %v774, %v766
    %v1119 = vpack.c.b16 %v775, %v767
    %v1120 = vpack.c.b16 %v776, %v768
    %v1121 = vpack.c.b16 %v777, %v769
    %v1122 = vpack.c.b16 %v778, %v770
    %v1123 = vpack.c.b16 %v779, %v771
    %v1124 = vpack.c.b16 %v780, %v772
    %v1125 = vpack.c.b16 %v789, %v781
    %v1126 = vpack.c.b16 %v790, %v782
    %v1127 = vpack.c.b16 %v791, %v783
    %v1128 = vpack.c.b16 %v792, %v784
    %v1129 = vpack.c.b16 %v793, %v785
    %v1130 = vpack.c.b16 %v794, %v786
    %v1131 = vpack.c.b16 %v795, %v787
    %v1132 = vpack.c.b16 %v796, %v788
    %v1133 = vpack.c.b16 %v805, %v797
    %v1134 = vpack.c.b16 %v806, %v798
    %v1135 = vpack.c.b16 %v807, %v799
    %v1136 = vpack.c.b16 %v808, %v800
    %v1137 = vpack.c.b16 %v809, %v801
    %v1138 = vpack.c.b16 %v810, %v802
    %v1139 = vpack.c.b16 %v811, %v803
    %v1140 = vpack.c.b16 %v812, %v804
    %v1141 = vpack.c.b16 %v821, %v813
    %v1142 = vpack.c.b16 %v822, %v814
    %v1143 = vpack.c.b16 %v823, %v815
    %v1144 = vpack.c.b16 %v824, %v816
    %v1145 = vpack.c.b16 %v825, %v817
    %v1146 = vpack.c.b16 %v826, %v818
    %v1147 = vpack.c.b16 %v827, %v819
    %v1148 = vpack.c.b16 %v828, %v820
    %v1149 = vpack.c.b16 %v837, %v829
    %v1150 = vpack.c.b16 %v838, %v830
    %v1151 = vpack.c.b16 %v839, %v831
    %v1152 = vpack.c.b16 %v840, %v832
    %v1153 = vpack.c.b16 %v841, %v833
    %v1154 = vpack.c.b16 %v842, %v834
    %v1155 = vpack.c.b16 %v843, %v835
    %v1156 = vpack.c.b16 %v844, %v836
    %v1157 = vpack.c.b16 %v853, %v845
    %v1158 = vpack.c.b16 %v854, %v846
    %v1159 = vpack.c.b16 %v855, %v847
    %v1160 = vpack.c.b16 %v856, %v848
    %v1161 = vpack.c.b16 %v857, %v849
    %v1162 = vpack.c.b16 %v858, %v850
    %v1163 = vpack.c.b16 %v859, %v851
    %v1164 = vpack.c.b16 %v860, %v852
    %v1165 = vpack.c.b16 %v869, %v861
    %v1166 = vpack.c.b16 %v870, %v862
    %v1167 = vpack.c.b16 %v871, %v863
    %v1168 = vpack.c.b16 %v872, %v864
    %v1169 = vpack.c.b16 %v873, %v865
    %v1170 = vpack.c.b16 %v874, %v866
    %v1171 = vpack.c.b16 %v875, %v867
    %v1172 = vpack.c.b16 %v876, %v868
    %v1173 = vpack.c.b16 %v885, %v877
    %v1174 = vpack.c.b16 %v886, %v878
    %v1175 = vpack.c.b16 %v887, %v879
    %v1176 = vpack.c.b16 %v888, %v880
    %v1177 = vpack.c.b16 %v889, %v881
    %v1178 = vpack.c.b16 %v890, %v882
    %v1179 = vpack.c.b16 %v891, %v883
    %v1180 = vpack.c.b16 %v892, %v884
    %v1181 = vpack.c.b16 %v901, %v893
    %v1182 = vpack.c.b16 %v902, %v894
    %v1183 = vpack.c.b16 %v903, %v895
    %v1184 = vpack.c.b16 %v904, %v896
    %v1185 = vpack.c.b16 %v905, %v897
    %v1186 = vpack.c.b16 %v906, %v898
    %v1187 = vpack.c.b16 %v907, %v899
    %v1188 = vpack.c.b16 %v908, %v900
    %v1189 = vpack.c.b16 %v917, %v909
    %v1190 = vpack.c.b16 %v918, %v910
    %v1191 = vpack.c.b16 %v919, %v911
    %v1192 = vpack.c.b16 %v920, %v912
    %v1193 = vpack.c.b16 %v921, %v913
    %v1194 = vpack.c.b16 %v922, %v914
    %v1195 = vpack.c.b16 %v923, %v915
    %v1196 = vpack.c.b16 %v924, %v916
    %v1197 = vpack.c.b16 %v933, %v925
    %v1198 = vpack.c.b16 %v934, %v926
    %v1199 = vpack.c.b16 %v935, %v927
    %v1200 = vpack.c.b16 %v936, %v928
    %v1201 = vpack.c.b16 %v937, %v929
    %v1202 = vpack.c.b16 %v938, %v930
    %v1203 = vpack.c.b16 %v939, %v931
    %v1204 = vpack.c.b16 %v940, %v932
    %v1205 = vpack.c.b16 %v949, %v941
    %v1206 = vpack.c.b16 %v950, %v942
    %v1207 = vpack.c.b16 %v951, %v943
    %v1208 = vpack.c.b16 %v952, %v944
    %v1209 = vpack.c.b16 %v953, %v945
    %v1210 = vpack.c.b16 %v954, %v946
    %v1211 = vpack.c.b16 %v955, %v947
    %v1212 = vpack.c.b16 %v956, %v948
    %v1213 = vpack.c.b16 %v965, %v957
    %v1214 = vpack.c.b16 %v966, %v958
    %v1215 = vpack.c.b16 %v967, %v959
    %v1216 = vpack.c.b16 %v968, %v960
    %v1217 = vpack.c.b16 %v969, %v961
    %v1218 = vpack.c.b16 %v970, %v962
    %v1219 = vpack.c.b16 %v971, %v963
    %v1220 = vpack.c.b16 %v972, %v964
    %v1221 = vpack.c.b16 %v981, %v973
    %v1222 = vpack.c.b16 %v982, %v974
    %v1223 = vpack.c.b16 %v983, %v975
    %v1224 = vpack.c.b16 %v984, %v976
    %v1225 = vpack.c.b16 %v985, %v977
    %v1226 = vpack.c.b16 %v986, %v978
    %v1227 = vpack.c.b16 %v987, %v979
    %v1228 = vpack.c.b16 %v988, %v980
    %v1229 = vpack.c.b16 %v997, %v989
    %v1230 = vpack.c.b16 %v998, %v990
    %v1231 = vpack.c.b16 %v999, %v991
    %v1232 = vpack.c.b16 %v1000, %v992
    %v1233 = vpack.c.b16 %v1001, %v993
    %v1234 = vpack.c.b16 %v1002, %v994
    %v1235 = vpack.c.b16 %v1003, %v995
    %v1236 = vpack.c.b16 %v1004, %v996
    %v1237 = vpack.c.b16 %v1013, %v1005
    %v1238 = vpack.c.b16 %v1014, %v1006
    %v1239 = vpack.c.b16 %v1015, %v1007
    %v1240 = vpack.c.b16 %v1016, %v1008
    %v1241 = vpack.c.b16 %v1017, %v1009
    %v1242 = vpack.c.b16 %v1018, %v1010
    %v1243 = vpack.c.b16 %v1019, %v1011
    %v1244 = vpack.c.b16 %v1020, %v1012
    %v1245 = vpack.c.b16 %v1029, %v1021
    %v1246 = vpack.c.b16 %v1030, %v1022
    %v1247 = vpack.c.b16 %v1031, %v1023
    %v1248 = vpack.c.b16 %v1032, %v1024
    %v1249 = vpack.c.b16 %v1033, %v1025
    %v1250 = vpack.c.b16 %v1034, %v1026
    %v1251 = vpack.c.b16 %v1035, %v1027
    %v1252 = vpack.c.b16 %v1036, %v1028
    %v1253 = vpack.c.b16 %v1045, %v1037
    %v1254 = vpack.c.b16 %v1046, %v1038
    %v1255 = vpack.c.b16 %v1047, %v1039
    %v1256 = vpack.c.b16 %v1048, %v1040
    %v1257 = vpack.c.b16 %v1049, %v1041
    %v1258 = vpack.c.b16 %v1050, %v1042
    %v1259 = vpack.c.b16 %v1051, %v1043
    %v1260 = vpack.c.b16 %v1052, %v1044
    %v1261 = vpack.c.b16 %v1061, %v1053
    %v1262 = vpack.c.b16 %v1062, %v1054
    %v1263 = vpack.c.b16 %v1063, %v1055
    %v1264 = vpack.c.b16 %v1064, %v1056
    %v1265 = vpack.c.b16 %v1065, %v1057
    %v1266 = vpack.c.b16 %v1066, %v1058
    %v1267 = vpack.c.b16 %v1067, %v1059
    %v1268 = vpack.c.b16 %v1068, %v1060
    %v1269 = vpack.c.b16 %v1077, %v1069
    %v1270 = vpack.c.b16 %v1078, %v1070
    %v1271 = vpack.c.b16 %v1079, %v1071
    %v1272 = vpack.c.b16 %v1080, %v1072
    %v1273 = vpack.c.b16 %v1081, %v1073
    %v1274 = vpack.c.b16 %v1082, %v1074
    %v1275 = vpack.c.b16 %v1083, %v1075
    %v1276 = vpack.c.b16 %v1084, %v1076
    %1469 = vmatprep.subr.bf16.mxu0 %v1086
    %1470 = vmatpush1.bf16.msra.mxu0 %v1085
    %1471 = vmatprep.subr.bf16.mxu0 %v1094
    %1472 = vmatpush1.bf16.msra.mxu0 %v1093
    %1473 = vmatprep.subr.bf16.mxu0 %v1102
    %1474 = vmatpush1.bf16.msra.mxu0 %v1101
    %1475 = vmatprep.subr.bf16.mxu0 %v1110
    %1476 = vmatpush1.bf16.msra.mxu0 %v1109
    %1477 = vmatprep.subr.bf16.mxu0 %v1118
    %1478 = vmatpush1.bf16.msra.mxu0 %v1117
    %1479 = vmatprep.subr.bf16.mxu0 %v1126
    %1480 = vmatpush1.bf16.msra.mxu0 %v1125
    %1481 = vmatprep.subr.bf16.mxu0 %v1134
    %1482 = vmatpush1.bf16.msra.mxu0 %v1133
    %1483 = vmatprep.subr.bf16.mxu0 %v1142
    %1484 = vmatpush1.bf16.msra.mxu0 %v1141
    %1485 = vmatprep.subr.bf16.mxu0 %v1150
    %1486 = vmatpush1.bf16.msra.mxu0 %v1149
    %1487 = vmatprep.subr.bf16.mxu0 %v1158
    %1488 = vmatpush1.bf16.msra.mxu0 %v1157
    %1489 = vmatprep.subr.bf16.mxu0 %v1166
    %1490 = vmatpush1.bf16.msra.mxu0 %v1165
    %1491 = vmatprep.subr.bf16.mxu0 %v1174
    %1492 = vmatpush1.bf16.msra.mxu0 %v1173
    %1493 = vmatprep.subr.bf16.mxu0 %v1182
    %1494 = vmatpush1.bf16.msra.mxu0 %v1181
    %1495 = vmatprep.subr.bf16.mxu0 %v1190
    %1496 = vmatpush1.bf16.msra.mxu0 %v1189
    %1497 = vmatprep.subr.bf16.mxu0 %v1198
    %1498 = vmatpush1.bf16.msra.mxu0 %v1197
    %1499 = vmatprep.subr.bf16.mxu0 %v1206
    %1500 = vmatpush1.bf16.msra.mxu0 %v1205
    %1501 = vmatprep.mubr.bf16.mxu0 %v507
    %1502 = vmatmul.mubr.bf16.gmra.mrb[0].mxu0 %v506
    %v1503 = vpop.f32.mrb[0].mxu0
    %v1504 = vadd.f32 %v264, %v1503
    %v1505 = vpop.f32.mrb[0].mxu0
    %v1506 = vadd.f32 %v268, %v1505
    %v1507 = vpop.f32.mrb[0].mxu0
    %v1508 = vpop.f32.mrb[0].mxu0
    %1509 = vdwg.mxu0
    %1510 = vmatprep.subr.bf16.mxu0 %v1214
    %1511 = vmatpush1.bf16.msra.mxu0 %v1213
    %1512 = vmatprep.subr.bf16.mxu0 %v1222
    %1513 = vmatpush1.bf16.msra.mxu0 %v1221
    %1514 = vmatprep.subr.bf16.mxu0 %v1230
    %1515 = vmatpush1.bf16.msra.mxu0 %v1229
    %1516 = vmatprep.subr.bf16.mxu0 %v1238
    %1517 = vmatpush1.bf16.msra.mxu0 %v1237
    %1518 = vmatprep.subr.bf16.mxu0 %v1246
    %1519 = vmatpush1.bf16.msra.mxu0 %v1245
    %1520 = vmatprep.subr.bf16.mxu0 %v1254
    %1521 = vmatpush1.bf16.msra.mxu0 %v1253
    %1522 = vmatprep.subr.bf16.mxu0 %v1262
    %1523 = vmatpush1.bf16.msra.mxu0 %v1261
    %1524 = vmatprep.subr.bf16.mxu0 %v1270
    %1525 = vmatpush1.bf16.msra.mxu0 %v1269
    %1526 = vmatprep.subr.bf16.mxu0 0
    %1527 = vmatpush1.bf16.msra.mxu0 0
    %1528 = vmatprep.subr.bf16.mxu0 0
    %1529 = vmatpush1.bf16.msra.mxu0 0
    %1530 = vmatprep.subr.bf16.mxu0 0
    %1531 = vmatpush1.bf16.msra.mxu0 0
    %1532 = vmatprep.subr.bf16.mxu0 0
    %1533 = vmatpush1.bf16.msra.mxu0 0
    %1534 = vmatprep.subr.bf16.mxu0 0
    %1535 = vmatpush1.bf16.msra.mxu0 0
    %1536 = vmatprep.subr.bf16.mxu0 0
    %1537 = vmatpush1.bf16.msra.mxu0 0
    %1538 = vmatprep.subr.bf16.mxu0 0
    %1539 = vmatpush1.bf16.msra.mxu0 0
    %1540 = vmatprep.subr.bf16.mxu0 0
    %1541 = vmatpush1.bf16.msra.mxu0 0
    %1542 = vmatprep.mubr.bf16.mxu0 0
    %1543 = vmatmul.mubr.bf16.gmra.mrb[0].mxu0 %v508
    %v1544 = vpop.f32.mrb[0].mxu0
    %v1545 = vadd.f32 %v1504, %v1544
    %v1546 = vpop.f32.mrb[0].mxu0
    %v1547 = vadd.f32 %v1506, %v1546
    %v1548 = vpop.f32.mrb[0].mxu0
    %v1549 = vpop.f32.mrb[0].mxu0
    %1550 = vdwg.mxu0
    %1551 = vmatprep.subr.bf16.mxu0 %v1088
    %1552 = vmatpush1.bf16.msra.mxu0 %v1087
    %1553 = vmatprep.subr.bf16.mxu0 %v1096
    %1554 = vmatpush1.bf16.msra.mxu0 %v1095
    %1555 = vmatprep.subr.bf16.mxu0 %v1104
    %1556 = vmatpush1.bf16.msra.mxu0 %v1103
    %1557 = vmatprep.subr.bf16.mxu0 %v1112
    %1558 = vmatpush1.bf16.msra.mxu0 %v1111
    %1559 = vmatprep.subr.bf16.mxu0 %v1120
    %1560 = vmatpush1.bf16.msra.mxu0 %v1119
    %1561 = vmatprep.subr.bf16.mxu0 %v1128
    %1562 = vmatpush1.bf16.msra.mxu0 %v1127
    %1563 = vmatprep.subr.bf16.mxu0 %v1136
    %1564 = vmatpush1.bf16.msra.mxu0 %v1135
    %1565 = vmatprep.subr.bf16.mxu0 %v1144
    %1566 = vmatpush1.bf16.msra.mxu0 %v1143
    %1567 = vmatprep.subr.bf16.mxu0 %v1152
    %1568 = vmatpush1.bf16.msra.mxu0 %v1151
    %1569 = vmatprep.subr.bf16.mxu0 %v1160
    %1570 = vmatpush1.bf16.msra.mxu0 %v1159
    %1571 = vmatprep.subr.bf16.mxu0 %v1168
    %1572 = vmatpush1.bf16.msra.mxu0 %v1167
    %1573 = vmatprep.subr.bf16.mxu0 %v1176
    %1574 = vmatpush1.bf16.msra.mxu0 %v1175
    %1575 = vmatprep.subr.bf16.mxu0 %v1184
    %1576 = vmatpush1.bf16.msra.mxu0 %v1183
    %1577 = vmatprep.subr.bf16.mxu0 %v1192
    %1578 = vmatpush1.bf16.msra.mxu0 %v1191
    %1579 = vmatprep.subr.bf16.mxu0 %v1200
    %1580 = vmatpush1.bf16.msra.mxu0 %v1199
    %1581 = vmatprep.subr.bf16.mxu0 %v1208
    %1582 = vmatpush1.bf16.msra.mxu0 %v1207
    %1583 = vmatprep.mubr.bf16.mxu0 %v507
    %1584 = vmatmul.mubr.bf16.gmra.mrb[0].mxu0 %v506
    %v1585 = vpop.f32.mrb[0].mxu0
    %v1586 = vadd.f32 %v272, %v1585
    %v1587 = vpop.f32.mrb[0].mxu0
    %v1588 = vadd.f32 %v276, %v1587
    %v1589 = vpop.f32.mrb[0].mxu0
    %v1590 = vpop.f32.mrb[0].mxu0
    %1591 = vdwg.mxu0
    %1592 = vmatprep.subr.bf16.mxu0 %v1216
    %1593 = vmatpush1.bf16.msra.mxu0 %v1215
    %1594 = vmatprep.subr.bf16.mxu0 %v1224
    %1595 = vmatpush1.bf16.msra.mxu0 %v1223
    %1596 = vmatprep.subr.bf16.mxu0 %v1232
    %1597 = vmatpush1.bf16.msra.mxu0 %v1231
    %1598 = vmatprep.subr.bf16.mxu0 %v1240
    %1599 = vmatpush1.bf16.msra.mxu0 %v1239
    %1600 = vmatprep.subr.bf16.mxu0 %v1248
    %1601 = vmatpush1.bf16.msra.mxu0 %v1247
    %1602 = vmatprep.subr.bf16.mxu0 %v1256
    %1603 = vmatpush1.bf16.msra.mxu0 %v1255
    %1604 = vmatprep.subr.bf16.mxu0 %v1264
    %1605 = vmatpush1.bf16.msra.mxu0 %v1263
    %1606 = vmatprep.subr.bf16.mxu0 %v1272
    %1607 = vmatpush1.bf16.msra.mxu0 %v1271
    %1608 = vmatprep.subr.bf16.mxu0 0
    %1609 = vmatpush1.bf16.msra.mxu0 0
    %1610 = vmatprep.subr.bf16.mxu0 0
    %1611 = vmatpush1.bf16.msra.mxu0 0
    %1612 = vmatprep.subr.bf16.mxu0 0
    %1613 = vmatpush1.bf16.msra.mxu0 0
    %1614 = vmatprep.subr.bf16.mxu0 0
    %1615 = vmatpush1.bf16.msra.mxu0 0
    %1616 = vmatprep.subr.bf16.mxu0 0
    %1617 = vmatpush1.bf16.msra.mxu0 0
    %1618 = vmatprep.subr.bf16.mxu0 0
    %1619 = vmatpush1.bf16.msra.mxu0 0
    %1620 = vmatprep.subr.bf16.mxu0 0
    %1621 = vmatpush1.bf16.msra.mxu0 0
    %1622 = vmatprep.subr.bf16.mxu0 0
    %1623 = vmatpush1.bf16.msra.mxu0 0
    %1624 = vmatprep.mubr.bf16.mxu0 0
    %1625 = vmatmul.mubr.bf16.gmra.mrb[0].mxu0 %v508
    %v1626 = vpop.f32.mrb[0].mxu0
    %v1627 = vadd.f32 %v1586, %v1626
    %v1628 = vpop.f32.mrb[0].mxu0
    %v1629 = vadd.f32 %v1588, %v1628
    %v1630 = vpop.f32.mrb[0].mxu0
    %v1631 = vpop.f32.mrb[0].mxu0
    %1632 = vdwg.mxu0
    %1633 = vmatprep.subr.bf16.mxu0 %v1090
    %1634 = vmatpush1.bf16.msra.mxu0 %v1089
    %1635 = vmatprep.subr.bf16.mxu0 %v1098
    %1636 = vmatpush1.bf16.msra.mxu0 %v1097
    %1637 = vmatprep.subr.bf16.mxu0 %v1106
    %1638 = vmatpush1.bf16.msra.mxu0 %v1105
    %1639 = vmatprep.subr.bf16.mxu0 %v1114
    %1640 = vmatpush1.bf16.msra.mxu0 %v1113
    %1641 = vmatprep.subr.bf16.mxu0 %v1122
    %1642 = vmatpush1.bf16.msra.mxu0 %v1121
    %1643 = vmatprep.subr.bf16.mxu0 %v1130
    %1644 = vmatpush1.bf16.msra.mxu0 %v1129
    %1645 = vmatprep.subr.bf16.mxu0 %v1138
    %1646 = vmatpush1.bf16.msra.mxu0 %v1137
    %1647 = vmatprep.subr.bf16.mxu0 %v1146
    %1648 = vmatpush1.bf16.msra.mxu0 %v1145
    %1649 = vmatprep.subr.bf16.mxu0 %v1154
    %1650 = vmatpush1.bf16.msra.mxu0 %v1153
    %1651 = vmatprep.subr.bf16.mxu0 %v1162
    %1652 = vmatpush1.bf16.msra.mxu0 %v1161
    %1653 = vmatprep.subr.bf16.mxu0 %v1170
    %1654 = vmatpush1.bf16.msra.mxu0 %v1169
    %1655 = vmatprep.subr.bf16.mxu0 %v1178
    %1656 = vmatpush1.bf16.msra.mxu0 %v1177
    %1657 = vmatprep.subr.bf16.mxu0 %v1186
    %1658 = vmatpush1.bf16.msra.mxu0 %v1185
    %1659 = vmatprep.subr.bf16.mxu0 %v1194
    %1660 = vmatpush1.bf16.msra.mxu0 %v1193
    %1661 = vmatprep.subr.bf16.mxu0 %v1202
    %1662 = vmatpush1.bf16.msra.mxu0 %v1201
    %1663 = vmatprep.subr.bf16.mxu0 %v1210
    %1664 = vmatpush1.bf16.msra.mxu0 %v1209
    %1665 = vmatprep.mubr.bf16.mxu0 %v507
    %1666 = vmatmul.mubr.bf16.gmra.mrb[0].mxu0 %v506
    %v1667 = vpop.f32.mrb[0].mxu0
    %v1668 = vadd.f32 %v280, %v1667
    %v1669 = vpop.f32.mrb[0].mxu0
    %v1670 = vadd.f32 %v284, %v1669
    %v1671 = vpop.f32.mrb[0].mxu0
    %v1672 = vpop.f32.mrb[0].mxu0
    %1673 = vdwg.mxu0
    %1674 = vmatprep.subr.bf16.mxu0 %v1218
    %1675 = vmatpush1.bf16.msra.mxu0 %v1217
    %1676 = vmatprep.subr.bf16.mxu0 %v1226
    %1677 = vmatpush1.bf16.msra.mxu0 %v1225
    %1678 = vmatprep.subr.bf16.mxu0 %v1234
    %1679 = vmatpush1.bf16.msra.mxu0 %v1233
    %1680 = vmatprep.subr.bf16.mxu0 %v1242
    %1681 = vmatpush1.bf16.msra.mxu0 %v1241
    %1682 = vmatprep.subr.bf16.mxu0 %v1250
    %1683 = vmatpush1.bf16.msra.mxu0 %v1249
    %1684 = vmatprep.subr.bf16.mxu0 %v1258
    %1685 = vmatpush1.bf16.msra.mxu0 %v1257
    %1686 = vmatprep.subr.bf16.mxu0 %v1266
    %1687 = vmatpush1.bf16.msra.mxu0 %v1265
    %1688 = vmatprep.subr.bf16.mxu0 %v1274
    %1689 = vmatpush1.bf16.msra.mxu0 %v1273
    %1690 = vmatprep.subr.bf16.mxu0 0
    %1691 = vmatpush1.bf16.msra.mxu0 0
    %1692 = vmatprep.subr.bf16.mxu0 0
    %1693 = vmatpush1.bf16.msra.mxu0 0
    %1694 = vmatprep.subr.bf16.mxu0 0
    %1695 = vmatpush1.bf16.msra.mxu0 0
    %1696 = vmatprep.subr.bf16.mxu0 0
    %1697 = vmatpush1.bf16.msra.mxu0 0
    %1698 = vmatprep.subr.bf16.mxu0 0
    %1699 = vmatpush1.bf16.msra.mxu0 0
    %1700 = vmatprep.subr.bf16.mxu0 0
    %1701 = vmatpush1.bf16.msra.mxu0 0
    %1702 = vmatprep.subr.bf16.mxu0 0
    %1703 = vmatpush1.bf16.msra.mxu0 0
    %1704 = vmatprep.subr.bf16.mxu0 0
    %1705 = vmatpush1.bf16.msra.mxu0 0
    %1706 = vmatprep.mubr.bf16.mxu0 0
    %1707 = vmatmul.mubr.bf16.gmra.mrb[0].mxu0 %v508
    %v1708 = vpop.f32.mrb[0].mxu0
    %v1709 = vadd.f32 %v1668, %v1708
    %v1710 = vpop.f32.mrb[0].mxu0
    %v1711 = vadd.f32 %v1670, %v1710
    %v1712 = vpop.f32.mrb[0].mxu0
    %v1713 = vpop.f32.mrb[0].mxu0
    %1714 = vdwg.mxu0
    %1715 = vmatprep.subr.bf16.mxu0 %v1092
    %1716 = vmatpush1.bf16.msra.mxu0 %v1091
    %1717 = vmatprep.subr.bf16.mxu0 %v1100
    %1718 = vmatpush1.bf16.msra.mxu0 %v1099
    %1719 = vmatprep.subr.bf16.mxu0 %v1108
    %1720 = vmatpush1.bf16.msra.mxu0 %v1107
    %1721 = vmatprep.subr.bf16.mxu0 %v1116
    %1722 = vmatpush1.bf16.msra.mxu0 %v1115
    %1723 = vmatprep.subr.bf16.mxu0 %v1124
    %1724 = vmatpush1.bf16.msra.mxu0 %v1123
    %1725 = vmatprep.subr.bf16.mxu0 %v1132
    %1726 = vmatpush1.bf16.msra.mxu0 %v1131
    %1727 = vmatprep.subr.bf16.mxu0 %v1140
    %1728 = vmatpush1.bf16.msra.mxu0 %v1139
    %1729 = vmatprep.subr.bf16.mxu0 %v1148
    %1730 = vmatpush1.bf16.msra.mxu0 %v1147
    %1731 = vmatprep.subr.bf16.mxu0 %v1156
    %1732 = vmatpush1.bf16.msra.mxu0 %v1155
    %1733 = vmatprep.subr.bf16.mxu0 %v1164
    %1734 = vmatpush1.bf16.msra.mxu0 %v1163
    %1735 = vmatprep.subr.bf16.mxu0 %v1172
    %1736 = vmatpush1.bf16.msra.mxu0 %v1171
    %1737 = vmatprep.subr.bf16.mxu0 %v1180
    %1738 = vmatpush1.bf16.msra.mxu0 %v1179
    %1739 = vmatprep.subr.bf16.mxu0 %v1188
    %1740 = vmatpush1.bf16.msra.mxu0 %v1187
    %1741 = vmatprep.subr.bf16.mxu0 %v1196
    %1742 = vmatpush1.bf16.msra.mxu0 %v1195
    %1743 = vmatprep.subr.bf16.mxu0 %v1204
    %1744 = vmatpush1.bf16.msra.mxu0 %v1203
    %1745 = vmatprep.subr.bf16.mxu0 %v1212
    %1746 = vmatpush1.bf16.msra.mxu0 %v1211
    %1747 = vmatprep.mubr.bf16.mxu0 %v507
    %1748 = vmatmul.mubr.bf16.gmra.mrb[0].mxu0 %v506
    %v1749 = vpop.f32.mrb[0].mxu0
    %v1750 = vadd.f32 %v288, %v1749
    %v1751 = vpop.f32.mrb[0].mxu0
    %v1752 = vadd.f32 %v292, %v1751
    %v1753 = vpop.f32.mrb[0].mxu0
    %v1754 = vpop.f32.mrb[0].mxu0
    %1755 = vdwg.mxu0
    %1756 = vmatprep.subr.bf16.mxu0 %v1220
    %1757 = vmatpush1.bf16.msra.mxu0 %v1219
    %1758 = vmatprep.subr.bf16.mxu0 %v1228
    %1759 = vmatpush1.bf16.msra.mxu0 %v1227
    %1760 = vmatprep.subr.bf16.mxu0 %v1236
    %1761 = vmatpush1.bf16.msra.mxu0 %v1235
    %1762 = vmatprep.subr.bf16.mxu0 %v1244
    %1763 = vmatpush1.bf16.msra.mxu0 %v1243
    %1764 = vmatprep.subr.bf16.mxu0 %v1252
    %1765 = vmatpush1.bf16.msra.mxu0 %v1251
    %1766 = vmatprep.subr.bf16.mxu0 %v1260
    %1767 = vmatpush1.bf16.msra.mxu0 %v1259
    %1768 = vmatprep.subr.bf16.mxu0 %v1268
    %1769 = vmatpush1.bf16.msra.mxu0 %v1267
    %1770 = vmatprep.subr.bf16.mxu0 %v1276
    %1771 = vmatpush1.bf16.msra.mxu0 %v1275
    %1772 = vmatprep.subr.bf16.mxu0 0
    %1773 = vmatpush1.bf16.msra.mxu0 0
    %1774 = vmatprep.subr.bf16.mxu0 0
    %1775 = vmatpush1.bf16.msra.mxu0 0
    %1776 = vmatprep.subr.bf16.mxu0 0
    %1777 = vmatpush1.bf16.msra.mxu0 0
    %1778 = vmatprep.subr.bf16.mxu0 0
    %1779 = vmatpush1.bf16.msra.mxu0 0
    %1780 = vmatprep.subr.bf16.mxu0 0
    %1781 = vmatpush1.bf16.msra.mxu0 0
    %1782 = vmatprep.subr.bf16.mxu0 0
    %1783 = vmatpush1.bf16.msra.mxu0 0
    %1784 = vmatprep.subr.bf16.mxu0 0
    %1785 = vmatpush1.bf16.msra.mxu0 0
    %1786 = vmatprep.subr.bf16.mxu0 0
    %1787 = vmatpush1.bf16.msra.mxu0 0
    %1788 = vmatprep.mubr.bf16.mxu0 0
    %1789 = vmatmul.mubr.bf16.gmra.mrb[0].mxu0 %v508
    %v1790 = vpop.f32.mrb[0].mxu0
    %v1791 = vadd.f32 %v1750, %v1790
    %v1792 = vpop.f32.mrb[0].mxu0
    %v1793 = vadd.f32 %v1752, %v1792
    %v1794 = vpop.f32.mrb[0].mxu0
    %v1795 = vpop.f32.mrb[0].mxu0
    %1796 = vdwg.mxu0
    %v1797 = vxor.u32 %v1545, 2147483648
    %v1798 = vmul.f32 %v1797, 1.442695
    %v1799 = vpow.pop %v1798
    %v1800 = vadd.f32 %v1799, 1.0
    %v1801 = vrcp.pop %v1800
    %v1802 = vmul.f32 1.0, %v1801
    %v1803 = vxor.u32 %v1547, 2147483648
    %v1804 = vmul.f32 %v1803, 1.442695
    %v1805 = vpow.pop %v1804
    %v1806 = vadd.f32 %v1805, 1.0
    %v1807 = vrcp.pop %v1806
    %v1808 = vmul.f32 1.0, %v1807
    %v1809 = vtanh.pop %v1627
    %v1810 = vxor.u32 %v1629, 2147483648
    %v1811 = vmul.f32 %v1810, 1.442695
    %v1812 = vpow.pop %v1811
    %v1813 = vadd.f32 %v1812, 1.0
    %v1814 = vrcp.pop %v1813
    %v1815 = vmul.f32 1.0, %v1814
    %v1816 = vmul.f32 %v1808, %v327
    %v1817 = vmul.f32 %v1802, %v1809
    %v1818 = vadd.f32 %v1816, %v1817
    %v1819 = vtanh.pop %v1818
    %v1820 = vmul.f32 %v1815, %v1819
    %v1821 = vxor.u32 %v1709, 2147483648
    %v1822 = vmul.f32 %v1821, 1.442695
    %v1823 = vpow.pop %v1822
    %v1824 = vadd.f32 %v1823, 1.0
    %v1825 = vrcp.pop %v1824
    %v1826 = vmul.f32 1.0, %v1825
    %v1827 = vxor.u32 %v1711, 2147483648
    %v1828 = vmul.f32 %v1827, 1.442695
    %v1829 = vpow.pop %v1828
    %v1830 = vadd.f32 %v1829, 1.0
    %v1831 = vrcp.pop %v1830
    %v1832 = vmul.f32 1.0, %v1831
    %v1833 = vtanh.pop %v1791
    %v1834 = vxor.u32 %v1793, 2147483648
    %v1835 = vmul.f32 %v1834, 1.442695
    %v1836 = vpow.pop %v1835
    %v1837 = vadd.f32 %v1836, 1.0
    %v1838 = vrcp.pop %v1837
    %v1839 = vmul.f32 1.0, %v1838
    %v1840 = vmul.f32 %v1832, %v505
    %v1841 = vmul.f32 %v1826, %v1833
    %v1842 = vadd.f32 %v1840, %v1841
    %v1843 = vtanh.pop %v1842
    %v1844 = vmul.f32 %v1839, %v1843
    %vm1845 = vcmp.gt.f32.partialorder %v356, 0.0
    %vm1846 = vcmp.gt.f32.partialorder %v364, 0.0
    %vm1847 = vcmp.gt.f32.partialorder %v372, 0.0
    %vm1848 = vcmp.gt.f32.partialorder %v380, 0.0
    %vm1849 = vcmp.gt.f32.partialorder %v388, 0.0
    %vm1850 = vcmp.gt.f32.partialorder %v396, 0.0
    %vm1851 = vcmp.gt.f32.partialorder %v404, 0.0
    %vm1852 = vcmp.gt.f32.partialorder %v412, 0.0
    %v1854 = vcombine.high %v1844, %v1844
    %v1856 = vunpack.c.l.s4 1966171168
    %v1857 = vunpack.c.0.s8 %v1856
    %v1858 = vlaneseq
    %v1859 = vshrl.u32 %v1858, 7
    %v1860 = vsub.s32 %v1857, %v1859
    %v1861 = vrot.slane %v1844, %v1860
    %v1863 = vunpack.c.l.s4 1966171168
    %v1864 = vunpack.c.0.s8 %v1863
    %v1865 = vlaneseq
    %v1866 = vshrl.u32 %v1865, 7
    %v1867 = vsub.s32 %v1864, %v1866
    %v1868 = vrot.slane %v1854, %v1867
    %v1869 = vcombine.high %v1861, %v1861
    %v1870 = vcombine.high %v1868, %v1868
    %v1872 = vunpack.c.l.s4 1966171168
    %v1873 = vunpack.c.0.s8 %v1872
    %v1874 = vlaneseq
    %v1875 = vshrl.u32 %v1874, 7
    %v1876 = vsub.s32 %v1873, %v1875
    %v1877 = vrot.slane %v1861, %v1876
    %v1879 = vunpack.c.l.s4 1966171168
    %v1880 = vunpack.c.0.s8 %v1879
    %v1881 = vlaneseq
    %v1882 = vshrl.u32 %v1881, 7
    %v1883 = vsub.s32 %v1880, %v1882
    %v1884 = vrot.slane %v1868, %v1883
    %v1886 = vunpack.c.l.s4 1966171168
    %v1887 = vunpack.c.0.s8 %v1886
    %v1888 = vlaneseq
    %v1889 = vshrl.u32 %v1888, 7
    %v1890 = vsub.s32 %v1887, %v1889
    %v1891 = vrot.slane %v1869, %v1890
    %v1893 = vunpack.c.l.s4 1966171168
    %v1894 = vunpack.c.0.s8 %v1893
    %v1895 = vlaneseq
    %v1896 = vshrl.u32 %v1895, 7
    %v1897 = vsub.s32 %v1894, %v1896
    %v1898 = vrot.slane %v1870, %v1897
    %v1899 = vcombine.high %v1877, %v1877
    %v1900 = vcombine.high %v1884, %v1884
    %v1901 = vcombine.high %v1891, %v1891
    %v1902 = vcombine.high %v1898, %v1898
    %v1903 = vsel %vm1845, 1, 0
    %v1904 = vsel %vm1846, 1, 0
    %v1905 = vsel %vm1847, 1, 0
    %v1906 = vsel %vm1848, 1, 0
    %v1907 = vsel %vm1849, 1, 0
    %v1908 = vsel %vm1850, 1, 0
    %v1909 = vsel %vm1851, 1, 0
    %v1910 = vsel %vm1852, 1, 0
    %vm1911 = vcmp.eq.s32.totalorder %v1903, 1
    %vm1912 = vcmp.eq.s32.totalorder %v1904, 1
    %vm1913 = vcmp.eq.s32.totalorder %v1905, 1
    %vm1914 = vcmp.eq.s32.totalorder %v1906, 1
    %vm1915 = vcmp.eq.s32.totalorder %v1907, 1
    %vm1916 = vcmp.eq.s32.totalorder %v1908, 1
    %vm1917 = vcmp.eq.s32.totalorder %v1909, 1
    %vm1918 = vcmp.eq.s32.totalorder %v1910, 1
    %v1919 = vlaneseq
    %v1920 = vshrl.u32 %v1919, 7
    %v1921 = vsub.s32 0, %v1920
    %v1922 = vrot.slane %v1877, %v1921
    %v1923 = vlaneseq
    %v1924 = vshrl.u32 %v1923, 7
    %v1925 = vsub.s32 0, %v1924
    %v1926 = vrot.slane %v1891, %v1925
    %v1927 = vlaneseq
    %v1928 = vshrl.u32 %v1927, 7
    %v1929 = vsub.s32 0, %v1928
    %v1930 = vrot.slane %v1899, %v1929
    %v1931 = vlaneseq
    %v1932 = vshrl.u32 %v1931, 7
    %v1933 = vsub.s32 0, %v1932
    %v1934 = vrot.slane %v1901, %v1933
    %v1935 = vlaneseq
    %v1936 = vshrl.u32 %v1935, 7
    %v1937 = vsub.s32 0, %v1936
    %v1938 = vrot.slane %v1884, %v1937
    %v1939 = vlaneseq
    %v1940 = vshrl.u32 %v1939, 7
    %v1941 = vsub.s32 0, %v1940
    %v1942 = vrot.slane %v1898, %v1941
    %v1943 = vlaneseq
    %v1944 = vshrl.u32 %v1943, 7
    %v1945 = vsub.s32 0, %v1944
    %v1946 = vrot.slane %v1900, %v1945
    %v1947 = vlaneseq
    %v1948 = vshrl.u32 %v1947, 7
    %v1949 = vsub.s32 0, %v1948
    %v1950 = vrot.slane %v1902, %v1949
    %v1959 = vsel %vm1911, %v1922, 0.0
    %v1960 = vsel %vm1912, %v1926, 0.0
    %v1961 = vsel %vm1913, %v1930, 0.0
    %v1962 = vsel %vm1914, %v1934, 0.0
    %v1963 = vsel %vm1915, %v1938, 0.0
    %v1964 = vsel %vm1916, %v1942, 0.0
    %v1965 = vsel %vm1917, %v1946, 0.0
    %v1966 = vsel %vm1918, %v1950, 0.0
    %v1968 = vcombine.high %v1842, %v1842
    %v1970 = vunpack.c.l.s4 1966171168
    %v1971 = vunpack.c.0.s8 %v1970
    %v1972 = vlaneseq
    %v1973 = vshrl.u32 %v1972, 7
    %v1974 = vsub.s32 %v1971, %v1973
    %v1975 = vrot.slane %v1842, %v1974
    %v1977 = vunpack.c.l.s4 1966171168
    %v1978 = vunpack.c.0.s8 %v1977
    %v1979 = vlaneseq
    %v1980 = vshrl.u32 %v1979, 7
    %v1981 = vsub.s32 %v1978, %v1980
    %v1982 = vrot.slane %v1968, %v1981
    %v1983 = vcombine.high %v1975, %v1975
    %v1984 = vcombine.high %v1982, %v1982
    %v1986 = vunpack.c.l.s4 1966171168
    %v1987 = vunpack.c.0.s8 %v1986
    %v1988 = vlaneseq
    %v1989 = vshrl.u32 %v1988, 7
    %v1990 = vsub.s32 %v1987, %v1989
    %v1991 = vrot.slane %v1975, %v1990
    %v1993 = vunpack.c.l.s4 1966171168
    %v1994 = vunpack.c.0.s8 %v1993
    %v1995 = vlaneseq
    %v1996 = vshrl.u32 %v1995, 7
    %v1997 = vsub.s32 %v1994, %v1996
    %v1998 = vrot.slane %v1982, %v1997
    %v2000 = vunpack.c.l.s4 1966171168
    %v2001 = vunpack.c.0.s8 %v2000
    %v2002 = vlaneseq
    %v2003 = vshrl.u32 %v2002, 7
    %v2004 = vsub.s32 %v2001, %v2003
    %v2005 = vrot.slane %v1983, %v2004
    %v2007 = vunpack.c.l.s4 1966171168
    %v2008 = vunpack.c.0.s8 %v2007
    %v2009 = vlaneseq
    %v2010 = vshrl.u32 %v2009, 7
    %v2011 = vsub.s32 %v2008, %v2010
    %v2012 = vrot.slane %v1984, %v2011
    %v2013 = vcombine.high %v1991, %v1991
    %v2014 = vcombine.high %v1998, %v1998
    %v2015 = vcombine.high %v2005, %v2005
    %v2016 = vcombine.high %v2012, %v2012
    %v2017 = vlaneseq
    %v2018 = vshrl.u32 %v2017, 7
    %v2019 = vsub.s32 0, %v2018
    %v2020 = vrot.slane %v1991, %v2019
    %v2021 = vlaneseq
    %v2022 = vshrl.u32 %v2021, 7
    %v2023 = vsub.s32 0, %v2022
    %v2024 = vrot.slane %v2005, %v2023
    %v2025 = vlaneseq
    %v2026 = vshrl.u32 %v2025, 7
    %v2027 = vsub.s32 0, %v2026
    %v2028 = vrot.slane %v2013, %v2027
    %v2029 = vlaneseq
    %v2030 = vshrl.u32 %v2029, 7
    %v2031 = vsub.s32 0, %v2030
    %v2032 = vrot.slane %v2015, %v2031
    %v2033 = vlaneseq
    %v2034 = vshrl.u32 %v2033, 7
    %v2035 = vsub.s32 0, %v2034
    %v2036 = vrot.slane %v1998, %v2035
    %v2037 = vlaneseq
    %v2038 = vshrl.u32 %v2037, 7
    %v2039 = vsub.s32 0, %v2038
    %v2040 = vrot.slane %v2012, %v2039
    %v2041 = vlaneseq
    %v2042 = vshrl.u32 %v2041, 7
    %v2043 = vsub.s32 0, %v2042
    %v2044 = vrot.slane %v2014, %v2043
    %v2045 = vlaneseq
    %v2046 = vshrl.u32 %v2045, 7
    %v2047 = vsub.s32 0, %v2046
    %v2048 = vrot.slane %v2016, %v2047
    %v2057 = vsel %vm1911, %v2020, 0.0
    %v2058 = vsel %vm1912, %v2024, 0.0
    %v2059 = vsel %vm1913, %v2028, 0.0
    %v2060 = vsel %vm1914, %v2032, 0.0
    %v2061 = vsel %vm1915, %v2036, 0.0
    %v2062 = vsel %vm1916, %v2040, 0.0
    %v2063 = vsel %vm1917, %v2044, 0.0
    %v2064 = vsel %vm1918, %v2048, 0.0
    %v2065 = vmax.f32 %v329, 0.0
    %2066 = vst [vmem:[#allocation8] sm:$0xff] %v1820
    %s2067 = scalar_lea.vmem [#allocation2], 8
    %v2068 = vld [vmem:[%s2067] sm:$0xff]
    %2070 = vrot.lane.b32.xlu0 %v2068, 32
    %v2071 = vpop.permute.xlu0 %2070
    %v2073 = vsel %vm334, %v2071, 0.0
    %2074 = vadd.xlane.f32.xlu0 %v2073
    %v2075 = vpop.xlane.xlu0 %2074
    %v2076 = vmul.f32 %v2068, %v2065
    %2078 = vrot.lane.b32.xlu0 %v2076, 32
    %v2079 = vpop.permute.xlu0 %2078
    %v2081 = vsel %vm334, %v2079, 0.0
    %2082 = vadd.xlane.f32.xlu0 %v2081
    %v2083 = vpop.xlane.xlu0 %2082
    %v2084 = vmul.f32 %v2075, %v2083
    %v2085 = vsub.f32 1.0, %v2083
    %v2086 = vmul.f32 %v2075, %v2085
    %v2087 = vlaneseq
    %v2088 = vshrl.u32 %v2087, 7
    %v2089 = vsub.s32 0, %v2088
    %v2090 = vrot.slane %v2068, %v2089
    %s2092 = sor.u32 256, 96
    %2093 = vbcast.lane.b32.xlu0 %v2090, %s2092
    %v2094 = vpop.permute.xlu0 %2093
    %v2095 = vlaneseq
    %v2096 = vshrl.u32 %v2095, 7
    %v2097 = vsub.s32 1, %v2096
    %v2098 = vrot.slane %v2068, %v2097
    %s2100 = sor.u32 256, 96
    %2101 = vbcast.lane.b32.xlu0 %v2098, %s2100
    %v2102 = vpop.permute.xlu0 %2101
    %v2103 = vlaneseq
    %v2104 = vshrl.u32 %v2103, 7
    %v2105 = vsub.s32 2, %v2104
    %v2106 = vrot.slane %v2068, %v2105
    %s2108 = sor.u32 256, 96
    %2109 = vbcast.lane.b32.xlu0 %v2106, %s2108
    %v2110 = vpop.permute.xlu0 %2109
    %v2111 = vlaneseq
    %v2112 = vshrl.u32 %v2111, 7
    %v2113 = vsub.s32 3, %v2112
    %v2114 = vrot.slane %v2068, %v2113
    %s2116 = sor.u32 256, 96
    %2117 = vbcast.lane.b32.xlu0 %v2114, %s2116
    %v2118 = vpop.permute.xlu0 %2117
    %v2119 = vlaneseq
    %v2120 = vshrl.u32 %v2119, 7
    %v2121 = vsub.s32 4, %v2120
    %v2122 = vrot.slane %v2068, %v2121
    %s2124 = sor.u32 256, 96
    %2125 = vbcast.lane.b32.xlu0 %v2122, %s2124
    %v2126 = vpop.permute.xlu0 %2125
    %v2127 = vlaneseq
    %v2128 = vshrl.u32 %v2127, 7
    %v2129 = vsub.s32 5, %v2128
    %v2130 = vrot.slane %v2068, %v2129
    %s2132 = sor.u32 256, 96
    %2133 = vbcast.lane.b32.xlu0 %v2130, %s2132
    %v2134 = vpop.permute.xlu0 %2133
    %v2135 = vlaneseq
    %v2136 = vshrl.u32 %v2135, 7
    %v2137 = vsub.s32 6, %v2136
    %v2138 = vrot.slane %v2068, %v2137
    %s2140 = sor.u32 256, 96
    %2141 = vbcast.lane.b32.xlu0 %v2138, %s2140
    %v2142 = vpop.permute.xlu0 %2141
    %v2143 = vlaneseq
    %v2144 = vshrl.u32 %v2143, 7
    %v2145 = vsub.s32 7, %v2144
    %v2146 = vrot.slane %v2068, %v2145
    %s2148 = sor.u32 256, 96
    %2149 = vbcast.lane.b32.xlu0 %v2146, %s2148
    %v2150 = vpop.permute.xlu0 %2149
    %v2151 = vmul.f32 %v2094, %v1959
    %v2152 = vmul.f32 %v2102, %v1960
    %v2153 = vmul.f32 %v2110, %v1961
    %v2154 = vmul.f32 %v2118, %v1962
    %v2155 = vmul.f32 %v2126, %v1963
    %v2156 = vmul.f32 %v2134, %v1964
    %v2157 = vmul.f32 %v2142, %v1965
    %v2158 = vmul.f32 %v2150, %v1966
    %v2159 = vsel %vm421, %v2151, 0.0
    %v2160 = vrot.slane %v2159, 4
    %v2161 = vadd.f32 %v2159, %v2160
    %v2162 = vrot.slane %v2161, 2
    %v2163 = vadd.f32 %v2161, %v2162
    %v2164 = vrot.slane %v2163, 1
    %v2165 = vadd.f32 %v2163, %v2164
    %v2166 = vsel %vm421, %v2152, 0.0
    %v2167 = vrot.slane %v2166, 4
    %v2168 = vadd.f32 %v2166, %v2167
    %v2169 = vrot.slane %v2168, 2
    %v2170 = vadd.f32 %v2168, %v2169
    %v2171 = vrot.slane %v2170, 1
    %v2172 = vadd.f32 %v2170, %v2171
    %v2173 = vsel %vm421, %v2153, 0.0
    %v2174 = vrot.slane %v2173, 4
    %v2175 = vadd.f32 %v2173, %v2174
    %v2176 = vrot.slane %v2175, 2
    %v2177 = vadd.f32 %v2175, %v2176
    %v2178 = vrot.slane %v2177, 1
    %v2179 = vadd.f32 %v2177, %v2178
    %v2180 = vsel %vm421, %v2154, 0.0
    %v2181 = vrot.slane %v2180, 4
    %v2182 = vadd.f32 %v2180, %v2181
    %v2183 = vrot.slane %v2182, 2
    %v2184 = vadd.f32 %v2182, %v2183
    %v2185 = vrot.slane %v2184, 1
    %v2186 = vadd.f32 %v2184, %v2185
    %v2187 = vsel %vm421, %v2155, 0.0
    %v2188 = vrot.slane %v2187, 4
    %v2189 = vadd.f32 %v2187, %v2188
    %v2190 = vrot.slane %v2189, 2
    %v2191 = vadd.f32 %v2189, %v2190
    %v2192 = vrot.slane %v2191, 1
    %v2193 = vadd.f32 %v2191, %v2192
    %v2194 = vsel %vm421, %v2156, 0.0
    %v2195 = vrot.slane %v2194, 4
    %v2196 = vadd.f32 %v2194, %v2195
    %v2197 = vrot.slane %v2196, 2
    %v2198 = vadd.f32 %v2196, %v2197
    %v2199 = vrot.slane %v2198, 1
    %v2200 = vadd.f32 %v2198, %v2199
    %v2201 = vsel %vm421, %v2157, 0.0
    %v2202 = vrot.slane %v2201, 4
    %v2203 = vadd.f32 %v2201, %v2202
    %v2204 = vrot.slane %v2203, 2
    %v2205 = vadd.f32 %v2203, %v2204
    %v2206 = vrot.slane %v2205, 1
    %v2207 = vadd.f32 %v2205, %v2206
    %v2208 = vsel %vm421, %v2158, 0.0
    %v2209 = vrot.slane %v2208, 4
    %v2210 = vadd.f32 %v2208, %v2209
    %v2211 = vrot.slane %v2210, 2
    %v2212 = vadd.f32 %v2210, %v2211
    %v2213 = vrot.slane %v2212, 1
    %v2214 = vadd.f32 %v2212, %v2213
    %v2215 = vmul.f32 %v2094, %v2057
    %v2216 = vmul.f32 %v2102, %v2058
    %v2217 = vmul.f32 %v2110, %v2059
    %v2218 = vmul.f32 %v2118, %v2060
    %v2219 = vmul.f32 %v2126, %v2061
    %v2220 = vmul.f32 %v2134, %v2062
    %v2221 = vmul.f32 %v2142, %v2063
    %v2222 = vmul.f32 %v2150, %v2064
    %v2223 = vsel %vm421, %v2215, 0.0
    %v2224 = vrot.slane %v2223, 4
    %v2225 = vadd.f32 %v2223, %v2224
    %v2226 = vrot.slane %v2225, 2
    %v2227 = vadd.f32 %v2225, %v2226
    %v2228 = vrot.slane %v2227, 1
    %v2229 = vadd.f32 %v2227, %v2228
    %v2230 = vsel %vm421, %v2216, 0.0
    %v2231 = vrot.slane %v2230, 4
    %v2232 = vadd.f32 %v2230, %v2231
    %v2233 = vrot.slane %v2232, 2
    %v2234 = vadd.f32 %v2232, %v2233
    %v2235 = vrot.slane %v2234, 1
    %v2236 = vadd.f32 %v2234, %v2235
    %v2237 = vsel %vm421, %v2217, 0.0
    %v2238 = vrot.slane %v2237, 4
    %v2239 = vadd.f32 %v2237, %v2238
    %v2240 = vrot.slane %v2239, 2
    %v2241 = vadd.f32 %v2239, %v2240
    %v2242 = vrot.slane %v2241, 1
    %v2243 = vadd.f32 %v2241, %v2242
    %v2244 = vsel %vm421, %v2218, 0.0
    %v2245 = vrot.slane %v2244, 4
    %v2246 = vadd.f32 %v2244, %v2245
    %v2247 = vrot.slane %v2246, 2
    %v2248 = vadd.f32 %v2246, %v2247
    %v2249 = vrot.slane %v2248, 1
    %v2250 = vadd.f32 %v2248, %v2249
    %v2251 = vsel %vm421, %v2219, 0.0
    %v2252 = vrot.slane %v2251, 4
    %v2253 = vadd.f32 %v2251, %v2252
    %v2254 = vrot.slane %v2253, 2
    %v2255 = vadd.f32 %v2253, %v2254
    %v2256 = vrot.slane %v2255, 1
    %v2257 = vadd.f32 %v2255, %v2256
    %v2258 = vsel %vm421, %v2220, 0.0
    %v2259 = vrot.slane %v2258, 4
    %v2260 = vadd.f32 %v2258, %v2259
    %v2261 = vrot.slane %v2260, 2
    %v2262 = vadd.f32 %v2260, %v2261
    %v2263 = vrot.slane %v2262, 1
    %v2264 = vadd.f32 %v2262, %v2263
    %v2265 = vsel %vm421, %v2221, 0.0
    %v2266 = vrot.slane %v2265, 4
    %v2267 = vadd.f32 %v2265, %v2266
    %v2268 = vrot.slane %v2267, 2
    %v2269 = vadd.f32 %v2267, %v2268
    %v2270 = vrot.slane %v2269, 1
    %v2271 = vadd.f32 %v2269, %v2270
    %v2272 = vsel %vm421, %v2222, 0.0
    %v2273 = vrot.slane %v2272, 4
    %v2274 = vadd.f32 %v2272, %v2273
    %v2275 = vrot.slane %v2274, 2
    %v2276 = vadd.f32 %v2274, %v2275
    %v2277 = vrot.slane %v2276, 1
    %v2278 = vadd.f32 %v2276, %v2277
    %v2287 = vsel %vm486, %v2172, %v2165
    %v2288 = vsel %vm488, %v2179, %v2287
    %v2289 = vsel %vm490, %v2186, %v2288
    %v2290 = vsel %vm492, %v2193, %v2289
    %v2291 = vsel %vm494, %v2200, %v2290
    %v2292 = vsel %vm496, %v2207, %v2291
    %v2293 = vsel %vm498, %v2214, %v2292
    %v2295 = vmul.f32 %v2084, %v2293
    %v2296 = vmul.f32 %v2086, %v306
    %v2297 = vadd.f32 %v2295, %v2296
    %v2306 = vsel %vm486, %v2236, %v2229
    %v2307 = vsel %vm488, %v2243, %v2306
    %v2308 = vsel %vm490, %v2250, %v2307
    %v2309 = vsel %vm492, %v2257, %v2308
    %v2310 = vsel %vm494, %v2264, %v2309
    %v2311 = vsel %vm496, %v2271, %v2310
    %v2312 = vsel %vm498, %v2278, %v2311
    %v2314 = vmul.f32 %v2084, %v2312
    %v2315 = vmul.f32 %v2086, %v313
    %v2316 = vadd.f32 %v2314, %v2315
    %v2317 = vpack.c.bf16 %v2068, %v2068
    %v2318 = vpack.c.bf16 %v1820, %v1820
    %v2319 = vpack.c.bf16 %v2297, %v2297
    %2320 = vmatprep.subr.bf16.mxu0 %v1086
    %2321 = vmatpush1.bf16.msra.mxu0 %v1085
    %2322 = vmatprep.subr.bf16.mxu0 %v1094
    %2323 = vmatpush1.bf16.msra.mxu0 %v1093
    %2324 = vmatprep.subr.bf16.mxu0 %v1102
    %2325 = vmatpush1.bf16.msra.mxu0 %v1101
    %2326 = vmatprep.subr.bf16.mxu0 %v1110
    %2327 = vmatpush1.bf16.msra.mxu0 %v1109
    %2328 = vmatprep.subr.bf16.mxu0 %v1118
    %2329 = vmatpush1.bf16.msra.mxu0 %v1117
    %2330 = vmatprep.subr.bf16.mxu0 %v1126
    %2331 = vmatpush1.bf16.msra.mxu0 %v1125
    %2332 = vmatprep.subr.bf16.mxu0 %v1134
    %2333 = vmatpush1.bf16.msra.mxu0 %v1133
    %2334 = vmatprep.subr.bf16.mxu0 %v1142
    %2335 = vmatpush1.bf16.msra.mxu0 %v1141
    %2336 = vmatprep.subr.bf16.mxu0 %v1150
    %2337 = vmatpush1.bf16.msra.mxu0 %v1149
    %2338 = vmatprep.subr.bf16.mxu0 %v1158
    %2339 = vmatpush1.bf16.msra.mxu0 %v1157
    %2340 = vmatprep.subr.bf16.mxu0 %v1166
    %2341 = vmatpush1.bf16.msra.mxu0 %v1165
    %2342 = vmatprep.subr.bf16.mxu0 %v1174
    %2343 = vmatpush1.bf16.msra.mxu0 %v1173
    %2344 = vmatprep.subr.bf16.mxu0 %v1182
    %2345 = vmatpush1.bf16.msra.mxu0 %v1181
    %2346 = vmatprep.subr.bf16.mxu0 %v1190
    %2347 = vmatpush1.bf16.msra.mxu0 %v1189
    %2348 = vmatprep.subr.bf16.mxu0 %v1198
    %2349 = vmatpush1.bf16.msra.mxu0 %v1197
    %2350 = vmatprep.subr.bf16.mxu0 %v1206
    %2351 = vmatpush1.bf16.msra.mxu0 %v1205
    %2352 = vmatprep.mubr.bf16.mxu0 %v2318
    %2353 = vmatmul.mubr.bf16.gmra.mrb[0].mxu0 %v2317
    %v2354 = vpop.f32.mrb[0].mxu0
    %v2355 = vadd.f32 %v264, %v2354
    %v2356 = vpop.f32.mrb[0].mxu0
    %v2357 = vadd.f32 %v268, %v2356
    %v2358 = vpop.f32.mrb[0].mxu0
    %v2359 = vpop.f32.mrb[0].mxu0
    %2360 = vdwg.mxu0
    %2361 = vmatprep.subr.bf16.mxu0 %v1214
    %2362 = vmatpush1.bf16.msra.mxu0 %v1213
    %2363 = vmatprep.subr.bf16.mxu0 %v1222
    %2364 = vmatpush1.bf16.msra.mxu0 %v1221
    %2365 = vmatprep.subr.bf16.mxu0 %v1230
    %2366 = vmatpush1.bf16.msra.mxu0 %v1229
    %2367 = vmatprep.subr.bf16.mxu0 %v1238
    %2368 = vmatpush1.bf16.msra.mxu0 %v1237
    %2369 = vmatprep.subr.bf16.mxu0 %v1246
    %2370 = vmatpush1.bf16.msra.mxu0 %v1245
    %2371 = vmatprep.subr.bf16.mxu0 %v1254
    %2372 = vmatpush1.bf16.msra.mxu0 %v1253
    %2373 = vmatprep.subr.bf16.mxu0 %v1262
    %2374 = vmatpush1.bf16.msra.mxu0 %v1261
    %2375 = vmatprep.subr.bf16.mxu0 %v1270
    %2376 = vmatpush1.bf16.msra.mxu0 %v1269
    %2377 = vmatprep.subr.bf16.mxu0 0
    %2378 = vmatpush1.bf16.msra.mxu0 0
    %2379 = vmatprep.subr.bf16.mxu0 0
    %2380 = vmatpush1.bf16.msra.mxu0 0
    %2381 = vmatprep.subr.bf16.mxu0 0
    %2382 = vmatpush1.bf16.msra.mxu0 0
    %2383 = vmatprep.subr.bf16.mxu0 0
    %2384 = vmatpush1.bf16.msra.mxu0 0
    %2385 = vmatprep.subr.bf16.mxu0 0
    %2386 = vmatpush1.bf16.msra.mxu0 0
    %2387 = vmatprep.subr.bf16.mxu0 0
    %2388 = vmatpush1.bf16.msra.mxu0 0
    %2389 = vmatprep.subr.bf16.mxu0 0
    %2390 = vmatpush1.bf16.msra.mxu0 0
    %2391 = vmatprep.subr.bf16.mxu0 0
    %2392 = vmatpush1.bf16.msra.mxu0 0
    %2393 = vmatprep.mubr.bf16.mxu0 0
    %2394 = vmatmul.mubr.bf16.gmra.mrb[0].mxu0 %v2319
    %v2395 = vpop.f32.mrb[0].mxu0
    %v2396 = vadd.f32 %v2355, %v2395
    %v2397 = vpop.f32.mrb[0].mxu0
    %v2398 = vadd.f32 %v2357, %v2397
    %v2399 = vpop.f32.mrb[0].mxu0
    %v2400 = vpop.f32.mrb[0].mxu0
    %2401 = vdwg.mxu0
    %2402 = vmatprep.subr.bf16.mxu0 %v1088
    %2403 = vmatpush1.bf16.msra.mxu0 %v1087
    %2404 = vmatprep.subr.bf16.mxu0 %v1096
    %2405 = vmatpush1.bf16.msra.mxu0 %v1095
    %2406 = vmatprep.subr.bf16.mxu0 %v1104
    %2407 = vmatpush1.bf16.msra.mxu0 %v1103
    %2408 = vmatprep.subr.bf16.mxu0 %v1112
    %2409 = vmatpush1.bf16.msra.mxu0 %v1111
    %2410 = vmatprep.subr.bf16.mxu0 %v1120
    %2411 = vmatpush1.bf16.msra.mxu0 %v1119
    %2412 = vmatprep.subr.bf16.mxu0 %v1128
    %2413 = vmatpush1.bf16.msra.mxu0 %v1127
    %2414 = vmatprep.subr.bf16.mxu0 %v1136
    %2415 = vmatpush1.bf16.msra.mxu0 %v1135
    %2416 = vmatprep.subr.bf16.mxu0 %v1144
    %2417 = vmatpush1.bf16.msra.mxu0 %v1143
    %2418 = vmatprep.subr.bf16.mxu0 %v1152
    %2419 = vmatpush1.bf16.msra.mxu0 %v1151
    %2420 = vmatprep.subr.bf16.mxu0 %v1160
    %2421 = vmatpush1.bf16.msra.mxu0 %v1159
    %2422 = vmatprep.subr.bf16.mxu0 %v1168
    %2423 = vmatpush1.bf16.msra.mxu0 %v1167
    %2424 = vmatprep.subr.bf16.mxu0 %v1176
    %2425 = vmatpush1.bf16.msra.mxu0 %v1175
    %2426 = vmatprep.subr.bf16.mxu0 %v1184
    %2427 = vmatpush1.bf16.msra.mxu0 %v1183
    %2428 = vmatprep.subr.bf16.mxu0 %v1192
    %2429 = vmatpush1.bf16.msra.mxu0 %v1191
    %2430 = vmatprep.subr.bf16.mxu0 %v1200
    %2431 = vmatpush1.bf16.msra.mxu0 %v1199
    %2432 = vmatprep.subr.bf16.mxu0 %v1208
    %2433 = vmatpush1.bf16.msra.mxu0 %v1207
    %2434 = vmatprep.mubr.bf16.mxu0 %v2318
    %2435 = vmatmul.mubr.bf16.gmra.mrb[0].mxu0 %v2317
    %v2436 = vpop.f32.mrb[0].mxu0
    %v2437 = vadd.f32 %v272, %v2436
    %v2438 = vpop.f32.mrb[0].mxu0
    %v2439 = vadd.f32 %v276, %v2438
    %v2440 = vpop.f32.mrb[0].mxu0
    %v2441 = vpop.f32.mrb[0].mxu0
    %2442 = vdwg.mxu0
    %2443 = vmatprep.subr.bf16.mxu0 %v1216
    %2444 = vmatpush1.bf16.msra.mxu0 %v1215
    %2445 = vmatprep.subr.bf16.mxu0 %v1224
    %2446 = vmatpush1.bf16.msra.mxu0 %v1223
    %2447 = vmatprep.subr.bf16.mxu0 %v1232
    %2448 = vmatpush1.bf16.msra.mxu0 %v1231
    %2449 = vmatprep.subr.bf16.mxu0 %v1240
    %2450 = vmatpush1.bf16.msra.mxu0 %v1239
    %2451 = vmatprep.subr.bf16.mxu0 %v1248
    %2452 = vmatpush1.bf16.msra.mxu0 %v1247
    %2453 = vmatprep.subr.bf16.mxu0 %v1256
    %2454 = vmatpush1.bf16.msra.mxu0 %v1255
    %2455 = vmatprep.subr.bf16.mxu0 %v1264
    %2456 = vmatpush1.bf16.msra.mxu0 %v1263
    %2457 = vmatprep.subr.bf16.mxu0 %v1272
    %2458 = vmatpush1.bf16.msra.mxu0 %v1271
    %2459 = vmatprep.subr.bf16.mxu0 0
    %2460 = vmatpush1.bf16.msra.mxu0 0
    %2461 = vmatprep.subr.bf16.mxu0 0
    %2462 = vmatpush1.bf16.msra.mxu0 0
    %2463 = vmatprep.subr.bf16.mxu0 0
    %2464 = vmatpush1.bf16.msra.mxu0 0
    %2465 = vmatprep.subr.bf16.mxu0 0
    %2466 = vmatpush1.bf16.msra.mxu0 0
    %2467 = vmatprep.subr.bf16.mxu0 0
    %2468 = vmatpush1.bf16.msra.mxu0 0
    %2469 = vmatprep.subr.bf16.mxu0 0
    %2470 = vmatpush1.bf16.msra.mxu0 0
    %2471 = vmatprep.subr.bf16.mxu0 0
    %2472 = vmatpush1.bf16.msra.mxu0 0
    %2473 = vmatprep.subr.bf16.mxu0 0
    %2474 = vmatpush1.bf16.msra.mxu0 0
    %2475 = vmatprep.mubr.bf16.mxu0 0
    %2476 = vmatmul.mubr.bf16.gmra.mrb[0].mxu0 %v2319
    %v2477 = vpop.f32.mrb[0].mxu0
    %v2478 = vadd.f32 %v2437, %v2477
    %v2479 = vpop.f32.mrb[0].mxu0
    %v2480 = vadd.f32 %v2439, %v2479
    %v2481 = vpop.f32.mrb[0].mxu0
    %v2482 = vpop.f32.mrb[0].mxu0
    %2483 = vdwg.mxu0
    %2484 = vmatprep.subr.bf16.mxu0 %v1090
    %2485 = vmatpush1.bf16.msra.mxu0 %v1089
    %2486 = vmatprep.subr.bf16.mxu0 %v1098
    %2487 = vmatpush1.bf16.msra.mxu0 %v1097
    %2488 = vmatprep.subr.bf16.mxu0 %v1106
    %2489 = vmatpush1.bf16.msra.mxu0 %v1105
    %2490 = vmatprep.subr.bf16.mxu0 %v1114
    %2491 = vmatpush1.bf16.msra.mxu0 %v1113
    %2492 = vmatprep.subr.bf16.mxu0 %v1122
    %2493 = vmatpush1.bf16.msra.mxu0 %v1121
    %2494 = vmatprep.subr.bf16.mxu0 %v1130
    %2495 = vmatpush1.bf16.msra.mxu0 %v1129
    %2496 = vmatprep.subr.bf16.mxu0 %v1138
    %2497 = vmatpush1.bf16.msra.mxu0 %v1137
    %2498 = vmatprep.subr.bf16.mxu0 %v1146
    %2499 = vmatpush1.bf16.msra.mxu0 %v1145
    %2500 = vmatprep.subr.bf16.mxu0 %v1154
    %2501 = vmatpush1.bf16.msra.mxu0 %v1153
    %2502 = vmatprep.subr.bf16.mxu0 %v1162
    %2503 = vmatpush1.bf16.msra.mxu0 %v1161
    %2504 = vmatprep.subr.bf16.mxu0 %v1170
    %2505 = vmatpush1.bf16.msra.mxu0 %v1169
    %2506 = vmatprep.subr.bf16.mxu0 %v1178
    %2507 = vmatpush1.bf16.msra.mxu0 %v1177
    %2508 = vmatprep.subr.bf16.mxu0 %v1186
    %2509 = vmatpush1.bf16.msra.mxu0 %v1185
    %2510 = vmatprep.subr.bf16.mxu0 %v1194
    %2511 = vmatpush1.bf16.msra.mxu0 %v1193
    %2512 = vmatprep.subr.bf16.mxu0 %v1202
    %2513 = vmatpush1.bf16.msra.mxu0 %v1201
    %2514 = vmatprep.subr.bf16.mxu0 %v1210
    %2515 = vmatpush1.bf16.msra.mxu0 %v1209
    %2516 = vmatprep.mubr.bf16.mxu0 %v2318
    %2517 = vmatmul.mubr.bf16.gmra.mrb[0].mxu0 %v2317
    %v2518 = vpop.f32.mrb[0].mxu0
    %v2519 = vadd.f32 %v280, %v2518
    %v2520 = vpop.f32.mrb[0].mxu0
    %v2521 = vadd.f32 %v284, %v2520
    %v2522 = vpop.f32.mrb[0].mxu0
    %v2523 = vpop.f32.mrb[0].mxu0
    %2524 = vdwg.mxu0
    %2525 = vmatprep.subr.bf16.mxu0 %v1218
    %2526 = vmatpush1.bf16.msra.mxu0 %v1217
    %2527 = vmatprep.subr.bf16.mxu0 %v1226
    %2528 = vmatpush1.bf16.msra.mxu0 %v1225
    %2529 = vmatprep.subr.bf16.mxu0 %v1234
    %2530 = vmatpush1.bf16.msra.mxu0 %v1233
    %2531 = vmatprep.subr.bf16.mxu0 %v1242
    %2532 = vmatpush1.bf16.msra.mxu0 %v1241
    %2533 = vmatprep.subr.bf16.mxu0 %v1250
    %2534 = vmatpush1.bf16.msra.mxu0 %v1249
    %2535 = vmatprep.subr.bf16.mxu0 %v1258
    %2536 = vmatpush1.bf16.msra.mxu0 %v1257
    %2537 = vmatprep.subr.bf16.mxu0 %v1266
    %2538 = vmatpush1.bf16.msra.mxu0 %v1265
    %2539 = vmatprep.subr.bf16.mxu0 %v1274
    %2540 = vmatpush1.bf16.msra.mxu0 %v1273
    %2541 = vmatprep.subr.bf16.mxu0 0
    %2542 = vmatpush1.bf16.msra.mxu0 0
    %2543 = vmatprep.subr.bf16.mxu0 0
    %2544 = vmatpush1.bf16.msra.mxu0 0
    %2545 = vmatprep.subr.bf16.mxu0 0
    %2546 = vmatpush1.bf16.msra.mxu0 0
    %2547 = vmatprep.subr.bf16.mxu0 0
    %2548 = vmatpush1.bf16.msra.mxu0 0
    %2549 = vmatprep.subr.bf16.mxu0 0
    %2550 = vmatpush1.bf16.msra.mxu0 0
    %2551 = vmatprep.subr.bf16.mxu0 0
    %2552 = vmatpush1.bf16.msra.mxu0 0
    %2553 = vmatprep.subr.bf16.mxu0 0
    %2554 = vmatpush1.bf16.msra.mxu0 0
    %2555 = vmatprep.subr.bf16.mxu0 0
    %2556 = vmatpush1.bf16.msra.mxu0 0
    %2557 = vmatprep.mubr.bf16.mxu0 0
    %2558 = vmatmul.mubr.bf16.gmra.mrb[0].mxu0 %v2319
    %v2559 = vpop.f32.mrb[0].mxu0
    %v2560 = vadd.f32 %v2519, %v2559
    %v2561 = vpop.f32.mrb[0].mxu0
    %v2562 = vadd.f32 %v2521, %v2561
    %v2563 = vpop.f32.mrb[0].mxu0
    %v2564 = vpop.f32.mrb[0].mxu0
    %2565 = vdwg.mxu0
    %2566 = vmatprep.subr.bf16.mxu0 %v1092
    %2567 = vmatpush1.bf16.msra.mxu0 %v1091
    %2568 = vmatprep.subr.bf16.mxu0 %v1100
    %2569 = vmatpush1.bf16.msra.mxu0 %v1099
    %2570 = vmatprep.subr.bf16.mxu0 %v1108
    %2571 = vmatpush1.bf16.msra.mxu0 %v1107
    %2572 = vmatprep.subr.bf16.mxu0 %v1116
    %2573 = vmatpush1.bf16.msra.mxu0 %v1115
    %2574 = vmatprep.subr.bf16.mxu0 %v1124
    %2575 = vmatpush1.bf16.msra.mxu0 %v1123
    %2576 = vmatprep.subr.bf16.mxu0 %v1132
    %2577 = vmatpush1.bf16.msra.mxu0 %v1131
    %2578 = vmatprep.subr.bf16.mxu0 %v1140
    %2579 = vmatpush1.bf16.msra.mxu0 %v1139
    %2580 = vmatprep.subr.bf16.mxu0 %v1148
    %2581 = vmatpush1.bf16.msra.mxu0 %v1147
    %2582 = vmatprep.subr.bf16.mxu0 %v1156
    %2583 = vmatpush1.bf16.msra.mxu0 %v1155
    %2584 = vmatprep.subr.bf16.mxu0 %v1164
    %2585 = vmatpush1.bf16.msra.mxu0 %v1163
    %2586 = vmatprep.subr.bf16.mxu0 %v1172
    %2587 = vmatpush1.bf16.msra.mxu0 %v1171
    %2588 = vmatprep.subr.bf16.mxu0 %v1180
    %2589 = vmatpush1.bf16.msra.mxu0 %v1179
    %2590 = vmatprep.subr.bf16.mxu0 %v1188
    %2591 = vmatpush1.bf16.msra.mxu0 %v1187
    %2592 = vmatprep.subr.bf16.mxu0 %v1196
    %2593 = vmatpush1.bf16.msra.mxu0 %v1195
    %2594 = vmatprep.subr.bf16.mxu0 %v1204
    %2595 = vmatpush1.bf16.msra.mxu0 %v1203
    %2596 = vmatprep.subr.bf16.mxu0 %v1212
    %2597 = vmatpush1.bf16.msra.mxu0 %v1211
    %2598 = vmatprep.mubr.bf16.mxu0 %v2318
    %2599 = vmatmul.mubr.bf16.gmra.mrb[0].mxu0 %v2317
    %v2600 = vpop.f32.mrb[0].mxu0
    %v2601 = vadd.f32 %v288, %v2600
    %v2602 = vpop.f32.mrb[0].mxu0
    %v2603 = vadd.f32 %v292, %v2602
    %v2604 = vpop.f32.mrb[0].mxu0
    %v2605 = vpop.f32.mrb[0].mxu0
    %2606 = vdwg.mxu0
    %2607 = vmatprep.subr.bf16.mxu0 %v1220
    %2608 = vmatpush1.bf16.msra.mxu0 %v1219
    %2609 = vmatprep.subr.bf16.mxu0 %v1228
    %2610 = vmatpush1.bf16.msra.mxu0 %v1227
    %2611 = vmatprep.subr.bf16.mxu0 %v1236
    %2612 = vmatpush1.bf16.msra.mxu0 %v1235
    %2613 = vmatprep.subr.bf16.mxu0 %v1244
    %2614 = vmatpush1.bf16.msra.mxu0 %v1243
    %2615 = vmatprep.subr.bf16.mxu0 %v1252
    %2616 = vmatpush1.bf16.msra.mxu0 %v1251
    %2617 = vmatprep.subr.bf16.mxu0 %v1260
    %2618 = vmatpush1.bf16.msra.mxu0 %v1259
    %2619 = vmatprep.subr.bf16.mxu0 %v1268
    %2620 = vmatpush1.bf16.msra.mxu0 %v1267
    %2621 = vmatprep.subr.bf16.mxu0 %v1276
    %2622 = vmatpush1.bf16.msra.mxu0 %v1275
    %2623 = vmatprep.subr.bf16.mxu0 0
    %2624 = vmatpush1.bf16.msra.mxu0 0
    %2625 = vmatprep.subr.bf16.mxu0 0
    %2626 = vmatpush1.bf16.msra.mxu0 0
    %2627 = vmatprep.subr.bf16.mxu0 0
    %2628 = vmatpush1.bf16.msra.mxu0 0
    %2629 = vmatprep.subr.bf16.mxu0 0
    %2630 = vmatpush1.bf16.msra.mxu0 0
    %2631 = vmatprep.subr.bf16.mxu0 0
    %2632 = vmatpush1.bf16.msra.mxu0 0
    %2633 = vmatprep.subr.bf16.mxu0 0
    %2634 = vmatpush1.bf16.msra.mxu0 0
    %2635 = vmatprep.subr.bf16.mxu0 0
    %2636 = vmatpush1.bf16.msra.mxu0 0
    %2637 = vmatprep.subr.bf16.mxu0 0
    %2638 = vmatpush1.bf16.msra.mxu0 0
    %2639 = vmatprep.mubr.bf16.mxu0 0
    %2640 = vmatmul.mubr.bf16.gmra.mrb[0].mxu0 %v2319
    %v2641 = vpop.f32.mrb[0].mxu0
    %v2642 = vadd.f32 %v2601, %v2641
    %v2643 = vpop.f32.mrb[0].mxu0
    %v2644 = vadd.f32 %v2603, %v2643
    %v2645 = vpop.f32.mrb[0].mxu0
    %v2646 = vpop.f32.mrb[0].mxu0
    %2647 = vdwg.mxu0
    %v2648 = vxor.u32 %v2396, 2147483648
    %v2649 = vmul.f32 %v2648, 1.442695
    %v2650 = vpow.pop %v2649
    %v2651 = vadd.f32 %v2650, 1.0
    %v2652 = vrcp.pop %v2651
    %v2653 = vmul.f32 1.0, %v2652
    %v2654 = vxor.u32 %v2398, 2147483648
    %v2655 = vmul.f32 %v2654, 1.442695
    %v2656 = vpow.pop %v2655
    %v2657 = vadd.f32 %v2656, 1.0
    %v2658 = vrcp.pop %v2657
    %v2659 = vmul.f32 1.0, %v2658
    %v2660 = vtanh.pop %v2478
    %v2661 = vxor.u32 %v2480, 2147483648
    %v2662 = vmul.f32 %v2661, 1.442695
    %v2663 = vpow.pop %v2662
    %v2664 = vadd.f32 %v2663, 1.0
    %v2665 = vrcp.pop %v2664
    %v2666 = vmul.f32 1.0, %v2665
    %v2667 = vmul.f32 %v2659, %v1818
    %v2668 = vmul.f32 %v2653, %v2660
    %v2669 = vadd.f32 %v2667, %v2668
    %v2670 = vtanh.pop %v2669
    %v2671 = vmul.f32 %v2666, %v2670
    %v2672 = vxor.u32 %v2560, 2147483648
    %v2673 = vmul.f32 %v2672, 1.442695
    %v2674 = vpow.pop %v2673
    %v2675 = vadd.f32 %v2674, 1.0
    %v2676 = vrcp.pop %v2675
    %v2677 = vmul.f32 1.0, %v2676
    %v2678 = vxor.u32 %v2562, 2147483648
    %v2679 = vmul.f32 %v2678, 1.442695
    %v2680 = vpow.pop %v2679
    %v2681 = vadd.f32 %v2680, 1.0
    %v2682 = vrcp.pop %v2681
    %v2683 = vmul.f32 1.0, %v2682
    %v2684 = vtanh.pop %v2642
    %v2685 = vxor.u32 %v2644, 2147483648
    %v2686 = vmul.f32 %v2685, 1.442695
    %v2687 = vpow.pop %v2686
    %v2688 = vadd.f32 %v2687, 1.0
    %v2689 = vrcp.pop %v2688
    %v2690 = vmul.f32 1.0, %v2689
    %v2691 = vmul.f32 %v2683, %v2316
    %v2692 = vmul.f32 %v2677, %v2684
    %v2693 = vadd.f32 %v2691, %v2692
    %v2694 = vtanh.pop %v2693
    %v2695 = vmul.f32 %v2690, %v2694
    %vm2696 = vcmp.gt.f32.partialorder %v2094, 0.0
    %vm2697 = vcmp.gt.f32.partialorder %v2102, 0.0
    %vm2698 = vcmp.gt.f32.partialorder %v2110, 0.0
    %vm2699 = vcmp.gt.f32.partialorder %v2118, 0.0
    %vm2700 = vcmp.gt.f32.partialorder %v2126, 0.0
    %vm2701 = vcmp.gt.f32.partialorder %v2134, 0.0
    %vm2702 = vcmp.gt.f32.partialorder %v2142, 0.0
    %vm2703 = vcmp.gt.f32.partialorder %v2150, 0.0
    %v2705 = vcombine.high %v2695, %v2695
    %v2707 = vunpack.c.l.s4 1966171168
    %v2708 = vunpack.c.0.s8 %v2707
    %v2709 = vlaneseq
    %v2710 = vshrl.u32 %v2709, 7
    %v2711 = vsub.s32 %v2708, %v2710
    %v2712 = vrot.slane %v2695, %v2711
    %v2714 = vunpack.c.l.s4 1966171168
    %v2715 = vunpack.c.0.s8 %v2714
    %v2716 = vlaneseq
    %v2717 = vshrl.u32 %v2716, 7
    %v2718 = vsub.s32 %v2715, %v2717
    %v2719 = vrot.slane %v2705, %v2718
    %v2720 = vcombine.high %v2712, %v2712
    %v2721 = vcombine.high %v2719, %v2719
    %v2723 = vunpack.c.l.s4 1966171168
    %v2724 = vunpack.c.0.s8 %v2723
    %v2725 = vlaneseq
    %v2726 = vshrl.u32 %v2725, 7
    %v2727 = vsub.s32 %v2724, %v2726
    %v2728 = vrot.slane %v2712, %v2727
    %v2730 = vunpack.c.l.s4 1966171168
    %v2731 = vunpack.c.0.s8 %v2730
    %v2732 = vlaneseq
    %v2733 = vshrl.u32 %v2732, 7
    %v2734 = vsub.s32 %v2731, %v2733
    %v2735 = vrot.slane %v2719, %v2734
    %v2737 = vunpack.c.l.s4 1966171168
    %v2738 = vunpack.c.0.s8 %v2737
    %v2739 = vlaneseq
    %v2740 = vshrl.u32 %v2739, 7
    %v2741 = vsub.s32 %v2738, %v2740
    %v2742 = vrot.slane %v2720, %v2741
    %v2744 = vunpack.c.l.s4 1966171168
    %v2745 = vunpack.c.0.s8 %v2744
    %v2746 = vlaneseq
    %v2747 = vshrl.u32 %v2746, 7
    %v2748 = vsub.s32 %v2745, %v2747
    %v2749 = vrot.slane %v2721, %v2748
    %v2750 = vcombine.high %v2728, %v2728
    %v2751 = vcombine.high %v2735, %v2735
    %v2752 = vcombine.high %v2742, %v2742
    %v2753 = vcombine.high %v2749, %v2749
    %v2754 = vsel %vm2696, 1, 0
    %v2755 = vsel %vm2697, 1, 0
    %v2756 = vsel %vm2698, 1, 0
    %v2757 = vsel %vm2699, 1, 0
    %v2758 = vsel %vm2700, 1, 0
    %v2759 = vsel %vm2701, 1, 0
    %v2760 = vsel %vm2702, 1, 0
    %v2761 = vsel %vm2703, 1, 0
    %vm2762 = vcmp.eq.s32.totalorder %v2754, 1
    %vm2763 = vcmp.eq.s32.totalorder %v2755, 1
    %vm2764 = vcmp.eq.s32.totalorder %v2756, 1
    %vm2765 = vcmp.eq.s32.totalorder %v2757, 1
    %vm2766 = vcmp.eq.s32.totalorder %v2758, 1
    %vm2767 = vcmp.eq.s32.totalorder %v2759, 1
    %vm2768 = vcmp.eq.s32.totalorder %v2760, 1
    %vm2769 = vcmp.eq.s32.totalorder %v2761, 1
    %v2770 = vlaneseq
    %v2771 = vshrl.u32 %v2770, 7
    %v2772 = vsub.s32 0, %v2771
    %v2773 = vrot.slane %v2728, %v2772
    %v2774 = vlaneseq
    %v2775 = vshrl.u32 %v2774, 7
    %v2776 = vsub.s32 0, %v2775
    %v2777 = vrot.slane %v2742, %v2776
    %v2778 = vlaneseq
    %v2779 = vshrl.u32 %v2778, 7
    %v2780 = vsub.s32 0, %v2779
    %v2781 = vrot.slane %v2750, %v2780
    %v2782 = vlaneseq
    %v2783 = vshrl.u32 %v2782, 7
    %v2784 = vsub.s32 0, %v2783
    %v2785 = vrot.slane %v2752, %v2784
    %v2786 = vlaneseq
    %v2787 = vshrl.u32 %v2786, 7
    %v2788 = vsub.s32 0, %v2787
    %v2789 = vrot.slane %v2735, %v2788
    %v2790 = vlaneseq
    %v2791 = vshrl.u32 %v2790, 7
    %v2792 = vsub.s32 0, %v2791
    %v2793 = vrot.slane %v2749, %v2792
    %v2794 = vlaneseq
    %v2795 = vshrl.u32 %v2794, 7
    %v2796 = vsub.s32 0, %v2795
    %v2797 = vrot.slane %v2751, %v2796
    %v2798 = vlaneseq
    %v2799 = vshrl.u32 %v2798, 7
    %v2800 = vsub.s32 0, %v2799
    %v2801 = vrot.slane %v2753, %v2800
    %v2810 = vsel %vm2762, %v2773, %v1959
    %v2811 = vsel %vm2763, %v2777, %v1960
    %v2812 = vsel %vm2764, %v2781, %v1961
    %v2813 = vsel %vm2765, %v2785, %v1962
    %v2814 = vsel %vm2766, %v2789, %v1963
    %v2815 = vsel %vm2767, %v2793, %v1964
    %v2816 = vsel %vm2768, %v2797, %v1965
    %v2817 = vsel %vm2769, %v2801, %v1966
    %v2819 = vcombine.high %v2693, %v2693
    %v2821 = vunpack.c.l.s4 1966171168
    %v2822 = vunpack.c.0.s8 %v2821
    %v2823 = vlaneseq
    %v2824 = vshrl.u32 %v2823, 7
    %v2825 = vsub.s32 %v2822, %v2824
    %v2826 = vrot.slane %v2693, %v2825
    %v2828 = vunpack.c.l.s4 1966171168
    %v2829 = vunpack.c.0.s8 %v2828
    %v2830 = vlaneseq
    %v2831 = vshrl.u32 %v2830, 7
    %v2832 = vsub.s32 %v2829, %v2831
    %v2833 = vrot.slane %v2819, %v2832
    %v2834 = vcombine.high %v2826, %v2826
    %v2835 = vcombine.high %v2833, %v2833
    %v2837 = vunpack.c.l.s4 1966171168
    %v2838 = vunpack.c.0.s8 %v2837
    %v2839 = vlaneseq
    %v2840 = vshrl.u32 %v2839, 7
    %v2841 = vsub.s32 %v2838, %v2840
    %v2842 = vrot.slane %v2826, %v2841
    %v2844 = vunpack.c.l.s4 1966171168
    %v2845 = vunpack.c.0.s8 %v2844
    %v2846 = vlaneseq
    %v2847 = vshrl.u32 %v2846, 7
    %v2848 = vsub.s32 %v2845, %v2847
    %v2849 = vrot.slane %v2833, %v2848
    %v2851 = vunpack.c.l.s4 1966171168
    %v2852 = vunpack.c.0.s8 %v2851
    %v2853 = vlaneseq
    %v2854 = vshrl.u32 %v2853, 7
    %v2855 = vsub.s32 %v2852, %v2854
    %v2856 = vrot.slane %v2834, %v2855
    %v2858 = vunpack.c.l.s4 1966171168
    %v2859 = vunpack.c.0.s8 %v2858
    %v2860 = vlaneseq
    %v2861 = vshrl.u32 %v2860, 7
    %v2862 = vsub.s32 %v2859, %v2861
    %v2863 = vrot.slane %v2835, %v2862
    %v2864 = vcombine.high %v2842, %v2842
    %v2865 = vcombine.high %v2849, %v2849
    %v2866 = vcombine.high %v2856, %v2856
    %v2867 = vcombine.high %v2863, %v2863
    %v2868 = vlaneseq
    %v2869 = vshrl.u32 %v2868, 7
    %v2870 = vsub.s32 0, %v2869
    %v2871 = vrot.slane %v2842, %v2870
    %v2872 = vlaneseq
    %v2873 = vshrl.u32 %v2872, 7
    %v2874 = vsub.s32 0, %v2873
    %v2875 = vrot.slane %v2856, %v2874
    %v2876 = vlaneseq
    %v2877 = vshrl.u32 %v2876, 7
    %v2878 = vsub.s32 0, %v2877
    %v2879 = vrot.slane %v2864, %v2878
    %v2880 = vlaneseq
    %v2881 = vshrl.u32 %v2880, 7
    %v2882 = vsub.s32 0, %v2881
    %v2883 = vrot.slane %v2866, %v2882
    %v2884 = vlaneseq
    %v2885 = vshrl.u32 %v2884, 7
    %v2886 = vsub.s32 0, %v2885
    %v2887 = vrot.slane %v2849, %v2886
    %v2888 = vlaneseq
    %v2889 = vshrl.u32 %v2888, 7
    %v2890 = vsub.s32 0, %v2889
    %v2891 = vrot.slane %v2863, %v2890
    %v2892 = vlaneseq
    %v2893 = vshrl.u32 %v2892, 7
    %v2894 = vsub.s32 0, %v2893
    %v2895 = vrot.slane %v2865, %v2894
    %v2896 = vlaneseq
    %v2897 = vshrl.u32 %v2896, 7
    %v2898 = vsub.s32 0, %v2897
    %v2899 = vrot.slane %v2867, %v2898
    %v2908 = vsel %vm2762, %v2871, %v2057
    %v2909 = vsel %vm2763, %v2875, %v2058
    %v2910 = vsel %vm2764, %v2879, %v2059
    %v2911 = vsel %vm2765, %v2883, %v2060
    %v2912 = vsel %vm2766, %v2887, %v2061
    %v2913 = vsel %vm2767, %v2891, %v2062
    %v2914 = vsel %vm2768, %v2895, %v2063
    %v2915 = vsel %vm2769, %v2899, %v2064
    %v2916 = vmax.f32 %v2065, %v2068
    %s2917 = scalar_lea.vmem [#allocation8], 8
    %2918 = vst [vmem:[%s2917] sm:$0xff] %v2671
    %s2919 = scalar_lea.vmem [#allocation2], 16
    %v2920 = vld [vmem:[%s2919] sm:$0xff]
    %2922 = vrot.lane.b32.xlu0 %v2920, 32
    %v2923 = vpop.permute.xlu0 %2922
    %v2925 = vsel %vm334, %v2923, 0.0
    %2926 = vadd.xlane.f32.xlu0 %v2925
    %v2927 = vpop.xlane.xlu0 %2926
    %v2928 = vmul.f32 %v2920, %v2916
    %2930 = vrot.lane.b32.xlu0 %v2928, 32
    %v2931 = vpop.permute.xlu0 %2930
    %v2933 = vsel %vm334, %v2931, 0.0
    %2934 = vadd.xlane.f32.xlu0 %v2933
    %v2935 = vpop.xlane.xlu0 %2934
    %v2936 = vmul.f32 %v2927, %v2935
    %v2937 = vsub.f32 1.0, %v2935
    %v2938 = vmul.f32 %v2927, %v2937
    %v2939 = vlaneseq
    %v2940 = vshrl.u32 %v2939, 7
    %v2941 = vsub.s32 0, %v2940
    %v2942 = vrot.slane %v2920, %v2941
    %s2944 = sor.u32 256, 96
    %2945 = vbcast.lane.b32.xlu0 %v2942, %s2944
    %v2946 = vpop.permute.xlu0 %2945
    %v2947 = vlaneseq
    %v2948 = vshrl.u32 %v2947, 7
    %v2949 = vsub.s32 1, %v2948
    %v2950 = vrot.slane %v2920, %v2949
    %s2952 = sor.u32 256, 96
    %2953 = vbcast.lane.b32.xlu0 %v2950, %s2952
    %v2954 = vpop.permute.xlu0 %2953
    %v2955 = vlaneseq
    %v2956 = vshrl.u32 %v2955, 7
    %v2957 = vsub.s32 2, %v2956
    %v2958 = vrot.slane %v2920, %v2957
    %s2960 = sor.u32 256, 96
    %2961 = vbcast.lane.b32.xlu0 %v2958, %s2960
    %v2962 = vpop.permute.xlu0 %2961
    %v2963 = vlaneseq
    %v2964 = vshrl.u32 %v2963, 7
    %v2965 = vsub.s32 3, %v2964
    %v2966 = vrot.slane %v2920, %v2965
    %s2968 = sor.u32 256, 96
    %2969 = vbcast.lane.b32.xlu0 %v2966, %s2968
    %v2970 = vpop.permute.xlu0 %2969
    %v2971 = vlaneseq
    %v2972 = vshrl.u32 %v2971, 7
    %v2973 = vsub.s32 4, %v2972
    %v2974 = vrot.slane %v2920, %v2973
    %s2976 = sor.u32 256, 96
    %2977 = vbcast.lane.b32.xlu0 %v2974, %s2976
    %v2978 = vpop.permute.xlu0 %2977
    %v2979 = vlaneseq
    %v2980 = vshrl.u32 %v2979, 7
    %v2981 = vsub.s32 5, %v2980
    %v2982 = vrot.slane %v2920, %v2981
    %s2984 = sor.u32 256, 96
    %2985 = vbcast.lane.b32.xlu0 %v2982, %s2984
    %v2986 = vpop.permute.xlu0 %2985
    %v2987 = vlaneseq
    %v2988 = vshrl.u32 %v2987, 7
    %v2989 = vsub.s32 6, %v2988
    %v2990 = vrot.slane %v2920, %v2989
    %s2992 = sor.u32 256, 96
    %2993 = vbcast.lane.b32.xlu0 %v2990, %s2992
    %v2994 = vpop.permute.xlu0 %2993
    %v2995 = vlaneseq
    %v2996 = vshrl.u32 %v2995, 7
    %v2997 = vsub.s32 7, %v2996
    %v2998 = vrot.slane %v2920, %v2997
    %s3000 = sor.u32 256, 96
    %3001 = vbcast.lane.b32.xlu0 %v2998, %s3000
    %v3002 = vpop.permute.xlu0 %3001
    %v3003 = vmul.f32 %v2946, %v2810
    %v3004 = vmul.f32 %v2954, %v2811
    %v3005 = vmul.f32 %v2962, %v2812
    %v3006 = vmul.f32 %v2970, %v2813
    %v3007 = vmul.f32 %v2978, %v2814
    %v3008 = vmul.f32 %v2986, %v2815
    %v3009 = vmul.f32 %v2994, %v2816
    %v3010 = vmul.f32 %v3002, %v2817
    %v3011 = vsel %vm421, %v3003, 0.0
    %v3012 = vrot.slane %v3011, 4
    %v3013 = vadd.f32 %v3011, %v3012
    %v3014 = vrot.slane %v3013, 2
    %v3015 = vadd.f32 %v3013, %v3014
    %v3016 = vrot.slane %v3015, 1
    %v3017 = vadd.f32 %v3015, %v3016
    %v3018 = vsel %vm421, %v3004, 0.0
    %v3019 = vrot.slane %v3018, 4
    %v3020 = vadd.f32 %v3018, %v3019
    %v3021 = vrot.slane %v3020, 2
    %v3022 = vadd.f32 %v3020, %v3021
    %v3023 = vrot.slane %v3022, 1
    %v3024 = vadd.f32 %v3022, %v3023
    %v3025 = vsel %vm421, %v3005, 0.0
    %v3026 = vrot.slane %v3025, 4
    %v3027 = vadd.f32 %v3025, %v3026
    %v3028 = vrot.slane %v3027, 2
    %v3029 = vadd.f32 %v3027, %v3028
    %v3030 = vrot.slane %v3029, 1
    %v3031 = vadd.f32 %v3029, %v3030
    %v3032 = vsel %vm421, %v3006, 0.0
    %v3033 = vrot.slane %v3032, 4
    %v3034 = vadd.f32 %v3032, %v3033
    %v3035 = vrot.slane %v3034, 2
    %v3036 = vadd.f32 %v3034, %v3035
    %v3037 = vrot.slane %v3036, 1
    %v3038 = vadd.f32 %v3036, %v3037
    %v3039 = vsel %vm421, %v3007, 0.0
    %v3040 = vrot.slane %v3039, 4
    %v3041 = vadd.f32 %v3039, %v3040
    %v3042 = vrot.slane %v3041, 2
    %v3043 = vadd.f32 %v3041, %v3042
    %v3044 = vrot.slane %v3043, 1
    %v3045 = vadd.f32 %v3043, %v3044
    %v3046 = vsel %vm421, %v3008, 0.0
    %v3047 = vrot.slane %v3046, 4
    %v3048 = vadd.f32 %v3046, %v3047
    %v3049 = vrot.slane %v3048, 2
    %v3050 = vadd.f32 %v3048, %v3049
    %v3051 = vrot.slane %v3050, 1
    %v3052 = vadd.f32 %v3050, %v3051
    %v3053 = vsel %vm421, %v3009, 0.0
    %v3054 = vrot.slane %v3053, 4
    %v3055 = vadd.f32 %v3053, %v3054
    %v3056 = vrot.slane %v3055, 2
    %v3057 = vadd.f32 %v3055, %v3056
    %v3058 = vrot.slane %v3057, 1
    %v3059 = vadd.f32 %v3057, %v3058
    %v3060 = vsel %vm421, %v3010, 0.0
    %v3061 = vrot.slane %v3060, 4
    %v3062 = vadd.f32 %v3060, %v3061
    %v3063 = vrot.slane %v3062, 2
    %v3064 = vadd.f32 %v3062, %v3063
    %v3065 = vrot.slane %v3064, 1
    %v3066 = vadd.f32 %v3064, %v3065
    %v3067 = vmul.f32 %v2946, %v2908
    %v3068 = vmul.f32 %v2954, %v2909
    %v3069 = vmul.f32 %v2962, %v2910
    %v3070 = vmul.f32 %v2970, %v2911
    %v3071 = vmul.f32 %v2978, %v2912
    %v3072 = vmul.f32 %v2986, %v2913
    %v3073 = vmul.f32 %v2994, %v2914
    %v3074 = vmul.f32 %v3002, %v2915
    %v3075 = vsel %vm421, %v3067, 0.0
    %v3076 = vrot.slane %v3075, 4
    %v3077 = vadd.f32 %v3075, %v3076
    %v3078 = vrot.slane %v3077, 2
    %v3079 = vadd.f32 %v3077, %v3078
    %v3080 = vrot.slane %v3079, 1
    %v3081 = vadd.f32 %v3079, %v3080
    %v3082 = vsel %vm421, %v3068, 0.0
    %v3083 = vrot.slane %v3082, 4
    %v3084 = vadd.f32 %v3082, %v3083
    %v3085 = vrot.slane %v3084, 2
    %v3086 = vadd.f32 %v3084, %v3085
    %v3087 = vrot.slane %v3086, 1
    %v3088 = vadd.f32 %v3086, %v3087
    %v3089 = vsel %vm421, %v3069, 0.0
    %v3090 = vrot.slane %v3089, 4
    %v3091 = vadd.f32 %v3089, %v3090
    %v3092 = vrot.slane %v3091, 2
    %v3093 = vadd.f32 %v3091, %v3092
    %v3094 = vrot.slane %v3093, 1
    %v3095 = vadd.f32 %v3093, %v3094
    %v3096 = vsel %vm421, %v3070, 0.0
    %v3097 = vrot.slane %v3096, 4
    %v3098 = vadd.f32 %v3096, %v3097
    %v3099 = vrot.slane %v3098, 2
    %v3100 = vadd.f32 %v3098, %v3099
    %v3101 = vrot.slane %v3100, 1
    %v3102 = vadd.f32 %v3100, %v3101
    %v3103 = vsel %vm421, %v3071, 0.0
    %v3104 = vrot.slane %v3103, 4
    %v3105 = vadd.f32 %v3103, %v3104
    %v3106 = vrot.slane %v3105, 2
    %v3107 = vadd.f32 %v3105, %v3106
    %v3108 = vrot.slane %v3107, 1
    %v3109 = vadd.f32 %v3107, %v3108
    %v3110 = vsel %vm421, %v3072, 0.0
    %v3111 = vrot.slane %v3110, 4
    %v3112 = vadd.f32 %v3110, %v3111
    %v3113 = vrot.slane %v3112, 2
    %v3114 = vadd.f32 %v3112, %v3113
    %v3115 = vrot.slane %v3114, 1
    %v3116 = vadd.f32 %v3114, %v3115
    %v3117 = vsel %vm421, %v3073, 0.0
    %v3118 = vrot.slane %v3117, 4
    %v3119 = vadd.f32 %v3117, %v3118
    %v3120 = vrot.slane %v3119, 2
    %v3121 = vadd.f32 %v3119, %v3120
    %v3122 = vrot.slane %v3121, 1
    %v3123 = vadd.f32 %v3121, %v3122
    %v3124 = vsel %vm421, %v3074, 0.0
    %v3125 = vrot.slane %v3124, 4
    %v3126 = vadd.f32 %v3124, %v3125
    %v3127 = vrot.slane %v3126, 2
    %v3128 = vadd.f32 %v3126, %v3127
    %v3129 = vrot.slane %v3128, 1
    %v3130 = vadd.f32 %v3128, %v3129
    %v3139 = vsel %vm486, %v3024, %v3017
    %v3140 = vsel %vm488, %v3031, %v3139
    %v3141 = vsel %vm490, %v3038, %v3140
    %v3142 = vsel %vm492, %v3045, %v3141
    %v3143 = vsel %vm494, %v3052, %v3142
    %v3144 = vsel %vm496, %v3059, %v3143
    %v3145 = vsel %vm498, %v3066, %v3144
    %v3147 = vmul.f32 %v2936, %v3145
    %v3148 = vmul.f32 %v2938, %v306
    %v3149 = vadd.f32 %v3147, %v3148
    %v3158 = vsel %vm486, %v3088, %v3081
    %v3159 = vsel %vm488, %v3095, %v3158
    %v3160 = vsel %vm490, %v3102, %v3159
    %v3161 = vsel %vm492, %v3109, %v3160
    %v3162 = vsel %vm494, %v3116, %v3161
    %v3163 = vsel %vm496, %v3123, %v3162
    %v3164 = vsel %vm498, %v3130, %v3163
    %v3166 = vmul.f32 %v2936, %v3164
    %v3167 = vmul.f32 %v2938, %v313
    %v3168 = vadd.f32 %v3166, %v3167
    %v3169 = vpack.c.bf16 %v2920, %v2920
    %v3170 = vpack.c.bf16 %v2671, %v2671
    %v3171 = vpack.c.bf16 %v3149, %v3149
    %3172 = vmatprep.subr.bf16.mxu0 %v1086
    %3173 = vmatpush1.bf16.msra.mxu0 %v1085
    %3174 = vmatprep.subr.bf16.mxu0 %v1094
    %3175 = vmatpush1.bf16.msra.mxu0 %v1093
    %3176 = vmatprep.subr.bf16.mxu0 %v1102
    %3177 = vmatpush1.bf16.msra.mxu0 %v1101
    %3178 = vmatprep.subr.bf16.mxu0 %v1110
    %3179 = vmatpush1.bf16.msra.mxu0 %v1109
    %3180 = vmatprep.subr.bf16.mxu0 %v1118
    %3181 = vmatpush1.bf16.msra.mxu0 %v1117
    %3182 = vmatprep.subr.bf16.mxu0 %v1126
    %3183 = vmatpush1.bf16.msra.mxu0 %v1125
    %3184 = vmatprep.subr.bf16.mxu0 %v1134
    %3185 = vmatpush1.bf16.msra.mxu0 %v1133
    %3186 = vmatprep.subr.bf16.mxu0 %v1142
    %3187 = vmatpush1.bf16.msra.mxu0 %v1141
    %3188 = vmatprep.subr.bf16.mxu0 %v1150
    %3189 = vmatpush1.bf16.msra.mxu0 %v1149
    %3190 = vmatprep.subr.bf16.mxu0 %v1158
    %3191 = vmatpush1.bf16.msra.mxu0 %v1157
    %3192 = vmatprep.subr.bf16.mxu0 %v1166
    %3193 = vmatpush1.bf16.msra.mxu0 %v1165
    %3194 = vmatprep.subr.bf16.mxu0 %v1174
    %3195 = vmatpush1.bf16.msra.mxu0 %v1173
    %3196 = vmatprep.subr.bf16.mxu0 %v1182
    %3197 = vmatpush1.bf16.msra.mxu0 %v1181
    %3198 = vmatprep.subr.bf16.mxu0 %v1190
    %3199 = vmatpush1.bf16.msra.mxu0 %v1189
    %3200 = vmatprep.subr.bf16.mxu0 %v1198
    %3201 = vmatpush1.bf16.msra.mxu0 %v1197
    %3202 = vmatprep.subr.bf16.mxu0 %v1206
    %3203 = vmatpush1.bf16.msra.mxu0 %v1205
    %3204 = vmatprep.mubr.bf16.mxu0 %v3170
    %3205 = vmatmul.mubr.bf16.gmra.mrb[0].mxu0 %v3169
    %v3206 = vpop.f32.mrb[0].mxu0
    %v3207 = vadd.f32 %v264, %v3206
    %v3208 = vpop.f32.mrb[0].mxu0
    %v3209 = vadd.f32 %v268, %v3208
    %v3210 = vpop.f32.mrb[0].mxu0
    %v3211 = vpop.f32.mrb[0].mxu0
    %3212 = vdwg.mxu0
    %3213 = vmatprep.subr.bf16.mxu0 %v1214
    %3214 = vmatpush1.bf16.msra.mxu0 %v1213
    %3215 = vmatprep.subr.bf16.mxu0 %v1222
    %3216 = vmatpush1.bf16.msra.mxu0 %v1221
    %3217 = vmatprep.subr.bf16.mxu0 %v1230
    %3218 = vmatpush1.bf16.msra.mxu0 %v1229
    %3219 = vmatprep.subr.bf16.mxu0 %v1238
    %3220 = vmatpush1.bf16.msra.mxu0 %v1237
    %3221 = vmatprep.subr.bf16.mxu0 %v1246
    %3222 = vmatpush1.bf16.msra.mxu0 %v1245
    %3223 = vmatprep.subr.bf16.mxu0 %v1254
    %3224 = vmatpush1.bf16.msra.mxu0 %v1253
    %3225 = vmatprep.subr.bf16.mxu0 %v1262
    %3226 = vmatpush1.bf16.msra.mxu0 %v1261
    %3227 = vmatprep.subr.bf16.mxu0 %v1270
    %3228 = vmatpush1.bf16.msra.mxu0 %v1269
    %3229 = vmatprep.subr.bf16.mxu0 0
    %3230 = vmatpush1.bf16.msra.mxu0 0
    %3231 = vmatprep.subr.bf16.mxu0 0
    %3232 = vmatpush1.bf16.msra.mxu0 0
    %3233 = vmatprep.subr.bf16.mxu0 0
    %3234 = vmatpush1.bf16.msra.mxu0 0
    %3235 = vmatprep.subr.bf16.mxu0 0
    %3236 = vmatpush1.bf16.msra.mxu0 0
    %3237 = vmatprep.subr.bf16.mxu0 0
    %3238 = vmatpush1.bf16.msra.mxu0 0
    %3239 = vmatprep.subr.bf16.mxu0 0
    %3240 = vmatpush1.bf16.msra.mxu0 0
    %3241 = vmatprep.subr.bf16.mxu0 0
    %3242 = vmatpush1.bf16.msra.mxu0 0
    %3243 = vmatprep.subr.bf16.mxu0 0
    %3244 = vmatpush1.bf16.msra.mxu0 0
    %3245 = vmatprep.mubr.bf16.mxu0 0
    %3246 = vmatmul.mubr.bf16.gmra.mrb[0].mxu0 %v3171
    %v3247 = vpop.f32.mrb[0].mxu0
    %v3248 = vadd.f32 %v3207, %v3247
    %v3249 = vpop.f32.mrb[0].mxu0
    %v3250 = vadd.f32 %v3209, %v3249
    %v3251 = vpop.f32.mrb[0].mxu0
    %v3252 = vpop.f32.mrb[0].mxu0
    %3253 = vdwg.mxu0
    %3254 = vmatprep.subr.bf16.mxu0 %v1088
    %3255 = vmatpush1.bf16.msra.mxu0 %v1087
    %3256 = vmatprep.subr.bf16.mxu0 %v1096
    %3257 = vmatpush1.bf16.msra.mxu0 %v1095
    %3258 = vmatprep.subr.bf16.mxu0 %v1104
    %3259 = vmatpush1.bf16.msra.mxu0 %v1103
    %3260 = vmatprep.subr.bf16.mxu0 %v1112
    %3261 = vmatpush1.bf16.msra.mxu0 %v1111
    %3262 = vmatprep.subr.bf16.mxu0 %v1120
    %3263 = vmatpush1.bf16.msra.mxu0 %v1119
    %3264 = vmatprep.subr.bf16.mxu0 %v1128
    %3265 = vmatpush1.bf16.msra.mxu0 %v1127
    %3266 = vmatprep.subr.bf16.mxu0 %v1136
    %3267 = vmatpush1.bf16.msra.mxu0 %v1135
    %3268 = vmatprep.subr.bf16.mxu0 %v1144
    %3269 = vmatpush1.bf16.msra.mxu0 %v1143
    %3270 = vmatprep.subr.bf16.mxu0 %v1152
    %3271 = vmatpush1.bf16.msra.mxu0 %v1151
    %3272 = vmatprep.subr.bf16.mxu0 %v1160
    %3273 = vmatpush1.bf16.msra.mxu0 %v1159
    %3274 = vmatprep.subr.bf16.mxu0 %v1168
    %3275 = vmatpush1.bf16.msra.mxu0 %v1167
    %3276 = vmatprep.subr.bf16.mxu0 %v1176
    %3277 = vmatpush1.bf16.msra.mxu0 %v1175
    %3278 = vmatprep.subr.bf16.mxu0 %v1184
    %3279 = vmatpush1.bf16.msra.mxu0 %v1183
    %3280 = vmatprep.subr.bf16.mxu0 %v1192
    %3281 = vmatpush1.bf16.msra.mxu0 %v1191
    %3282 = vmatprep.subr.bf16.mxu0 %v1200
    %3283 = vmatpush1.bf16.msra.mxu0 %v1199
    %3284 = vmatprep.subr.bf16.mxu0 %v1208
    %3285 = vmatpush1.bf16.msra.mxu0 %v1207
    %3286 = vmatprep.mubr.bf16.mxu0 %v3170
    %3287 = vmatmul.mubr.bf16.gmra.mrb[0].mxu0 %v3169
    %v3288 = vpop.f32.mrb[0].mxu0
    %v3289 = vadd.f32 %v272, %v3288
    %v3290 = vpop.f32.mrb[0].mxu0
    %v3291 = vadd.f32 %v276, %v3290
    %v3292 = vpop.f32.mrb[0].mxu0
    %v3293 = vpop.f32.mrb[0].mxu0
    %3294 = vdwg.mxu0
    %3295 = vmatprep.subr.bf16.mxu0 %v1216
    %3296 = vmatpush1.bf16.msra.mxu0 %v1215
    %3297 = vmatprep.subr.bf16.mxu0 %v1224
    %3298 = vmatpush1.bf16.msra.mxu0 %v1223
    %3299 = vmatprep.subr.bf16.mxu0 %v1232
    %3300 = vmatpush1.bf16.msra.mxu0 %v1231
    %3301 = vmatprep.subr.bf16.mxu0 %v1240
    %3302 = vmatpush1.bf16.msra.mxu0 %v1239
    %3303 = vmatprep.subr.bf16.mxu0 %v1248
    %3304 = vmatpush1.bf16.msra.mxu0 %v1247
    %3305 = vmatprep.subr.bf16.mxu0 %v1256
    %3306 = vmatpush1.bf16.msra.mxu0 %v1255
    %3307 = vmatprep.subr.bf16.mxu0 %v1264
    %3308 = vmatpush1.bf16.msra.mxu0 %v1263
    %3309 = vmatprep.subr.bf16.mxu0 %v1272
    %3310 = vmatpush1.bf16.msra.mxu0 %v1271
    %3311 = vmatprep.subr.bf16.mxu0 0
    %3312 = vmatpush1.bf16.msra.mxu0 0
    %3313 = vmatprep.subr.bf16.mxu0 0
    %3314 = vmatpush1.bf16.msra.mxu0 0
    %3315 = vmatprep.subr.bf16.mxu0 0
    %3316 = vmatpush1.bf16.msra.mxu0 0
    %3317 = vmatprep.subr.bf16.mxu0 0
    %3318 = vmatpush1.bf16.msra.mxu0 0
    %3319 = vmatprep.subr.bf16.mxu0 0
    %3320 = vmatpush1.bf16.msra.mxu0 0
    %3321 = vmatprep.subr.bf16.mxu0 0
    %3322 = vmatpush1.bf16.msra.mxu0 0
    %3323 = vmatprep.subr.bf16.mxu0 0
    %3324 = vmatpush1.bf16.msra.mxu0 0
    %3325 = vmatprep.subr.bf16.mxu0 0
    %3326 = vmatpush1.bf16.msra.mxu0 0
    %3327 = vmatprep.mubr.bf16.mxu0 0
    %3328 = vmatmul.mubr.bf16.gmra.mrb[0].mxu0 %v3171
    %v3329 = vpop.f32.mrb[0].mxu0
    %v3330 = vadd.f32 %v3289, %v3329
    %v3331 = vpop.f32.mrb[0].mxu0
    %v3332 = vadd.f32 %v3291, %v3331
    %v3333 = vpop.f32.mrb[0].mxu0
    %v3334 = vpop.f32.mrb[0].mxu0
    %3335 = vdwg.mxu0
    %3336 = vmatprep.subr.bf16.mxu0 %v1090
    %3337 = vmatpush1.bf16.msra.mxu0 %v1089
    %3338 = vmatprep.subr.bf16.mxu0 %v1098
    %3339 = vmatpush1.bf16.msra.mxu0 %v1097
    %3340 = vmatprep.subr.bf16.mxu0 %v1106
    %3341 = vmatpush1.bf16.msra.mxu0 %v1105
    %3342 = vmatprep.subr.bf16.mxu0 %v1114
    %3343 = vmatpush1.bf16.msra.mxu0 %v1113
    %3344 = vmatprep.subr.bf16.mxu0 %v1122
    %3345 = vmatpush1.bf16.msra.mxu0 %v1121
    %3346 = vmatprep.subr.bf16.mxu0 %v1130
    %3347 = vmatpush1.bf16.msra.mxu0 %v1129
    %3348 = vmatprep.subr.bf16.mxu0 %v1138
    %3349 = vmatpush1.bf16.msra.mxu0 %v1137
    %3350 = vmatprep.subr.bf16.mxu0 %v1146
    %3351 = vmatpush1.bf16.msra.mxu0 %v1145
    %3352 = vmatprep.subr.bf16.mxu0 %v1154
    %3353 = vmatpush1.bf16.msra.mxu0 %v1153
    %3354 = vmatprep.subr.bf16.mxu0 %v1162
    %3355 = vmatpush1.bf16.msra.mxu0 %v1161
    %3356 = vmatprep.subr.bf16.mxu0 %v1170
    %3357 = vmatpush1.bf16.msra.mxu0 %v1169
    %3358 = vmatprep.subr.bf16.mxu0 %v1178
    %3359 = vmatpush1.bf16.msra.mxu0 %v1177
    %3360 = vmatprep.subr.bf16.mxu0 %v1186
    %3361 = vmatpush1.bf16.msra.mxu0 %v1185
    %3362 = vmatprep.subr.bf16.mxu0 %v1194
    %3363 = vmatpush1.bf16.msra.mxu0 %v1193
    %3364 = vmatprep.subr.bf16.mxu0 %v1202
    %3365 = vmatpush1.bf16.msra.mxu0 %v1201
    %3366 = vmatprep.subr.bf16.mxu0 %v1210
    %3367 = vmatpush1.bf16.msra.mxu0 %v1209
    %3368 = vmatprep.mubr.bf16.mxu0 %v3170
    %3369 = vmatmul.mubr.bf16.gmra.mrb[0].mxu0 %v3169
    %v3370 = vpop.f32.mrb[0].mxu0
    %v3371 = vadd.f32 %v280, %v3370
    %v3372 = vpop.f32.mrb[0].mxu0
    %v3373 = vadd.f32 %v284, %v3372
    %v3374 = vpop.f32.mrb[0].mxu0
    %v3375 = vpop.f32.mrb[0].mxu0
    %3376 = vdwg.mxu0
    %3377 = vmatprep.subr.bf16.mxu0 %v1218
    %3378 = vmatpush1.bf16.msra.mxu0 %v1217
    %3379 = vmatprep.subr.bf16.mxu0 %v1226
    %3380 = vmatpush1.bf16.msra.mxu0 %v1225
    %3381 = vmatprep.subr.bf16.mxu0 %v1234
    %3382 = vmatpush1.bf16.msra.mxu0 %v1233
    %3383 = vmatprep.subr.bf16.mxu0 %v1242
    %3384 = vmatpush1.bf16.msra.mxu0 %v1241
    %3385 = vmatprep.subr.bf16.mxu0 %v1250
    %3386 = vmatpush1.bf16.msra.mxu0 %v1249
    %3387 = vmatprep.subr.bf16.mxu0 %v1258
    %3388 = vmatpush1.bf16.msra.mxu0 %v1257
    %3389 = vmatprep.subr.bf16.mxu0 %v1266
    %3390 = vmatpush1.bf16.msra.mxu0 %v1265
    %3391 = vmatprep.subr.bf16.mxu0 %v1274
    %3392 = vmatpush1.bf16.msra.mxu0 %v1273
    %3393 = vmatprep.subr.bf16.mxu0 0
    %3394 = vmatpush1.bf16.msra.mxu0 0
    %3395 = vmatprep.subr.bf16.mxu0 0
    %3396 = vmatpush1.bf16.msra.mxu0 0
    %3397 = vmatprep.subr.bf16.mxu0 0
    %3398 = vmatpush1.bf16.msra.mxu0 0
    %3399 = vmatprep.subr.bf16.mxu0 0
    %3400 = vmatpush1.bf16.msra.mxu0 0
    %3401 = vmatprep.subr.bf16.mxu0 0
    %3402 = vmatpush1.bf16.msra.mxu0 0
    %3403 = vmatprep.subr.bf16.mxu0 0
    %3404 = vmatpush1.bf16.msra.mxu0 0
    %3405 = vmatprep.subr.bf16.mxu0 0
    %3406 = vmatpush1.bf16.msra.mxu0 0
    %3407 = vmatprep.subr.bf16.mxu0 0
    %3408 = vmatpush1.bf16.msra.mxu0 0
    %3409 = vmatprep.mubr.bf16.mxu0 0
    %3410 = vmatmul.mubr.bf16.gmra.mrb[0].mxu0 %v3171
    %v3411 = vpop.f32.mrb[0].mxu0
    %v3412 = vadd.f32 %v3371, %v3411
    %v3413 = vpop.f32.mrb[0].mxu0
    %v3414 = vadd.f32 %v3373, %v3413
    %v3415 = vpop.f32.mrb[0].mxu0
    %v3416 = vpop.f32.mrb[0].mxu0
    %3417 = vdwg.mxu0
    %3418 = vmatprep.subr.bf16.mxu0 %v1092
    %3419 = vmatpush1.bf16.msra.mxu0 %v1091
    %3420 = vmatprep.subr.bf16.mxu0 %v1100
    %3421 = vmatpush1.bf16.msra.mxu0 %v1099
    %3422 = vmatprep.subr.bf16.mxu0 %v1108
    %3423 = vmatpush1.bf16.msra.mxu0 %v1107
    %3424 = vmatprep.subr.bf16.mxu0 %v1116
    %3425 = vmatpush1.bf16.msra.mxu0 %v1115
    %3426 = vmatprep.subr.bf16.mxu0 %v1124
    %3427 = vmatpush1.bf16.msra.mxu0 %v1123
    %3428 = vmatprep.subr.bf16.mxu0 %v1132
    %3429 = vmatpush1.bf16.msra.mxu0 %v1131
    %3430 = vmatprep.subr.bf16.mxu0 %v1140
    %3431 = vmatpush1.bf16.msra.mxu0 %v1139
    %3432 = vmatprep.subr.bf16.mxu0 %v1148
    %3433 = vmatpush1.bf16.msra.mxu0 %v1147
    %3434 = vmatprep.subr.bf16.mxu0 %v1156
    %3435 = vmatpush1.bf16.msra.mxu0 %v1155
    %3436 = vmatprep.subr.bf16.mxu0 %v1164
    %3437 = vmatpush1.bf16.msra.mxu0 %v1163
    %3438 = vmatprep.subr.bf16.mxu0 %v1172
    %3439 = vmatpush1.bf16.msra.mxu0 %v1171
    %3440 = vmatprep.subr.bf16.mxu0 %v1180
    %3441 = vmatpush1.bf16.msra.mxu0 %v1179
    %3442 = vmatprep.subr.bf16.mxu0 %v1188
    %3443 = vmatpush1.bf16.msra.mxu0 %v1187
    %3444 = vmatprep.subr.bf16.mxu0 %v1196
    %3445 = vmatpush1.bf16.msra.mxu0 %v1195
    %3446 = vmatprep.subr.bf16.mxu0 %v1204
    %3447 = vmatpush1.bf16.msra.mxu0 %v1203
    %3448 = vmatprep.subr.bf16.mxu0 %v1212
    %3449 = vmatpush1.bf16.msra.mxu0 %v1211
    %3450 = vmatprep.mubr.bf16.mxu0 %v3170
    %3451 = vmatmul.mubr.bf16.gmra.mrb[0].mxu0 %v3169
    %v3452 = vpop.f32.mrb[0].mxu0
    %v3453 = vadd.f32 %v288, %v3452
    %v3454 = vpop.f32.mrb[0].mxu0
    %v3455 = vadd.f32 %v292, %v3454
    %v3456 = vpop.f32.mrb[0].mxu0
    %v3457 = vpop.f32.mrb[0].mxu0
    %3458 = vdwg.mxu0
    %3459 = vmatprep.subr.bf16.mxu0 %v1220
    %3460 = vmatpush1.bf16.msra.mxu0 %v1219
    %3461 = vmatprep.subr.bf16.mxu0 %v1228
    %3462 = vmatpush1.bf16.msra.mxu0 %v1227
    %3463 = vmatprep.subr.bf16.mxu0 %v1236
    %3464 = vmatpush1.bf16.msra.mxu0 %v1235
    %3465 = vmatprep.subr.bf16.mxu0 %v1244
    %3466 = vmatpush1.bf16.msra.mxu0 %v1243
    %3467 = vmatprep.subr.bf16.mxu0 %v1252
    %3468 = vmatpush1.bf16.msra.mxu0 %v1251
    %3469 = vmatprep.subr.bf16.mxu0 %v1260
    %3470 = vmatpush1.bf16.msra.mxu0 %v1259
    %3471 = vmatprep.subr.bf16.mxu0 %v1268
    %3472 = vmatpush1.bf16.msra.mxu0 %v1267
    %3473 = vmatprep.subr.bf16.mxu0 %v1276
    %3474 = vmatpush1.bf16.msra.mxu0 %v1275
    %3475 = vmatprep.subr.bf16.mxu0 0
    %3476 = vmatpush1.bf16.msra.mxu0 0
    %3477 = vmatprep.subr.bf16.mxu0 0
    %3478 = vmatpush1.bf16.msra.mxu0 0
    %3479 = vmatprep.subr.bf16.mxu0 0
    %3480 = vmatpush1.bf16.msra.mxu0 0
    %3481 = vmatprep.subr.bf16.mxu0 0
    %3482 = vmatpush1.bf16.msra.mxu0 0
    %3483 = vmatprep.subr.bf16.mxu0 0
    %3484 = vmatpush1.bf16.msra.mxu0 0
    %3485 = vmatprep.subr.bf16.mxu0 0
    %3486 = vmatpush1.bf16.msra.mxu0 0
    %3487 = vmatprep.subr.bf16.mxu0 0
    %3488 = vmatpush1.bf16.msra.mxu0 0
    %3489 = vmatprep.subr.bf16.mxu0 0
    %3490 = vmatpush1.bf16.msra.mxu0 0
    %3491 = vmatprep.mubr.bf16.mxu0 0
    %3492 = vmatmul.mubr.bf16.gmra.mrb[0].mxu0 %v3171
    %v3493 = vpop.f32.mrb[0].mxu0
    %v3494 = vadd.f32 %v3453, %v3493
    %v3495 = vpop.f32.mrb[0].mxu0
    %v3496 = vadd.f32 %v3455, %v3495
    %v3497 = vpop.f32.mrb[0].mxu0
    %v3498 = vpop.f32.mrb[0].mxu0
    %3499 = vdwg.mxu0
    %v3500 = vxor.u32 %v3248, 2147483648
    %v3501 = vmul.f32 %v3500, 1.442695
    %v3502 = vpow.pop %v3501
    %v3503 = vadd.f32 %v3502, 1.0
    %v3504 = vrcp.pop %v3503
    %v3505 = vmul.f32 1.0, %v3504
    %v3506 = vxor.u32 %v3250, 2147483648
    %v3507 = vmul.f32 %v3506, 1.442695
    %v3508 = vpow.pop %v3507
    %v3509 = vadd.f32 %v3508, 1.0
    %v3510 = vrcp.pop %v3509
    %v3511 = vmul.f32 1.0, %v3510
    %v3512 = vtanh.pop %v3330
    %v3513 = vxor.u32 %v3332, 2147483648
    %v3514 = vmul.f32 %v3513, 1.442695
    %v3515 = vpow.pop %v3514
    %v3516 = vadd.f32 %v3515, 1.0
    %v3517 = vrcp.pop %v3516
    %v3518 = vmul.f32 1.0, %v3517
    %v3519 = vmul.f32 %v3511, %v2669
    %v3520 = vmul.f32 %v3505, %v3512
    %v3521 = vadd.f32 %v3519, %v3520
    %v3522 = vtanh.pop %v3521
    %v3523 = vmul.f32 %v3518, %v3522
    %v3524 = vxor.u32 %v3412, 2147483648
    %v3525 = vmul.f32 %v3524, 1.442695
    %v3526 = vpow.pop %v3525
    %v3527 = vadd.f32 %v3526, 1.0
    %v3528 = vrcp.pop %v3527
    %v3529 = vmul.f32 1.0, %v3528
    %v3530 = vxor.u32 %v3414, 2147483648
    %v3531 = vmul.f32 %v3530, 1.442695
    %v3532 = vpow.pop %v3531
    %v3533 = vadd.f32 %v3532, 1.0
    %v3534 = vrcp.pop %v3533
    %v3535 = vmul.f32 1.0, %v3534
    %v3536 = vtanh.pop %v3494
    %v3537 = vxor.u32 %v3496, 2147483648
    %v3538 = vmul.f32 %v3537, 1.442695
    %v3539 = vpow.pop %v3538
    %v3540 = vadd.f32 %v3539, 1.0
    %v3541 = vrcp.pop %v3540
    %v3542 = vmul.f32 1.0, %v3541
    %v3543 = vmul.f32 %v3535, %v3168
    %v3544 = vmul.f32 %v3529, %v3536
    %v3545 = vadd.f32 %v3543, %v3544
    %v3546 = vtanh.pop %v3545
    %v3547 = vmul.f32 %v3542, %v3546
    %vm3548 = vcmp.gt.f32.partialorder %v2946, 0.0
    %vm3549 = vcmp.gt.f32.partialorder %v2954, 0.0
    %vm3550 = vcmp.gt.f32.partialorder %v2962, 0.0
    %vm3551 = vcmp.gt.f32.partialorder %v2970, 0.0
    %vm3552 = vcmp.gt.f32.partialorder %v2978, 0.0
    %vm3553 = vcmp.gt.f32.partialorder %v2986, 0.0
    %vm3554 = vcmp.gt.f32.partialorder %v2994, 0.0
    %vm3555 = vcmp.gt.f32.partialorder %v3002, 0.0
    %v3557 = vcombine.high %v3547, %v3547
    %v3559 = vunpack.c.l.s4 1966171168
    %v3560 = vunpack.c.0.s8 %v3559
    %v3561 = vlaneseq
    %v3562 = vshrl.u32 %v3561, 7
    %v3563 = vsub.s32 %v3560, %v3562
    %v3564 = vrot.slane %v3547, %v3563
    %v3566 = vunpack.c.l.s4 1966171168
    %v3567 = vunpack.c.0.s8 %v3566
    %v3568 = vlaneseq
    %v3569 = vshrl.u32 %v3568, 7
    %v3570 = vsub.s32 %v3567, %v3569
    %v3571 = vrot.slane %v3557, %v3570
    %v3572 = vcombine.high %v3564, %v3564
    %v3573 = vcombine.high %v3571, %v3571
    %v3575 = vunpack.c.l.s4 1966171168
    %v3576 = vunpack.c.0.s8 %v3575
    %v3577 = vlaneseq
    %v3578 = vshrl.u32 %v3577, 7
    %v3579 = vsub.s32 %v3576, %v3578
    %v3580 = vrot.slane %v3564, %v3579
    %v3582 = vunpack.c.l.s4 1966171168
    %v3583 = vunpack.c.0.s8 %v3582
    %v3584 = vlaneseq
    %v3585 = vshrl.u32 %v3584, 7
    %v3586 = vsub.s32 %v3583, %v3585
    %v3587 = vrot.slane %v3571, %v3586
    %v3589 = vunpack.c.l.s4 1966171168
    %v3590 = vunpack.c.0.s8 %v3589
    %v3591 = vlaneseq
    %v3592 = vshrl.u32 %v3591, 7
    %v3593 = vsub.s32 %v3590, %v3592
    %v3594 = vrot.slane %v3572, %v3593
    %v3596 = vunpack.c.l.s4 1966171168
    %v3597 = vunpack.c.0.s8 %v3596
    %v3598 = vlaneseq
    %v3599 = vshrl.u32 %v3598, 7
    %v3600 = vsub.s32 %v3597, %v3599
    %v3601 = vrot.slane %v3573, %v3600
    %v3602 = vcombine.high %v3580, %v3580
    %v3603 = vcombine.high %v3587, %v3587
    %v3604 = vcombine.high %v3594, %v3594
    %v3605 = vcombine.high %v3601, %v3601
    %v3606 = vsel %vm3548, 1, 0
    %v3607 = vsel %vm3549, 1, 0
    %v3608 = vsel %vm3550, 1, 0
    %v3609 = vsel %vm3551, 1, 0
    %v3610 = vsel %vm3552, 1, 0
    %v3611 = vsel %vm3553, 1, 0
    %v3612 = vsel %vm3554, 1, 0
    %v3613 = vsel %vm3555, 1, 0
    %vm3614 = vcmp.eq.s32.totalorder %v3606, 1
    %vm3615 = vcmp.eq.s32.totalorder %v3607, 1
    %vm3616 = vcmp.eq.s32.totalorder %v3608, 1
    %vm3617 = vcmp.eq.s32.totalorder %v3609, 1
    %vm3618 = vcmp.eq.s32.totalorder %v3610, 1
    %vm3619 = vcmp.eq.s32.totalorder %v3611, 1
    %vm3620 = vcmp.eq.s32.totalorder %v3612, 1
    %vm3621 = vcmp.eq.s32.totalorder %v3613, 1
    %v3622 = vlaneseq
    %v3623 = vshrl.u32 %v3622, 7
    %v3624 = vsub.s32 0, %v3623
    %v3625 = vrot.slane %v3580, %v3624
    %v3626 = vlaneseq
    %v3627 = vshrl.u32 %v3626, 7
    %v3628 = vsub.s32 0, %v3627
    %v3629 = vrot.slane %v3594, %v3628
    %v3630 = vlaneseq
    %v3631 = vshrl.u32 %v3630, 7
    %v3632 = vsub.s32 0, %v3631
    %v3633 = vrot.slane %v3602, %v3632
    %v3634 = vlaneseq
    %v3635 = vshrl.u32 %v3634, 7
    %v3636 = vsub.s32 0, %v3635
    %v3637 = vrot.slane %v3604, %v3636
    %v3638 = vlaneseq
    %v3639 = vshrl.u32 %v3638, 7
    %v3640 = vsub.s32 0, %v3639
    %v3641 = vrot.slane %v3587, %v3640
    %v3642 = vlaneseq
    %v3643 = vshrl.u32 %v3642, 7
    %v3644 = vsub.s32 0, %v3643
    %v3645 = vrot.slane %v3601, %v3644
    %v3646 = vlaneseq
    %v3647 = vshrl.u32 %v3646, 7
    %v3648 = vsub.s32 0, %v3647
    %v3649 = vrot.slane %v3603, %v3648
    %v3650 = vlaneseq
    %v3651 = vshrl.u32 %v3650, 7
    %v3652 = vsub.s32 0, %v3651
    %v3653 = vrot.slane %v3605, %v3652
    %v3662 = vsel %vm3614, %v3625, %v2810
    %v3663 = vsel %vm3615, %v3629, %v2811
    %v3664 = vsel %vm3616, %v3633, %v2812
    %v3665 = vsel %vm3617, %v3637, %v2813
    %v3666 = vsel %vm3618, %v3641, %v2814
    %v3667 = vsel %vm3619, %v3645, %v2815
    %v3668 = vsel %vm3620, %v3649, %v2816
    %v3669 = vsel %vm3621, %v3653, %v2817
    %v3671 = vcombine.high %v3545, %v3545
    %v3673 = vunpack.c.l.s4 1966171168
    %v3674 = vunpack.c.0.s8 %v3673
    %v3675 = vlaneseq
    %v3676 = vshrl.u32 %v3675, 7
    %v3677 = vsub.s32 %v3674, %v3676
    %v3678 = vrot.slane %v3545, %v3677
    %v3680 = vunpack.c.l.s4 1966171168
    %v3681 = vunpack.c.0.s8 %v3680
    %v3682 = vlaneseq
    %v3683 = vshrl.u32 %v3682, 7
    %v3684 = vsub.s32 %v3681, %v3683
    %v3685 = vrot.slane %v3671, %v3684
    %v3686 = vcombine.high %v3678, %v3678
    %v3687 = vcombine.high %v3685, %v3685
    %v3689 = vunpack.c.l.s4 1966171168
    %v3690 = vunpack.c.0.s8 %v3689
    %v3691 = vlaneseq
    %v3692 = vshrl.u32 %v3691, 7
    %v3693 = vsub.s32 %v3690, %v3692
    %v3694 = vrot.slane %v3678, %v3693
    %v3696 = vunpack.c.l.s4 1966171168
    %v3697 = vunpack.c.0.s8 %v3696
    %v3698 = vlaneseq
    %v3699 = vshrl.u32 %v3698, 7
    %v3700 = vsub.s32 %v3697, %v3699
    %v3701 = vrot.slane %v3685, %v3700
    %v3703 = vunpack.c.l.s4 1966171168
    %v3704 = vunpack.c.0.s8 %v3703
    %v3705 = vlaneseq
    %v3706 = vshrl.u32 %v3705, 7
    %v3707 = vsub.s32 %v3704, %v3706
    %v3708 = vrot.slane %v3686, %v3707
    %v3710 = vunpack.c.l.s4 1966171168
    %v3711 = vunpack.c.0.s8 %v3710
    %v3712 = vlaneseq
    %v3713 = vshrl.u32 %v3712, 7
    %v3714 = vsub.s32 %v3711, %v3713
    %v3715 = vrot.slane %v3687, %v3714
    %v3716 = vcombine.high %v3694, %v3694
    %v3717 = vcombine.high %v3701, %v3701
    %v3718 = vcombine.high %v3708, %v3708
    %v3719 = vcombine.high %v3715, %v3715
    %v3720 = vlaneseq
    %v3721 = vshrl.u32 %v3720, 7
    %v3722 = vsub.s32 0, %v3721
    %v3723 = vrot.slane %v3694, %v3722
    %v3724 = vlaneseq
    %v3725 = vshrl.u32 %v3724, 7
    %v3726 = vsub.s32 0, %v3725
    %v3727 = vrot.slane %v3708, %v3726
    %v3728 = vlaneseq
    %v3729 = vshrl.u32 %v3728, 7
    %v3730 = vsub.s32 0, %v3729
    %v3731 = vrot.slane %v3716, %v3730
    %v3732 = vlaneseq
    %v3733 = vshrl.u32 %v3732, 7
    %v3734 = vsub.s32 0, %v3733
    %v3735 = vrot.slane %v3718, %v3734
    %v3736 = vlaneseq
    %v3737 = vshrl.u32 %v3736, 7
    %v3738 = vsub.s32 0, %v3737
    %v3739 = vrot.slane %v3701, %v3738
    %v3740 = vlaneseq
    %v3741 = vshrl.u32 %v3740, 7
    %v3742 = vsub.s32 0, %v3741
    %v3743 = vrot.slane %v3715, %v3742
    %v3744 = vlaneseq
    %v3745 = vshrl.u32 %v3744, 7
    %v3746 = vsub.s32 0, %v3745
    %v3747 = vrot.slane %v3717, %v3746
    %v3748 = vlaneseq
    %v3749 = vshrl.u32 %v3748, 7
    %v3750 = vsub.s32 0, %v3749
    %v3751 = vrot.slane %v3719, %v3750
    %v3760 = vsel %vm3614, %v3723, %v2908
    %v3761 = vsel %vm3615, %v3727, %v2909
    %v3762 = vsel %vm3616, %v3731, %v2910
    %v3763 = vsel %vm3617, %v3735, %v2911
    %v3764 = vsel %vm3618, %v3739, %v2912
    %v3765 = vsel %vm3619, %v3743, %v2913
    %v3766 = vsel %vm3620, %v3747, %v2914
    %v3767 = vsel %vm3621, %v3751, %v2915
    %v3768 = vmax.f32 %v2916, %v2920
    %s3769 = scalar_lea.vmem [#allocation8], 16
    %3770 = vst [vmem:[%s3769] sm:$0xff] %v3523
    %s3771 = scalar_lea.vmem [#allocation2], 24
    %v3772 = vld [vmem:[%s3771] sm:$0xff]
    %3774 = vrot.lane.b32.xlu0 %v3772, 32
    %v3775 = vpop.permute.xlu0 %3774
    %v3777 = vsel %vm334, %v3775, 0.0
    %3778 = vadd.xlane.f32.xlu0 %v3777
    %v3779 = vpop.xlane.xlu0 %3778
    %v3780 = vmul.f32 %v3772, %v3768
    %3782 = vrot.lane.b32.xlu0 %v3780, 32
    %v3783 = vpop.permute.xlu0 %3782
    %v3785 = vsel %vm334, %v3783, 0.0
    %3786 = vadd.xlane.f32.xlu0 %v3785
    %v3787 = vpop.xlane.xlu0 %3786
    %v3788 = vmul.f32 %v3779, %v3787
    %v3789 = vsub.f32 1.0, %v3787
    %v3790 = vmul.f32 %v3779, %v3789
    %v3791 = vlaneseq
    %v3792 = vshrl.u32 %v3791, 7
    %v3793 = vsub.s32 0, %v3792
    %v3794 = vrot.slane %v3772, %v3793
    %s3796 = sor.u32 256, 96
    %3797 = vbcast.lane.b32.xlu0 %v3794, %s3796
    %v3798 = vpop.permute.xlu0 %3797
    %v3799 = vlaneseq
    %v3800 = vshrl.u32 %v3799, 7
    %v3801 = vsub.s32 1, %v3800
    %v3802 = vrot.slane %v3772, %v3801
    %s3804 = sor.u32 256, 96
    %3805 = vbcast.lane.b32.xlu0 %v3802, %s3804
    %v3806 = vpop.permute.xlu0 %3805
    %v3807 = vlaneseq
    %v3808 = vshrl.u32 %v3807, 7
    %v3809 = vsub.s32 2, %v3808
    %v3810 = vrot.slane %v3772, %v3809
    %s3812 = sor.u32 256, 96
    %3813 = vbcast.lane.b32.xlu0 %v3810, %s3812
    %v3814 = vpop.permute.xlu0 %3813
    %v3815 = vlaneseq
    %v3816 = vshrl.u32 %v3815, 7
    %v3817 = vsub.s32 3, %v3816
    %v3818 = vrot.slane %v3772, %v3817
    %s3820 = sor.u32 256, 96
    %3821 = vbcast.lane.b32.xlu0 %v3818, %s3820
    %v3822 = vpop.permute.xlu0 %3821
    %v3823 = vlaneseq
    %v3824 = vshrl.u32 %v3823, 7
    %v3825 = vsub.s32 4, %v3824
    %v3826 = vrot.slane %v3772, %v3825
    %s3828 = sor.u32 256, 96
    %3829 = vbcast.lane.b32.xlu0 %v3826, %s3828
    %v3830 = vpop.permute.xlu0 %3829
    %v3831 = vlaneseq
    %v3832 = vshrl.u32 %v3831, 7
    %v3833 = vsub.s32 5, %v3832
    %v3834 = vrot.slane %v3772, %v3833
    %s3836 = sor.u32 256, 96
    %3837 = vbcast.lane.b32.xlu0 %v3834, %s3836
    %v3838 = vpop.permute.xlu0 %3837
    %v3839 = vlaneseq
    %v3840 = vshrl.u32 %v3839, 7
    %v3841 = vsub.s32 6, %v3840
    %v3842 = vrot.slane %v3772, %v3841
    %s3844 = sor.u32 256, 96
    %3845 = vbcast.lane.b32.xlu0 %v3842, %s3844
    %v3846 = vpop.permute.xlu0 %3845
    %v3847 = vlaneseq
    %v3848 = vshrl.u32 %v3847, 7
    %v3849 = vsub.s32 7, %v3848
    %v3850 = vrot.slane %v3772, %v3849
    %s3852 = sor.u32 256, 96
    %3853 = vbcast.lane.b32.xlu0 %v3850, %s3852
    %v3854 = vpop.permute.xlu0 %3853
    %v3855 = vmul.f32 %v3798, %v3662
    %v3856 = vmul.f32 %v3806, %v3663
    %v3857 = vmul.f32 %v3814, %v3664
    %v3858 = vmul.f32 %v3822, %v3665
    %v3859 = vmul.f32 %v3830, %v3666
    %v3860 = vmul.f32 %v3838, %v3667
    %v3861 = vmul.f32 %v3846, %v3668
    %v3862 = vmul.f32 %v3854, %v3669
    %v3863 = vsel %vm421, %v3855, 0.0
    %v3864 = vrot.slane %v3863, 4
    %v3865 = vadd.f32 %v3863, %v3864
    %v3866 = vrot.slane %v3865, 2
    %v3867 = vadd.f32 %v3865, %v3866
    %v3868 = vrot.slane %v3867, 1
    %v3869 = vadd.f32 %v3867, %v3868
    %v3870 = vsel %vm421, %v3856, 0.0
    %v3871 = vrot.slane %v3870, 4
    %v3872 = vadd.f32 %v3870, %v3871
    %v3873 = vrot.slane %v3872, 2
    %v3874 = vadd.f32 %v3872, %v3873
    %v3875 = vrot.slane %v3874, 1
    %v3876 = vadd.f32 %v3874, %v3875
    %v3877 = vsel %vm421, %v3857, 0.0
    %v3878 = vrot.slane %v3877, 4
    %v3879 = vadd.f32 %v3877, %v3878
    %v3880 = vrot.slane %v3879, 2
    %v3881 = vadd.f32 %v3879, %v3880
    %v3882 = vrot.slane %v3881, 1
    %v3883 = vadd.f32 %v3881, %v3882
    %v3884 = vsel %vm421, %v3858, 0.0
    %v3885 = vrot.slane %v3884, 4
    %v3886 = vadd.f32 %v3884, %v3885
    %v3887 = vrot.slane %v3886, 2
    %v3888 = vadd.f32 %v3886, %v3887
    %v3889 = vrot.slane %v3888, 1
    %v3890 = vadd.f32 %v3888, %v3889
    %v3891 = vsel %vm421, %v3859, 0.0
    %v3892 = vrot.slane %v3891, 4
    %v3893 = vadd.f32 %v3891, %v3892
    %v3894 = vrot.slane %v3893, 2
    %v3895 = vadd.f32 %v3893, %v3894
    %v3896 = vrot.slane %v3895, 1
    %v3897 = vadd.f32 %v3895, %v3896
    %v3898 = vsel %vm421, %v3860, 0.0
    %v3899 = vrot.slane %v3898, 4
    %v3900 = vadd.f32 %v3898, %v3899
    %v3901 = vrot.slane %v3900, 2
    %v3902 = vadd.f32 %v3900, %v3901
    %v3903 = vrot.slane %v3902, 1
    %v3904 = vadd.f32 %v3902, %v3903
    %v3905 = vsel %vm421, %v3861, 0.0
    %v3906 = vrot.slane %v3905, 4
    %v3907 = vadd.f32 %v3905, %v3906
    %v3908 = vrot.slane %v3907, 2
    %v3909 = vadd.f32 %v3907, %v3908
    %v3910 = vrot.slane %v3909, 1
    %v3911 = vadd.f32 %v3909, %v3910
    %v3912 = vsel %vm421, %v3862, 0.0
    %v3913 = vrot.slane %v3912, 4
    %v3914 = vadd.f32 %v3912, %v3913
    %v3915 = vrot.slane %v3914, 2
    %v3916 = vadd.f32 %v3914, %v3915
    %v3917 = vrot.slane %v3916, 1
    %v3918 = vadd.f32 %v3916, %v3917
    %v3919 = vmul.f32 %v3798, %v3760
    %v3920 = vmul.f32 %v3806, %v3761
    %v3921 = vmul.f32 %v3814, %v3762
    %v3922 = vmul.f32 %v3822, %v3763
    %v3923 = vmul.f32 %v3830, %v3764
    %v3924 = vmul.f32 %v3838, %v3765
    %v3925 = vmul.f32 %v3846, %v3766
    %v3926 = vmul.f32 %v3854, %v3767
    %v3927 = vsel %vm421, %v3919, 0.0
    %v3928 = vrot.slane %v3927, 4
    %v3929 = vadd.f32 %v3927, %v3928
    %v3930 = vrot.slane %v3929, 2
    %v3931 = vadd.f32 %v3929, %v3930
    %v3932 = vrot.slane %v3931, 1
    %v3933 = vadd.f32 %v3931, %v3932
    %v3934 = vsel %vm421, %v3920, 0.0
    %v3935 = vrot.slane %v3934, 4
    %v3936 = vadd.f32 %v3934, %v3935
    %v3937 = vrot.slane %v3936, 2
    %v3938 = vadd.f32 %v3936, %v3937
    %v3939 = vrot.slane %v3938, 1
    %v3940 = vadd.f32 %v3938, %v3939
    %v3941 = vsel %vm421, %v3921, 0.0
    %v3942 = vrot.slane %v3941, 4
    %v3943 = vadd.f32 %v3941, %v3942
    %v3944 = vrot.slane %v3943, 2
    %v3945 = vadd.f32 %v3943, %v3944
    %v3946 = vrot.slane %v3945, 1
    %v3947 = vadd.f32 %v3945, %v3946
    %v3948 = vsel %vm421, %v3922, 0.0
    %v3949 = vrot.slane %v3948, 4
    %v3950 = vadd.f32 %v3948, %v3949
    %v3951 = vrot.slane %v3950, 2
    %v3952 = vadd.f32 %v3950, %v3951
    %v3953 = vrot.slane %v3952, 1
    %v3954 = vadd.f32 %v3952, %v3953
    %v3955 = vsel %vm421, %v3923, 0.0
    %v3956 = vrot.slane %v3955, 4
    %v3957 = vadd.f32 %v3955, %v3956
    %v3958 = vrot.slane %v3957, 2
    %v3959 = vadd.f32 %v3957, %v3958
    %v3960 = vrot.slane %v3959, 1
    %v3961 = vadd.f32 %v3959, %v3960
    %v3962 = vsel %vm421, %v3924, 0.0
    %v3963 = vrot.slane %v3962, 4
    %v3964 = vadd.f32 %v3962, %v3963
    %v3965 = vrot.slane %v3964, 2
    %v3966 = vadd.f32 %v3964, %v3965
    %v3967 = vrot.slane %v3966, 1
    %v3968 = vadd.f32 %v3966, %v3967
    %v3969 = vsel %vm421, %v3925, 0.0
    %v3970 = vrot.slane %v3969, 4
    %v3971 = vadd.f32 %v3969, %v3970
    %v3972 = vrot.slane %v3971, 2
    %v3973 = vadd.f32 %v3971, %v3972
    %v3974 = vrot.slane %v3973, 1
    %v3975 = vadd.f32 %v3973, %v3974
    %v3976 = vsel %vm421, %v3926, 0.0
    %v3977 = vrot.slane %v3976, 4
    %v3978 = vadd.f32 %v3976, %v3977
    %v3979 = vrot.slane %v3978, 2
    %v3980 = vadd.f32 %v3978, %v3979
    %v3981 = vrot.slane %v3980, 1
    %v3982 = vadd.f32 %v3980, %v3981
    %v3991 = vsel %vm486, %v3876, %v3869
    %v3992 = vsel %vm488, %v3883, %v3991
    %v3993 = vsel %vm490, %v3890, %v3992
    %v3994 = vsel %vm492, %v3897, %v3993
    %v3995 = vsel %vm494, %v3904, %v3994
    %v3996 = vsel %vm496, %v3911, %v3995
    %v3997 = vsel %vm498, %v3918, %v3996
    %v3999 = vmul.f32 %v3788, %v3997
    %v4000 = vmul.f32 %v3790, %v306
    %v4001 = vadd.f32 %v3999, %v4000
    %v4010 = vsel %vm486, %v3940, %v3933
    %v4011 = vsel %vm488, %v3947, %v4010
    %v4012 = vsel %vm490, %v3954, %v4011
    %v4013 = vsel %vm492, %v3961, %v4012
    %v4014 = vsel %vm494, %v3968, %v4013
    %v4015 = vsel %vm496, %v3975, %v4014
    %v4016 = vsel %vm498, %v3982, %v4015
    %v4018 = vmul.f32 %v3788, %v4016
    %v4019 = vmul.f32 %v3790, %v313
    %v4020 = vadd.f32 %v4018, %v4019
    %v4021 = vpack.c.bf16 %v3772, %v3772
    %v4022 = vpack.c.bf16 %v3523, %v3523
    %v4023 = vpack.c.bf16 %v4001, %v4001
    %4024 = vmatprep.subr.bf16.mxu0 %v1086
    %4025 = vmatpush1.bf16.msra.mxu0 %v1085
    %4026 = vmatprep.subr.bf16.mxu0 %v1094
    %4027 = vmatpush1.bf16.msra.mxu0 %v1093
    %4028 = vmatprep.subr.bf16.mxu0 %v1102
    %4029 = vmatpush1.bf16.msra.mxu0 %v1101
    %4030 = vmatprep.subr.bf16.mxu0 %v1110
    %4031 = vmatpush1.bf16.msra.mxu0 %v1109
    %4032 = vmatprep.subr.bf16.mxu0 %v1118
    %4033 = vmatpush1.bf16.msra.mxu0 %v1117
    %4034 = vmatprep.subr.bf16.mxu0 %v1126
    %4035 = vmatpush1.bf16.msra.mxu0 %v1125
    %4036 = vmatprep.subr.bf16.mxu0 %v1134
    %4037 = vmatpush1.bf16.msra.mxu0 %v1133
    %4038 = vmatprep.subr.bf16.mxu0 %v1142
    %4039 = vmatpush1.bf16.msra.mxu0 %v1141
    %4040 = vmatprep.subr.bf16.mxu0 %v1150
    %4041 = vmatpush1.bf16.msra.mxu0 %v1149
    %4042 = vmatprep.subr.bf16.mxu0 %v1158
    %4043 = vmatpush1.bf16.msra.mxu0 %v1157
    %4044 = vmatprep.subr.bf16.mxu0 %v1166
    %4045 = vmatpush1.bf16.msra.mxu0 %v1165
    %4046 = vmatprep.subr.bf16.mxu0 %v1174
    %4047 = vmatpush1.bf16.msra.mxu0 %v1173
    %4048 = vmatprep.subr.bf16.mxu0 %v1182
    %4049 = vmatpush1.bf16.msra.mxu0 %v1181
    %4050 = vmatprep.subr.bf16.mxu0 %v1190
    %4051 = vmatpush1.bf16.msra.mxu0 %v1189
    %4052 = vmatprep.subr.bf16.mxu0 %v1198
    %4053 = vmatpush1.bf16.msra.mxu0 %v1197
    %4054 = vmatprep.subr.bf16.mxu0 %v1206
    %4055 = vmatpush1.bf16.msra.mxu0 %v1205
    %4056 = vmatprep.mubr.bf16.mxu0 %v4022
    %4057 = vmatmul.mubr.bf16.gmra.mrb[0].mxu0 %v4021
    %v4058 = vpop.f32.mrb[0].mxu0
    %v4059 = vadd.f32 %v264, %v4058
    %v4060 = vpop.f32.mrb[0].mxu0
    %v4061 = vadd.f32 %v268, %v4060
    %v4062 = vpop.f32.mrb[0].mxu0
    %v4063 = vpop.f32.mrb[0].mxu0
    %4064 = vdwg.mxu0
    %4065 = vmatprep.subr.bf16.mxu0 %v1214
    %4066 = vmatpush1.bf16.msra.mxu0 %v1213
    %4067 = vmatprep.subr.bf16.mxu0 %v1222
    %4068 = vmatpush1.bf16.msra.mxu0 %v1221
    %4069 = vmatprep.subr.bf16.mxu0 %v1230
    %4070 = vmatpush1.bf16.msra.mxu0 %v1229
    %4071 = vmatprep.subr.bf16.mxu0 %v1238
    %4072 = vmatpush1.bf16.msra.mxu0 %v1237
    %4073 = vmatprep.subr.bf16.mxu0 %v1246
    %4074 = vmatpush1.bf16.msra.mxu0 %v1245
    %4075 = vmatprep.subr.bf16.mxu0 %v1254
    %4076 = vmatpush1.bf16.msra.mxu0 %v1253
    %4077 = vmatprep.subr.bf16.mxu0 %v1262
    %4078 = vmatpush1.bf16.msra.mxu0 %v1261
    %4079 = vmatprep.subr.bf16.mxu0 %v1270
    %4080 = vmatpush1.bf16.msra.mxu0 %v1269
    %4081 = vmatprep.subr.bf16.mxu0 0
    %4082 = vmatpush1.bf16.msra.mxu0 0
    %4083 = vmatprep.subr.bf16.mxu0 0
    %4084 = vmatpush1.bf16.msra.mxu0 0
    %4085 = vmatprep.subr.bf16.mxu0 0
    %4086 = vmatpush1.bf16.msra.mxu0 0
    %4087 = vmatprep.subr.bf16.mxu0 0
    %4088 = vmatpush1.bf16.msra.mxu0 0
    %4089 = vmatprep.subr.bf16.mxu0 0
    %4090 = vmatpush1.bf16.msra.mxu0 0
    %4091 = vmatprep.subr.bf16.mxu0 0
    %4092 = vmatpush1.bf16.msra.mxu0 0
    %4093 = vmatprep.subr.bf16.mxu0 0
    %4094 = vmatpush1.bf16.msra.mxu0 0
    %4095 = vmatprep.subr.bf16.mxu0 0
    %4096 = vmatpush1.bf16.msra.mxu0 0
    %4097 = vmatprep.mubr.bf16.mxu0 0
    %4098 = vmatmul.mubr.bf16.gmra.mrb[0].mxu0 %v4023
    %v4099 = vpop.f32.mrb[0].mxu0
    %v4100 = vadd.f32 %v4059, %v4099
    %v4101 = vpop.f32.mrb[0].mxu0
    %v4102 = vadd.f32 %v4061, %v4101
    %v4103 = vpop.f32.mrb[0].mxu0
    %v4104 = vpop.f32.mrb[0].mxu0
    %4105 = vdwg.mxu0
    %4106 = vmatprep.subr.bf16.mxu0 %v1088
    %4107 = vmatpush1.bf16.msra.mxu0 %v1087
    %4108 = vmatprep.subr.bf16.mxu0 %v1096
    %4109 = vmatpush1.bf16.msra.mxu0 %v1095
    %4110 = vmatprep.subr.bf16.mxu0 %v1104
    %4111 = vmatpush1.bf16.msra.mxu0 %v1103
    %4112 = vmatprep.subr.bf16.mxu0 %v1112
    %4113 = vmatpush1.bf16.msra.mxu0 %v1111
    %4114 = vmatprep.subr.bf16.mxu0 %v1120
    %4115 = vmatpush1.bf16.msra.mxu0 %v1119
    %4116 = vmatprep.subr.bf16.mxu0 %v1128
    %4117 = vmatpush1.bf16.msra.mxu0 %v1127
    %4118 = vmatprep.subr.bf16.mxu0 %v1136
    %4119 = vmatpush1.bf16.msra.mxu0 %v1135
    %4120 = vmatprep.subr.bf16.mxu0 %v1144
    %4121 = vmatpush1.bf16.msra.mxu0 %v1143
    %4122 = vmatprep.subr.bf16.mxu0 %v1152
    %4123 = vmatpush1.bf16.msra.mxu0 %v1151
    %4124 = vmatprep.subr.bf16.mxu0 %v1160
    %4125 = vmatpush1.bf16.msra.mxu0 %v1159
    %4126 = vmatprep.subr.bf16.mxu0 %v1168
    %4127 = vmatpush1.bf16.msra.mxu0 %v1167
    %4128 = vmatprep.subr.bf16.mxu0 %v1176
    %4129 = vmatpush1.bf16.msra.mxu0 %v1175
    %4130 = vmatprep.subr.bf16.mxu0 %v1184
    %4131 = vmatpush1.bf16.msra.mxu0 %v1183
    %4132 = vmatprep.subr.bf16.mxu0 %v1192
    %4133 = vmatpush1.bf16.msra.mxu0 %v1191
    %4134 = vmatprep.subr.bf16.mxu0 %v1200
    %4135 = vmatpush1.bf16.msra.mxu0 %v1199
    %4136 = vmatprep.subr.bf16.mxu0 %v1208
    %4137 = vmatpush1.bf16.msra.mxu0 %v1207
    %4138 = vmatprep.mubr.bf16.mxu0 %v4022
    %4139 = vmatmul.mubr.bf16.gmra.mrb[0].mxu0 %v4021
    %v4140 = vpop.f32.mrb[0].mxu0
    %v4141 = vadd.f32 %v272, %v4140
    %v4142 = vpop.f32.mrb[0].mxu0
    %v4143 = vadd.f32 %v276, %v4142
    %v4144 = vpop.f32.mrb[0].mxu0
    %v4145 = vpop.f32.mrb[0].mxu0
    %4146 = vdwg.mxu0
    %4147 = vmatprep.subr.bf16.mxu0 %v1216
    %4148 = vmatpush1.bf16.msra.mxu0 %v1215
    %4149 = vmatprep.subr.bf16.mxu0 %v1224
    %4150 = vmatpush1.bf16.msra.mxu0 %v1223
    %4151 = vmatprep.subr.bf16.mxu0 %v1232
    %4152 = vmatpush1.bf16.msra.mxu0 %v1231
    %4153 = vmatprep.subr.bf16.mxu0 %v1240
    %4154 = vmatpush1.bf16.msra.mxu0 %v1239
    %4155 = vmatprep.subr.bf16.mxu0 %v1248
    %4156 = vmatpush1.bf16.msra.mxu0 %v1247
    %4157 = vmatprep.subr.bf16.mxu0 %v1256
    %4158 = vmatpush1.bf16.msra.mxu0 %v1255
    %4159 = vmatprep.subr.bf16.mxu0 %v1264
    %4160 = vmatpush1.bf16.msra.mxu0 %v1263
    %4161 = vmatprep.subr.bf16.mxu0 %v1272
    %4162 = vmatpush1.bf16.msra.mxu0 %v1271
    %4163 = vmatprep.subr.bf16.mxu0 0
    %4164 = vmatpush1.bf16.msra.mxu0 0
    %4165 = vmatprep.subr.bf16.mxu0 0
    %4166 = vmatpush1.bf16.msra.mxu0 0
    %4167 = vmatprep.subr.bf16.mxu0 0
    %4168 = vmatpush1.bf16.msra.mxu0 0
    %4169 = vmatprep.subr.bf16.mxu0 0
    %4170 = vmatpush1.bf16.msra.mxu0 0
    %4171 = vmatprep.subr.bf16.mxu0 0
    %4172 = vmatpush1.bf16.msra.mxu0 0
    %4173 = vmatprep.subr.bf16.mxu0 0
    %4174 = vmatpush1.bf16.msra.mxu0 0
    %4175 = vmatprep.subr.bf16.mxu0 0
    %4176 = vmatpush1.bf16.msra.mxu0 0
    %4177 = vmatprep.subr.bf16.mxu0 0
    %4178 = vmatpush1.bf16.msra.mxu0 0
    %4179 = vmatprep.mubr.bf16.mxu0 0
    %4180 = vmatmul.mubr.bf16.gmra.mrb[0].mxu0 %v4023
    %v4181 = vpop.f32.mrb[0].mxu0
    %v4182 = vadd.f32 %v4141, %v4181
    %v4183 = vpop.f32.mrb[0].mxu0
    %v4184 = vadd.f32 %v4143, %v4183
    %v4185 = vpop.f32.mrb[0].mxu0
    %v4186 = vpop.f32.mrb[0].mxu0
    %4187 = vdwg.mxu0
    %4188 = vmatprep.subr.bf16.mxu0 %v1090
    %4189 = vmatpush1.bf16.msra.mxu0 %v1089
    %4190 = vmatprep.subr.bf16.mxu0 %v1098
    %4191 = vmatpush1.bf16.msra.mxu0 %v1097
    %4192 = vmatprep.subr.bf16.mxu0 %v1106
    %4193 = vmatpush1.bf16.msra.mxu0 %v1105
    %4194 = vmatprep.subr.bf16.mxu0 %v1114
    %4195 = vmatpush1.bf16.msra.mxu0 %v1113
    %4196 = vmatprep.subr.bf16.mxu0 %v1122
    %4197 = vmatpush1.bf16.msra.mxu0 %v1121
    %4198 = vmatprep.subr.bf16.mxu0 %v1130
    %4199 = vmatpush1.bf16.msra.mxu0 %v1129
    %4200 = vmatprep.subr.bf16.mxu0 %v1138
    %4201 = vmatpush1.bf16.msra.mxu0 %v1137
    %4202 = vmatprep.subr.bf16.mxu0 %v1146
    %4203 = vmatpush1.bf16.msra.mxu0 %v1145
    %4204 = vmatprep.subr.bf16.mxu0 %v1154
    %4205 = vmatpush1.bf16.msra.mxu0 %v1153
    %4206 = vmatprep.subr.bf16.mxu0 %v1162
    %4207 = vmatpush1.bf16.msra.mxu0 %v1161
    %4208 = vmatprep.subr.bf16.mxu0 %v1170
    %4209 = vmatpush1.bf16.msra.mxu0 %v1169
    %4210 = vmatprep.subr.bf16.mxu0 %v1178
    %4211 = vmatpush1.bf16.msra.mxu0 %v1177
    %4212 = vmatprep.subr.bf16.mxu0 %v1186
    %4213 = vmatpush1.bf16.msra.mxu0 %v1185
    %4214 = vmatprep.subr.bf16.mxu0 %v1194
    %4215 = vmatpush1.bf16.msra.mxu0 %v1193
    %4216 = vmatprep.subr.bf16.mxu0 %v1202
    %4217 = vmatpush1.bf16.msra.mxu0 %v1201
    %4218 = vmatprep.subr.bf16.mxu0 %v1210
    %4219 = vmatpush1.bf16.msra.mxu0 %v1209
    %4220 = vmatprep.mubr.bf16.mxu0 %v4022
    %4221 = vmatmul.mubr.bf16.gmra.mrb[0].mxu0 %v4021
    %v4222 = vpop.f32.mrb[0].mxu0
    %v4223 = vadd.f32 %v280, %v4222
    %v4224 = vpop.f32.mrb[0].mxu0
    %v4225 = vadd.f32 %v284, %v4224
    %v4226 = vpop.f32.mrb[0].mxu0
    %v4227 = vpop.f32.mrb[0].mxu0
    %4228 = vdwg.mxu0
    %4229 = vmatprep.subr.bf16.mxu0 %v1218
    %4230 = vmatpush1.bf16.msra.mxu0 %v1217
    %4231 = vmatprep.subr.bf16.mxu0 %v1226
    %4232 = vmatpush1.bf16.msra.mxu0 %v1225
    %4233 = vmatprep.subr.bf16.mxu0 %v1234
    %4234 = vmatpush1.bf16.msra.mxu0 %v1233
    %4235 = vmatprep.subr.bf16.mxu0 %v1242
    %4236 = vmatpush1.bf16.msra.mxu0 %v1241
    %4237 = vmatprep.subr.bf16.mxu0 %v1250
    %4238 = vmatpush1.bf16.msra.mxu0 %v1249
    %4239 = vmatprep.subr.bf16.mxu0 %v1258
    %4240 = vmatpush1.bf16.msra.mxu0 %v1257
    %4241 = vmatprep.subr.bf16.mxu0 %v1266
    %4242 = vmatpush1.bf16.msra.mxu0 %v1265
    %4243 = vmatprep.subr.bf16.mxu0 %v1274
    %4244 = vmatpush1.bf16.msra.mxu0 %v1273
    %4245 = vmatprep.subr.bf16.mxu0 0
    %4246 = vmatpush1.bf16.msra.mxu0 0
    %4247 = vmatprep.subr.bf16.mxu0 0
    %4248 = vmatpush1.bf16.msra.mxu0 0
    %4249 = vmatprep.subr.bf16.mxu0 0
    %4250 = vmatpush1.bf16.msra.mxu0 0
    %4251 = vmatprep.subr.bf16.mxu0 0
    %4252 = vmatpush1.bf16.msra.mxu0 0
    %4253 = vmatprep.subr.bf16.mxu0 0
    %4254 = vmatpush1.bf16.msra.mxu0 0
    %4255 = vmatprep.subr.bf16.mxu0 0
    %4256 = vmatpush1.bf16.msra.mxu0 0
    %4257 = vmatprep.subr.bf16.mxu0 0
    %4258 = vmatpush1.bf16.msra.mxu0 0
    %4259 = vmatprep.subr.bf16.mxu0 0
    %4260 = vmatpush1.bf16.msra.mxu0 0
    %4261 = vmatprep.mubr.bf16.mxu0 0
    %4262 = vmatmul.mubr.bf16.gmra.mrb[0].mxu0 %v4023
    %v4263 = vpop.f32.mrb[0].mxu0
    %v4264 = vadd.f32 %v4223, %v4263
    %v4265 = vpop.f32.mrb[0].mxu0
    %v4266 = vadd.f32 %v4225, %v4265
    %v4267 = vpop.f32.mrb[0].mxu0
    %v4268 = vpop.f32.mrb[0].mxu0
    %4269 = vdwg.mxu0
    %4270 = vmatprep.subr.bf16.mxu0 %v1092
    %4271 = vmatpush1.bf16.msra.mxu0 %v1091
    %4272 = vmatprep.subr.bf16.mxu0 %v1100
    %4273 = vmatpush1.bf16.msra.mxu0 %v1099
    %4274 = vmatprep.subr.bf16.mxu0 %v1108
    %4275 = vmatpush1.bf16.msra.mxu0 %v1107
    %4276 = vmatprep.subr.bf16.mxu0 %v1116
    %4277 = vmatpush1.bf16.msra.mxu0 %v1115
    %4278 = vmatprep.subr.bf16.mxu0 %v1124
    %4279 = vmatpush1.bf16.msra.mxu0 %v1123
    %4280 = vmatprep.subr.bf16.mxu0 %v1132
    %4281 = vmatpush1.bf16.msra.mxu0 %v1131
    %4282 = vmatprep.subr.bf16.mxu0 %v1140
    %4283 = vmatpush1.bf16.msra.mxu0 %v1139
    %4284 = vmatprep.subr.bf16.mxu0 %v1148
    %4285 = vmatpush1.bf16.msra.mxu0 %v1147
    %4286 = vmatprep.subr.bf16.mxu0 %v1156
    %4287 = vmatpush1.bf16.msra.mxu0 %v1155
    %4288 = vmatprep.subr.bf16.mxu0 %v1164
    %4289 = vmatpush1.bf16.msra.mxu0 %v1163
    %4290 = vmatprep.subr.bf16.mxu0 %v1172
    %4291 = vmatpush1.bf16.msra.mxu0 %v1171
    %4292 = vmatprep.subr.bf16.mxu0 %v1180
    %4293 = vmatpush1.bf16.msra.mxu0 %v1179
    %4294 = vmatprep.subr.bf16.mxu0 %v1188
    %4295 = vmatpush1.bf16.msra.mxu0 %v1187
    %4296 = vmatprep.subr.bf16.mxu0 %v1196
    %4297 = vmatpush1.bf16.msra.mxu0 %v1195
    %4298 = vmatprep.subr.bf16.mxu0 %v1204
    %4299 = vmatpush1.bf16.msra.mxu0 %v1203
    %4300 = vmatprep.subr.bf16.mxu0 %v1212
    %4301 = vmatpush1.bf16.msra.mxu0 %v1211
    %4302 = vmatprep.mubr.bf16.mxu0 %v4022
    %4303 = vmatmul.mubr.bf16.gmra.mrb[0].mxu0 %v4021
    %v4304 = vpop.f32.mrb[0].mxu0
    %v4305 = vadd.f32 %v288, %v4304
    %v4306 = vpop.f32.mrb[0].mxu0
    %v4307 = vadd.f32 %v292, %v4306
    %v4308 = vpop.f32.mrb[0].mxu0
    %v4309 = vpop.f32.mrb[0].mxu0
    %4310 = vdwg.mxu0
    %4311 = vmatprep.subr.bf16.mxu0 %v1220
    %4312 = vmatpush1.bf16.msra.mxu0 %v1219
    %4313 = vmatprep.subr.bf16.mxu0 %v1228
    %4314 = vmatpush1.bf16.msra.mxu0 %v1227
    %4315 = vmatprep.subr.bf16.mxu0 %v1236
    %4316 = vmatpush1.bf16.msra.mxu0 %v1235
    %4317 = vmatprep.subr.bf16.mxu0 %v1244
    %4318 = vmatpush1.bf16.msra.mxu0 %v1243
    %4319 = vmatprep.subr.bf16.mxu0 %v1252
    %4320 = vmatpush1.bf16.msra.mxu0 %v1251
    %4321 = vmatprep.subr.bf16.mxu0 %v1260
    %4322 = vmatpush1.bf16.msra.mxu0 %v1259
    %4323 = vmatprep.subr.bf16.mxu0 %v1268
    %4324 = vmatpush1.bf16.msra.mxu0 %v1267
    %4325 = vmatprep.subr.bf16.mxu0 %v1276
    %4326 = vmatpush1.bf16.msra.mxu0 %v1275
    %4327 = vmatprep.subr.bf16.mxu0 0
    %4328 = vmatpush1.bf16.msra.mxu0 0
    %4329 = vmatprep.subr.bf16.mxu0 0
    %4330 = vmatpush1.bf16.msra.mxu0 0
    %4331 = vmatprep.subr.bf16.mxu0 0
    %4332 = vmatpush1.bf16.msra.mxu0 0
    %4333 = vmatprep.subr.bf16.mxu0 0
    %4334 = vmatpush1.bf16.msra.mxu0 0
    %4335 = vmatprep.subr.bf16.mxu0 0
    %4336 = vmatpush1.bf16.msra.mxu0 0
    %4337 = vmatprep.subr.bf16.mxu0 0
    %4338 = vmatpush1.bf16.msra.mxu0 0
    %4339 = vmatprep.subr.bf16.mxu0 0
    %4340 = vmatpush1.bf16.msra.mxu0 0
    %4341 = vmatprep.subr.bf16.mxu0 0
    %4342 = vmatpush1.bf16.msra.mxu0 0
    %4343 = vmatprep.mubr.bf16.mxu0 0
    %4344 = vmatmul.mubr.bf16.gmra.mrb[0].mxu0 %v4023
    %v4345 = vpop.f32.mrb[0].mxu0
    %v4346 = vadd.f32 %v4305, %v4345
    %v4347 = vpop.f32.mrb[0].mxu0
    %v4348 = vadd.f32 %v4307, %v4347
    %v4349 = vpop.f32.mrb[0].mxu0
    %v4350 = vpop.f32.mrb[0].mxu0
    %4351 = vdwg.mxu0
    %v4352 = vxor.u32 %v4100, 2147483648
    %v4353 = vmul.f32 %v4352, 1.442695
    %v4354 = vpow.pop %v4353
    %v4355 = vadd.f32 %v4354, 1.0
    %v4356 = vrcp.pop %v4355
    %v4357 = vmul.f32 1.0, %v4356
    %v4358 = vxor.u32 %v4102, 2147483648
    %v4359 = vmul.f32 %v4358, 1.442695
    %v4360 = vpow.pop %v4359
    %v4361 = vadd.f32 %v4360, 1.0
    %v4362 = vrcp.pop %v4361
    %v4363 = vmul.f32 1.0, %v4362
    %v4364 = vtanh.pop %v4182
    %v4365 = vxor.u32 %v4184, 2147483648
    %v4366 = vmul.f32 %v4365, 1.442695
    %v4367 = vpow.pop %v4366
    %v4368 = vadd.f32 %v4367, 1.0
    %v4369 = vrcp.pop %v4368
    %v4370 = vmul.f32 1.0, %v4369
    %v4371 = vmul.f32 %v4363, %v3521
    %v4372 = vmul.f32 %v4357, %v4364
    %v4373 = vadd.f32 %v4371, %v4372
    %v4374 = vtanh.pop %v4373
    %v4375 = vmul.f32 %v4370, %v4374
    %v4376 = vxor.u32 %v4264, 2147483648
    %v4377 = vmul.f32 %v4376, 1.442695
    %v4378 = vpow.pop %v4377
    %v4379 = vadd.f32 %v4378, 1.0
    %v4380 = vrcp.pop %v4379
    %v4381 = vmul.f32 1.0, %v4380
    %v4382 = vxor.u32 %v4266, 2147483648
    %v4383 = vmul.f32 %v4382, 1.442695
    %v4384 = vpow.pop %v4383
    %v4385 = vadd.f32 %v4384, 1.0
    %v4386 = vrcp.pop %v4385
    %v4387 = vmul.f32 1.0, %v4386
    %v4388 = vtanh.pop %v4346
    %v4389 = vxor.u32 %v4348, 2147483648
    %v4390 = vmul.f32 %v4389, 1.442695
    %v4391 = vpow.pop %v4390
    %v4392 = vadd.f32 %v4391, 1.0
    %v4393 = vrcp.pop %v4392
    %v4394 = vmul.f32 1.0, %v4393
    %v4395 = vmul.f32 %v4387, %v4020
    %v4396 = vmul.f32 %v4381, %v4388
    %v4397 = vadd.f32 %v4395, %v4396
    %v4398 = vtanh.pop %v4397
    %v4399 = vmul.f32 %v4394, %v4398
    %vm4400 = vcmp.gt.f32.partialorder %v3798, 0.0
    %vm4401 = vcmp.gt.f32.partialorder %v3806, 0.0
    %vm4402 = vcmp.gt.f32.partialorder %v3814, 0.0
    %vm4403 = vcmp.gt.f32.partialorder %v3822, 0.0
    %vm4404 = vcmp.gt.f32.partialorder %v3830, 0.0
    %vm4405 = vcmp.gt.f32.partialorder %v3838, 0.0
    %vm4406 = vcmp.gt.f32.partialorder %v3846, 0.0
    %vm4407 = vcmp.gt.f32.partialorder %v3854, 0.0
    %v4409 = vcombine.high %v4399, %v4399
    %v4411 = vunpack.c.l.s4 1966171168
    %v4412 = vunpack.c.0.s8 %v4411
    %v4413 = vlaneseq
    %v4414 = vshrl.u32 %v4413, 7
    %v4415 = vsub.s32 %v4412, %v4414
    %v4416 = vrot.slane %v4399, %v4415
    %v4418 = vunpack.c.l.s4 1966171168
    %v4419 = vunpack.c.0.s8 %v4418
    %v4420 = vlaneseq
    %v4421 = vshrl.u32 %v4420, 7
    %v4422 = vsub.s32 %v4419, %v4421
    %v4423 = vrot.slane %v4409, %v4422
    %v4424 = vcombine.high %v4416, %v4416
    %v4425 = vcombine.high %v4423, %v4423
    %v4427 = vunpack.c.l.s4 1966171168
    %v4428 = vunpack.c.0.s8 %v4427
    %v4429 = vlaneseq
    %v4430 = vshrl.u32 %v4429, 7
    %v4431 = vsub.s32 %v4428, %v4430
    %v4432 = vrot.slane %v4416, %v4431
    %v4434 = vunpack.c.l.s4 1966171168
    %v4435 = vunpack.c.0.s8 %v4434
    %v4436 = vlaneseq
    %v4437 = vshrl.u32 %v4436, 7
    %v4438 = vsub.s32 %v4435, %v4437
    %v4439 = vrot.slane %v4423, %v4438
    %v4441 = vunpack.c.l.s4 1966171168
    %v4442 = vunpack.c.0.s8 %v4441
    %v4443 = vlaneseq
    %v4444 = vshrl.u32 %v4443, 7
    %v4445 = vsub.s32 %v4442, %v4444
    %v4446 = vrot.slane %v4424, %v4445
    %v4448 = vunpack.c.l.s4 1966171168
    %v4449 = vunpack.c.0.s8 %v4448
    %v4450 = vlaneseq
    %v4451 = vshrl.u32 %v4450, 7
    %v4452 = vsub.s32 %v4449, %v4451
    %v4453 = vrot.slane %v4425, %v4452
    %v4454 = vcombine.high %v4432, %v4432
    %v4455 = vcombine.high %v4439, %v4439
    %v4456 = vcombine.high %v4446, %v4446
    %v4457 = vcombine.high %v4453, %v4453
    %v4458 = vsel %vm4400, 1, 0
    %v4459 = vsel %vm4401, 1, 0
    %v4460 = vsel %vm4402, 1, 0
    %v4461 = vsel %vm4403, 1, 0
    %v4462 = vsel %vm4404, 1, 0
    %v4463 = vsel %vm4405, 1, 0
    %v4464 = vsel %vm4406, 1, 0
    %v4465 = vsel %vm4407, 1, 0
    %vm4466 = vcmp.eq.s32.totalorder %v4458, 1
    %vm4467 = vcmp.eq.s32.totalorder %v4459, 1
    %vm4468 = vcmp.eq.s32.totalorder %v4460, 1
    %vm4469 = vcmp.eq.s32.totalorder %v4461, 1
    %vm4470 = vcmp.eq.s32.totalorder %v4462, 1
    %vm4471 = vcmp.eq.s32.totalorder %v4463, 1
    %vm4472 = vcmp.eq.s32.totalorder %v4464, 1
    %vm4473 = vcmp.eq.s32.totalorder %v4465, 1
    %v4474 = vlaneseq
    %v4475 = vshrl.u32 %v4474, 7
    %v4476 = vsub.s32 0, %v4475
    %v4477 = vrot.slane %v4432, %v4476
    %v4478 = vlaneseq
    %v4479 = vshrl.u32 %v4478, 7
    %v4480 = vsub.s32 0, %v4479
    %v4481 = vrot.slane %v4446, %v4480
    %v4482 = vlaneseq
    %v4483 = vshrl.u32 %v4482, 7
    %v4484 = vsub.s32 0, %v4483
    %v4485 = vrot.slane %v4454, %v4484
    %v4486 = vlaneseq
    %v4487 = vshrl.u32 %v4486, 7
    %v4488 = vsub.s32 0, %v4487
    %v4489 = vrot.slane %v4456, %v4488
    %v4490 = vlaneseq
    %v4491 = vshrl.u32 %v4490, 7
    %v4492 = vsub.s32 0, %v4491
    %v4493 = vrot.slane %v4439, %v4492
    %v4494 = vlaneseq
    %v4495 = vshrl.u32 %v4494, 7
    %v4496 = vsub.s32 0, %v4495
    %v4497 = vrot.slane %v4453, %v4496
    %v4498 = vlaneseq
    %v4499 = vshrl.u32 %v4498, 7
    %v4500 = vsub.s32 0, %v4499
    %v4501 = vrot.slane %v4455, %v4500
    %v4502 = vlaneseq
    %v4503 = vshrl.u32 %v4502, 7
    %v4504 = vsub.s32 0, %v4503
    %v4505 = vrot.slane %v4457, %v4504
    %v4514 = vsel %vm4466, %v4477, %v3662
    %v4515 = vsel %vm4467, %v4481, %v3663
    %v4516 = vsel %vm4468, %v4485, %v3664
    %v4517 = vsel %vm4469, %v4489, %v3665
    %v4518 = vsel %vm4470, %v4493, %v3666
    %v4519 = vsel %vm4471, %v4497, %v3667
    %v4520 = vsel %vm4472, %v4501, %v3668
    %v4521 = vsel %vm4473, %v4505, %v3669
    %v4523 = vcombine.high %v4397, %v4397
    %v4525 = vunpack.c.l.s4 1966171168
    %v4526 = vunpack.c.0.s8 %v4525
    %v4527 = vlaneseq
    %v4528 = vshrl.u32 %v4527, 7
    %v4529 = vsub.s32 %v4526, %v4528
    %v4530 = vrot.slane %v4397, %v4529
    %v4532 = vunpack.c.l.s4 1966171168
    %v4533 = vunpack.c.0.s8 %v4532
    %v4534 = vlaneseq
    %v4535 = vshrl.u32 %v4534, 7
    %v4536 = vsub.s32 %v4533, %v4535
    %v4537 = vrot.slane %v4523, %v4536
    %v4538 = vcombine.high %v4530, %v4530
    %v4539 = vcombine.high %v4537, %v4537
    %v4541 = vunpack.c.l.s4 1966171168
    %v4542 = vunpack.c.0.s8 %v4541
    %v4543 = vlaneseq
    %v4544 = vshrl.u32 %v4543, 7
    %v4545 = vsub.s32 %v4542, %v4544
    %v4546 = vrot.slane %v4530, %v4545
    %v4548 = vunpack.c.l.s4 1966171168
    %v4549 = vunpack.c.0.s8 %v4548
    %v4550 = vlaneseq
    %v4551 = vshrl.u32 %v4550, 7
    %v4552 = vsub.s32 %v4549, %v4551
    %v4553 = vrot.slane %v4537, %v4552
    %v4555 = vunpack.c.l.s4 1966171168
    %v4556 = vunpack.c.0.s8 %v4555
    %v4557 = vlaneseq
    %v4558 = vshrl.u32 %v4557, 7
    %v4559 = vsub.s32 %v4556, %v4558
    %v4560 = vrot.slane %v4538, %v4559
    %v4562 = vunpack.c.l.s4 1966171168
    %v4563 = vunpack.c.0.s8 %v4562
    %v4564 = vlaneseq
    %v4565 = vshrl.u32 %v4564, 7
    %v4566 = vsub.s32 %v4563, %v4565
    %v4567 = vrot.slane %v4539, %v4566
    %v4568 = vcombine.high %v4546, %v4546
    %v4569 = vcombine.high %v4553, %v4553
    %v4570 = vcombine.high %v4560, %v4560
    %v4571 = vcombine.high %v4567, %v4567
    %v4572 = vlaneseq
    %v4573 = vshrl.u32 %v4572, 7
    %v4574 = vsub.s32 0, %v4573
    %v4575 = vrot.slane %v4546, %v4574
    %v4576 = vlaneseq
    %v4577 = vshrl.u32 %v4576, 7
    %v4578 = vsub.s32 0, %v4577
    %v4579 = vrot.slane %v4560, %v4578
    %v4580 = vlaneseq
    %v4581 = vshrl.u32 %v4580, 7
    %v4582 = vsub.s32 0, %v4581
    %v4583 = vrot.slane %v4568, %v4582
    %v4584 = vlaneseq
    %v4585 = vshrl.u32 %v4584, 7
    %v4586 = vsub.s32 0, %v4585
    %v4587 = vrot.slane %v4570, %v4586
    %v4588 = vlaneseq
    %v4589 = vshrl.u32 %v4588, 7
    %v4590 = vsub.s32 0, %v4589
    %v4591 = vrot.slane %v4553, %v4590
    %v4592 = vlaneseq
    %v4593 = vshrl.u32 %v4592, 7
    %v4594 = vsub.s32 0, %v4593
    %v4595 = vrot.slane %v4567, %v4594
    %v4596 = vlaneseq
    %v4597 = vshrl.u32 %v4596, 7
    %v4598 = vsub.s32 0, %v4597
    %v4599 = vrot.slane %v4569, %v4598
    %v4600 = vlaneseq
    %v4601 = vshrl.u32 %v4600, 7
    %v4602 = vsub.s32 0, %v4601
    %v4603 = vrot.slane %v4571, %v4602
    %v4612 = vsel %vm4466, %v4575, %v3760
    %v4613 = vsel %vm4467, %v4579, %v3761
    %v4614 = vsel %vm4468, %v4583, %v3762
    %v4615 = vsel %vm4469, %v4587, %v3763
    %v4616 = vsel %vm4470, %v4591, %v3764
    %v4617 = vsel %vm4471, %v4595, %v3765
    %v4618 = vsel %vm4472, %v4599, %v3766
    %v4619 = vsel %vm4473, %v4603, %v3767
    %v4620 = vmax.f32 %v3768, %v3772
    %s4621 = scalar_lea.vmem [#allocation8], 24
    %4622 = vst [vmem:[%s4621] sm:$0xff] %v4375
    %s4623 = scalar_lea.vmem [#allocation2], 32
    %v4624 = vld [vmem:[%s4623] sm:$0xff]
    %4626 = vrot.lane.b32.xlu0 %v4624, 32
    %v4627 = vpop.permute.xlu0 %4626
    %v4629 = vsel %vm334, %v4627, 0.0
    %4630 = vadd.xlane.f32.xlu0 %v4629
    %v4631 = vpop.xlane.xlu0 %4630
    %v4632 = vmul.f32 %v4624, %v4620
    %4634 = vrot.lane.b32.xlu0 %v4632, 32
    %v4635 = vpop.permute.xlu0 %4634
    %v4637 = vsel %vm334, %v4635, 0.0
    %4638 = vadd.xlane.f32.xlu0 %v4637
    %v4639 = vpop.xlane.xlu0 %4638
    %v4640 = vmul.f32 %v4631, %v4639
    %v4641 = vsub.f32 1.0, %v4639
    %v4642 = vmul.f32 %v4631, %v4641
    %v4643 = vlaneseq
    %v4644 = vshrl.u32 %v4643, 7
    %v4645 = vsub.s32 0, %v4644
    %v4646 = vrot.slane %v4624, %v4645
    %s4648 = sor.u32 256, 96
    %4649 = vbcast.lane.b32.xlu0 %v4646, %s4648
    %v4650 = vpop.permute.xlu0 %4649
    %v4651 = vlaneseq
    %v4652 = vshrl.u32 %v4651, 7
    %v4653 = vsub.s32 1, %v4652
    %v4654 = vrot.slane %v4624, %v4653
    %s4656 = sor.u32 256, 96
    %4657 = vbcast.lane.b32.xlu0 %v4654, %s4656
    %v4658 = vpop.permute.xlu0 %4657
    %v4659 = vlaneseq
    %v4660 = vshrl.u32 %v4659, 7
    %v4661 = vsub.s32 2, %v4660
    %v4662 = vrot.slane %v4624, %v4661
    %s4664 = sor.u32 256, 96
    %4665 = vbcast.lane.b32.xlu0 %v4662, %s4664
    %v4666 = vpop.permute.xlu0 %4665
    %v4667 = vlaneseq
    %v4668 = vshrl.u32 %v4667, 7
    %v4669 = vsub.s32 3, %v4668
    %v4670 = vrot.slane %v4624, %v4669
    %s4672 = sor.u32 256, 96
    %4673 = vbcast.lane.b32.xlu0 %v4670, %s4672
    %v4674 = vpop.permute.xlu0 %4673
    %v4675 = vlaneseq
    %v4676 = vshrl.u32 %v4675, 7
    %v4677 = vsub.s32 4, %v4676
    %v4678 = vrot.slane %v4624, %v4677
    %s4680 = sor.u32 256, 96
    %4681 = vbcast.lane.b32.xlu0 %v4678, %s4680
    %v4682 = vpop.permute.xlu0 %4681
    %v4683 = vlaneseq
    %v4684 = vshrl.u32 %v4683, 7
    %v4685 = vsub.s32 5, %v4684
    %v4686 = vrot.slane %v4624, %v4685
    %s4688 = sor.u32 256, 96
    %4689 = vbcast.lane.b32.xlu0 %v4686, %s4688
    %v4690 = vpop.permute.xlu0 %4689
    %v4691 = vlaneseq
    %v4692 = vshrl.u32 %v4691, 7
    %v4693 = vsub.s32 6, %v4692
    %v4694 = vrot.slane %v4624, %v4693
    %s4696 = sor.u32 256, 96
    %4697 = vbcast.lane.b32.xlu0 %v4694, %s4696
    %v4698 = vpop.permute.xlu0 %4697
    %v4699 = vlaneseq
    %v4700 = vshrl.u32 %v4699, 7
    %v4701 = vsub.s32 7, %v4700
    %v4702 = vrot.slane %v4624, %v4701
    %s4704 = sor.u32 256, 96
    %4705 = vbcast.lane.b32.xlu0 %v4702, %s4704
    %v4706 = vpop.permute.xlu0 %4705
    %v4707 = vmul.f32 %v4650, %v4514
    %v4708 = vmul.f32 %v4658, %v4515
    %v4709 = vmul.f32 %v4666, %v4516
    %v4710 = vmul.f32 %v4674, %v4517
    %v4711 = vmul.f32 %v4682, %v4518
    %v4712 = vmul.f32 %v4690, %v4519
    %v4713 = vmul.f32 %v4698, %v4520
    %v4714 = vmul.f32 %v4706, %v4521
    %v4715 = vsel %vm421, %v4707, 0.0
    %v4716 = vrot.slane %v4715, 4
    %v4717 = vadd.f32 %v4715, %v4716
    %v4718 = vrot.slane %v4717, 2
    %v4719 = vadd.f32 %v4717, %v4718
    %v4720 = vrot.slane %v4719, 1
    %v4721 = vadd.f32 %v4719, %v4720
    %v4722 = vsel %vm421, %v4708, 0.0
    %v4723 = vrot.slane %v4722, 4
    %v4724 = vadd.f32 %v4722, %v4723
    %v4725 = vrot.slane %v4724, 2
    %v4726 = vadd.f32 %v4724, %v4725
    %v4727 = vrot.slane %v4726, 1
    %v4728 = vadd.f32 %v4726, %v4727
    %v4729 = vsel %vm421, %v4709, 0.0
    %v4730 = vrot.slane %v4729, 4
    %v4731 = vadd.f32 %v4729, %v4730
    %v4732 = vrot.slane %v4731, 2
    %v4733 = vadd.f32 %v4731, %v4732
    %v4734 = vrot.slane %v4733, 1
    %v4735 = vadd.f32 %v4733, %v4734
    %v4736 = vsel %vm421, %v4710, 0.0
    %v4737 = vrot.slane %v4736, 4
    %v4738 = vadd.f32 %v4736, %v4737
    %v4739 = vrot.slane %v4738, 2
    %v4740 = vadd.f32 %v4738, %v4739
    %v4741 = vrot.slane %v4740, 1
    %v4742 = vadd.f32 %v4740, %v4741
    %v4743 = vsel %vm421, %v4711, 0.0
    %v4744 = vrot.slane %v4743, 4
    %v4745 = vadd.f32 %v4743, %v4744
    %v4746 = vrot.slane %v4745, 2
    %v4747 = vadd.f32 %v4745, %v4746
    %v4748 = vrot.slane %v4747, 1
    %v4749 = vadd.f32 %v4747, %v4748
    %v4750 = vsel %vm421, %v4712, 0.0
    %v4751 = vrot.slane %v4750, 4
    %v4752 = vadd.f32 %v4750, %v4751
    %v4753 = vrot.slane %v4752, 2
    %v4754 = vadd.f32 %v4752, %v4753
    %v4755 = vrot.slane %v4754, 1
    %v4756 = vadd.f32 %v4754, %v4755
    %v4757 = vsel %vm421, %v4713, 0.0
    %v4758 = vrot.slane %v4757, 4
    %v4759 = vadd.f32 %v4757, %v4758
    %v4760 = vrot.slane %v4759, 2
    %v4761 = vadd.f32 %v4759, %v4760
    %v4762 = vrot.slane %v4761, 1
    %v4763 = vadd.f32 %v4761, %v4762
    %v4764 = vsel %vm421, %v4714, 0.0
    %v4765 = vrot.slane %v4764, 4
    %v4766 = vadd.f32 %v4764, %v4765
    %v4767 = vrot.slane %v4766, 2
    %v4768 = vadd.f32 %v4766, %v4767
    %v4769 = vrot.slane %v4768, 1
    %v4770 = vadd.f32 %v4768, %v4769
    %v4771 = vmul.f32 %v4650, %v4612
    %v4772 = vmul.f32 %v4658, %v4613
    %v4773 = vmul.f32 %v4666, %v4614
    %v4774 = vmul.f32 %v4674, %v4615
    %v4775 = vmul.f32 %v4682, %v4616
    %v4776 = vmul.f32 %v4690, %v4617
    %v4777 = vmul.f32 %v4698, %v4618
    %v4778 = vmul.f32 %v4706, %v4619
    %v4779 = vsel %vm421, %v4771, 0.0
    %v4780 = vrot.slane %v4779, 4
    %v4781 = vadd.f32 %v4779, %v4780
    %v4782 = vrot.slane %v4781, 2
    %v4783 = vadd.f32 %v4781, %v4782
    %v4784 = vrot.slane %v4783, 1
    %v4785 = vadd.f32 %v4783, %v4784
    %v4786 = vsel %vm421, %v4772, 0.0
    %v4787 = vrot.slane %v4786, 4
    %v4788 = vadd.f32 %v4786, %v4787
    %v4789 = vrot.slane %v4788, 2
    %v4790 = vadd.f32 %v4788, %v4789
    %v4791 = vrot.slane %v4790, 1
    %v4792 = vadd.f32 %v4790, %v4791
    %v4793 = vsel %vm421, %v4773, 0.0
    %v4794 = vrot.slane %v4793, 4
    %v4795 = vadd.f32 %v4793, %v4794
    %v4796 = vrot.slane %v4795, 2
    %v4797 = vadd.f32 %v4795, %v4796
    %v4798 = vrot.slane %v4797, 1
    %v4799 = vadd.f32 %v4797, %v4798
    %v4800 = vsel %vm421, %v4774, 0.0
    %v4801 = vrot.slane %v4800, 4
    %v4802 = vadd.f32 %v4800, %v4801
    %v4803 = vrot.slane %v4802, 2
    %v4804 = vadd.f32 %v4802, %v4803
    %v4805 = vrot.slane %v4804, 1
    %v4806 = vadd.f32 %v4804, %v4805
    %v4807 = vsel %vm421, %v4775, 0.0
    %v4808 = vrot.slane %v4807, 4
    %v4809 = vadd.f32 %v4807, %v4808
    %v4810 = vrot.slane %v4809, 2
    %v4811 = vadd.f32 %v4809, %v4810
    %v4812 = vrot.slane %v4811, 1
    %v4813 = vadd.f32 %v4811, %v4812
    %v4814 = vsel %vm421, %v4776, 0.0
    %v4815 = vrot.slane %v4814, 4
    %v4816 = vadd.f32 %v4814, %v4815
    %v4817 = vrot.slane %v4816, 2
    %v4818 = vadd.f32 %v4816, %v4817
    %v4819 = vrot.slane %v4818, 1
    %v4820 = vadd.f32 %v4818, %v4819
    %v4821 = vsel %vm421, %v4777, 0.0
    %v4822 = vrot.slane %v4821, 4
    %v4823 = vadd.f32 %v4821, %v4822
    %v4824 = vrot.slane %v4823, 2
    %v4825 = vadd.f32 %v4823, %v4824
    %v4826 = vrot.slane %v4825, 1
    %v4827 = vadd.f32 %v4825, %v4826
    %v4828 = vsel %vm421, %v4778, 0.0
    %v4829 = vrot.slane %v4828, 4
    %v4830 = vadd.f32 %v4828, %v4829
    %v4831 = vrot.slane %v4830, 2
    %v4832 = vadd.f32 %v4830, %v4831
    %v4833 = vrot.slane %v4832, 1
    %v4834 = vadd.f32 %v4832, %v4833
    %v4843 = vsel %vm486, %v4728, %v4721
    %v4844 = vsel %vm488, %v4735, %v4843
    %v4845 = vsel %vm490, %v4742, %v4844
    %v4846 = vsel %vm492, %v4749, %v4845
    %v4847 = vsel %vm494, %v4756, %v4846
    %v4848 = vsel %vm496, %v4763, %v4847
    %v4849 = vsel %vm498, %v4770, %v4848
    %v4851 = vmul.f32 %v4640, %v4849
    %v4852 = vmul.f32 %v4642, %v306
    %v4853 = vadd.f32 %v4851, %v4852
    %v4862 = vsel %vm486, %v4792, %v4785
    %v4863 = vsel %vm488, %v4799, %v4862
    %v4864 = vsel %vm490, %v4806, %v4863
    %v4865 = vsel %vm492, %v4813, %v4864
    %v4866 = vsel %vm494, %v4820, %v4865
    %v4867 = vsel %vm496, %v4827, %v4866
    %v4868 = vsel %vm498, %v4834, %v4867
    %v4870 = vmul.f32 %v4640, %v4868
    %v4871 = vmul.f32 %v4642, %v313
    %v4872 = vadd.f32 %v4870, %v4871
    %v4873 = vpack.c.bf16 %v4624, %v4624
    %v4874 = vpack.c.bf16 %v4375, %v4375
    %v4875 = vpack.c.bf16 %v4853, %v4853
    %4876 = vmatprep.subr.bf16.mxu0 %v1086
    %4877 = vmatpush1.bf16.msra.mxu0 %v1085
    %4878 = vmatprep.subr.bf16.mxu0 %v1094
    %4879 = vmatpush1.bf16.msra.mxu0 %v1093
    %4880 = vmatprep.subr.bf16.mxu0 %v1102
    %4881 = vmatpush1.bf16.msra.mxu0 %v1101
    %4882 = vmatprep.subr.bf16.mxu0 %v1110
    %4883 = vmatpush1.bf16.msra.mxu0 %v1109
    %4884 = vmatprep.subr.bf16.mxu0 %v1118
    %4885 = vmatpush1.bf16.msra.mxu0 %v1117
    %4886 = vmatprep.subr.bf16.mxu0 %v1126
    %4887 = vmatpush1.bf16.msra.mxu0 %v1125
    %4888 = vmatprep.subr.bf16.mxu0 %v1134
    %4889 = vmatpush1.bf16.msra.mxu0 %v1133
    %4890 = vmatprep.subr.bf16.mxu0 %v1142
    %4891 = vmatpush1.bf16.msra.mxu0 %v1141
    %4892 = vmatprep.subr.bf16.mxu0 %v1150
    %4893 = vmatpush1.bf16.msra.mxu0 %v1149
    %4894 = vmatprep.subr.bf16.mxu0 %v1158
    %4895 = vmatpush1.bf16.msra.mxu0 %v1157
    %4896 = vmatprep.subr.bf16.mxu0 %v1166
    %4897 = vmatpush1.bf16.msra.mxu0 %v1165
    %4898 = vmatprep.subr.bf16.mxu0 %v1174
    %4899 = vmatpush1.bf16.msra.mxu0 %v1173
    %4900 = vmatprep.subr.bf16.mxu0 %v1182
    %4901 = vmatpush1.bf16.msra.mxu0 %v1181
    %4902 = vmatprep.subr.bf16.mxu0 %v1190
    %4903 = vmatpush1.bf16.msra.mxu0 %v1189
    %4904 = vmatprep.subr.bf16.mxu0 %v1198
    %4905 = vmatpush1.bf16.msra.mxu0 %v1197
    %4906 = vmatprep.subr.bf16.mxu0 %v1206
    %4907 = vmatpush1.bf16.msra.mxu0 %v1205
    %4908 = vmatprep.mubr.bf16.mxu0 %v4874
    %4909 = vmatmul.mubr.bf16.gmra.mrb[0].mxu0 %v4873
    %v4910 = vpop.f32.mrb[0].mxu0
    %v4911 = vadd.f32 %v264, %v4910
    %v4912 = vpop.f32.mrb[0].mxu0
    %v4913 = vadd.f32 %v268, %v4912
    %v4914 = vpop.f32.mrb[0].mxu0
    %v4915 = vpop.f32.mrb[0].mxu0
    %4916 = vdwg.mxu0
    %4917 = vmatprep.subr.bf16.mxu0 %v1214
    %4918 = vmatpush1.bf16.msra.mxu0 %v1213
    %4919 = vmatprep.subr.bf16.mxu0 %v1222
    %4920 = vmatpush1.bf16.msra.mxu0 %v1221
    %4921 = vmatprep.subr.bf16.mxu0 %v1230
    %4922 = vmatpush1.bf16.msra.mxu0 %v1229
    %4923 = vmatprep.subr.bf16.mxu0 %v1238
    %4924 = vmatpush1.bf16.msra.mxu0 %v1237
    %4925 = vmatprep.subr.bf16.mxu0 %v1246
    %4926 = vmatpush1.bf16.msra.mxu0 %v1245
    %4927 = vmatprep.subr.bf16.mxu0 %v1254
    %4928 = vmatpush1.bf16.msra.mxu0 %v1253
    %4929 = vmatprep.subr.bf16.mxu0 %v1262
    %4930 = vmatpush1.bf16.msra.mxu0 %v1261
    %4931 = vmatprep.subr.bf16.mxu0 %v1270
    %4932 = vmatpush1.bf16.msra.mxu0 %v1269
    %4933 = vmatprep.subr.bf16.mxu0 0
    %4934 = vmatpush1.bf16.msra.mxu0 0
    %4935 = vmatprep.subr.bf16.mxu0 0
    %4936 = vmatpush1.bf16.msra.mxu0 0
    %4937 = vmatprep.subr.bf16.mxu0 0
    %4938 = vmatpush1.bf16.msra.mxu0 0
    %4939 = vmatprep.subr.bf16.mxu0 0
    %4940 = vmatpush1.bf16.msra.mxu0 0
    %4941 = vmatprep.subr.bf16.mxu0 0
    %4942 = vmatpush1.bf16.msra.mxu0 0
    %4943 = vmatprep.subr.bf16.mxu0 0
    %4944 = vmatpush1.bf16.msra.mxu0 0
    %4945 = vmatprep.subr.bf16.mxu0 0
    %4946 = vmatpush1.bf16.msra.mxu0 0
    %4947 = vmatprep.subr.bf16.mxu0 0
    %4948 = vmatpush1.bf16.msra.mxu0 0
    %4949 = vmatprep.mubr.bf16.mxu0 0
    %4950 = vmatmul.mubr.bf16.gmra.mrb[0].mxu0 %v4875
    %v4951 = vpop.f32.mrb[0].mxu0
    %v4952 = vadd.f32 %v4911, %v4951
    %v4953 = vpop.f32.mrb[0].mxu0
    %v4954 = vadd.f32 %v4913, %v4953
    %v4955 = vpop.f32.mrb[0].mxu0
    %v4956 = vpop.f32.mrb[0].mxu0
    %4957 = vdwg.mxu0
    %4958 = vmatprep.subr.bf16.mxu0 %v1088
    %4959 = vmatpush1.bf16.msra.mxu0 %v1087
    %4960 = vmatprep.subr.bf16.mxu0 %v1096
    %4961 = vmatpush1.bf16.msra.mxu0 %v1095
    %4962 = vmatprep.subr.bf16.mxu0 %v1104
    %4963 = vmatpush1.bf16.msra.mxu0 %v1103
    %4964 = vmatprep.subr.bf16.mxu0 %v1112
    %4965 = vmatpush1.bf16.msra.mxu0 %v1111
    %4966 = vmatprep.subr.bf16.mxu0 %v1120
    %4967 = vmatpush1.bf16.msra.mxu0 %v1119
    %4968 = vmatprep.subr.bf16.mxu0 %v1128
    %4969 = vmatpush1.bf16.msra.mxu0 %v1127
    %4970 = vmatprep.subr.bf16.mxu0 %v1136
    %4971 = vmatpush1.bf16.msra.mxu0 %v1135
    %4972 = vmatprep.subr.bf16.mxu0 %v1144
    %4973 = vmatpush1.bf16.msra.mxu0 %v1143
    %4974 = vmatprep.subr.bf16.mxu0 %v1152
    %4975 = vmatpush1.bf16.msra.mxu0 %v1151
    %4976 = vmatprep.subr.bf16.mxu0 %v1160
    %4977 = vmatpush1.bf16.msra.mxu0 %v1159
    %4978 = vmatprep.subr.bf16.mxu0 %v1168
    %4979 = vmatpush1.bf16.msra.mxu0 %v1167
    %4980 = vmatprep.subr.bf16.mxu0 %v1176
    %4981 = vmatpush1.bf16.msra.mxu0 %v1175
    %4982 = vmatprep.subr.bf16.mxu0 %v1184
    %4983 = vmatpush1.bf16.msra.mxu0 %v1183
    %4984 = vmatprep.subr.bf16.mxu0 %v1192
    %4985 = vmatpush1.bf16.msra.mxu0 %v1191
    %4986 = vmatprep.subr.bf16.mxu0 %v1200
    %4987 = vmatpush1.bf16.msra.mxu0 %v1199
    %4988 = vmatprep.subr.bf16.mxu0 %v1208
    %4989 = vmatpush1.bf16.msra.mxu0 %v1207
    %4990 = vmatprep.mubr.bf16.mxu0 %v4874
    %4991 = vmatmul.mubr.bf16.gmra.mrb[0].mxu0 %v4873
    %v4992 = vpop.f32.mrb[0].mxu0
    %v4993 = vadd.f32 %v272, %v4992
    %v4994 = vpop.f32.mrb[0].mxu0
    %v4995 = vadd.f32 %v276, %v4994
    %v4996 = vpop.f32.mrb[0].mxu0
    %v4997 = vpop.f32.mrb[0].mxu0
    %4998 = vdwg.mxu0
    %4999 = vmatprep.subr.bf16.mxu0 %v1216
    %5000 = vmatpush1.bf16.msra.mxu0 %v1215
    %5001 = vmatprep.subr.bf16.mxu0 %v1224
    %5002 = vmatpush1.bf16.msra.mxu0 %v1223
    %5003 = vmatprep.subr.bf16.mxu0 %v1232
    %5004 = vmatpush1.bf16.msra.mxu0 %v1231
    %5005 = vmatprep.subr.bf16.mxu0 %v1240
    %5006 = vmatpush1.bf16.msra.mxu0 %v1239
    %5007 = vmatprep.subr.bf16.mxu0 %v1248
    %5008 = vmatpush1.bf16.msra.mxu0 %v1247
    %5009 = vmatprep.subr.bf16.mxu0 %v1256
    %5010 = vmatpush1.bf16.msra.mxu0 %v1255
    %5011 = vmatprep.subr.bf16.mxu0 %v1264
    %5012 = vmatpush1.bf16.msra.mxu0 %v1263
    %5013 = vmatprep.subr.bf16.mxu0 %v1272
    %5014 = vmatpush1.bf16.msra.mxu0 %v1271
    %5015 = vmatprep.subr.bf16.mxu0 0
    %5016 = vmatpush1.bf16.msra.mxu0 0
    %5017 = vmatprep.subr.bf16.mxu0 0
    %5018 = vmatpush1.bf16.msra.mxu0 0
    %5019 = vmatprep.subr.bf16.mxu0 0
    %5020 = vmatpush1.bf16.msra.mxu0 0
    %5021 = vmatprep.subr.bf16.mxu0 0
    %5022 = vmatpush1.bf16.msra.mxu0 0
    %5023 = vmatprep.subr.bf16.mxu0 0
    %5024 = vmatpush1.bf16.msra.mxu0 0
    %5025 = vmatprep.subr.bf16.mxu0 0
    %5026 = vmatpush1.bf16.msra.mxu0 0
    %5027 = vmatprep.subr.bf16.mxu0 0
    %5028 = vmatpush1.bf16.msra.mxu0 0
    %5029 = vmatprep.subr.bf16.mxu0 0
    %5030 = vmatpush1.bf16.msra.mxu0 0
    %5031 = vmatprep.mubr.bf16.mxu0 0
    %5032 = vmatmul.mubr.bf16.gmra.mrb[0].mxu0 %v4875
    %v5033 = vpop.f32.mrb[0].mxu0
    %v5034 = vadd.f32 %v4993, %v5033
    %v5035 = vpop.f32.mrb[0].mxu0
    %v5036 = vadd.f32 %v4995, %v5035
    %v5037 = vpop.f32.mrb[0].mxu0
    %v5038 = vpop.f32.mrb[0].mxu0
    %5039 = vdwg.mxu0
    %5040 = vmatprep.subr.bf16.mxu0 %v1090
    %5041 = vmatpush1.bf16.msra.mxu0 %v1089
    %5042 = vmatprep.subr.bf16.mxu0 %v1098
    %5043 = vmatpush1.bf16.msra.mxu0 %v1097
    %5044 = vmatprep.subr.bf16.mxu0 %v1106
    %5045 = vmatpush1.bf16.msra.mxu0 %v1105
    %5046 = vmatprep.subr.bf16.mxu0 %v1114
    %5047 = vmatpush1.bf16.msra.mxu0 %v1113
    %5048 = vmatprep.subr.bf16.mxu0 %v1122
    %5049 = vmatpush1.bf16.msra.mxu0 %v1121
    %5050 = vmatprep.subr.bf16.mxu0 %v1130
    %5051 = vmatpush1.bf16.msra.mxu0 %v1129
    %5052 = vmatprep.subr.bf16.mxu0 %v1138
    %5053 = vmatpush1.bf16.msra.mxu0 %v1137
    %5054 = vmatprep.subr.bf16.mxu0 %v1146
    %5055 = vmatpush1.bf16.msra.mxu0 %v1145
    %5056 = vmatprep.subr.bf16.mxu0 %v1154
    %5057 = vmatpush1.bf16.msra.mxu0 %v1153
    %5058 = vmatprep.subr.bf16.mxu0 %v1162
    %5059 = vmatpush1.bf16.msra.mxu0 %v1161
    %5060 = vmatprep.subr.bf16.mxu0 %v1170
    %5061 = vmatpush1.bf16.msra.mxu0 %v1169
    %5062 = vmatprep.subr.bf16.mxu0 %v1178
    %5063 = vmatpush1.bf16.msra.mxu0 %v1177
    %5064 = vmatprep.subr.bf16.mxu0 %v1186
    %5065 = vmatpush1.bf16.msra.mxu0 %v1185
    %5066 = vmatprep.subr.bf16.mxu0 %v1194
    %5067 = vmatpush1.bf16.msra.mxu0 %v1193
    %5068 = vmatprep.subr.bf16.mxu0 %v1202
    %5069 = vmatpush1.bf16.msra.mxu0 %v1201
    %5070 = vmatprep.subr.bf16.mxu0 %v1210
    %5071 = vmatpush1.bf16.msra.mxu0 %v1209
    %5072 = vmatprep.mubr.bf16.mxu0 %v4874
    %5073 = vmatmul.mubr.bf16.gmra.mrb[0].mxu0 %v4873
    %v5074 = vpop.f32.mrb[0].mxu0
    %v5075 = vadd.f32 %v280, %v5074
    %v5076 = vpop.f32.mrb[0].mxu0
    %v5077 = vadd.f32 %v284, %v5076
    %v5078 = vpop.f32.mrb[0].mxu0
    %v5079 = vpop.f32.mrb[0].mxu0
    %5080 = vdwg.mxu0
    %5081 = vmatprep.subr.bf16.mxu0 %v1218
    %5082 = vmatpush1.bf16.msra.mxu0 %v1217
    %5083 = vmatprep.subr.bf16.mxu0 %v1226
    %5084 = vmatpush1.bf16.msra.mxu0 %v1225
    %5085 = vmatprep.subr.bf16.mxu0 %v1234
    %5086 = vmatpush1.bf16.msra.mxu0 %v1233
    %5087 = vmatprep.subr.bf16.mxu0 %v1242
    %5088 = vmatpush1.bf16.msra.mxu0 %v1241
    %5089 = vmatprep.subr.bf16.mxu0 %v1250
    %5090 = vmatpush1.bf16.msra.mxu0 %v1249
    %5091 = vmatprep.subr.bf16.mxu0 %v1258
    %5092 = vmatpush1.bf16.msra.mxu0 %v1257
    %5093 = vmatprep.subr.bf16.mxu0 %v1266
    %5094 = vmatpush1.bf16.msra.mxu0 %v1265
    %5095 = vmatprep.subr.bf16.mxu0 %v1274
    %5096 = vmatpush1.bf16.msra.mxu0 %v1273
    %5097 = vmatprep.subr.bf16.mxu0 0
    %5098 = vmatpush1.bf16.msra.mxu0 0
    %5099 = vmatprep.subr.bf16.mxu0 0
    %5100 = vmatpush1.bf16.msra.mxu0 0
    %5101 = vmatprep.subr.bf16.mxu0 0
    %5102 = vmatpush1.bf16.msra.mxu0 0
    %5103 = vmatprep.subr.bf16.mxu0 0
    %5104 = vmatpush1.bf16.msra.mxu0 0
    %5105 = vmatprep.subr.bf16.mxu0 0
    %5106 = vmatpush1.bf16.msra.mxu0 0
    %5107 = vmatprep.subr.bf16.mxu0 0
    %5108 = vmatpush1.bf16.msra.mxu0 0
    %5109 = vmatprep.subr.bf16.mxu0 0
    %5110 = vmatpush1.bf16.msra.mxu0 0
    %5111 = vmatprep.subr.bf16.mxu0 0
    %5112 = vmatpush1.bf16.msra.mxu0 0
    %5113 = vmatprep.mubr.bf16.mxu0 0
    %5114 = vmatmul.mubr.bf16.gmra.mrb[0].mxu0 %v4875
    %v5115 = vpop.f32.mrb[0].mxu0
    %v5116 = vadd.f32 %v5075, %v5115
    %v5117 = vpop.f32.mrb[0].mxu0
    %v5118 = vadd.f32 %v5077, %v5117
    %v5119 = vpop.f32.mrb[0].mxu0
    %v5120 = vpop.f32.mrb[0].mxu0
    %5121 = vdwg.mxu0
    %5122 = vmatprep.subr.bf16.mxu0 %v1092
    %5123 = vmatpush1.bf16.msra.mxu0 %v1091
    %5124 = vmatprep.subr.bf16.mxu0 %v1100
    %5125 = vmatpush1.bf16.msra.mxu0 %v1099
    %5126 = vmatprep.subr.bf16.mxu0 %v1108
    %5127 = vmatpush1.bf16.msra.mxu0 %v1107
    %5128 = vmatprep.subr.bf16.mxu0 %v1116
    %5129 = vmatpush1.bf16.msra.mxu0 %v1115
    %5130 = vmatprep.subr.bf16.mxu0 %v1124
    %5131 = vmatpush1.bf16.msra.mxu0 %v1123
    %5132 = vmatprep.subr.bf16.mxu0 %v1132
    %5133 = vmatpush1.bf16.msra.mxu0 %v1131
    %5134 = vmatprep.subr.bf16.mxu0 %v1140
    %5135 = vmatpush1.bf16.msra.mxu0 %v1139
    %5136 = vmatprep.subr.bf16.mxu0 %v1148
    %5137 = vmatpush1.bf16.msra.mxu0 %v1147
    %5138 = vmatprep.subr.bf16.mxu0 %v1156
    %5139 = vmatpush1.bf16.msra.mxu0 %v1155
    %5140 = vmatprep.subr.bf16.mxu0 %v1164
    %5141 = vmatpush1.bf16.msra.mxu0 %v1163
    %5142 = vmatprep.subr.bf16.mxu0 %v1172
    %5143 = vmatpush1.bf16.msra.mxu0 %v1171
    %5144 = vmatprep.subr.bf16.mxu0 %v1180
    %5145 = vmatpush1.bf16.msra.mxu0 %v1179
    %5146 = vmatprep.subr.bf16.mxu0 %v1188
    %5147 = vmatpush1.bf16.msra.mxu0 %v1187
    %5148 = vmatprep.subr.bf16.mxu0 %v1196
    %5149 = vmatpush1.bf16.msra.mxu0 %v1195
    %5150 = vmatprep.subr.bf16.mxu0 %v1204
    %5151 = vmatpush1.bf16.msra.mxu0 %v1203
    %5152 = vmatprep.subr.bf16.mxu0 %v1212
    %5153 = vmatpush1.bf16.msra.mxu0 %v1211
    %5154 = vmatprep.mubr.bf16.mxu0 %v4874
    %5155 = vmatmul.mubr.bf16.gmra.mrb[0].mxu0 %v4873
    %v5156 = vpop.f32.mrb[0].mxu0
    %v5157 = vadd.f32 %v288, %v5156
    %v5158 = vpop.f32.mrb[0].mxu0
    %v5159 = vadd.f32 %v292, %v5158
    %v5160 = vpop.f32.mrb[0].mxu0
    %v5161 = vpop.f32.mrb[0].mxu0
    %5162 = vdwg.mxu0
    %5163 = vmatprep.subr.bf16.mxu0 %v1220
    %5164 = vmatpush1.bf16.msra.mxu0 %v1219
    %5165 = vmatprep.subr.bf16.mxu0 %v1228
    %5166 = vmatpush1.bf16.msra.mxu0 %v1227
    %5167 = vmatprep.subr.bf16.mxu0 %v1236
    %5168 = vmatpush1.bf16.msra.mxu0 %v1235
    %5169 = vmatprep.subr.bf16.mxu0 %v1244
    %5170 = vmatpush1.bf16.msra.mxu0 %v1243
    %5171 = vmatprep.subr.bf16.mxu0 %v1252
    %5172 = vmatpush1.bf16.msra.mxu0 %v1251
    %5173 = vmatprep.subr.bf16.mxu0 %v1260
    %5174 = vmatpush1.bf16.msra.mxu0 %v1259
    %5175 = vmatprep.subr.bf16.mxu0 %v1268
    %5176 = vmatpush1.bf16.msra.mxu0 %v1267
    %5177 = vmatprep.subr.bf16.mxu0 %v1276
    %5178 = vmatpush1.bf16.msra.mxu0 %v1275
    %5179 = vmatprep.subr.bf16.mxu0 0
    %5180 = vmatpush1.bf16.msra.mxu0 0
    %5181 = vmatprep.subr.bf16.mxu0 0
    %5182 = vmatpush1.bf16.msra.mxu0 0
    %5183 = vmatprep.subr.bf16.mxu0 0
    %5184 = vmatpush1.bf16.msra.mxu0 0
    %5185 = vmatprep.subr.bf16.mxu0 0
    %5186 = vmatpush1.bf16.msra.mxu0 0
    %5187 = vmatprep.subr.bf16.mxu0 0
    %5188 = vmatpush1.bf16.msra.mxu0 0
    %5189 = vmatprep.subr.bf16.mxu0 0
    %5190 = vmatpush1.bf16.msra.mxu0 0
    %5191 = vmatprep.subr.bf16.mxu0 0
    %5192 = vmatpush1.bf16.msra.mxu0 0
    %5193 = vmatprep.subr.bf16.mxu0 0
    %5194 = vmatpush1.bf16.msra.mxu0 0
    %5195 = vmatprep.mubr.bf16.mxu0 0
    %5196 = vmatmul.mubr.bf16.gmra.mrb[0].mxu0 %v4875
    %v5197 = vpop.f32.mrb[0].mxu0
    %v5198 = vadd.f32 %v5157, %v5197
    %v5199 = vpop.f32.mrb[0].mxu0
    %v5200 = vadd.f32 %v5159, %v5199
    %v5201 = vpop.f32.mrb[0].mxu0
    %v5202 = vpop.f32.mrb[0].mxu0
    %5203 = vdwg.mxu0
    %v5204 = vxor.u32 %v4952, 2147483648
    %v5205 = vmul.f32 %v5204, 1.442695
    %v5206 = vpow.pop %v5205
    %v5207 = vadd.f32 %v5206, 1.0
    %v5208 = vrcp.pop %v5207
    %v5209 = vmul.f32 1.0, %v5208
    %v5210 = vxor.u32 %v4954, 2147483648
    %v5211 = vmul.f32 %v5210, 1.442695
    %v5212 = vpow.pop %v5211
    %v5213 = vadd.f32 %v5212, 1.0
    %v5214 = vrcp.pop %v5213
    %v5215 = vmul.f32 1.0, %v5214
    %v5216 = vtanh.pop %v5034
    %v5217 = vxor.u32 %v5036, 2147483648
    %v5218 = vmul.f32 %v5217, 1.442695
    %v5219 = vpow.pop %v5218
    %v5220 = vadd.f32 %v5219, 1.0
    %v5221 = vrcp.pop %v5220
    %v5222 = vmul.f32 1.0, %v5221
    %v5223 = vmul.f32 %v5215, %v4373
    %v5224 = vmul.f32 %v5209, %v5216
    %v5225 = vadd.f32 %v5223, %v5224
    %v5226 = vtanh.pop %v5225
    %v5227 = vmul.f32 %v5222, %v5226
    %v5228 = vxor.u32 %v5116, 2147483648
    %v5229 = vmul.f32 %v5228, 1.442695
    %v5230 = vpow.pop %v5229
    %v5231 = vadd.f32 %v5230, 1.0
    %v5232 = vrcp.pop %v5231
    %v5233 = vmul.f32 1.0, %v5232
    %v5234 = vxor.u32 %v5118, 2147483648
    %v5235 = vmul.f32 %v5234, 1.442695
    %v5236 = vpow.pop %v5235
    %v5237 = vadd.f32 %v5236, 1.0
    %v5238 = vrcp.pop %v5237
    %v5239 = vmul.f32 1.0, %v5238
    %v5240 = vtanh.pop %v5198
    %v5241 = vxor.u32 %v5200, 2147483648
    %v5242 = vmul.f32 %v5241, 1.442695
    %v5243 = vpow.pop %v5242
    %v5244 = vadd.f32 %v5243, 1.0
    %v5245 = vrcp.pop %v5244
    %v5246 = vmul.f32 1.0, %v5245
    %v5247 = vmul.f32 %v5239, %v4872
    %v5248 = vmul.f32 %v5233, %v5240
    %v5249 = vadd.f32 %v5247, %v5248
    %v5250 = vtanh.pop %v5249
    %v5251 = vmul.f32 %v5246, %v5250
    %vm5252 = vcmp.gt.f32.partialorder %v4650, 0.0
    %vm5253 = vcmp.gt.f32.partialorder %v4658, 0.0
    %vm5254 = vcmp.gt.f32.partialorder %v4666, 0.0
    %vm5255 = vcmp.gt.f32.partialorder %v4674, 0.0
    %vm5256 = vcmp.gt.f32.partialorder %v4682, 0.0
    %vm5257 = vcmp.gt.f32.partialorder %v4690, 0.0
    %vm5258 = vcmp.gt.f32.partialorder %v4698, 0.0
    %vm5259 = vcmp.gt.f32.partialorder %v4706, 0.0
    %v5261 = vcombine.high %v5251, %v5251
    %v5263 = vunpack.c.l.s4 1966171168
    %v5264 = vunpack.c.0.s8 %v5263
    %v5265 = vlaneseq
    %v5266 = vshrl.u32 %v5265, 7
    %v5267 = vsub.s32 %v5264, %v5266
    %v5268 = vrot.slane %v5251, %v5267
    %v5270 = vunpack.c.l.s4 1966171168
    %v5271 = vunpack.c.0.s8 %v5270
    %v5272 = vlaneseq
    %v5273 = vshrl.u32 %v5272, 7
    %v5274 = vsub.s32 %v5271, %v5273
    %v5275 = vrot.slane %v5261, %v5274
    %v5276 = vcombine.high %v5268, %v5268
    %v5277 = vcombine.high %v5275, %v5275
    %v5279 = vunpack.c.l.s4 1966171168
    %v5280 = vunpack.c.0.s8 %v5279
    %v5281 = vlaneseq
    %v5282 = vshrl.u32 %v5281, 7
    %v5283 = vsub.s32 %v5280, %v5282
    %v5284 = vrot.slane %v5268, %v5283
    %v5286 = vunpack.c.l.s4 1966171168
    %v5287 = vunpack.c.0.s8 %v5286
    %v5288 = vlaneseq
    %v5289 = vshrl.u32 %v5288, 7
    %v5290 = vsub.s32 %v5287, %v5289
    %v5291 = vrot.slane %v5275, %v5290
    %v5293 = vunpack.c.l.s4 1966171168
    %v5294 = vunpack.c.0.s8 %v5293
    %v5295 = vlaneseq
    %v5296 = vshrl.u32 %v5295, 7
    %v5297 = vsub.s32 %v5294, %v5296
    %v5298 = vrot.slane %v5276, %v5297
    %v5300 = vunpack.c.l.s4 1966171168
    %v5301 = vunpack.c.0.s8 %v5300
    %v5302 = vlaneseq
    %v5303 = vshrl.u32 %v5302, 7
    %v5304 = vsub.s32 %v5301, %v5303
    %v5305 = vrot.slane %v5277, %v5304
    %v5306 = vcombine.high %v5284, %v5284
    %v5307 = vcombine.high %v5291, %v5291
    %v5308 = vcombine.high %v5298, %v5298
    %v5309 = vcombine.high %v5305, %v5305
    %v5310 = vsel %vm5252, 1, 0
    %v5311 = vsel %vm5253, 1, 0
    %v5312 = vsel %vm5254, 1, 0
    %v5313 = vsel %vm5255, 1, 0
    %v5314 = vsel %vm5256, 1, 0
    %v5315 = vsel %vm5257, 1, 0
    %v5316 = vsel %vm5258, 1, 0
    %v5317 = vsel %vm5259, 1, 0
    %vm5318 = vcmp.eq.s32.totalorder %v5310, 1
    %vm5319 = vcmp.eq.s32.totalorder %v5311, 1
    %vm5320 = vcmp.eq.s32.totalorder %v5312, 1
    %vm5321 = vcmp.eq.s32.totalorder %v5313, 1
    %vm5322 = vcmp.eq.s32.totalorder %v5314, 1
    %vm5323 = vcmp.eq.s32.totalorder %v5315, 1
    %vm5324 = vcmp.eq.s32.totalorder %v5316, 1
    %vm5325 = vcmp.eq.s32.totalorder %v5317, 1
    %v5326 = vlaneseq
    %v5327 = vshrl.u32 %v5326, 7
    %v5328 = vsub.s32 0, %v5327
    %v5329 = vrot.slane %v5284, %v5328
    %v5330 = vlaneseq
    %v5331 = vshrl.u32 %v5330, 7
    %v5332 = vsub.s32 0, %v5331
    %v5333 = vrot.slane %v5298, %v5332
    %v5334 = vlaneseq
    %v5335 = vshrl.u32 %v5334, 7
    %v5336 = vsub.s32 0, %v5335
    %v5337 = vrot.slane %v5306, %v5336
    %v5338 = vlaneseq
    %v5339 = vshrl.u32 %v5338, 7
    %v5340 = vsub.s32 0, %v5339
    %v5341 = vrot.slane %v5308, %v5340
    %v5342 = vlaneseq
    %v5343 = vshrl.u32 %v5342, 7
    %v5344 = vsub.s32 0, %v5343
    %v5345 = vrot.slane %v5291, %v5344
    %v5346 = vlaneseq
    %v5347 = vshrl.u32 %v5346, 7
    %v5348 = vsub.s32 0, %v5347
    %v5349 = vrot.slane %v5305, %v5348
    %v5350 = vlaneseq
    %v5351 = vshrl.u32 %v5350, 7
    %v5352 = vsub.s32 0, %v5351
    %v5353 = vrot.slane %v5307, %v5352
    %v5354 = vlaneseq
    %v5355 = vshrl.u32 %v5354, 7
    %v5356 = vsub.s32 0, %v5355
    %v5357 = vrot.slane %v5309, %v5356
    %v5366 = vsel %vm5318, %v5329, %v4514
    %v5367 = vsel %vm5319, %v5333, %v4515
    %v5368 = vsel %vm5320, %v5337, %v4516
    %v5369 = vsel %vm5321, %v5341, %v4517
    %v5370 = vsel %vm5322, %v5345, %v4518
    %v5371 = vsel %vm5323, %v5349, %v4519
    %v5372 = vsel %vm5324, %v5353, %v4520
    %v5373 = vsel %vm5325, %v5357, %v4521
    %v5375 = vcombine.high %v5249, %v5249
    %v5377 = vunpack.c.l.s4 1966171168
    %v5378 = vunpack.c.0.s8 %v5377
    %v5379 = vlaneseq
    %v5380 = vshrl.u32 %v5379, 7
    %v5381 = vsub.s32 %v5378, %v5380
    %v5382 = vrot.slane %v5249, %v5381
    %v5384 = vunpack.c.l.s4 1966171168
    %v5385 = vunpack.c.0.s8 %v5384
    %v5386 = vlaneseq
    %v5387 = vshrl.u32 %v5386, 7
    %v5388 = vsub.s32 %v5385, %v5387
    %v5389 = vrot.slane %v5375, %v5388
    %v5390 = vcombine.high %v5382, %v5382
    %v5391 = vcombine.high %v5389, %v5389
    %v5393 = vunpack.c.l.s4 1966171168
    %v5394 = vunpack.c.0.s8 %v5393
    %v5395 = vlaneseq
    %v5396 = vshrl.u32 %v5395, 7
    %v5397 = vsub.s32 %v5394, %v5396
    %v5398 = vrot.slane %v5382, %v5397
    %v5400 = vunpack.c.l.s4 1966171168
    %v5401 = vunpack.c.0.s8 %v5400
    %v5402 = vlaneseq
    %v5403 = vshrl.u32 %v5402, 7
    %v5404 = vsub.s32 %v5401, %v5403
    %v5405 = vrot.slane %v5389, %v5404
    %v5407 = vunpack.c.l.s4 1966171168
    %v5408 = vunpack.c.0.s8 %v5407
    %v5409 = vlaneseq
    %v5410 = vshrl.u32 %v5409, 7
    %v5411 = vsub.s32 %v5408, %v5410
    %v5412 = vrot.slane %v5390, %v5411
    %v5414 = vunpack.c.l.s4 1966171168
    %v5415 = vunpack.c.0.s8 %v5414
    %v5416 = vlaneseq
    %v5417 = vshrl.u32 %v5416, 7
    %v5418 = vsub.s32 %v5415, %v5417
    %v5419 = vrot.slane %v5391, %v5418
    %v5420 = vcombine.high %v5398, %v5398
    %v5421 = vcombine.high %v5405, %v5405
    %v5422 = vcombine.high %v5412, %v5412
    %v5423 = vcombine.high %v5419, %v5419
    %v5424 = vlaneseq
    %v5425 = vshrl.u32 %v5424, 7
    %v5426 = vsub.s32 0, %v5425
    %v5427 = vrot.slane %v5398, %v5426
    %v5428 = vlaneseq
    %v5429 = vshrl.u32 %v5428, 7
    %v5430 = vsub.s32 0, %v5429
    %v5431 = vrot.slane %v5412, %v5430
    %v5432 = vlaneseq
    %v5433 = vshrl.u32 %v5432, 7
    %v5434 = vsub.s32 0, %v5433
    %v5435 = vrot.slane %v5420, %v5434
    %v5436 = vlaneseq
    %v5437 = vshrl.u32 %v5436, 7
    %v5438 = vsub.s32 0, %v5437
    %v5439 = vrot.slane %v5422, %v5438
    %v5440 = vlaneseq
    %v5441 = vshrl.u32 %v5440, 7
    %v5442 = vsub.s32 0, %v5441
    %v5443 = vrot.slane %v5405, %v5442
    %v5444 = vlaneseq
    %v5445 = vshrl.u32 %v5444, 7
    %v5446 = vsub.s32 0, %v5445
    %v5447 = vrot.slane %v5419, %v5446
    %v5448 = vlaneseq
    %v5449 = vshrl.u32 %v5448, 7
    %v5450 = vsub.s32 0, %v5449
    %v5451 = vrot.slane %v5421, %v5450
    %v5452 = vlaneseq
    %v5453 = vshrl.u32 %v5452, 7
    %v5454 = vsub.s32 0, %v5453
    %v5455 = vrot.slane %v5423, %v5454
    %v5464 = vsel %vm5318, %v5427, %v4612
    %v5465 = vsel %vm5319, %v5431, %v4613
    %v5466 = vsel %vm5320, %v5435, %v4614
    %v5467 = vsel %vm5321, %v5439, %v4615
    %v5468 = vsel %vm5322, %v5443, %v4616
    %v5469 = vsel %vm5323, %v5447, %v4617
    %v5470 = vsel %vm5324, %v5451, %v4618
    %v5471 = vsel %vm5325, %v5455, %v4619
    %v5472 = vmax.f32 %v4620, %v4624
    %s5473 = scalar_lea.vmem [#allocation8], 32
    %5474 = vst [vmem:[%s5473] sm:$0xff] %v5227
    %s5475 = scalar_lea.vmem [#allocation2], 40
    %v5476 = vld [vmem:[%s5475] sm:$0xff]
    %5478 = vrot.lane.b32.xlu0 %v5476, 32
    %v5479 = vpop.permute.xlu0 %5478
    %v5481 = vsel %vm334, %v5479, 0.0
    %5482 = vadd.xlane.f32.xlu0 %v5481
    %v5483 = vpop.xlane.xlu0 %5482
    %v5484 = vmul.f32 %v5476, %v5472
    %5486 = vrot.lane.b32.xlu0 %v5484, 32
    %v5487 = vpop.permute.xlu0 %5486
    %v5489 = vsel %vm334, %v5487, 0.0
    %5490 = vadd.xlane.f32.xlu0 %v5489
    %v5491 = vpop.xlane.xlu0 %5490
    %v5492 = vmul.f32 %v5483, %v5491
    %v5493 = vsub.f32 1.0, %v5491
    %v5494 = vmul.f32 %v5483, %v5493
    %v5495 = vlaneseq
    %v5496 = vshrl.u32 %v5495, 7
    %v5497 = vsub.s32 0, %v5496
    %v5498 = vrot.slane %v5476, %v5497
    %s5500 = sor.u32 256, 96
    %5501 = vbcast.lane.b32.xlu0 %v5498, %s5500
    %v5502 = vpop.permute.xlu0 %5501
    %v5503 = vlaneseq
    %v5504 = vshrl.u32 %v5503, 7
    %v5505 = vsub.s32 1, %v5504
    %v5506 = vrot.slane %v5476, %v5505
    %s5508 = sor.u32 256, 96
    %5509 = vbcast.lane.b32.xlu0 %v5506, %s5508
    %v5510 = vpop.permute.xlu0 %5509
    %v5511 = vlaneseq
    %v5512 = vshrl.u32 %v5511, 7
    %v5513 = vsub.s32 2, %v5512
    %v5514 = vrot.slane %v5476, %v5513
    %s5516 = sor.u32 256, 96
    %5517 = vbcast.lane.b32.xlu0 %v5514, %s5516
    %v5518 = vpop.permute.xlu0 %5517
    %v5519 = vlaneseq
    %v5520 = vshrl.u32 %v5519, 7
    %v5521 = vsub.s32 3, %v5520
    %v5522 = vrot.slane %v5476, %v5521
    %s5524 = sor.u32 256, 96
    %5525 = vbcast.lane.b32.xlu0 %v5522, %s5524
    %v5526 = vpop.permute.xlu0 %5525
    %v5527 = vlaneseq
    %v5528 = vshrl.u32 %v5527, 7
    %v5529 = vsub.s32 4, %v5528
    %v5530 = vrot.slane %v5476, %v5529
    %s5532 = sor.u32 256, 96
    %5533 = vbcast.lane.b32.xlu0 %v5530, %s5532
    %v5534 = vpop.permute.xlu0 %5533
    %v5535 = vlaneseq
    %v5536 = vshrl.u32 %v5535, 7
    %v5537 = vsub.s32 5, %v5536
    %v5538 = vrot.slane %v5476, %v5537
    %s5540 = sor.u32 256, 96
    %5541 = vbcast.lane.b32.xlu0 %v5538, %s5540
    %v5542 = vpop.permute.xlu0 %5541
    %v5543 = vlaneseq
    %v5544 = vshrl.u32 %v5543, 7
    %v5545 = vsub.s32 6, %v5544
    %v5546 = vrot.slane %v5476, %v5545
    %s5548 = sor.u32 256, 96
    %5549 = vbcast.lane.b32.xlu0 %v5546, %s5548
    %v5550 = vpop.permute.xlu0 %5549
    %v5551 = vlaneseq
    %v5552 = vshrl.u32 %v5551, 7
    %v5553 = vsub.s32 7, %v5552
    %v5554 = vrot.slane %v5476, %v5553
    %s5556 = sor.u32 256, 96
    %5557 = vbcast.lane.b32.xlu0 %v5554, %s5556
    %v5558 = vpop.permute.xlu0 %5557
    %v5559 = vmul.f32 %v5502, %v5366
    %v5560 = vmul.f32 %v5510, %v5367
    %v5561 = vmul.f32 %v5518, %v5368
    %v5562 = vmul.f32 %v5526, %v5369
    %v5563 = vmul.f32 %v5534, %v5370
    %v5564 = vmul.f32 %v5542, %v5371
    %v5565 = vmul.f32 %v5550, %v5372
    %v5566 = vmul.f32 %v5558, %v5373
    %v5567 = vsel %vm421, %v5559, 0.0
    %v5568 = vrot.slane %v5567, 4
    %v5569 = vadd.f32 %v5567, %v5568
    %v5570 = vrot.slane %v5569, 2
    %v5571 = vadd.f32 %v5569, %v5570
    %v5572 = vrot.slane %v5571, 1
    %v5573 = vadd.f32 %v5571, %v5572
    %v5574 = vsel %vm421, %v5560, 0.0
    %v5575 = vrot.slane %v5574, 4
    %v5576 = vadd.f32 %v5574, %v5575
    %v5577 = vrot.slane %v5576, 2
    %v5578 = vadd.f32 %v5576, %v5577
    %v5579 = vrot.slane %v5578, 1
    %v5580 = vadd.f32 %v5578, %v5579
    %v5581 = vsel %vm421, %v5561, 0.0
    %v5582 = vrot.slane %v5581, 4
    %v5583 = vadd.f32 %v5581, %v5582
    %v5584 = vrot.slane %v5583, 2
    %v5585 = vadd.f32 %v5583, %v5584
    %v5586 = vrot.slane %v5585, 1
    %v5587 = vadd.f32 %v5585, %v5586
    %v5588 = vsel %vm421, %v5562, 0.0
    %v5589 = vrot.slane %v5588, 4
    %v5590 = vadd.f32 %v5588, %v5589
    %v5591 = vrot.slane %v5590, 2
    %v5592 = vadd.f32 %v5590, %v5591
    %v5593 = vrot.slane %v5592, 1
    %v5594 = vadd.f32 %v5592, %v5593
    %v5595 = vsel %vm421, %v5563, 0.0
    %v5596 = vrot.slane %v5595, 4
    %v5597 = vadd.f32 %v5595, %v5596
    %v5598 = vrot.slane %v5597, 2
    %v5599 = vadd.f32 %v5597, %v5598
    %v5600 = vrot.slane %v5599, 1
    %v5601 = vadd.f32 %v5599, %v5600
    %v5602 = vsel %vm421, %v5564, 0.0
    %v5603 = vrot.slane %v5602, 4
    %v5604 = vadd.f32 %v5602, %v5603
    %v5605 = vrot.slane %v5604, 2
    %v5606 = vadd.f32 %v5604, %v5605
    %v5607 = vrot.slane %v5606, 1
    %v5608 = vadd.f32 %v5606, %v5607
    %v5609 = vsel %vm421, %v5565, 0.0
    %v5610 = vrot.slane %v5609, 4
    %v5611 = vadd.f32 %v5609, %v5610
    %v5612 = vrot.slane %v5611, 2
    %v5613 = vadd.f32 %v5611, %v5612
    %v5614 = vrot.slane %v5613, 1
    %v5615 = vadd.f32 %v5613, %v5614
    %v5616 = vsel %vm421, %v5566, 0.0
    %v5617 = vrot.slane %v5616, 4
    %v5618 = vadd.f32 %v5616, %v5617
    %v5619 = vrot.slane %v5618, 2
    %v5620 = vadd.f32 %v5618, %v5619
    %v5621 = vrot.slane %v5620, 1
    %v5622 = vadd.f32 %v5620, %v5621
    %v5623 = vmul.f32 %v5502, %v5464
    %v5624 = vmul.f32 %v5510, %v5465
    %v5625 = vmul.f32 %v5518, %v5466
    %v5626 = vmul.f32 %v5526, %v5467
    %v5627 = vmul.f32 %v5534, %v5468
    %v5628 = vmul.f32 %v5542, %v5469
    %v5629 = vmul.f32 %v5550, %v5470
    %v5630 = vmul.f32 %v5558, %v5471
    %v5631 = vsel %vm421, %v5623, 0.0
    %v5632 = vrot.slane %v5631, 4
    %v5633 = vadd.f32 %v5631, %v5632
    %v5634 = vrot.slane %v5633, 2
    %v5635 = vadd.f32 %v5633, %v5634
    %v5636 = vrot.slane %v5635, 1
    %v5637 = vadd.f32 %v5635, %v5636
    %v5638 = vsel %vm421, %v5624, 0.0
    %v5639 = vrot.slane %v5638, 4
    %v5640 = vadd.f32 %v5638, %v5639
    %v5641 = vrot.slane %v5640, 2
    %v5642 = vadd.f32 %v5640, %v5641
    %v5643 = vrot.slane %v5642, 1
    %v5644 = vadd.f32 %v5642, %v5643
    %v5645 = vsel %vm421, %v5625, 0.0
    %v5646 = vrot.slane %v5645, 4
    %v5647 = vadd.f32 %v5645, %v5646
    %v5648 = vrot.slane %v5647, 2
    %v5649 = vadd.f32 %v5647, %v5648
    %v5650 = vrot.slane %v5649, 1
    %v5651 = vadd.f32 %v5649, %v5650
    %v5652 = vsel %vm421, %v5626, 0.0
    %v5653 = vrot.slane %v5652, 4
    %v5654 = vadd.f32 %v5652, %v5653
    %v5655 = vrot.slane %v5654, 2
    %v5656 = vadd.f32 %v5654, %v5655
    %v5657 = vrot.slane %v5656, 1
    %v5658 = vadd.f32 %v5656, %v5657
    %v5659 = vsel %vm421, %v5627, 0.0
    %v5660 = vrot.slane %v5659, 4
    %v5661 = vadd.f32 %v5659, %v5660
    %v5662 = vrot.slane %v5661, 2
    %v5663 = vadd.f32 %v5661, %v5662
    %v5664 = vrot.slane %v5663, 1
    %v5665 = vadd.f32 %v5663, %v5664
    %v5666 = vsel %vm421, %v5628, 0.0
    %v5667 = vrot.slane %v5666, 4
    %v5668 = vadd.f32 %v5666, %v5667
    %v5669 = vrot.slane %v5668, 2
    %v5670 = vadd.f32 %v5668, %v5669
    %v5671 = vrot.slane %v5670, 1
    %v5672 = vadd.f32 %v5670, %v5671
    %v5673 = vsel %vm421, %v5629, 0.0
    %v5674 = vrot.slane %v5673, 4
    %v5675 = vadd.f32 %v5673, %v5674
    %v5676 = vrot.slane %v5675, 2
    %v5677 = vadd.f32 %v5675, %v5676
    %v5678 = vrot.slane %v5677, 1
    %v5679 = vadd.f32 %v5677, %v5678
    %v5680 = vsel %vm421, %v5630, 0.0
    %v5681 = vrot.slane %v5680, 4
    %v5682 = vadd.f32 %v5680, %v5681
    %v5683 = vrot.slane %v5682, 2
    %v5684 = vadd.f32 %v5682, %v5683
    %v5685 = vrot.slane %v5684, 1
    %v5686 = vadd.f32 %v5684, %v5685
    %v5695 = vsel %vm486, %v5580, %v5573
    %v5696 = vsel %vm488, %v5587, %v5695
    %v5697 = vsel %vm490, %v5594, %v5696
    %v5698 = vsel %vm492, %v5601, %v5697
    %v5699 = vsel %vm494, %v5608, %v5698
    %v5700 = vsel %vm496, %v5615, %v5699
    %v5701 = vsel %vm498, %v5622, %v5700
    %v5703 = vmul.f32 %v5492, %v5701
    %v5704 = vmul.f32 %v5494, %v306
    %v5705 = vadd.f32 %v5703, %v5704
    %v5714 = vsel %vm486, %v5644, %v5637
    %v5715 = vsel %vm488, %v5651, %v5714
    %v5716 = vsel %vm490, %v5658, %v5715
    %v5717 = vsel %vm492, %v5665, %v5716
    %v5718 = vsel %vm494, %v5672, %v5717
    %v5719 = vsel %vm496, %v5679, %v5718
    %v5720 = vsel %vm498, %v5686, %v5719
    %v5722 = vmul.f32 %v5492, %v5720
    %v5723 = vmul.f32 %v5494, %v313
    %v5724 = vadd.f32 %v5722, %v5723
    %v5725 = vpack.c.bf16 %v5476, %v5476
    %v5726 = vpack.c.bf16 %v5227, %v5227
    %v5727 = vpack.c.bf16 %v5705, %v5705
    %5728 = vmatprep.subr.bf16.mxu0 %v1086
    %5729 = vmatpush1.bf16.msra.mxu0 %v1085
    %5730 = vmatprep.subr.bf16.mxu0 %v1094
    %5731 = vmatpush1.bf16.msra.mxu0 %v1093
    %5732 = vmatprep.subr.bf16.mxu0 %v1102
    %5733 = vmatpush1.bf16.msra.mxu0 %v1101
    %5734 = vmatprep.subr.bf16.mxu0 %v1110
    %5735 = vmatpush1.bf16.msra.mxu0 %v1109
    %5736 = vmatprep.subr.bf16.mxu0 %v1118
    %5737 = vmatpush1.bf16.msra.mxu0 %v1117
    %5738 = vmatprep.subr.bf16.mxu0 %v1126
    %5739 = vmatpush1.bf16.msra.mxu0 %v1125
    %5740 = vmatprep.subr.bf16.mxu0 %v1134
    %5741 = vmatpush1.bf16.msra.mxu0 %v1133
    %5742 = vmatprep.subr.bf16.mxu0 %v1142
    %5743 = vmatpush1.bf16.msra.mxu0 %v1141
    %5744 = vmatprep.subr.bf16.mxu0 %v1150
    %5745 = vmatpush1.bf16.msra.mxu0 %v1149
    %5746 = vmatprep.subr.bf16.mxu0 %v1158
    %5747 = vmatpush1.bf16.msra.mxu0 %v1157
    %5748 = vmatprep.subr.bf16.mxu0 %v1166
    %5749 = vmatpush1.bf16.msra.mxu0 %v1165
    %5750 = vmatprep.subr.bf16.mxu0 %v1174
    %5751 = vmatpush1.bf16.msra.mxu0 %v1173
    %5752 = vmatprep.subr.bf16.mxu0 %v1182
    %5753 = vmatpush1.bf16.msra.mxu0 %v1181
    %5754 = vmatprep.subr.bf16.mxu0 %v1190
    %5755 = vmatpush1.bf16.msra.mxu0 %v1189
    %5756 = vmatprep.subr.bf16.mxu0 %v1198
    %5757 = vmatpush1.bf16.msra.mxu0 %v1197
    %5758 = vmatprep.subr.bf16.mxu0 %v1206
    %5759 = vmatpush1.bf16.msra.mxu0 %v1205
    %5760 = vmatprep.mubr.bf16.mxu0 %v5726
    %5761 = vmatmul.mubr.bf16.gmra.mrb[0].mxu0 %v5725
    %v5762 = vpop.f32.mrb[0].mxu0
    %v5763 = vadd.f32 %v264, %v5762
    %v5764 = vpop.f32.mrb[0].mxu0
    %v5765 = vadd.f32 %v268, %v5764
    %v5766 = vpop.f32.mrb[0].mxu0
    %v5767 = vpop.f32.mrb[0].mxu0
    %5768 = vdwg.mxu0
    %5769 = vmatprep.subr.bf16.mxu0 %v1214
    %5770 = vmatpush1.bf16.msra.mxu0 %v1213
    %5771 = vmatprep.subr.bf16.mxu0 %v1222
    %5772 = vmatpush1.bf16.msra.mxu0 %v1221
    %5773 = vmatprep.subr.bf16.mxu0 %v1230
    %5774 = vmatpush1.bf16.msra.mxu0 %v1229
    %5775 = vmatprep.subr.bf16.mxu0 %v1238
    %5776 = vmatpush1.bf16.msra.mxu0 %v1237
    %5777 = vmatprep.subr.bf16.mxu0 %v1246
    %5778 = vmatpush1.bf16.msra.mxu0 %v1245
    %5779 = vmatprep.subr.bf16.mxu0 %v1254
    %5780 = vmatpush1.bf16.msra.mxu0 %v1253
    %5781 = vmatprep.subr.bf16.mxu0 %v1262
    %5782 = vmatpush1.bf16.msra.mxu0 %v1261
    %5783 = vmatprep.subr.bf16.mxu0 %v1270
    %5784 = vmatpush1.bf16.msra.mxu0 %v1269
    %5785 = vmatprep.subr.bf16.mxu0 0
    %5786 = vmatpush1.bf16.msra.mxu0 0
    %5787 = vmatprep.subr.bf16.mxu0 0
    %5788 = vmatpush1.bf16.msra.mxu0 0
    %5789 = vmatprep.subr.bf16.mxu0 0
    %5790 = vmatpush1.bf16.msra.mxu0 0
    %5791 = vmatprep.subr.bf16.mxu0 0
    %5792 = vmatpush1.bf16.msra.mxu0 0
    %5793 = vmatprep.subr.bf16.mxu0 0
    %5794 = vmatpush1.bf16.msra.mxu0 0
    %5795 = vmatprep.subr.bf16.mxu0 0
    %5796 = vmatpush1.bf16.msra.mxu0 0
    %5797 = vmatprep.subr.bf16.mxu0 0
    %5798 = vmatpush1.bf16.msra.mxu0 0
    %5799 = vmatprep.subr.bf16.mxu0 0
    %5800 = vmatpush1.bf16.msra.mxu0 0
    %5801 = vmatprep.mubr.bf16.mxu0 0
    %5802 = vmatmul.mubr.bf16.gmra.mrb[0].mxu0 %v5727
    %v5803 = vpop.f32.mrb[0].mxu0
    %v5804 = vadd.f32 %v5763, %v5803
    %v5805 = vpop.f32.mrb[0].mxu0
    %v5806 = vadd.f32 %v5765, %v5805
    %v5807 = vpop.f32.mrb[0].mxu0
    %v5808 = vpop.f32.mrb[0].mxu0
    %5809 = vdwg.mxu0
    %5810 = vmatprep.subr.bf16.mxu0 %v1088
    %5811 = vmatpush1.bf16.msra.mxu0 %v1087
    %5812 = vmatprep.subr.bf16.mxu0 %v1096
    %5813 = vmatpush1.bf16.msra.mxu0 %v1095
    %5814 = vmatprep.subr.bf16.mxu0 %v1104
    %5815 = vmatpush1.bf16.msra.mxu0 %v1103
    %5816 = vmatprep.subr.bf16.mxu0 %v1112
    %5817 = vmatpush1.bf16.msra.mxu0 %v1111
    %5818 = vmatprep.subr.bf16.mxu0 %v1120
    %5819 = vmatpush1.bf16.msra.mxu0 %v1119
    %5820 = vmatprep.subr.bf16.mxu0 %v1128
    %5821 = vmatpush1.bf16.msra.mxu0 %v1127
    %5822 = vmatprep.subr.bf16.mxu0 %v1136
    %5823 = vmatpush1.bf16.msra.mxu0 %v1135
    %5824 = vmatprep.subr.bf16.mxu0 %v1144
    %5825 = vmatpush1.bf16.msra.mxu0 %v1143
    %5826 = vmatprep.subr.bf16.mxu0 %v1152
    %5827 = vmatpush1.bf16.msra.mxu0 %v1151
    %5828 = vmatprep.subr.bf16.mxu0 %v1160
    %5829 = vmatpush1.bf16.msra.mxu0 %v1159
    %5830 = vmatprep.subr.bf16.mxu0 %v1168
    %5831 = vmatpush1.bf16.msra.mxu0 %v1167
    %5832 = vmatprep.subr.bf16.mxu0 %v1176
    %5833 = vmatpush1.bf16.msra.mxu0 %v1175
    %5834 = vmatprep.subr.bf16.mxu0 %v1184
    %5835 = vmatpush1.bf16.msra.mxu0 %v1183
    %5836 = vmatprep.subr.bf16.mxu0 %v1192
    %5837 = vmatpush1.bf16.msra.mxu0 %v1191
    %5838 = vmatprep.subr.bf16.mxu0 %v1200
    %5839 = vmatpush1.bf16.msra.mxu0 %v1199
    %5840 = vmatprep.subr.bf16.mxu0 %v1208
    %5841 = vmatpush1.bf16.msra.mxu0 %v1207
    %5842 = vmatprep.mubr.bf16.mxu0 %v5726
    %5843 = vmatmul.mubr.bf16.gmra.mrb[0].mxu0 %v5725
    %v5844 = vpop.f32.mrb[0].mxu0
    %v5845 = vadd.f32 %v272, %v5844
    %v5846 = vpop.f32.mrb[0].mxu0
    %v5847 = vadd.f32 %v276, %v5846
    %v5848 = vpop.f32.mrb[0].mxu0
    %v5849 = vpop.f32.mrb[0].mxu0
    %5850 = vdwg.mxu0
    %5851 = vmatprep.subr.bf16.mxu0 %v1216
    %5852 = vmatpush1.bf16.msra.mxu0 %v1215
    %5853 = vmatprep.subr.bf16.mxu0 %v1224
    %5854 = vmatpush1.bf16.msra.mxu0 %v1223
    %5855 = vmatprep.subr.bf16.mxu0 %v1232
    %5856 = vmatpush1.bf16.msra.mxu0 %v1231
    %5857 = vmatprep.subr.bf16.mxu0 %v1240
    %5858 = vmatpush1.bf16.msra.mxu0 %v1239
    %5859 = vmatprep.subr.bf16.mxu0 %v1248
    %5860 = vmatpush1.bf16.msra.mxu0 %v1247
    %5861 = vmatprep.subr.bf16.mxu0 %v1256
    %5862 = vmatpush1.bf16.msra.mxu0 %v1255
    %5863 = vmatprep.subr.bf16.mxu0 %v1264
    %5864 = vmatpush1.bf16.msra.mxu0 %v1263
    %5865 = vmatprep.subr.bf16.mxu0 %v1272
    %5866 = vmatpush1.bf16.msra.mxu0 %v1271
    %5867 = vmatprep.subr.bf16.mxu0 0
    %5868 = vmatpush1.bf16.msra.mxu0 0
    %5869 = vmatprep.subr.bf16.mxu0 0
    %5870 = vmatpush1.bf16.msra.mxu0 0
    %5871 = vmatprep.subr.bf16.mxu0 0
    %5872 = vmatpush1.bf16.msra.mxu0 0
    %5873 = vmatprep.subr.bf16.mxu0 0
    %5874 = vmatpush1.bf16.msra.mxu0 0
    %5875 = vmatprep.subr.bf16.mxu0 0
    %5876 = vmatpush1.bf16.msra.mxu0 0
    %5877 = vmatprep.subr.bf16.mxu0 0
    %5878 = vmatpush1.bf16.msra.mxu0 0
    %5879 = vmatprep.subr.bf16.mxu0 0
    %5880 = vmatpush1.bf16.msra.mxu0 0
    %5881 = vmatprep.subr.bf16.mxu0 0
    %5882 = vmatpush1.bf16.msra.mxu0 0
    %5883 = vmatprep.mubr.bf16.mxu0 0
    %5884 = vmatmul.mubr.bf16.gmra.mrb[0].mxu0 %v5727
    %v5885 = vpop.f32.mrb[0].mxu0
    %v5886 = vadd.f32 %v5845, %v5885
    %v5887 = vpop.f32.mrb[0].mxu0
    %v5888 = vadd.f32 %v5847, %v5887
    %v5889 = vpop.f32.mrb[0].mxu0
    %v5890 = vpop.f32.mrb[0].mxu0
    %5891 = vdwg.mxu0
    %5892 = vmatprep.subr.bf16.mxu0 %v1090
    %5893 = vmatpush1.bf16.msra.mxu0 %v1089
    %5894 = vmatprep.subr.bf16.mxu0 %v1098
    %5895 = vmatpush1.bf16.msra.mxu0 %v1097
    %5896 = vmatprep.subr.bf16.mxu0 %v1106
    %5897 = vmatpush1.bf16.msra.mxu0 %v1105
    %5898 = vmatprep.subr.bf16.mxu0 %v1114
    %5899 = vmatpush1.bf16.msra.mxu0 %v1113
    %5900 = vmatprep.subr.bf16.mxu0 %v1122
    %5901 = vmatpush1.bf16.msra.mxu0 %v1121
    %5902 = vmatprep.subr.bf16.mxu0 %v1130
    %5903 = vmatpush1.bf16.msra.mxu0 %v1129
    %5904 = vmatprep.subr.bf16.mxu0 %v1138
    %5905 = vmatpush1.bf16.msra.mxu0 %v1137
    %5906 = vmatprep.subr.bf16.mxu0 %v1146
    %5907 = vmatpush1.bf16.msra.mxu0 %v1145
    %5908 = vmatprep.subr.bf16.mxu0 %v1154
    %5909 = vmatpush1.bf16.msra.mxu0 %v1153
    %5910 = vmatprep.subr.bf16.mxu0 %v1162
    %5911 = vmatpush1.bf16.msra.mxu0 %v1161
    %5912 = vmatprep.subr.bf16.mxu0 %v1170
    %5913 = vmatpush1.bf16.msra.mxu0 %v1169
    %5914 = vmatprep.subr.bf16.mxu0 %v1178
    %5915 = vmatpush1.bf16.msra.mxu0 %v1177
    %5916 = vmatprep.subr.bf16.mxu0 %v1186
    %5917 = vmatpush1.bf16.msra.mxu0 %v1185
    %5918 = vmatprep.subr.bf16.mxu0 %v1194
    %5919 = vmatpush1.bf16.msra.mxu0 %v1193
    %5920 = vmatprep.subr.bf16.mxu0 %v1202
    %5921 = vmatpush1.bf16.msra.mxu0 %v1201
    %5922 = vmatprep.subr.bf16.mxu0 %v1210
    %5923 = vmatpush1.bf16.msra.mxu0 %v1209
    %5924 = vmatprep.mubr.bf16.mxu0 %v5726
    %5925 = vmatmul.mubr.bf16.gmra.mrb[0].mxu0 %v5725
    %v5926 = vpop.f32.mrb[0].mxu0
    %v5927 = vadd.f32 %v280, %v5926
    %v5928 = vpop.f32.mrb[0].mxu0
    %v5929 = vadd.f32 %v284, %v5928
    %v5930 = vpop.f32.mrb[0].mxu0
    %v5931 = vpop.f32.mrb[0].mxu0
    %5932 = vdwg.mxu0
    %5933 = vmatprep.subr.bf16.mxu0 %v1218
    %5934 = vmatpush1.bf16.msra.mxu0 %v1217
    %5935 = vmatprep.subr.bf16.mxu0 %v1226
    %5936 = vmatpush1.bf16.msra.mxu0 %v1225
    %5937 = vmatprep.subr.bf16.mxu0 %v1234
    %5938 = vmatpush1.bf16.msra.mxu0 %v1233
    %5939 = vmatprep.subr.bf16.mxu0 %v1242
    %5940 = vmatpush1.bf16.msra.mxu0 %v1241
    %5941 = vmatprep.subr.bf16.mxu0 %v1250
    %5942 = vmatpush1.bf16.msra.mxu0 %v1249
    %5943 = vmatprep.subr.bf16.mxu0 %v1258
    %5944 = vmatpush1.bf16.msra.mxu0 %v1257
    %5945 = vmatprep.subr.bf16.mxu0 %v1266
    %5946 = vmatpush1.bf16.msra.mxu0 %v1265
    %5947 = vmatprep.subr.bf16.mxu0 %v1274
    %5948 = vmatpush1.bf16.msra.mxu0 %v1273
    %5949 = vmatprep.subr.bf16.mxu0 0
    %5950 = vmatpush1.bf16.msra.mxu0 0
    %5951 = vmatprep.subr.bf16.mxu0 0
    %5952 = vmatpush1.bf16.msra.mxu0 0
    %5953 = vmatprep.subr.bf16.mxu0 0
    %5954 = vmatpush1.bf16.msra.mxu0 0
    %5955 = vmatprep.subr.bf16.mxu0 0
    %5956 = vmatpush1.bf16.msra.mxu0 0
    %5957 = vmatprep.subr.bf16.mxu0 0
    %5958 = vmatpush1.bf16.msra.mxu0 0
    %5959 = vmatprep.subr.bf16.mxu0 0
    %5960 = vmatpush1.bf16.msra.mxu0 0
    %5961 = vmatprep.subr.bf16.mxu0 0
    %5962 = vmatpush1.bf16.msra.mxu0 0
    %5963 = vmatprep.subr.bf16.mxu0 0
    %5964 = vmatpush1.bf16.msra.mxu0 0
    %5965 = vmatprep.mubr.bf16.mxu0 0
    %5966 = vmatmul.mubr.bf16.gmra.mrb[0].mxu0 %v5727
    %v5967 = vpop.f32.mrb[0].mxu0
    %v5968 = vadd.f32 %v5927, %v5967
    %v5969 = vpop.f32.mrb[0].mxu0
    %v5970 = vadd.f32 %v5929, %v5969
    %v5971 = vpop.f32.mrb[0].mxu0
    %v5972 = vpop.f32.mrb[0].mxu0
    %5973 = vdwg.mxu0
    %5974 = vmatprep.subr.bf16.mxu0 %v1092
    %5975 = vmatpush1.bf16.msra.mxu0 %v1091
    %5976 = vmatprep.subr.bf16.mxu0 %v1100
    %5977 = vmatpush1.bf16.msra.mxu0 %v1099
    %5978 = vmatprep.subr.bf16.mxu0 %v1108
    %5979 = vmatpush1.bf16.msra.mxu0 %v1107
    %5980 = vmatprep.subr.bf16.mxu0 %v1116
    %5981 = vmatpush1.bf16.msra.mxu0 %v1115
    %5982 = vmatprep.subr.bf16.mxu0 %v1124
    %5983 = vmatpush1.bf16.msra.mxu0 %v1123
    %5984 = vmatprep.subr.bf16.mxu0 %v1132
    %5985 = vmatpush1.bf16.msra.mxu0 %v1131
    %5986 = vmatprep.subr.bf16.mxu0 %v1140
    %5987 = vmatpush1.bf16.msra.mxu0 %v1139
    %5988 = vmatprep.subr.bf16.mxu0 %v1148
    %5989 = vmatpush1.bf16.msra.mxu0 %v1147
    %5990 = vmatprep.subr.bf16.mxu0 %v1156
    %5991 = vmatpush1.bf16.msra.mxu0 %v1155
    %5992 = vmatprep.subr.bf16.mxu0 %v1164
    %5993 = vmatpush1.bf16.msra.mxu0 %v1163
    %5994 = vmatprep.subr.bf16.mxu0 %v1172
    %5995 = vmatpush1.bf16.msra.mxu0 %v1171
    %5996 = vmatprep.subr.bf16.mxu0 %v1180
    %5997 = vmatpush1.bf16.msra.mxu0 %v1179
    %5998 = vmatprep.subr.bf16.mxu0 %v1188
    %5999 = vmatpush1.bf16.msra.mxu0 %v1187
    %6000 = vmatprep.subr.bf16.mxu0 %v1196
    %6001 = vmatpush1.bf16.msra.mxu0 %v1195
    %6002 = vmatprep.subr.bf16.mxu0 %v1204
    %6003 = vmatpush1.bf16.msra.mxu0 %v1203
    %6004 = vmatprep.subr.bf16.mxu0 %v1212
    %6005 = vmatpush1.bf16.msra.mxu0 %v1211
    %6006 = vmatprep.mubr.bf16.mxu0 %v5726
    %6007 = vmatmul.mubr.bf16.gmra.mrb[0].mxu0 %v5725
    %v6008 = vpop.f32.mrb[0].mxu0
    %v6009 = vadd.f32 %v288, %v6008
    %v6010 = vpop.f32.mrb[0].mxu0
    %v6011 = vadd.f32 %v292, %v6010
    %v6012 = vpop.f32.mrb[0].mxu0
    %v6013 = vpop.f32.mrb[0].mxu0
    %6014 = vdwg.mxu0
    %6015 = vmatprep.subr.bf16.mxu0 %v1220
    %6016 = vmatpush1.bf16.msra.mxu0 %v1219
    %6017 = vmatprep.subr.bf16.mxu0 %v1228
    %6018 = vmatpush1.bf16.msra.mxu0 %v1227
    %6019 = vmatprep.subr.bf16.mxu0 %v1236
    %6020 = vmatpush1.bf16.msra.mxu0 %v1235
    %6021 = vmatprep.subr.bf16.mxu0 %v1244
    %6022 = vmatpush1.bf16.msra.mxu0 %v1243
    %6023 = vmatprep.subr.bf16.mxu0 %v1252
    %6024 = vmatpush1.bf16.msra.mxu0 %v1251
    %6025 = vmatprep.subr.bf16.mxu0 %v1260
    %6026 = vmatpush1.bf16.msra.mxu0 %v1259
    %6027 = vmatprep.subr.bf16.mxu0 %v1268
    %6028 = vmatpush1.bf16.msra.mxu0 %v1267
    %6029 = vmatprep.subr.bf16.mxu0 %v1276
    %6030 = vmatpush1.bf16.msra.mxu0 %v1275
    %6031 = vmatprep.subr.bf16.mxu0 0
    %6032 = vmatpush1.bf16.msra.mxu0 0
    %6033 = vmatprep.subr.bf16.mxu0 0
    %6034 = vmatpush1.bf16.msra.mxu0 0
    %6035 = vmatprep.subr.bf16.mxu0 0
    %6036 = vmatpush1.bf16.msra.mxu0 0
    %6037 = vmatprep.subr.bf16.mxu0 0
    %6038 = vmatpush1.bf16.msra.mxu0 0
    %6039 = vmatprep.subr.bf16.mxu0 0
    %6040 = vmatpush1.bf16.msra.mxu0 0
    %6041 = vmatprep.subr.bf16.mxu0 0
    %6042 = vmatpush1.bf16.msra.mxu0 0
    %6043 = vmatprep.subr.bf16.mxu0 0
    %6044 = vmatpush1.bf16.msra.mxu0 0
    %6045 = vmatprep.subr.bf16.mxu0 0
    %6046 = vmatpush1.bf16.msra.mxu0 0
    %6047 = vmatprep.mubr.bf16.mxu0 0
    %6048 = vmatmul.mubr.bf16.gmra.mrb[0].mxu0 %v5727
    %v6049 = vpop.f32.mrb[0].mxu0
    %v6050 = vadd.f32 %v6009, %v6049
    %v6051 = vpop.f32.mrb[0].mxu0
    %v6052 = vadd.f32 %v6011, %v6051
    %v6053 = vpop.f32.mrb[0].mxu0
    %v6054 = vpop.f32.mrb[0].mxu0
    %6055 = vdwg.mxu0
    %v6056 = vxor.u32 %v5804, 2147483648
    %v6057 = vmul.f32 %v6056, 1.442695
    %v6058 = vpow.pop %v6057
    %v6059 = vadd.f32 %v6058, 1.0
    %v6060 = vrcp.pop %v6059
    %v6061 = vmul.f32 1.0, %v6060
    %v6062 = vxor.u32 %v5806, 2147483648
    %v6063 = vmul.f32 %v6062, 1.442695
    %v6064 = vpow.pop %v6063
    %v6065 = vadd.f32 %v6064, 1.0
    %v6066 = vrcp.pop %v6065
    %v6067 = vmul.f32 1.0, %v6066
    %v6068 = vtanh.pop %v5886
    %v6069 = vxor.u32 %v5888, 2147483648
    %v6070 = vmul.f32 %v6069, 1.442695
    %v6071 = vpow.pop %v6070
    %v6072 = vadd.f32 %v6071, 1.0
    %v6073 = vrcp.pop %v6072
    %v6074 = vmul.f32 1.0, %v6073
    %v6075 = vmul.f32 %v6067, %v5225
    %v6076 = vmul.f32 %v6061, %v6068
    %v6077 = vadd.f32 %v6075, %v6076
    %v6078 = vtanh.pop %v6077
    %v6079 = vmul.f32 %v6074, %v6078
    %v6080 = vxor.u32 %v5968, 2147483648
    %v6081 = vmul.f32 %v6080, 1.442695
    %v6082 = vpow.pop %v6081
    %v6083 = vadd.f32 %v6082, 1.0
    %v6084 = vrcp.pop %v6083
    %v6085 = vmul.f32 1.0, %v6084
    %v6086 = vxor.u32 %v5970, 2147483648
    %v6087 = vmul.f32 %v6086, 1.442695
    %v6088 = vpow.pop %v6087
    %v6089 = vadd.f32 %v6088, 1.0
    %v6090 = vrcp.pop %v6089
    %v6091 = vmul.f32 1.0, %v6090
    %v6092 = vtanh.pop %v6050
    %v6093 = vxor.u32 %v6052, 2147483648
    %v6094 = vmul.f32 %v6093, 1.442695
    %v6095 = vpow.pop %v6094
    %v6096 = vadd.f32 %v6095, 1.0
    %v6097 = vrcp.pop %v6096
    %v6098 = vmul.f32 1.0, %v6097
    %v6099 = vmul.f32 %v6091, %v5724
    %v6100 = vmul.f32 %v6085, %v6092
    %v6101 = vadd.f32 %v6099, %v6100
    %v6102 = vtanh.pop %v6101
    %v6103 = vmul.f32 %v6098, %v6102
    %vm6104 = vcmp.gt.f32.partialorder %v5502, 0.0
    %vm6105 = vcmp.gt.f32.partialorder %v5510, 0.0
    %vm6106 = vcmp.gt.f32.partialorder %v5518, 0.0
    %vm6107 = vcmp.gt.f32.partialorder %v5526, 0.0
    %vm6108 = vcmp.gt.f32.partialorder %v5534, 0.0
    %vm6109 = vcmp.gt.f32.partialorder %v5542, 0.0
    %vm6110 = vcmp.gt.f32.partialorder %v5550, 0.0
    %vm6111 = vcmp.gt.f32.partialorder %v5558, 0.0
    %v6113 = vcombine.high %v6103, %v6103
    %v6115 = vunpack.c.l.s4 1966171168
    %v6116 = vunpack.c.0.s8 %v6115
    %v6117 = vlaneseq
    %v6118 = vshrl.u32 %v6117, 7
    %v6119 = vsub.s32 %v6116, %v6118
    %v6120 = vrot.slane %v6103, %v6119
    %v6122 = vunpack.c.l.s4 1966171168
    %v6123 = vunpack.c.0.s8 %v6122
    %v6124 = vlaneseq
    %v6125 = vshrl.u32 %v6124, 7
    %v6126 = vsub.s32 %v6123, %v6125
    %v6127 = vrot.slane %v6113, %v6126
    %v6128 = vcombine.high %v6120, %v6120
    %v6129 = vcombine.high %v6127, %v6127
    %v6131 = vunpack.c.l.s4 1966171168
    %v6132 = vunpack.c.0.s8 %v6131
    %v6133 = vlaneseq
    %v6134 = vshrl.u32 %v6133, 7
    %v6135 = vsub.s32 %v6132, %v6134
    %v6136 = vrot.slane %v6120, %v6135
    %v6138 = vunpack.c.l.s4 1966171168
    %v6139 = vunpack.c.0.s8 %v6138
    %v6140 = vlaneseq
    %v6141 = vshrl.u32 %v6140, 7
    %v6142 = vsub.s32 %v6139, %v6141
    %v6143 = vrot.slane %v6127, %v6142
    %v6145 = vunpack.c.l.s4 1966171168
    %v6146 = vunpack.c.0.s8 %v6145
    %v6147 = vlaneseq
    %v6148 = vshrl.u32 %v6147, 7
    %v6149 = vsub.s32 %v6146, %v6148
    %v6150 = vrot.slane %v6128, %v6149
    %v6152 = vunpack.c.l.s4 1966171168
    %v6153 = vunpack.c.0.s8 %v6152
    %v6154 = vlaneseq
    %v6155 = vshrl.u32 %v6154, 7
    %v6156 = vsub.s32 %v6153, %v6155
    %v6157 = vrot.slane %v6129, %v6156
    %v6158 = vcombine.high %v6136, %v6136
    %v6159 = vcombine.high %v6143, %v6143
    %v6160 = vcombine.high %v6150, %v6150
    %v6161 = vcombine.high %v6157, %v6157
    %v6162 = vsel %vm6104, 1, 0
    %v6163 = vsel %vm6105, 1, 0
    %v6164 = vsel %vm6106, 1, 0
    %v6165 = vsel %vm6107, 1, 0
    %v6166 = vsel %vm6108, 1, 0
    %v6167 = vsel %vm6109, 1, 0
    %v6168 = vsel %vm6110, 1, 0
    %v6169 = vsel %vm6111, 1, 0
    %vm6170 = vcmp.eq.s32.totalorder %v6162, 1
    %vm6171 = vcmp.eq.s32.totalorder %v6163, 1
    %vm6172 = vcmp.eq.s32.totalorder %v6164, 1
    %vm6173 = vcmp.eq.s32.totalorder %v6165, 1
    %vm6174 = vcmp.eq.s32.totalorder %v6166, 1
    %vm6175 = vcmp.eq.s32.totalorder %v6167, 1
    %vm6176 = vcmp.eq.s32.totalorder %v6168, 1
    %vm6177 = vcmp.eq.s32.totalorder %v6169, 1
    %v6178 = vlaneseq
    %v6179 = vshrl.u32 %v6178, 7
    %v6180 = vsub.s32 0, %v6179
    %v6181 = vrot.slane %v6136, %v6180
    %v6182 = vlaneseq
    %v6183 = vshrl.u32 %v6182, 7
    %v6184 = vsub.s32 0, %v6183
    %v6185 = vrot.slane %v6150, %v6184
    %v6186 = vlaneseq
    %v6187 = vshrl.u32 %v6186, 7
    %v6188 = vsub.s32 0, %v6187
    %v6189 = vrot.slane %v6158, %v6188
    %v6190 = vlaneseq
    %v6191 = vshrl.u32 %v6190, 7
    %v6192 = vsub.s32 0, %v6191
    %v6193 = vrot.slane %v6160, %v6192
    %v6194 = vlaneseq
    %v6195 = vshrl.u32 %v6194, 7
    %v6196 = vsub.s32 0, %v6195
    %v6197 = vrot.slane %v6143, %v6196
    %v6198 = vlaneseq
    %v6199 = vshrl.u32 %v6198, 7
    %v6200 = vsub.s32 0, %v6199
    %v6201 = vrot.slane %v6157, %v6200
    %v6202 = vlaneseq
    %v6203 = vshrl.u32 %v6202, 7
    %v6204 = vsub.s32 0, %v6203
    %v6205 = vrot.slane %v6159, %v6204
    %v6206 = vlaneseq
    %v6207 = vshrl.u32 %v6206, 7
    %v6208 = vsub.s32 0, %v6207
    %v6209 = vrot.slane %v6161, %v6208
    %v6218 = vsel %vm6170, %v6181, %v5366
    %v6219 = vsel %vm6171, %v6185, %v5367
    %v6220 = vsel %vm6172, %v6189, %v5368
    %v6221 = vsel %vm6173, %v6193, %v5369
    %v6222 = vsel %vm6174, %v6197, %v5370
    %v6223 = vsel %vm6175, %v6201, %v5371
    %v6224 = vsel %vm6176, %v6205, %v5372
    %v6225 = vsel %vm6177, %v6209, %v5373
    %v6227 = vcombine.high %v6101, %v6101
    %v6229 = vunpack.c.l.s4 1966171168
    %v6230 = vunpack.c.0.s8 %v6229
    %v6231 = vlaneseq
    %v6232 = vshrl.u32 %v6231, 7
    %v6233 = vsub.s32 %v6230, %v6232
    %v6234 = vrot.slane %v6101, %v6233
    %v6236 = vunpack.c.l.s4 1966171168
    %v6237 = vunpack.c.0.s8 %v6236
    %v6238 = vlaneseq
    %v6239 = vshrl.u32 %v6238, 7
    %v6240 = vsub.s32 %v6237, %v6239
    %v6241 = vrot.slane %v6227, %v6240
    %v6242 = vcombine.high %v6234, %v6234
    %v6243 = vcombine.high %v6241, %v6241
    %v6245 = vunpack.c.l.s4 1966171168
    %v6246 = vunpack.c.0.s8 %v6245
    %v6247 = vlaneseq
    %v6248 = vshrl.u32 %v6247, 7
    %v6249 = vsub.s32 %v6246, %v6248
    %v6250 = vrot.slane %v6234, %v6249
    %v6252 = vunpack.c.l.s4 1966171168
    %v6253 = vunpack.c.0.s8 %v6252
    %v6254 = vlaneseq
    %v6255 = vshrl.u32 %v6254, 7
    %v6256 = vsub.s32 %v6253, %v6255
    %v6257 = vrot.slane %v6241, %v6256
    %v6259 = vunpack.c.l.s4 1966171168
    %v6260 = vunpack.c.0.s8 %v6259
    %v6261 = vlaneseq
    %v6262 = vshrl.u32 %v6261, 7
    %v6263 = vsub.s32 %v6260, %v6262
    %v6264 = vrot.slane %v6242, %v6263
    %v6266 = vunpack.c.l.s4 1966171168
    %v6267 = vunpack.c.0.s8 %v6266
    %v6268 = vlaneseq
    %v6269 = vshrl.u32 %v6268, 7
    %v6270 = vsub.s32 %v6267, %v6269
    %v6271 = vrot.slane %v6243, %v6270
    %v6272 = vcombine.high %v6250, %v6250
    %v6273 = vcombine.high %v6257, %v6257
    %v6274 = vcombine.high %v6264, %v6264
    %v6275 = vcombine.high %v6271, %v6271
    %v6276 = vlaneseq
    %v6277 = vshrl.u32 %v6276, 7
    %v6278 = vsub.s32 0, %v6277
    %v6279 = vrot.slane %v6250, %v6278
    %v6280 = vlaneseq
    %v6281 = vshrl.u32 %v6280, 7
    %v6282 = vsub.s32 0, %v6281
    %v6283 = vrot.slane %v6264, %v6282
    %v6284 = vlaneseq
    %v6285 = vshrl.u32 %v6284, 7
    %v6286 = vsub.s32 0, %v6285
    %v6287 = vrot.slane %v6272, %v6286
    %v6288 = vlaneseq
    %v6289 = vshrl.u32 %v6288, 7
    %v6290 = vsub.s32 0, %v6289
    %v6291 = vrot.slane %v6274, %v6290
    %v6292 = vlaneseq
    %v6293 = vshrl.u32 %v6292, 7
    %v6294 = vsub.s32 0, %v6293
    %v6295 = vrot.slane %v6257, %v6294
    %v6296 = vlaneseq
    %v6297 = vshrl.u32 %v6296, 7
    %v6298 = vsub.s32 0, %v6297
    %v6299 = vrot.slane %v6271, %v6298
    %v6300 = vlaneseq
    %v6301 = vshrl.u32 %v6300, 7
    %v6302 = vsub.s32 0, %v6301
    %v6303 = vrot.slane %v6273, %v6302
    %v6304 = vlaneseq
    %v6305 = vshrl.u32 %v6304, 7
    %v6306 = vsub.s32 0, %v6305
    %v6307 = vrot.slane %v6275, %v6306
    %v6316 = vsel %vm6170, %v6279, %v5464
    %v6317 = vsel %vm6171, %v6283, %v5465
    %v6318 = vsel %vm6172, %v6287, %v5466
    %v6319 = vsel %vm6173, %v6291, %v5467
    %v6320 = vsel %vm6174, %v6295, %v5468
    %v6321 = vsel %vm6175, %v6299, %v5469
    %v6322 = vsel %vm6176, %v6303, %v5470
    %v6323 = vsel %vm6177, %v6307, %v5471
    %v6324 = vmax.f32 %v5472, %v5476
    %s6325 = scalar_lea.vmem [#allocation8], 40
    %6326 = vst [vmem:[%s6325] sm:$0xff] %v6079
    %s6327 = scalar_lea.vmem [#allocation2], 48
    %v6328 = vld [vmem:[%s6327] sm:$0xff]
    %6330 = vrot.lane.b32.xlu0 %v6328, 32
    %v6331 = vpop.permute.xlu0 %6330
    %v6333 = vsel %vm334, %v6331, 0.0
    %6334 = vadd.xlane.f32.xlu0 %v6333
    %v6335 = vpop.xlane.xlu0 %6334
    %v6336 = vmul.f32 %v6328, %v6324
    %6338 = vrot.lane.b32.xlu0 %v6336, 32
    %v6339 = vpop.permute.xlu0 %6338
    %v6341 = vsel %vm334, %v6339, 0.0
    %6342 = vadd.xlane.f32.xlu0 %v6341
    %v6343 = vpop.xlane.xlu0 %6342
    %v6344 = vmul.f32 %v6335, %v6343
    %v6345 = vsub.f32 1.0, %v6343
    %v6346 = vmul.f32 %v6335, %v6345
    %v6347 = vlaneseq
    %v6348 = vshrl.u32 %v6347, 7
    %v6349 = vsub.s32 0, %v6348
    %v6350 = vrot.slane %v6328, %v6349
    %s6352 = sor.u32 256, 96
    %6353 = vbcast.lane.b32.xlu0 %v6350, %s6352
    %v6354 = vpop.permute.xlu0 %6353
    %v6355 = vlaneseq
    %v6356 = vshrl.u32 %v6355, 7
    %v6357 = vsub.s32 1, %v6356
    %v6358 = vrot.slane %v6328, %v6357
    %s6360 = sor.u32 256, 96
    %6361 = vbcast.lane.b32.xlu0 %v6358, %s6360
    %v6362 = vpop.permute.xlu0 %6361
    %v6363 = vlaneseq
    %v6364 = vshrl.u32 %v6363, 7
    %v6365 = vsub.s32 2, %v6364
    %v6366 = vrot.slane %v6328, %v6365
    %s6368 = sor.u32 256, 96
    %6369 = vbcast.lane.b32.xlu0 %v6366, %s6368
    %v6370 = vpop.permute.xlu0 %6369
    %v6371 = vlaneseq
    %v6372 = vshrl.u32 %v6371, 7
    %v6373 = vsub.s32 3, %v6372
    %v6374 = vrot.slane %v6328, %v6373
    %s6376 = sor.u32 256, 96
    %6377 = vbcast.lane.b32.xlu0 %v6374, %s6376
    %v6378 = vpop.permute.xlu0 %6377
    %v6379 = vlaneseq
    %v6380 = vshrl.u32 %v6379, 7
    %v6381 = vsub.s32 4, %v6380
    %v6382 = vrot.slane %v6328, %v6381
    %s6384 = sor.u32 256, 96
    %6385 = vbcast.lane.b32.xlu0 %v6382, %s6384
    %v6386 = vpop.permute.xlu0 %6385
    %v6387 = vlaneseq
    %v6388 = vshrl.u32 %v6387, 7
    %v6389 = vsub.s32 5, %v6388
    %v6390 = vrot.slane %v6328, %v6389
    %s6392 = sor.u32 256, 96
    %6393 = vbcast.lane.b32.xlu0 %v6390, %s6392
    %v6394 = vpop.permute.xlu0 %6393
    %v6395 = vlaneseq
    %v6396 = vshrl.u32 %v6395, 7
    %v6397 = vsub.s32 6, %v6396
    %v6398 = vrot.slane %v6328, %v6397
    %s6400 = sor.u32 256, 96
    %6401 = vbcast.lane.b32.xlu0 %v6398, %s6400
    %v6402 = vpop.permute.xlu0 %6401
    %v6403 = vlaneseq
    %v6404 = vshrl.u32 %v6403, 7
    %v6405 = vsub.s32 7, %v6404
    %v6406 = vrot.slane %v6328, %v6405
    %s6408 = sor.u32 256, 96
    %6409 = vbcast.lane.b32.xlu0 %v6406, %s6408
    %v6410 = vpop.permute.xlu0 %6409
    %v6411 = vmul.f32 %v6354, %v6218
    %v6412 = vmul.f32 %v6362, %v6219
    %v6413 = vmul.f32 %v6370, %v6220
    %v6414 = vmul.f32 %v6378, %v6221
    %v6415 = vmul.f32 %v6386, %v6222
    %v6416 = vmul.f32 %v6394, %v6223
    %v6417 = vmul.f32 %v6402, %v6224
    %v6418 = vmul.f32 %v6410, %v6225
    %v6419 = vsel %vm421, %v6411, 0.0
    %v6420 = vrot.slane %v6419, 4
    %v6421 = vadd.f32 %v6419, %v6420
    %v6422 = vrot.slane %v6421, 2
    %v6423 = vadd.f32 %v6421, %v6422
    %v6424 = vrot.slane %v6423, 1
    %v6425 = vadd.f32 %v6423, %v6424
    %v6426 = vsel %vm421, %v6412, 0.0
    %v6427 = vrot.slane %v6426, 4
    %v6428 = vadd.f32 %v6426, %v6427
    %v6429 = vrot.slane %v6428, 2
    %v6430 = vadd.f32 %v6428, %v6429
    %v6431 = vrot.slane %v6430, 1
    %v6432 = vadd.f32 %v6430, %v6431
    %v6433 = vsel %vm421, %v6413, 0.0
    %v6434 = vrot.slane %v6433, 4
    %v6435 = vadd.f32 %v6433, %v6434
    %v6436 = vrot.slane %v6435, 2
    %v6437 = vadd.f32 %v6435, %v6436
    %v6438 = vrot.slane %v6437, 1
    %v6439 = vadd.f32 %v6437, %v6438
    %v6440 = vsel %vm421, %v6414, 0.0
    %v6441 = vrot.slane %v6440, 4
    %v6442 = vadd.f32 %v6440, %v6441
    %v6443 = vrot.slane %v6442, 2
    %v6444 = vadd.f32 %v6442, %v6443
    %v6445 = vrot.slane %v6444, 1
    %v6446 = vadd.f32 %v6444, %v6445
    %v6447 = vsel %vm421, %v6415, 0.0
    %v6448 = vrot.slane %v6447, 4
    %v6449 = vadd.f32 %v6447, %v6448
    %v6450 = vrot.slane %v6449, 2
    %v6451 = vadd.f32 %v6449, %v6450
    %v6452 = vrot.slane %v6451, 1
    %v6453 = vadd.f32 %v6451, %v6452
    %v6454 = vsel %vm421, %v6416, 0.0
    %v6455 = vrot.slane %v6454, 4
    %v6456 = vadd.f32 %v6454, %v6455
    %v6457 = vrot.slane %v6456, 2
    %v6458 = vadd.f32 %v6456, %v6457
    %v6459 = vrot.slane %v6458, 1
    %v6460 = vadd.f32 %v6458, %v6459
    %v6461 = vsel %vm421, %v6417, 0.0
    %v6462 = vrot.slane %v6461, 4
    %v6463 = vadd.f32 %v6461, %v6462
    %v6464 = vrot.slane %v6463, 2
    %v6465 = vadd.f32 %v6463, %v6464
    %v6466 = vrot.slane %v6465, 1
    %v6467 = vadd.f32 %v6465, %v6466
    %v6468 = vsel %vm421, %v6418, 0.0
    %v6469 = vrot.slane %v6468, 4
    %v6470 = vadd.f32 %v6468, %v6469
    %v6471 = vrot.slane %v6470, 2
    %v6472 = vadd.f32 %v6470, %v6471
    %v6473 = vrot.slane %v6472, 1
    %v6474 = vadd.f32 %v6472, %v6473
    %v6475 = vmul.f32 %v6354, %v6316
    %v6476 = vmul.f32 %v6362, %v6317
    %v6477 = vmul.f32 %v6370, %v6318
    %v6478 = vmul.f32 %v6378, %v6319
    %v6479 = vmul.f32 %v6386, %v6320
    %v6480 = vmul.f32 %v6394, %v6321
    %v6481 = vmul.f32 %v6402, %v6322
    %v6482 = vmul.f32 %v6410, %v6323
    %v6483 = vsel %vm421, %v6475, 0.0
    %v6484 = vrot.slane %v6483, 4
    %v6485 = vadd.f32 %v6483, %v6484
    %v6486 = vrot.slane %v6485, 2
    %v6487 = vadd.f32 %v6485, %v6486
    %v6488 = vrot.slane %v6487, 1
    %v6489 = vadd.f32 %v6487, %v6488
    %v6490 = vsel %vm421, %v6476, 0.0
    %v6491 = vrot.slane %v6490, 4
    %v6492 = vadd.f32 %v6490, %v6491
    %v6493 = vrot.slane %v6492, 2
    %v6494 = vadd.f32 %v6492, %v6493
    %v6495 = vrot.slane %v6494, 1
    %v6496 = vadd.f32 %v6494, %v6495
    %v6497 = vsel %vm421, %v6477, 0.0
    %v6498 = vrot.slane %v6497, 4
    %v6499 = vadd.f32 %v6497, %v6498
    %v6500 = vrot.slane %v6499, 2
    %v6501 = vadd.f32 %v6499, %v6500
    %v6502 = vrot.slane %v6501, 1
    %v6503 = vadd.f32 %v6501, %v6502
    %v6504 = vsel %vm421, %v6478, 0.0
    %v6505 = vrot.slane %v6504, 4
    %v6506 = vadd.f32 %v6504, %v6505
    %v6507 = vrot.slane %v6506, 2
    %v6508 = vadd.f32 %v6506, %v6507
    %v6509 = vrot.slane %v6508, 1
    %v6510 = vadd.f32 %v6508, %v6509
    %v6511 = vsel %vm421, %v6479, 0.0
    %v6512 = vrot.slane %v6511, 4
    %v6513 = vadd.f32 %v6511, %v6512
    %v6514 = vrot.slane %v6513, 2
    %v6515 = vadd.f32 %v6513, %v6514
    %v6516 = vrot.slane %v6515, 1
    %v6517 = vadd.f32 %v6515, %v6516
    %v6518 = vsel %vm421, %v6480, 0.0
    %v6519 = vrot.slane %v6518, 4
    %v6520 = vadd.f32 %v6518, %v6519
    %v6521 = vrot.slane %v6520, 2
    %v6522 = vadd.f32 %v6520, %v6521
    %v6523 = vrot.slane %v6522, 1
    %v6524 = vadd.f32 %v6522, %v6523
    %v6525 = vsel %vm421, %v6481, 0.0
    %v6526 = vrot.slane %v6525, 4
    %v6527 = vadd.f32 %v6525, %v6526
    %v6528 = vrot.slane %v6527, 2
    %v6529 = vadd.f32 %v6527, %v6528
    %v6530 = vrot.slane %v6529, 1
    %v6531 = vadd.f32 %v6529, %v6530
    %v6532 = vsel %vm421, %v6482, 0.0
    %v6533 = vrot.slane %v6532, 4
    %v6534 = vadd.f32 %v6532, %v6533
    %v6535 = vrot.slane %v6534, 2
    %v6536 = vadd.f32 %v6534, %v6535
    %v6537 = vrot.slane %v6536, 1
    %v6538 = vadd.f32 %v6536, %v6537
    %v6547 = vsel %vm486, %v6432, %v6425
    %v6548 = vsel %vm488, %v6439, %v6547
    %v6549 = vsel %vm490, %v6446, %v6548
    %v6550 = vsel %vm492, %v6453, %v6549
    %v6551 = vsel %vm494, %v6460, %v6550
    %v6552 = vsel %vm496, %v6467, %v6551
    %v6553 = vsel %vm498, %v6474, %v6552
    %v6555 = vmul.f32 %v6344, %v6553
    %v6556 = vmul.f32 %v6346, %v306
    %v6557 = vadd.f32 %v6555, %v6556
    %v6566 = vsel %vm486, %v6496, %v6489
    %v6567 = vsel %vm488, %v6503, %v6566
    %v6568 = vsel %vm490, %v6510, %v6567
    %v6569 = vsel %vm492, %v6517, %v6568
    %v6570 = vsel %vm494, %v6524, %v6569
    %v6571 = vsel %vm496, %v6531, %v6570
    %v6572 = vsel %vm498, %v6538, %v6571
    %v6574 = vmul.f32 %v6344, %v6572
    %v6575 = vmul.f32 %v6346, %v313
    %v6576 = vadd.f32 %v6574, %v6575
    %v6577 = vpack.c.bf16 %v6328, %v6328
    %v6578 = vpack.c.bf16 %v6079, %v6079
    %v6579 = vpack.c.bf16 %v6557, %v6557
    %6580 = vmatprep.subr.bf16.mxu0 %v1086
    %6581 = vmatpush1.bf16.msra.mxu0 %v1085
    %6582 = vmatprep.subr.bf16.mxu0 %v1094
    %6583 = vmatpush1.bf16.msra.mxu0 %v1093
    %6584 = vmatprep.subr.bf16.mxu0 %v1102
    %6585 = vmatpush1.bf16.msra.mxu0 %v1101
    %6586 = vmatprep.subr.bf16.mxu0 %v1110
    %6587 = vmatpush1.bf16.msra.mxu0 %v1109
    %6588 = vmatprep.subr.bf16.mxu0 %v1118
    %6589 = vmatpush1.bf16.msra.mxu0 %v1117
    %6590 = vmatprep.subr.bf16.mxu0 %v1126
    %6591 = vmatpush1.bf16.msra.mxu0 %v1125
    %6592 = vmatprep.subr.bf16.mxu0 %v1134
    %6593 = vmatpush1.bf16.msra.mxu0 %v1133
    %6594 = vmatprep.subr.bf16.mxu0 %v1142
    %6595 = vmatpush1.bf16.msra.mxu0 %v1141
    %6596 = vmatprep.subr.bf16.mxu0 %v1150
    %6597 = vmatpush1.bf16.msra.mxu0 %v1149
    %6598 = vmatprep.subr.bf16.mxu0 %v1158
    %6599 = vmatpush1.bf16.msra.mxu0 %v1157
    %6600 = vmatprep.subr.bf16.mxu0 %v1166
    %6601 = vmatpush1.bf16.msra.mxu0 %v1165
    %6602 = vmatprep.subr.bf16.mxu0 %v1174
    %6603 = vmatpush1.bf16.msra.mxu0 %v1173
    %6604 = vmatprep.subr.bf16.mxu0 %v1182
    %6605 = vmatpush1.bf16.msra.mxu0 %v1181
    %6606 = vmatprep.subr.bf16.mxu0 %v1190
    %6607 = vmatpush1.bf16.msra.mxu0 %v1189
    %6608 = vmatprep.subr.bf16.mxu0 %v1198
    %6609 = vmatpush1.bf16.msra.mxu0 %v1197
    %6610 = vmatprep.subr.bf16.mxu0 %v1206
    %6611 = vmatpush1.bf16.msra.mxu0 %v1205
    %6612 = vmatprep.mubr.bf16.mxu0 %v6578
    %6613 = vmatmul.mubr.bf16.gmra.mrb[0].mxu0 %v6577
    %v6614 = vpop.f32.mrb[0].mxu0
    %v6615 = vadd.f32 %v264, %v6614
    %v6616 = vpop.f32.mrb[0].mxu0
    %v6617 = vadd.f32 %v268, %v6616
    %v6618 = vpop.f32.mrb[0].mxu0
    %v6619 = vpop.f32.mrb[0].mxu0
    %6620 = vdwg.mxu0
    %6621 = vmatprep.subr.bf16.mxu0 %v1214
    %6622 = vmatpush1.bf16.msra.mxu0 %v1213
    %6623 = vmatprep.subr.bf16.mxu0 %v1222
    %6624 = vmatpush1.bf16.msra.mxu0 %v1221
    %6625 = vmatprep.subr.bf16.mxu0 %v1230
    %6626 = vmatpush1.bf16.msra.mxu0 %v1229
    %6627 = vmatprep.subr.bf16.mxu0 %v1238
    %6628 = vmatpush1.bf16.msra.mxu0 %v1237
    %6629 = vmatprep.subr.bf16.mxu0 %v1246
    %6630 = vmatpush1.bf16.msra.mxu0 %v1245
    %6631 = vmatprep.subr.bf16.mxu0 %v1254
    %6632 = vmatpush1.bf16.msra.mxu0 %v1253
    %6633 = vmatprep.subr.bf16.mxu0 %v1262
    %6634 = vmatpush1.bf16.msra.mxu0 %v1261
    %6635 = vmatprep.subr.bf16.mxu0 %v1270
    %6636 = vmatpush1.bf16.msra.mxu0 %v1269
    %6637 = vmatprep.subr.bf16.mxu0 0
    %6638 = vmatpush1.bf16.msra.mxu0 0
    %6639 = vmatprep.subr.bf16.mxu0 0
    %6640 = vmatpush1.bf16.msra.mxu0 0
    %6641 = vmatprep.subr.bf16.mxu0 0
    %6642 = vmatpush1.bf16.msra.mxu0 0
    %6643 = vmatprep.subr.bf16.mxu0 0
    %6644 = vmatpush1.bf16.msra.mxu0 0
    %6645 = vmatprep.subr.bf16.mxu0 0
    %6646 = vmatpush1.bf16.msra.mxu0 0
    %6647 = vmatprep.subr.bf16.mxu0 0
    %6648 = vmatpush1.bf16.msra.mxu0 0
    %6649 = vmatprep.subr.bf16.mxu0 0
    %6650 = vmatpush1.bf16.msra.mxu0 0
    %6651 = vmatprep.subr.bf16.mxu0 0
    %6652 = vmatpush1.bf16.msra.mxu0 0
    %6653 = vmatprep.mubr.bf16.mxu0 0
    %6654 = vmatmul.mubr.bf16.gmra.mrb[0].mxu0 %v6579
    %v6655 = vpop.f32.mrb[0].mxu0
    %v6656 = vadd.f32 %v6615, %v6655
    %v6657 = vpop.f32.mrb[0].mxu0
    %v6658 = vadd.f32 %v6617, %v6657
    %v6659 = vpop.f32.mrb[0].mxu0
    %v6660 = vpop.f32.mrb[0].mxu0
    %6661 = vdwg.mxu0
    %6662 = vmatprep.subr.bf16.mxu0 %v1088
    %6663 = vmatpush1.bf16.msra.mxu0 %v1087
    %6664 = vmatprep.subr.bf16.mxu0 %v1096
    %6665 = vmatpush1.bf16.msra.mxu0 %v1095
    %6666 = vmatprep.subr.bf16.mxu0 %v1104
    %6667 = vmatpush1.bf16.msra.mxu0 %v1103
    %6668 = vmatprep.subr.bf16.mxu0 %v1112
    %6669 = vmatpush1.bf16.msra.mxu0 %v1111
    %6670 = vmatprep.subr.bf16.mxu0 %v1120
    %6671 = vmatpush1.bf16.msra.mxu0 %v1119
    %6672 = vmatprep.subr.bf16.mxu0 %v1128
    %6673 = vmatpush1.bf16.msra.mxu0 %v1127
    %6674 = vmatprep.subr.bf16.mxu0 %v1136
    %6675 = vmatpush1.bf16.msra.mxu0 %v1135
    %6676 = vmatprep.subr.bf16.mxu0 %v1144
    %6677 = vmatpush1.bf16.msra.mxu0 %v1143
    %6678 = vmatprep.subr.bf16.mxu0 %v1152
    %6679 = vmatpush1.bf16.msra.mxu0 %v1151
    %6680 = vmatprep.subr.bf16.mxu0 %v1160
    %6681 = vmatpush1.bf16.msra.mxu0 %v1159
    %6682 = vmatprep.subr.bf16.mxu0 %v1168
    %6683 = vmatpush1.bf16.msra.mxu0 %v1167
    %6684 = vmatprep.subr.bf16.mxu0 %v1176
    %6685 = vmatpush1.bf16.msra.mxu0 %v1175
    %6686 = vmatprep.subr.bf16.mxu0 %v1184
    %6687 = vmatpush1.bf16.msra.mxu0 %v1183
    %6688 = vmatprep.subr.bf16.mxu0 %v1192
    %6689 = vmatpush1.bf16.msra.mxu0 %v1191
    %6690 = vmatprep.subr.bf16.mxu0 %v1200
    %6691 = vmatpush1.bf16.msra.mxu0 %v1199
    %6692 = vmatprep.subr.bf16.mxu0 %v1208
    %6693 = vmatpush1.bf16.msra.mxu0 %v1207
    %6694 = vmatprep.mubr.bf16.mxu0 %v6578
    %6695 = vmatmul.mubr.bf16.gmra.mrb[0].mxu0 %v6577
    %v6696 = vpop.f32.mrb[0].mxu0
    %v6697 = vadd.f32 %v272, %v6696
    %v6698 = vpop.f32.mrb[0].mxu0
    %v6699 = vadd.f32 %v276, %v6698
    %v6700 = vpop.f32.mrb[0].mxu0
    %v6701 = vpop.f32.mrb[0].mxu0
    %6702 = vdwg.mxu0
    %6703 = vmatprep.subr.bf16.mxu0 %v1216
    %6704 = vmatpush1.bf16.msra.mxu0 %v1215
    %6705 = vmatprep.subr.bf16.mxu0 %v1224
    %6706 = vmatpush1.bf16.msra.mxu0 %v1223
    %6707 = vmatprep.subr.bf16.mxu0 %v1232
    %6708 = vmatpush1.bf16.msra.mxu0 %v1231
    %6709 = vmatprep.subr.bf16.mxu0 %v1240
    %6710 = vmatpush1.bf16.msra.mxu0 %v1239
    %6711 = vmatprep.subr.bf16.mxu0 %v1248
    %6712 = vmatpush1.bf16.msra.mxu0 %v1247
    %6713 = vmatprep.subr.bf16.mxu0 %v1256
    %6714 = vmatpush1.bf16.msra.mxu0 %v1255
    %6715 = vmatprep.subr.bf16.mxu0 %v1264
    %6716 = vmatpush1.bf16.msra.mxu0 %v1263
    %6717 = vmatprep.subr.bf16.mxu0 %v1272
    %6718 = vmatpush1.bf16.msra.mxu0 %v1271
    %6719 = vmatprep.subr.bf16.mxu0 0
    %6720 = vmatpush1.bf16.msra.mxu0 0
    %6721 = vmatprep.subr.bf16.mxu0 0
    %6722 = vmatpush1.bf16.msra.mxu0 0
    %6723 = vmatprep.subr.bf16.mxu0 0
    %6724 = vmatpush1.bf16.msra.mxu0 0
    %6725 = vmatprep.subr.bf16.mxu0 0
    %6726 = vmatpush1.bf16.msra.mxu0 0
    %6727 = vmatprep.subr.bf16.mxu0 0
    %6728 = vmatpush1.bf16.msra.mxu0 0
    %6729 = vmatprep.subr.bf16.mxu0 0
    %6730 = vmatpush1.bf16.msra.mxu0 0
    %6731 = vmatprep.subr.bf16.mxu0 0
    %6732 = vmatpush1.bf16.msra.mxu0 0
    %6733 = vmatprep.subr.bf16.mxu0 0
    %6734 = vmatpush1.bf16.msra.mxu0 0
    %6735 = vmatprep.mubr.bf16.mxu0 0
    %6736 = vmatmul.mubr.bf16.gmra.mrb[0].mxu0 %v6579
    %v6737 = vpop.f32.mrb[0].mxu0
    %v6738 = vadd.f32 %v6697, %v6737
    %v6739 = vpop.f32.mrb[0].mxu0
    %v6740 = vadd.f32 %v6699, %v6739
    %v6741 = vpop.f32.mrb[0].mxu0
    %v6742 = vpop.f32.mrb[0].mxu0
    %6743 = vdwg.mxu0
    %6744 = vmatprep.subr.bf16.mxu0 %v1090
    %6745 = vmatpush1.bf16.msra.mxu0 %v1089
    %6746 = vmatprep.subr.bf16.mxu0 %v1098
    %6747 = vmatpush1.bf16.msra.mxu0 %v1097
    %6748 = vmatprep.subr.bf16.mxu0 %v1106
    %6749 = vmatpush1.bf16.msra.mxu0 %v1105
    %6750 = vmatprep.subr.bf16.mxu0 %v1114
    %6751 = vmatpush1.bf16.msra.mxu0 %v1113
    %6752 = vmatprep.subr.bf16.mxu0 %v1122
    %6753 = vmatpush1.bf16.msra.mxu0 %v1121
    %6754 = vmatprep.subr.bf16.mxu0 %v1130
    %6755 = vmatpush1.bf16.msra.mxu0 %v1129
    %6756 = vmatprep.subr.bf16.mxu0 %v1138
    %6757 = vmatpush1.bf16.msra.mxu0 %v1137
    %6758 = vmatprep.subr.bf16.mxu0 %v1146
    %6759 = vmatpush1.bf16.msra.mxu0 %v1145
    %6760 = vmatprep.subr.bf16.mxu0 %v1154
    %6761 = vmatpush1.bf16.msra.mxu0 %v1153
    %6762 = vmatprep.subr.bf16.mxu0 %v1162
    %6763 = vmatpush1.bf16.msra.mxu0 %v1161
    %6764 = vmatprep.subr.bf16.mxu0 %v1170
    %6765 = vmatpush1.bf16.msra.mxu0 %v1169
    %6766 = vmatprep.subr.bf16.mxu0 %v1178
    %6767 = vmatpush1.bf16.msra.mxu0 %v1177
    %6768 = vmatprep.subr.bf16.mxu0 %v1186
    %6769 = vmatpush1.bf16.msra.mxu0 %v1185
    %6770 = vmatprep.subr.bf16.mxu0 %v1194
    %6771 = vmatpush1.bf16.msra.mxu0 %v1193
    %6772 = vmatprep.subr.bf16.mxu0 %v1202
    %6773 = vmatpush1.bf16.msra.mxu0 %v1201
    %6774 = vmatprep.subr.bf16.mxu0 %v1210
    %6775 = vmatpush1.bf16.msra.mxu0 %v1209
    %6776 = vmatprep.mubr.bf16.mxu0 %v6578
    %6777 = vmatmul.mubr.bf16.gmra.mrb[0].mxu0 %v6577
    %v6778 = vpop.f32.mrb[0].mxu0
    %v6779 = vadd.f32 %v280, %v6778
    %v6780 = vpop.f32.mrb[0].mxu0
    %v6781 = vadd.f32 %v284, %v6780
    %v6782 = vpop.f32.mrb[0].mxu0
    %v6783 = vpop.f32.mrb[0].mxu0
    %6784 = vdwg.mxu0
    %6785 = vmatprep.subr.bf16.mxu0 %v1218
    %6786 = vmatpush1.bf16.msra.mxu0 %v1217
    %6787 = vmatprep.subr.bf16.mxu0 %v1226
    %6788 = vmatpush1.bf16.msra.mxu0 %v1225
    %6789 = vmatprep.subr.bf16.mxu0 %v1234
    %6790 = vmatpush1.bf16.msra.mxu0 %v1233
    %6791 = vmatprep.subr.bf16.mxu0 %v1242
    %6792 = vmatpush1.bf16.msra.mxu0 %v1241
    %6793 = vmatprep.subr.bf16.mxu0 %v1250
    %6794 = vmatpush1.bf16.msra.mxu0 %v1249
    %6795 = vmatprep.subr.bf16.mxu0 %v1258
    %6796 = vmatpush1.bf16.msra.mxu0 %v1257
    %6797 = vmatprep.subr.bf16.mxu0 %v1266
    %6798 = vmatpush1.bf16.msra.mxu0 %v1265
    %6799 = vmatprep.subr.bf16.mxu0 %v1274
    %6800 = vmatpush1.bf16.msra.mxu0 %v1273
    %6801 = vmatprep.subr.bf16.mxu0 0
    %6802 = vmatpush1.bf16.msra.mxu0 0
    %6803 = vmatprep.subr.bf16.mxu0 0
    %6804 = vmatpush1.bf16.msra.mxu0 0
    %6805 = vmatprep.subr.bf16.mxu0 0
    %6806 = vmatpush1.bf16.msra.mxu0 0
    %6807 = vmatprep.subr.bf16.mxu0 0
    %6808 = vmatpush1.bf16.msra.mxu0 0
    %6809 = vmatprep.subr.bf16.mxu0 0
    %6810 = vmatpush1.bf16.msra.mxu0 0
    %6811 = vmatprep.subr.bf16.mxu0 0
    %6812 = vmatpush1.bf16.msra.mxu0 0
    %6813 = vmatprep.subr.bf16.mxu0 0
    %6814 = vmatpush1.bf16.msra.mxu0 0
    %6815 = vmatprep.subr.bf16.mxu0 0
    %6816 = vmatpush1.bf16.msra.mxu0 0
    %6817 = vmatprep.mubr.bf16.mxu0 0
    %6818 = vmatmul.mubr.bf16.gmra.mrb[0].mxu0 %v6579
    %v6819 = vpop.f32.mrb[0].mxu0
    %v6820 = vadd.f32 %v6779, %v6819
    %v6821 = vpop.f32.mrb[0].mxu0
    %v6822 = vadd.f32 %v6781, %v6821
    %v6823 = vpop.f32.mrb[0].mxu0
    %v6824 = vpop.f32.mrb[0].mxu0
    %6825 = vdwg.mxu0
    %6826 = vmatprep.subr.bf16.mxu0 %v1092
    %6827 = vmatpush1.bf16.msra.mxu0 %v1091
    %6828 = vmatprep.subr.bf16.mxu0 %v1100
    %6829 = vmatpush1.bf16.msra.mxu0 %v1099
    %6830 = vmatprep.subr.bf16.mxu0 %v1108
    %6831 = vmatpush1.bf16.msra.mxu0 %v1107
    %6832 = vmatprep.subr.bf16.mxu0 %v1116
    %6833 = vmatpush1.bf16.msra.mxu0 %v1115
    %6834 = vmatprep.subr.bf16.mxu0 %v1124
    %6835 = vmatpush1.bf16.msra.mxu0 %v1123
    %6836 = vmatprep.subr.bf16.mxu0 %v1132
    %6837 = vmatpush1.bf16.msra.mxu0 %v1131
    %6838 = vmatprep.subr.bf16.mxu0 %v1140
    %6839 = vmatpush1.bf16.msra.mxu0 %v1139
    %6840 = vmatprep.subr.bf16.mxu0 %v1148
    %6841 = vmatpush1.bf16.msra.mxu0 %v1147
    %6842 = vmatprep.subr.bf16.mxu0 %v1156
    %6843 = vmatpush1.bf16.msra.mxu0 %v1155
    %6844 = vmatprep.subr.bf16.mxu0 %v1164
    %6845 = vmatpush1.bf16.msra.mxu0 %v1163
    %6846 = vmatprep.subr.bf16.mxu0 %v1172
    %6847 = vmatpush1.bf16.msra.mxu0 %v1171
    %6848 = vmatprep.subr.bf16.mxu0 %v1180
    %6849 = vmatpush1.bf16.msra.mxu0 %v1179
    %6850 = vmatprep.subr.bf16.mxu0 %v1188
    %6851 = vmatpush1.bf16.msra.mxu0 %v1187
    %6852 = vmatprep.subr.bf16.mxu0 %v1196
    %6853 = vmatpush1.bf16.msra.mxu0 %v1195
    %6854 = vmatprep.subr.bf16.mxu0 %v1204
    %6855 = vmatpush1.bf16.msra.mxu0 %v1203
    %6856 = vmatprep.subr.bf16.mxu0 %v1212
    %6857 = vmatpush1.bf16.msra.mxu0 %v1211
    %6858 = vmatprep.mubr.bf16.mxu0 %v6578
    %6859 = vmatmul.mubr.bf16.gmra.mrb[0].mxu0 %v6577
    %v6860 = vpop.f32.mrb[0].mxu0
    %v6861 = vadd.f32 %v288, %v6860
    %v6862 = vpop.f32.mrb[0].mxu0
    %v6863 = vadd.f32 %v292, %v6862
    %v6864 = vpop.f32.mrb[0].mxu0
    %v6865 = vpop.f32.mrb[0].mxu0
    %6866 = vdwg.mxu0
    %6867 = vmatprep.subr.bf16.mxu0 %v1220
    %6868 = vmatpush1.bf16.msra.mxu0 %v1219
    %6869 = vmatprep.subr.bf16.mxu0 %v1228
    %6870 = vmatpush1.bf16.msra.mxu0 %v1227
    %6871 = vmatprep.subr.bf16.mxu0 %v1236
    %6872 = vmatpush1.bf16.msra.mxu0 %v1235
    %6873 = vmatprep.subr.bf16.mxu0 %v1244
    %6874 = vmatpush1.bf16.msra.mxu0 %v1243
    %6875 = vmatprep.subr.bf16.mxu0 %v1252
    %6876 = vmatpush1.bf16.msra.mxu0 %v1251
    %6877 = vmatprep.subr.bf16.mxu0 %v1260
    %6878 = vmatpush1.bf16.msra.mxu0 %v1259
    %6879 = vmatprep.subr.bf16.mxu0 %v1268
    %6880 = vmatpush1.bf16.msra.mxu0 %v1267
    %6881 = vmatprep.subr.bf16.mxu0 %v1276
    %6882 = vmatpush1.bf16.msra.mxu0 %v1275
    %6883 = vmatprep.subr.bf16.mxu0 0
    %6884 = vmatpush1.bf16.msra.mxu0 0
    %6885 = vmatprep.subr.bf16.mxu0 0
    %6886 = vmatpush1.bf16.msra.mxu0 0
    %6887 = vmatprep.subr.bf16.mxu0 0
    %6888 = vmatpush1.bf16.msra.mxu0 0
    %6889 = vmatprep.subr.bf16.mxu0 0
    %6890 = vmatpush1.bf16.msra.mxu0 0
    %6891 = vmatprep.subr.bf16.mxu0 0
    %6892 = vmatpush1.bf16.msra.mxu0 0
    %6893 = vmatprep.subr.bf16.mxu0 0
    %6894 = vmatpush1.bf16.msra.mxu0 0
    %6895 = vmatprep.subr.bf16.mxu0 0
    %6896 = vmatpush1.bf16.msra.mxu0 0
    %6897 = vmatprep.subr.bf16.mxu0 0
    %6898 = vmatpush1.bf16.msra.mxu0 0
    %6899 = vmatprep.mubr.bf16.mxu0 0
    %6900 = vmatmul.mubr.bf16.gmra.mrb[0].mxu0 %v6579
    %v6901 = vpop.f32.mrb[0].mxu0
    %v6902 = vadd.f32 %v6861, %v6901
    %v6903 = vpop.f32.mrb[0].mxu0
    %v6904 = vadd.f32 %v6863, %v6903
    %v6905 = vpop.f32.mrb[0].mxu0
    %v6906 = vpop.f32.mrb[0].mxu0
    %6907 = vdwg.mxu0
    %v6908 = vxor.u32 %v6656, 2147483648
    %v6909 = vmul.f32 %v6908, 1.442695
    %v6910 = vpow.pop %v6909
    %v6911 = vadd.f32 %v6910, 1.0
    %v6912 = vrcp.pop %v6911
    %v6913 = vmul.f32 1.0, %v6912
    %v6914 = vxor.u32 %v6658, 2147483648
    %v6915 = vmul.f32 %v6914, 1.442695
    %v6916 = vpow.pop %v6915
    %v6917 = vadd.f32 %v6916, 1.0
    %v6918 = vrcp.pop %v6917
    %v6919 = vmul.f32 1.0, %v6918
    %v6920 = vtanh.pop %v6738
    %v6921 = vxor.u32 %v6740, 2147483648
    %v6922 = vmul.f32 %v6921, 1.442695
    %v6923 = vpow.pop %v6922
    %v6924 = vadd.f32 %v6923, 1.0
    %v6925 = vrcp.pop %v6924
    %v6926 = vmul.f32 1.0, %v6925
    %v6927 = vmul.f32 %v6919, %v6077
    %v6928 = vmul.f32 %v6913, %v6920
    %v6929 = vadd.f32 %v6927, %v6928
    %v6930 = vtanh.pop %v6929
    %v6931 = vmul.f32 %v6926, %v6930
    %v6932 = vxor.u32 %v6820, 2147483648
    %v6933 = vmul.f32 %v6932, 1.442695
    %v6934 = vpow.pop %v6933
    %v6935 = vadd.f32 %v6934, 1.0
    %v6936 = vrcp.pop %v6935
    %v6937 = vmul.f32 1.0, %v6936
    %v6938 = vxor.u32 %v6822, 2147483648
    %v6939 = vmul.f32 %v6938, 1.442695
    %v6940 = vpow.pop %v6939
    %v6941 = vadd.f32 %v6940, 1.0
    %v6942 = vrcp.pop %v6941
    %v6943 = vmul.f32 1.0, %v6942
    %v6944 = vtanh.pop %v6902
    %v6945 = vxor.u32 %v6904, 2147483648
    %v6946 = vmul.f32 %v6945, 1.442695
    %v6947 = vpow.pop %v6946
    %v6948 = vadd.f32 %v6947, 1.0
    %v6949 = vrcp.pop %v6948
    %v6950 = vmul.f32 1.0, %v6949
    %v6951 = vmul.f32 %v6943, %v6576
    %v6952 = vmul.f32 %v6937, %v6944
    %v6953 = vadd.f32 %v6951, %v6952
    %v6954 = vtanh.pop %v6953
    %v6955 = vmul.f32 %v6950, %v6954
    %vm6956 = vcmp.gt.f32.partialorder %v6354, 0.0
    %vm6957 = vcmp.gt.f32.partialorder %v6362, 0.0
    %vm6958 = vcmp.gt.f32.partialorder %v6370, 0.0
    %vm6959 = vcmp.gt.f32.partialorder %v6378, 0.0
    %vm6960 = vcmp.gt.f32.partialorder %v6386, 0.0
    %vm6961 = vcmp.gt.f32.partialorder %v6394, 0.0
    %vm6962 = vcmp.gt.f32.partialorder %v6402, 0.0
    %vm6963 = vcmp.gt.f32.partialorder %v6410, 0.0
    %v6965 = vcombine.high %v6955, %v6955
    %v6967 = vunpack.c.l.s4 1966171168
    %v6968 = vunpack.c.0.s8 %v6967
    %v6969 = vlaneseq
    %v6970 = vshrl.u32 %v6969, 7
    %v6971 = vsub.s32 %v6968, %v6970
    %v6972 = vrot.slane %v6955, %v6971
    %v6974 = vunpack.c.l.s4 1966171168
    %v6975 = vunpack.c.0.s8 %v6974
    %v6976 = vlaneseq
    %v6977 = vshrl.u32 %v6976, 7
    %v6978 = vsub.s32 %v6975, %v6977
    %v6979 = vrot.slane %v6965, %v6978
    %v6980 = vcombine.high %v6972, %v6972
    %v6981 = vcombine.high %v6979, %v6979
    %v6983 = vunpack.c.l.s4 1966171168
    %v6984 = vunpack.c.0.s8 %v6983
    %v6985 = vlaneseq
    %v6986 = vshrl.u32 %v6985, 7
    %v6987 = vsub.s32 %v6984, %v6986
    %v6988 = vrot.slane %v6972, %v6987
    %v6990 = vunpack.c.l.s4 1966171168
    %v6991 = vunpack.c.0.s8 %v6990
    %v6992 = vlaneseq
    %v6993 = vshrl.u32 %v6992, 7
    %v6994 = vsub.s32 %v6991, %v6993
    %v6995 = vrot.slane %v6979, %v6994
    %v6997 = vunpack.c.l.s4 1966171168
    %v6998 = vunpack.c.0.s8 %v6997
    %v6999 = vlaneseq
    %v7000 = vshrl.u32 %v6999, 7
    %v7001 = vsub.s32 %v6998, %v7000
    %v7002 = vrot.slane %v6980, %v7001
    %v7004 = vunpack.c.l.s4 1966171168
    %v7005 = vunpack.c.0.s8 %v7004
    %v7006 = vlaneseq
    %v7007 = vshrl.u32 %v7006, 7
    %v7008 = vsub.s32 %v7005, %v7007
    %v7009 = vrot.slane %v6981, %v7008
    %v7010 = vcombine.high %v6988, %v6988
    %v7011 = vcombine.high %v6995, %v6995
    %v7012 = vcombine.high %v7002, %v7002
    %v7013 = vcombine.high %v7009, %v7009
    %v7014 = vsel %vm6956, 1, 0
    %v7015 = vsel %vm6957, 1, 0
    %v7016 = vsel %vm6958, 1, 0
    %v7017 = vsel %vm6959, 1, 0
    %v7018 = vsel %vm6960, 1, 0
    %v7019 = vsel %vm6961, 1, 0
    %v7020 = vsel %vm6962, 1, 0
    %v7021 = vsel %vm6963, 1, 0
    %vm7022 = vcmp.eq.s32.totalorder %v7014, 1
    %vm7023 = vcmp.eq.s32.totalorder %v7015, 1
    %vm7024 = vcmp.eq.s32.totalorder %v7016, 1
    %vm7025 = vcmp.eq.s32.totalorder %v7017, 1
    %vm7026 = vcmp.eq.s32.totalorder %v7018, 1
    %vm7027 = vcmp.eq.s32.totalorder %v7019, 1
    %vm7028 = vcmp.eq.s32.totalorder %v7020, 1
    %vm7029 = vcmp.eq.s32.totalorder %v7021, 1
    %v7030 = vlaneseq
    %v7031 = vshrl.u32 %v7030, 7
    %v7032 = vsub.s32 0, %v7031
    %v7033 = vrot.slane %v6988, %v7032
    %v7034 = vlaneseq
    %v7035 = vshrl.u32 %v7034, 7
    %v7036 = vsub.s32 0, %v7035
    %v7037 = vrot.slane %v7002, %v7036
    %v7038 = vlaneseq
    %v7039 = vshrl.u32 %v7038, 7
    %v7040 = vsub.s32 0, %v7039
    %v7041 = vrot.slane %v7010, %v7040
    %v7042 = vlaneseq
    %v7043 = vshrl.u32 %v7042, 7
    %v7044 = vsub.s32 0, %v7043
    %v7045 = vrot.slane %v7012, %v7044
    %v7046 = vlaneseq
    %v7047 = vshrl.u32 %v7046, 7
    %v7048 = vsub.s32 0, %v7047
    %v7049 = vrot.slane %v6995, %v7048
    %v7050 = vlaneseq
    %v7051 = vshrl.u32 %v7050, 7
    %v7052 = vsub.s32 0, %v7051
    %v7053 = vrot.slane %v7009, %v7052
    %v7054 = vlaneseq
    %v7055 = vshrl.u32 %v7054, 7
    %v7056 = vsub.s32 0, %v7055
    %v7057 = vrot.slane %v7011, %v7056
    %v7058 = vlaneseq
    %v7059 = vshrl.u32 %v7058, 7
    %v7060 = vsub.s32 0, %v7059
    %v7061 = vrot.slane %v7013, %v7060
    %v7070 = vsel %vm7022, %v7033, %v6218
    %v7071 = vsel %vm7023, %v7037, %v6219
    %v7072 = vsel %vm7024, %v7041, %v6220
    %v7073 = vsel %vm7025, %v7045, %v6221
    %v7074 = vsel %vm7026, %v7049, %v6222
    %v7075 = vsel %vm7027, %v7053, %v6223
    %v7076 = vsel %vm7028, %v7057, %v6224
    %v7077 = vsel %vm7029, %v7061, %v6225
    %v7078 = vmax.f32 %v6324, %v6328
    %s7079 = scalar_lea.vmem [#allocation8], 48
    %7080 = vst [vmem:[%s7079] sm:$0xff] %v6931
    %s7081 = scalar_lea.vmem [#allocation2], 56
    %v7082 = vld [vmem:[%s7081] sm:$0xff]
    %7084 = vrot.lane.b32.xlu0 %v7082, 32
    %v7085 = vpop.permute.xlu0 %7084
    %v7087 = vsel %vm334, %v7085, 0.0
    %7088 = vadd.xlane.f32.xlu0 %v7087
    %v7089 = vpop.xlane.xlu0 %7088
    %v7090 = vmul.f32 %v7082, %v7078
    %7092 = vrot.lane.b32.xlu0 %v7090, 32
    %v7093 = vpop.permute.xlu0 %7092
    %v7095 = vsel %vm334, %v7093, 0.0
    %7096 = vadd.xlane.f32.xlu0 %v7095
    %v7097 = vpop.xlane.xlu0 %7096
    %v7098 = vmul.f32 %v7089, %v7097
    %v7099 = vsub.f32 1.0, %v7097
    %v7100 = vmul.f32 %v7089, %v7099
    %v7101 = vlaneseq
    %v7102 = vshrl.u32 %v7101, 7
    %v7103 = vsub.s32 0, %v7102
    %v7104 = vrot.slane %v7082, %v7103
    %s7106 = sor.u32 256, 96
    %7107 = vbcast.lane.b32.xlu0 %v7104, %s7106
    %v7108 = vpop.permute.xlu0 %7107
    %v7109 = vlaneseq
    %v7110 = vshrl.u32 %v7109, 7
    %v7111 = vsub.s32 1, %v7110
    %v7112 = vrot.slane %v7082, %v7111
    %s7114 = sor.u32 256, 96
    %7115 = vbcast.lane.b32.xlu0 %v7112, %s7114
    %v7116 = vpop.permute.xlu0 %7115
    %v7117 = vlaneseq
    %v7118 = vshrl.u32 %v7117, 7
    %v7119 = vsub.s32 2, %v7118
    %v7120 = vrot.slane %v7082, %v7119
    %s7122 = sor.u32 256, 96
    %7123 = vbcast.lane.b32.xlu0 %v7120, %s7122
    %v7124 = vpop.permute.xlu0 %7123
    %v7125 = vlaneseq
    %v7126 = vshrl.u32 %v7125, 7
    %v7127 = vsub.s32 3, %v7126
    %v7128 = vrot.slane %v7082, %v7127
    %s7130 = sor.u32 256, 96
    %7131 = vbcast.lane.b32.xlu0 %v7128, %s7130
    %v7132 = vpop.permute.xlu0 %7131
    %v7133 = vlaneseq
    %v7134 = vshrl.u32 %v7133, 7
    %v7135 = vsub.s32 4, %v7134
    %v7136 = vrot.slane %v7082, %v7135
    %s7138 = sor.u32 256, 96
    %7139 = vbcast.lane.b32.xlu0 %v7136, %s7138
    %v7140 = vpop.permute.xlu0 %7139
    %v7141 = vlaneseq
    %v7142 = vshrl.u32 %v7141, 7
    %v7143 = vsub.s32 5, %v7142
    %v7144 = vrot.slane %v7082, %v7143
    %s7146 = sor.u32 256, 96
    %7147 = vbcast.lane.b32.xlu0 %v7144, %s7146
    %v7148 = vpop.permute.xlu0 %7147
    %v7149 = vlaneseq
    %v7150 = vshrl.u32 %v7149, 7
    %v7151 = vsub.s32 6, %v7150
    %v7152 = vrot.slane %v7082, %v7151
    %s7154 = sor.u32 256, 96
    %7155 = vbcast.lane.b32.xlu0 %v7152, %s7154
    %v7156 = vpop.permute.xlu0 %7155
    %v7157 = vlaneseq
    %v7158 = vshrl.u32 %v7157, 7
    %v7159 = vsub.s32 7, %v7158
    %v7160 = vrot.slane %v7082, %v7159
    %s7162 = sor.u32 256, 96
    %7163 = vbcast.lane.b32.xlu0 %v7160, %s7162
    %v7164 = vpop.permute.xlu0 %7163
    %v7165 = vmul.f32 %v7108, %v7070
    %v7166 = vmul.f32 %v7116, %v7071
    %v7167 = vmul.f32 %v7124, %v7072
    %v7168 = vmul.f32 %v7132, %v7073
    %v7169 = vmul.f32 %v7140, %v7074
    %v7170 = vmul.f32 %v7148, %v7075
    %v7171 = vmul.f32 %v7156, %v7076
    %v7172 = vmul.f32 %v7164, %v7077
    %v7173 = vsel %vm421, %v7165, 0.0
    %v7174 = vrot.slane %v7173, 4
    %v7175 = vadd.f32 %v7173, %v7174
    %v7176 = vrot.slane %v7175, 2
    %v7177 = vadd.f32 %v7175, %v7176
    %v7178 = vrot.slane %v7177, 1
    %v7179 = vadd.f32 %v7177, %v7178
    %v7180 = vsel %vm421, %v7166, 0.0
    %v7181 = vrot.slane %v7180, 4
    %v7182 = vadd.f32 %v7180, %v7181
    %v7183 = vrot.slane %v7182, 2
    %v7184 = vadd.f32 %v7182, %v7183
    %v7185 = vrot.slane %v7184, 1
    %v7186 = vadd.f32 %v7184, %v7185
    %v7187 = vsel %vm421, %v7167, 0.0
    %v7188 = vrot.slane %v7187, 4
    %v7189 = vadd.f32 %v7187, %v7188
    %v7190 = vrot.slane %v7189, 2
    %v7191 = vadd.f32 %v7189, %v7190
    %v7192 = vrot.slane %v7191, 1
    %v7193 = vadd.f32 %v7191, %v7192
    %v7194 = vsel %vm421, %v7168, 0.0
    %v7195 = vrot.slane %v7194, 4
    %v7196 = vadd.f32 %v7194, %v7195
    %v7197 = vrot.slane %v7196, 2
    %v7198 = vadd.f32 %v7196, %v7197
    %v7199 = vrot.slane %v7198, 1
    %v7200 = vadd.f32 %v7198, %v7199
    %v7201 = vsel %vm421, %v7169, 0.0
    %v7202 = vrot.slane %v7201, 4
    %v7203 = vadd.f32 %v7201, %v7202
    %v7204 = vrot.slane %v7203, 2
    %v7205 = vadd.f32 %v7203, %v7204
    %v7206 = vrot.slane %v7205, 1
    %v7207 = vadd.f32 %v7205, %v7206
    %v7208 = vsel %vm421, %v7170, 0.0
    %v7209 = vrot.slane %v7208, 4
    %v7210 = vadd.f32 %v7208, %v7209
    %v7211 = vrot.slane %v7210, 2
    %v7212 = vadd.f32 %v7210, %v7211
    %v7213 = vrot.slane %v7212, 1
    %v7214 = vadd.f32 %v7212, %v7213
    %v7215 = vsel %vm421, %v7171, 0.0
    %v7216 = vrot.slane %v7215, 4
    %v7217 = vadd.f32 %v7215, %v7216
    %v7218 = vrot.slane %v7217, 2
    %v7219 = vadd.f32 %v7217, %v7218
    %v7220 = vrot.slane %v7219, 1
    %v7221 = vadd.f32 %v7219, %v7220
    %v7222 = vsel %vm421, %v7172, 0.0
    %v7223 = vrot.slane %v7222, 4
    %v7224 = vadd.f32 %v7222, %v7223
    %v7225 = vrot.slane %v7224, 2
    %v7226 = vadd.f32 %v7224, %v7225
    %v7227 = vrot.slane %v7226, 1
    %v7228 = vadd.f32 %v7226, %v7227
    %v7237 = vsel %vm486, %v7186, %v7179
    %v7238 = vsel %vm488, %v7193, %v7237
    %v7239 = vsel %vm490, %v7200, %v7238
    %v7240 = vsel %vm492, %v7207, %v7239
    %v7241 = vsel %vm494, %v7214, %v7240
    %v7242 = vsel %vm496, %v7221, %v7241
    %v7243 = vsel %vm498, %v7228, %v7242
    %v7245 = vmul.f32 %v7098, %v7243
    %v7246 = vmul.f32 %v7100, %v306
    %v7247 = vadd.f32 %v7245, %v7246
    %v7248 = vpack.c.bf16 %v7082, %v7082
    %v7249 = vpack.c.bf16 %v6931, %v6931
    %v7250 = vpack.c.bf16 %v7247, %v7247
    %7251 = vmatprep.subr.bf16.mxu0 %v1086
    %7252 = vmatpush1.bf16.msra.mxu0 %v1085
    %7253 = vmatprep.subr.bf16.mxu0 %v1094
    %7254 = vmatpush1.bf16.msra.mxu0 %v1093
    %7255 = vmatprep.subr.bf16.mxu0 %v1102
    %7256 = vmatpush1.bf16.msra.mxu0 %v1101
    %7257 = vmatprep.subr.bf16.mxu0 %v1110
    %7258 = vmatpush1.bf16.msra.mxu0 %v1109
    %7259 = vmatprep.subr.bf16.mxu0 %v1118
    %7260 = vmatpush1.bf16.msra.mxu0 %v1117
    %7261 = vmatprep.subr.bf16.mxu0 %v1126
    %7262 = vmatpush1.bf16.msra.mxu0 %v1125
    %7263 = vmatprep.subr.bf16.mxu0 %v1134
    %7264 = vmatpush1.bf16.msra.mxu0 %v1133
    %7265 = vmatprep.subr.bf16.mxu0 %v1142
    %7266 = vmatpush1.bf16.msra.mxu0 %v1141
    %7267 = vmatprep.subr.bf16.mxu0 %v1150
    %7268 = vmatpush1.bf16.msra.mxu0 %v1149
    %7269 = vmatprep.subr.bf16.mxu0 %v1158
    %7270 = vmatpush1.bf16.msra.mxu0 %v1157
    %7271 = vmatprep.subr.bf16.mxu0 %v1166
    %7272 = vmatpush1.bf16.msra.mxu0 %v1165
    %7273 = vmatprep.subr.bf16.mxu0 %v1174
    %7274 = vmatpush1.bf16.msra.mxu0 %v1173
    %7275 = vmatprep.subr.bf16.mxu0 %v1182
    %7276 = vmatpush1.bf16.msra.mxu0 %v1181
    %7277 = vmatprep.subr.bf16.mxu0 %v1190
    %7278 = vmatpush1.bf16.msra.mxu0 %v1189
    %7279 = vmatprep.subr.bf16.mxu0 %v1198
    %7280 = vmatpush1.bf16.msra.mxu0 %v1197
    %7281 = vmatprep.subr.bf16.mxu0 %v1206
    %7282 = vmatpush1.bf16.msra.mxu0 %v1205
    %7283 = vmatprep.mubr.bf16.mxu0 %v7249
    %7284 = vmatmul.mubr.bf16.gmra.mrb[0].mxu0 %v7248
    %v7285 = vpop.f32.mrb[0].mxu0
    %v7286 = vadd.f32 %v264, %v7285
    %v7287 = vpop.f32.mrb[0].mxu0
    %v7288 = vadd.f32 %v268, %v7287
    %v7289 = vpop.f32.mrb[0].mxu0
    %v7290 = vpop.f32.mrb[0].mxu0
    %7291 = vdwg.mxu0
    %7292 = vmatprep.subr.bf16.mxu0 %v1214
    %7293 = vmatpush1.bf16.msra.mxu0 %v1213
    %7294 = vmatprep.subr.bf16.mxu0 %v1222
    %7295 = vmatpush1.bf16.msra.mxu0 %v1221
    %7296 = vmatprep.subr.bf16.mxu0 %v1230
    %7297 = vmatpush1.bf16.msra.mxu0 %v1229
    %7298 = vmatprep.subr.bf16.mxu0 %v1238
    %7299 = vmatpush1.bf16.msra.mxu0 %v1237
    %7300 = vmatprep.subr.bf16.mxu0 %v1246
    %7301 = vmatpush1.bf16.msra.mxu0 %v1245
    %7302 = vmatprep.subr.bf16.mxu0 %v1254
    %7303 = vmatpush1.bf16.msra.mxu0 %v1253
    %7304 = vmatprep.subr.bf16.mxu0 %v1262
    %7305 = vmatpush1.bf16.msra.mxu0 %v1261
    %7306 = vmatprep.subr.bf16.mxu0 %v1270
    %7307 = vmatpush1.bf16.msra.mxu0 %v1269
    %7308 = vmatprep.subr.bf16.mxu0 0
    %7309 = vmatpush1.bf16.msra.mxu0 0
    %7310 = vmatprep.subr.bf16.mxu0 0
    %7311 = vmatpush1.bf16.msra.mxu0 0
    %7312 = vmatprep.subr.bf16.mxu0 0
    %7313 = vmatpush1.bf16.msra.mxu0 0
    %7314 = vmatprep.subr.bf16.mxu0 0
    %7315 = vmatpush1.bf16.msra.mxu0 0
    %7316 = vmatprep.subr.bf16.mxu0 0
    %7317 = vmatpush1.bf16.msra.mxu0 0
    %7318 = vmatprep.subr.bf16.mxu0 0
    %7319 = vmatpush1.bf16.msra.mxu0 0
    %7320 = vmatprep.subr.bf16.mxu0 0
    %7321 = vmatpush1.bf16.msra.mxu0 0
    %7322 = vmatprep.subr.bf16.mxu0 0
    %7323 = vmatpush1.bf16.msra.mxu0 0
    %7324 = vmatprep.mubr.bf16.mxu0 0
    %7325 = vmatmul.mubr.bf16.gmra.mrb[0].mxu0 %v7250
    %v7326 = vpop.f32.mrb[0].mxu0
    %v7327 = vadd.f32 %v7286, %v7326
    %v7328 = vpop.f32.mrb[0].mxu0
    %v7329 = vadd.f32 %v7288, %v7328
    %v7330 = vpop.f32.mrb[0].mxu0
    %v7331 = vpop.f32.mrb[0].mxu0
    %7332 = vdwg.mxu0
    %7333 = vmatprep.subr.bf16.mxu0 %v1088
    %7334 = vmatpush1.bf16.msra.mxu0 %v1087
    %7335 = vmatprep.subr.bf16.mxu0 %v1096
    %7336 = vmatpush1.bf16.msra.mxu0 %v1095
    %7337 = vmatprep.subr.bf16.mxu0 %v1104
    %7338 = vmatpush1.bf16.msra.mxu0 %v1103
    %7339 = vmatprep.subr.bf16.mxu0 %v1112
    %7340 = vmatpush1.bf16.msra.mxu0 %v1111
    %7341 = vmatprep.subr.bf16.mxu0 %v1120
    %7342 = vmatpush1.bf16.msra.mxu0 %v1119
    %7343 = vmatprep.subr.bf16.mxu0 %v1128
    %7344 = vmatpush1.bf16.msra.mxu0 %v1127
    %7345 = vmatprep.subr.bf16.mxu0 %v1136
    %7346 = vmatpush1.bf16.msra.mxu0 %v1135
    %7347 = vmatprep.subr.bf16.mxu0 %v1144
    %7348 = vmatpush1.bf16.msra.mxu0 %v1143
    %7349 = vmatprep.subr.bf16.mxu0 %v1152
    %7350 = vmatpush1.bf16.msra.mxu0 %v1151
    %7351 = vmatprep.subr.bf16.mxu0 %v1160
    %7352 = vmatpush1.bf16.msra.mxu0 %v1159
    %7353 = vmatprep.subr.bf16.mxu0 %v1168
    %7354 = vmatpush1.bf16.msra.mxu0 %v1167
    %7355 = vmatprep.subr.bf16.mxu0 %v1176
    %7356 = vmatpush1.bf16.msra.mxu0 %v1175
    %7357 = vmatprep.subr.bf16.mxu0 %v1184
    %7358 = vmatpush1.bf16.msra.mxu0 %v1183
    %7359 = vmatprep.subr.bf16.mxu0 %v1192
    %7360 = vmatpush1.bf16.msra.mxu0 %v1191
    %7361 = vmatprep.subr.bf16.mxu0 %v1200
    %7362 = vmatpush1.bf16.msra.mxu0 %v1199
    %7363 = vmatprep.subr.bf16.mxu0 %v1208
    %7364 = vmatpush1.bf16.msra.mxu0 %v1207
    %7365 = vmatprep.mubr.bf16.mxu0 %v7249
    %7366 = vmatmul.mubr.bf16.gmra.mrb[0].mxu0 %v7248
    %v7367 = vpop.f32.mrb[0].mxu0
    %v7368 = vadd.f32 %v272, %v7367
    %v7369 = vpop.f32.mrb[0].mxu0
    %v7370 = vadd.f32 %v276, %v7369
    %v7371 = vpop.f32.mrb[0].mxu0
    %v7372 = vpop.f32.mrb[0].mxu0
    %7373 = vdwg.mxu0
    %7374 = vmatprep.subr.bf16.mxu0 %v1216
    %7375 = vmatpush1.bf16.msra.mxu0 %v1215
    %7376 = vmatprep.subr.bf16.mxu0 %v1224
    %7377 = vmatpush1.bf16.msra.mxu0 %v1223
    %7378 = vmatprep.subr.bf16.mxu0 %v1232
    %7379 = vmatpush1.bf16.msra.mxu0 %v1231
    %7380 = vmatprep.subr.bf16.mxu0 %v1240
    %7381 = vmatpush1.bf16.msra.mxu0 %v1239
    %7382 = vmatprep.subr.bf16.mxu0 %v1248
    %7383 = vmatpush1.bf16.msra.mxu0 %v1247
    %7384 = vmatprep.subr.bf16.mxu0 %v1256
    %7385 = vmatpush1.bf16.msra.mxu0 %v1255
    %7386 = vmatprep.subr.bf16.mxu0 %v1264
    %7387 = vmatpush1.bf16.msra.mxu0 %v1263
    %7388 = vmatprep.subr.bf16.mxu0 %v1272
    %7389 = vmatpush1.bf16.msra.mxu0 %v1271
    %7390 = vmatprep.subr.bf16.mxu0 0
    %7391 = vmatpush1.bf16.msra.mxu0 0
    %7392 = vmatprep.subr.bf16.mxu0 0
    %7393 = vmatpush1.bf16.msra.mxu0 0
    %7394 = vmatprep.subr.bf16.mxu0 0
    %7395 = vmatpush1.bf16.msra.mxu0 0
    %7396 = vmatprep.subr.bf16.mxu0 0
    %7397 = vmatpush1.bf16.msra.mxu0 0
    %7398 = vmatprep.subr.bf16.mxu0 0
    %7399 = vmatpush1.bf16.msra.mxu0 0
    %7400 = vmatprep.subr.bf16.mxu0 0
    %7401 = vmatpush1.bf16.msra.mxu0 0
    %7402 = vmatprep.subr.bf16.mxu0 0
    %7403 = vmatpush1.bf16.msra.mxu0 0
    %7404 = vmatprep.subr.bf16.mxu0 0
    %7405 = vmatpush1.bf16.msra.mxu0 0
    %7406 = vmatprep.mubr.bf16.mxu0 0
    %7407 = vmatmul.mubr.bf16.gmra.mrb[0].mxu0 %v7250
    %v7408 = vpop.f32.mrb[0].mxu0
    %v7409 = vadd.f32 %v7368, %v7408
    %v7410 = vpop.f32.mrb[0].mxu0
    %v7411 = vadd.f32 %v7370, %v7410
    %v7412 = vpop.f32.mrb[0].mxu0
    %v7413 = vpop.f32.mrb[0].mxu0
    %7414 = vdwg.mxu0
    %v7415 = vxor.u32 %v7327, 2147483648
    %v7416 = vmul.f32 %v7415, 1.442695
    %v7417 = vpow.pop %v7416
    %v7418 = vadd.f32 %v7417, 1.0
    %v7419 = vrcp.pop %v7418
    %v7420 = vmul.f32 1.0, %v7419
    %v7421 = vxor.u32 %v7329, 2147483648
    %v7422 = vmul.f32 %v7421, 1.442695
    %v7423 = vpow.pop %v7422
    %v7424 = vadd.f32 %v7423, 1.0
    %v7425 = vrcp.pop %v7424
    %v7426 = vmul.f32 1.0, %v7425
    %v7427 = vtanh.pop %v7409
    %v7428 = vxor.u32 %v7411, 2147483648
    %v7429 = vmul.f32 %v7428, 1.442695
    %v7430 = vpow.pop %v7429
    %v7431 = vadd.f32 %v7430, 1.0
    %v7432 = vrcp.pop %v7431
    %v7433 = vmul.f32 1.0, %v7432
    %v7434 = vmul.f32 %v7426, %v6929
    %v7435 = vmul.f32 %v7420, %v7427
    %v7436 = vadd.f32 %v7434, %v7435
    %v7437 = vtanh.pop %v7436
    %v7438 = vmul.f32 %v7433, %v7437
    %s7439 = scalar_lea.vmem [#allocation8], 56
    %7440 = vst [vmem:[%s7439] sm:$0xff] %v7438
    // Predicated region
    $region42: #{tpu_custom_call.1} parent=1 // pred_check
      _
    $region43: #{tpu_custom_call.1} parent=1 // pred_check_branch
      %7442 = sbr.rel (0) target = $region45
    $region44: #{tpu_custom_call.1} parent=1 // pred_region
      %s7444 = ssub.s32 1024, 1024
      %7445 = vsyncadd [#allocation4], %s7444
      %s7446 = sshll.u32 [#allocation8], 4
      %s7447 = int_to_ptr.vmem [resolvable:$true] %s7446
      %7452 = dma.vmem_to_hbm [thread:$0]  %s7447, 1024, %s7, [#allocation4], 128, 128, 8
    $region45: #{tpu_custom_call.1} parent=1 // pred_fallthru
      _
    // Predicated region
    $region46: #{tpu_custom_call.1} parent=1 // pred_check
      _
    $region47: #{tpu_custom_call.1} parent=1 // pred_check_branch
      %7454 = sbr.rel (0) target = $region49
    $region48: #{tpu_custom_call.1} parent=1 // pred_region
      %7455 = dma.done [#allocation4], 1024
    $region49: #{tpu_custom_call.1} parent=1 // pred_fallthru
      _
    %7456 = vsyncpa [#allocation3], 1
    %7457 = vsyncpa [#allocation6], 1
    %7458 = vsyncpa [#allocation4], 1

</llo_original>
